<compile_context>
chip_gen: v7x
topology: tpu7x:2x2x1
jax: 0.10.0
libtpu: 0.0.40
codegen_flags: <defaults>
</compile_context>

<pallas_src>
import numpy as np
import jax
import jax.numpy as jnp
from jax import lax
from jax.experimental import pallas as pl
from jax.experimental.pallas import tpu as pltpu

EPS = 1e-5
# MXU operand / scratch / inter-block activation dtype (f32 accumulation via
# preferred_element_type).
MXU_DTYPE = jnp.bfloat16


def _bn_affine(bn):
    scale = bn["gamma"] / jnp.sqrt(bn["var"] + EPS)
    bias = bn["beta"] - bn["mean"] * scale
    return scale, bias


# ------------------------ fused BasicBlock kernel ---------------------------

def _make_basic_block_kernel(s, hs, ws, cin, cout, equal, b_blk, use_slab):
    """Fused pre-activation BasicBlock kernel; B_blk images per grid step.

    s        : conv1 stride (1 or 2).  Input arrives as s*s space-to-depth
               planes so every 3x3 tap (even with stride) is a plain slice.
    hs, ws   : per-plane spatial size (= H//s, W//s) == output spatial size.
    cin/cout : channels;  equal : identity shortcut (no 1x1 conv).
    use_slab : pack 9 taps into a VMEM im2col slab -> single matmul per conv.
    """
    hout, wout = hs, ws
    m = b_blk * hout * wout
    nsq = s * s

    def tap_offsets(kh, kw):
        pr = (kh - 1) % s                  # plane row parity for this tap
        r0 = 1 + (kh - 1 - pr) // s        # row offset into the padded plane
        pc = (kw - 1) % s
        c0 = 1 + (kw - 1 - pc) // s
        return pr * s + pc, r0, c0

    def kernel(*refs):
        if equal:
            (xs_ref, s1_ref, b1_ref, w1_ref, s2_ref, b2_ref, w2_ref,
             o_ref, *scratch) = refs
            wsc_ref = None
        else:
            (xs_ref, s1_ref, b1_ref, w1_ref, s2_ref, b2_ref, w2_ref, wsc_ref,
             o_ref, *scratch) = refs
        if use_slab:
            pad1, pad2, slab1, slab2 = scratch
        else:
            pad1, pad2 = scratch

        # ---- re-zero ONLY the 1-pixel borders (interiors are overwritten) --
        pad1[:, :, 0:1, :, :] = jnp.zeros((b_blk, nsq, 1, ws + 2, cin), MXU_DTYPE)
        pad1[:, :, hs + 1:hs + 2, :, :] = jnp.zeros((b_blk, nsq, 1, ws + 2, cin), MXU_DTYPE)
        pad1[:, :, :, 0:1, :] = jnp.zeros((b_blk, nsq, hs + 2, 1, cin), MXU_DTYPE)
        pad1[:, :, :, ws + 1:ws + 2, :] = jnp.zeros((b_blk, nsq, hs + 2, 1, cin), MXU_DTYPE)
        pad2[:, 0:1, :, :] = jnp.zeros((b_blk, 1, wout + 2, cout), MXU_DTYPE)
        pad2[:, hout + 1:hout + 2, :, :] = jnp.zeros((b_blk, 1, wout + 2, cout), MXU_DTYPE)
        pad2[:, :, 0:1, :] = jnp.zeros((b_blk, hout + 2, 1, cout), MXU_DTYPE)
        pad2[:, :, wout + 1:wout + 2, :] = jnp.zeros((b_blk, hout + 2, 1, cout), MXU_DTYPE)

        # ---- BN1 + ReLU prologue: f32 VPU math, single bf16 cast on store ---
        s1 = s1_ref[...]                   # (1, cin) broadcasts over NHWC
        b1 = b1_ref[...]
        for p in range(nsq):
            act = jnp.maximum(xs_ref[:, p].astype(jnp.float32) * s1 + b1, 0.0)
            pad1[:, p, 1:hs + 1, 1:ws + 1, :] = act.astype(MXU_DTYPE)

        # ---- residual path (f32; no zeros tensor ever materialized) --------
        if equal:
            res = xs_ref[:, 0].reshape(m, cin).astype(jnp.float32)
        else:
            a00 = pad1[:, 0, 1:hout + 1, 1:wout + 1, :].reshape(m, cin)
            res = jnp.dot(a00, wsc_ref[...], preferred_element_type=jnp.float32)

        # ---- conv1: 3x3 stride s --------------------------------------------
        if use_slab:
            # im2col slab in VMEM: 9 plain slice copies (no reshapes), then
            # ONE MXU matmul with K = 9*cin.
            for kh in range(3):
                for kw in range(3):
                    k = kh * 3 + kw
                    p, r0, c0 = tap_offsets(kh, kw)
                    slab1[:, :, :, k * cin:(k + 1) * cin] = \
                        pad1[:, p, r0:r0 + hout, c0:c0 + wout, :]
            h_pre = jnp.dot(slab1[...].reshape(m, 9 * cin), w1_ref[...],
                            preferred_element_type=jnp.float32)
        else:
            # wide-channel path: 9 tap matmuls, 3 independent partial sums to
            # break the serial accumulate chain.
            parts = [None, None, None]
            for kh in range(3):
                for kw in range(3):
                    k = kh * 3 + kw
                    p, r0, c0 = tap_offsets(kh, kw)
                    tap = pad1[:, p, r0:r0 + hout, c0:c0 + wout, :].reshape(m, cin)
                    d = jnp.dot(tap, w1_ref[k], preferred_element_type=jnp.float32)
                    parts[k % 3] = d if parts[k % 3] is None else parts[k % 3] + d
            h_pre = parts[0] + parts[1] + parts[2]

        # ---- BN2 + ReLU epilogue (f32 VPU), single bf16 cast on store -------
        h = jnp.maximum(h_pre * s2_ref[...] + b2_ref[...], 0.0)
        # TODO(synk): dropout (dropRate>0, training mode) not implemented; the
        # module default dropRate=0.0 makes it an identity.
        pad2[:, 1:hout + 1, 1:wout + 1, :] = \
            h.astype(MXU_DTYPE).reshape(b_blk, hout, wout, cout)

        # ---- conv2: 3x3 stride 1, residual folded into the f32 result -------
        if use_slab:
            for kh in range(3):
                for kw in range(3):
                    k = kh * 3 + kw
                    slab2[:, :, :, k * cout:(k + 1) * cout] = \
                        pad2[:, kh:kh + hout, kw:kw + wout, :]
            out = res + jnp.dot(slab2[...].reshape(m, 9 * cout), w2_ref[...],
                                preferred_element_type=jnp.float32)
        else:
            parts = [None, None, None]
            for kh in range(3):
                for kw in range(3):
                    k = kh * 3 + kw
                    tap = pad2[:, kh:kh + hout, kw:kw + wout, :].reshape(m, cout)
                    d = jnp.dot(tap, w2_ref[k], preferred_element_type=jnp.float32)
                    parts[k % 3] = d if parts[k % 3] is None else parts[k % 3] + d
            out = res + (parts[0] + parts[1] + parts[2])

        o_ref[...] = out.astype(o_ref.dtype)

    return kernel


# ------------------------------ block wrapper --------------------------------

def basic_block_forward(x_nhwc, p, stride, out_dtype=MXU_DTYPE):
    """x: (N,H,W,Cin), params dict p, conv1 stride.  Returns (N,H/s,W/s,Cout)."""
    n, h, w, cin = x_nhwc.shape
    cout = p["conv1_w"].shape[0]
    equal = "conv_sc_w" not in p
    s = int(stride)
    assert h % s == 0 and w % s == 0
    if equal:
        assert s == 1 and cin == cout

    hs, ws = h // s, w // s
    hout, wout = hs, ws
    nsq = s * s

    # 9-tap -> single-matmul (im2col slab) for small channels; per-tap matmuls
    # with split partial accumulators once the channels are MXU-wide.
    use_slab = max(cin, cout) < 128

    # ---- choose images-per-grid-step under a VMEM budget (v7x: 64 MiB) -----
    in_itemsize = jnp.dtype(x_nhwc.dtype).itemsize
    out_itemsize = jnp.dtype(out_dtype).itemsize

    def vmem_bytes(b):
        by = b * nsq * (hs + 2) * (ws + 2) * cin * 2           # pad1 (bf16)
        by += b * (hout + 2) * (wout + 2) * cout * 2           # pad2 (bf16)
        if use_slab:
            by += b * hout * wout * 9 * cin * 2                # slab1 (bf16)
            by += b * hout * wout * 9 * cout * 2               # slab2 (bf16)
        by += 2 * b * nsq * hs * ws * cin * in_itemsize        # dbl-buffered in
        by += 2 * b * hout * wout * cout * out_itemsize        # dbl-buffered out
        by += 9 * cin * cout * 2 + 9 * cout * cout * 2 + cin * cout * 2
        return by

    budget = 24 * 1024 * 1024
    b_blk = 1
    for cand in range(min(n, 8), 0, -1):
        if n % cand == 0 and vmem_bytes(cand) <= budget:
            b_blk = cand
            break

    # Space-to-depth: (N,H,W,C) -> (N, s*s, H/s, W/s, C); plane pr*s+pc holds
    # x[:, pr::s, pc::s, :].  For s=1 this is just a leading unit axis.
    xs = (x_nhwc.reshape(n, hs, s, ws, s, cin)
          .transpose(0, 2, 4, 1, 3, 5)
          .reshape(n, nsq, hs, ws, cin))

    s1, b1 = _bn_affine(p["bn1"])
    s2, b2 = _bn_affine(p["bn2"])
    s1 = s1.reshape(1, cin).astype(jnp.float32)
    b1 = b1.reshape(1, cin).astype(jnp.float32)
    s2 = s2.reshape(1, cout).astype(jnp.float32)
    b2 = b2.reshape(1, cout).astype(jnp.float32)

    # torch OIHW -> (kh, kw, Cin, Cout); packed (9*Cin, Cout) for the slab path
    # (K index = (kh*3+kw)*Cin + ci matches the slab channel layout).
    if use_slab:
        w1 = jnp.transpose(p["conv1_w"], (2, 3, 1, 0)).reshape(9 * cin, cout).astype(MXU_DTYPE)
        w2 = jnp.transpose(p["conv2_w"], (2, 3, 1, 0)).reshape(9 * cout, cout).astype(MXU_DTYPE)
        w1_spec = pl.BlockSpec((9 * cin, cout), lambda i: (0, 0))
        w2_spec = pl.BlockSpec((9 * cout, cout), lambda i: (0, 0))
    else:
        w1 = jnp.transpose(p["conv1_w"], (2, 3, 1, 0)).reshape(9, cin, cout).astype(MXU_DTYPE)
        w2 = jnp.transpose(p["conv2_w"], (2, 3, 1, 0)).reshape(9, cout, cout).astype(MXU_DTYPE)
        w1_spec = pl.BlockSpec((9, cin, cout), lambda i: (0, 0, 0))
        w2_spec = pl.BlockSpec((9, cout, cout), lambda i: (0, 0, 0))

    operands = [xs, s1, b1, w1, s2, b2, w2]
    in_specs = [
        pl.BlockSpec((b_blk, nsq, hs, ws, cin), lambda i: (i, 0, 0, 0, 0)),
        pl.BlockSpec((1, cin), lambda i: (0, 0)),
        pl.BlockSpec((1, cin), lambda i: (0, 0)),
        w1_spec,
        pl.BlockSpec((1, cout), lambda i: (0, 0)),
        pl.BlockSpec((1, cout), lambda i: (0, 0)),
        w2_spec,
    ]
    if not equal:
        wsc = p["conv_sc_w"].reshape(cout, cin).T.astype(MXU_DTYPE)   # (Cin, Cout)
        operands.append(wsc)
        in_specs.append(pl.BlockSpec((cin, cout), lambda i: (0, 0)))

    scratch_shapes = [
        pltpu.VMEM((b_blk, nsq, hs + 2, ws + 2, cin), MXU_DTYPE),     # padded act(x)
        pltpu.VMEM((b_blk, hout + 2, wout + 2, cout), MXU_DTYPE),     # padded conv1 act
    ]
    if use_slab:
        scratch_shapes += [
            pltpu.VMEM((b_blk, hout, wout, 9 * cin), MXU_DTYPE),      # im2col conv1
            pltpu.VMEM((b_blk, hout, wout, 9 * cout), MXU_DTYPE),     # im2col conv2
        ]

    # ---- cost estimate & VMEM limit (with headroom) -------------------------
    m_total = n * hout * wout
    flops = 2 * m_total * cout * (9 * cin + 9 * cout + (0 if equal else cin))
    param_bytes = sum(int(a.size) * jnp.dtype(a.dtype).itemsize for a in operands[1:])
    bytes_acc = (int(xs.size) * in_itemsize + param_bytes
                 + m_total * cout * out_itemsize)
    vmem_limit = int(min(max(2 * vmem_bytes(b_blk), 16 << 20), 48 << 20))

    kernel = _make_basic_block_kernel(s, hs, ws, cin, cout, equal, b_blk, use_slab)
    out2d = pl.pallas_call(
        kernel,
        out_shape=jax.ShapeDtypeStruct((m_total, cout), out_dtype),
        grid=(n // b_blk,),
        in_specs=in_specs,
        out_specs=pl.BlockSpec((b_blk * hout * wout, cout), lambda i: (i, 0)),
        scratch_shapes=scratch_shapes,
        compiler_params=pltpu.CompilerParams(
            dimension_semantics=("parallel",),
            vmem_limit_bytes=vmem_limit),
        cost_estimate=pl.CostEstimate(flops=flops, transcendentals=0,
                                      bytes_accessed=bytes_acc),
    )(*operands)
    return out2d.reshape(n, hout, wout, cout)


def network_block_forward(x_nchw, blocks, stride):
    x = jnp.transpose(x_nchw, (0, 2, 3, 1)).astype(jnp.float32)   # NCHW -> NHWC
    for i, p in enumerate(blocks):
        # inter-block activations stay in bf16 (HBM traffic); f32 only at the
        # NetworkBlock boundary.
        x = basic_block_forward(x, p, stride if i == 0 else 1, out_dtype=MXU_DTYPE)
    return jnp.transpose(x, (0, 3, 1, 2)).astype(jnp.float32)     # NHWC -> NCHW


# ----------------------------- parameter init -------------------------------

def _init_bn(key, c):
    k1, k2, k3, k4 = jax.random.split(key, 4)
    return dict(
        gamma=jax.random.uniform(k1, (c,), jnp.float32, 0.5, 1.5),
        beta=0.1 * jax.random.normal(k2, (c,), jnp.float32),
        mean=0.1 * jax.random.normal(k3, (c,), jnp.float32),
        var=jax.random.uniform(k4, (c,), jnp.float32, 0.5, 1.5),
    )


def _init_conv(key, cout, cin, k):
    return 0.1 * jax.random.normal(key, (cout, cin, k, k), jnp.float32)


def init_network_block(key, nb_layers, in_planes, out_planes):
    blocks = []
    for i in range(nb_layers):
        ip = in_planes if i == 0 else out_planes
        key, ka, kb, kc, kd, ke = jax.random.split(key, 6)
        p = dict(
            bn1=_init_bn(ka, ip),
            conv1_w=_init_conv(kb, out_planes, ip, 3),
            bn2=_init_bn(kc, out_planes),
            conv2_w=_init_conv(kd, out_planes, out_planes, 3),
        )
        if ip != out_planes:
            p["conv_sc_w"] = _init_conv(ke, out_planes, ip, 1)
        blocks.append(p)
    return blocks


# ------------------------------- reference ----------------------------------
# Same module math in plain XLA (NCHW), precision-matched to the kernel: conv
# operands in bf16 (f32 accumulation), BN/ReLU/residual in f32, and the
# inter-block activation rounded to bf16 exactly like the kernel's output.

def _ref_conv(x, w, stride, pad):
    return lax.conv_general_dilated(
        x.astype(MXU_DTYPE), w.astype(MXU_DTYPE), (stride, stride),
        [(pad, pad), (pad, pad)],
        dimension_numbers=("NCHW", "OIHW", "NCHW"),
        preferred_element_type=jnp.float32)


def _ref_bn_relu(x, bn):
    s = bn["gamma"] / jnp.sqrt(bn["var"] + EPS)
    b = bn["beta"] - bn["mean"] * s
    return jnp.maximum(x * s[None, :, None, None] + b[None, :, None, None], 0.0)


def ref_network_block(x, blocks, stride):
    for i, p in enumerate(blocks):
        s = stride if i == 0 else 1
        equal = "conv_sc_w" not in p
        o = _ref_bn_relu(x, p["bn1"])
        h = _ref_conv(o, p["conv1_w"], s, 1)
        h = _ref_bn_relu(h, p["bn2"])
        h = _ref_conv(h, p["conv2_w"], 1, 1)
        res = x if equal else _ref_conv(o, p["conv_sc_w"], s, 0)
        # kernel emits bf16 activations between blocks
        x = (res + h).astype(MXU_DTYPE).astype(jnp.float32)
    return x


# --------------------------------- main --------------------------------------

if __name__ == "__main__":
    key = jax.random.PRNGKey(0)
    kx, kp = jax.random.split(key)

    # NetworkBlock(nb_layers=2, in_planes=4, out_planes=8, block=BasicBlock, stride=2)
    nb_layers, in_planes, out_planes, stride = 2, 4, 8, 2
    x = jax.random.normal(kx, (2, in_planes, 16, 16), jnp.float32)   # NCHW like PyTorch

    blocks = init_network_block(kp, nb_layers, in_planes, out_planes)

    fwd = jax.jit(network_block_forward, static_argnames=("stride",))
    out = jax.block_until_ready(fwd(x, blocks, stride=stride))

    ref = jax.block_until_ready(ref_network_block(x, blocks, stride))
    np.testing.assert_allclose(np.asarray(out), np.asarray(ref), rtol=2e-2, atol=2e-2)
    assert out.shape == (2, out_planes, 8, 8), out.shape

    print("KERNEL_OK")
</pallas_src>

<mosaic_0001>
module attributes {stable_mosaic.version = 11 : i64} {
  func.func @kernel(%arg0: i32, %arg1: memref<2x1x8x8x8xbf16, #tpu.memory_space<vmem>>, %arg2: memref<1x8xf32, #tpu.memory_space<vmem>>, %arg3: memref<1x8xf32, #tpu.memory_space<vmem>>, %arg4: memref<72x8xbf16, #tpu.memory_space<vmem>>, %arg5: memref<1x8xf32, #tpu.memory_space<vmem>>, %arg6: memref<1x8xf32, #tpu.memory_space<vmem>>, %arg7: memref<72x8xbf16, #tpu.memory_space<vmem>>, %arg8: memref<128x8xbf16, #tpu.memory_space<vmem>>, %arg9: memref<2x1x10x10x8xbf16, #tpu.memory_space<vmem>>, %arg10: memref<2x10x10x8xbf16, #tpu.memory_space<vmem>>, %arg11: memref<2x8x8x72xbf16, #tpu.memory_space<vmem>>, %arg12: memref<2x8x8x72xbf16, #tpu.memory_space<vmem>>) attributes {dimension_semantics = [#tpu.dimension_semantics<parallel>], iteration_bounds = array<i64: 1>, scalar_prefetch = 0 : i64, scratch_operands = 4 : i64, tpu.core_type = #tpu.core_type<tc>, window_params = [{transform_indices = @transform_0, window_bounds = array<i64: 2, 1, 8, 8, 8>}, {pipeline_mode = #tpu.pipeline_mode<synchronous>, transform_indices = @transform_1, window_bounds = array<i64: 1, 8>}, {pipeline_mode = #tpu.pipeline_mode<synchronous>, transform_indices = @transform_2, window_bounds = array<i64: 1, 8>}, {pipeline_mode = #tpu.pipeline_mode<synchronous>, transform_indices = @transform_3, window_bounds = array<i64: 72, 8>}, {pipeline_mode = #tpu.pipeline_mode<synchronous>, transform_indices = @transform_4, window_bounds = array<i64: 1, 8>}, {pipeline_mode = #tpu.pipeline_mode<synchronous>, transform_indices = @transform_5, window_bounds = array<i64: 1, 8>}, {pipeline_mode = #tpu.pipeline_mode<synchronous>, transform_indices = @transform_6, window_bounds = array<i64: 72, 8>}, {transform_indices = @transform_7, window_bounds = array<i64: 128, 8>}]} {
    %cst = arith.constant 0.000000e+00 : bf16
    %0 = vector.broadcast %cst : bf16 to vector<2x1x1x10x8xbf16>
    %c0 = arith.constant 0 : index
    %c0_0 = arith.constant 0 : index
    %c0_1 = arith.constant 0 : index
    %c0_2 = arith.constant 0 : index
    %c0_3 = arith.constant 0 : index
    %1 = vector.load %arg9[%c0, %c0_0, %c0_1, %c0_2, %c0_3] : memref<2x1x10x10x8xbf16, #tpu.memory_space<vmem>>, vector<2x1x1x10x8xbf16>
    tpu.vector_store %arg9[%c0, %c0_0, %c0_1, %c0_2, %c0_3], %0 {strides = array<i32>} : memref<2x1x10x10x8xbf16, #tpu.memory_space<vmem>>, vector<2x1x1x10x8xbf16>,
    %cst_4 = arith.constant 0.000000e+00 : bf16
    %2 = vector.broadcast %cst_4 : bf16 to vector<2x1x1x10x8xbf16>
    %c0_5 = arith.constant 0 : index
    %c0_6 = arith.constant 0 : index
    %c9 = arith.constant 9 : index
    %c0_7 = arith.constant 0 : index
    %c0_8 = arith.constant 0 : index
    %3 = vector.load %arg9[%c0_5, %c0_6, %c9, %c0_7, %c0_8] : memref<2x1x10x10x8xbf16, #tpu.memory_space<vmem>>, vector<2x1x1x10x8xbf16>
    tpu.vector_store %arg9[%c0_5, %c0_6, %c9, %c0_7, %c0_8], %2 {strides = array<i32>} : memref<2x1x10x10x8xbf16, #tpu.memory_space<vmem>>, vector<2x1x1x10x8xbf16>,
    %cst_9 = arith.constant 0.000000e+00 : bf16
    %4 = vector.broadcast %cst_9 : bf16 to vector<2x1x10x1x8xbf16>
    %c0_10 = arith.constant 0 : index
    %c0_11 = arith.constant 0 : index
    %c0_12 = arith.constant 0 : index
    %c0_13 = arith.constant 0 : index
    %c0_14 = arith.constant 0 : index
    %5 = vector.load %arg9[%c0_10, %c0_11, %c0_12, %c0_13, %c0_14] : memref<2x1x10x10x8xbf16, #tpu.memory_space<vmem>>, vector<2x1x10x1x8xbf16>
    tpu.vector_store %arg9[%c0_10, %c0_11, %c0_12, %c0_13, %c0_14], %4 {strides = array<i32>} : memref<2x1x10x10x8xbf16, #tpu.memory_space<vmem>>, vector<2x1x10x1x8xbf16>,
    %cst_15 = arith.constant 0.000000e+00 : bf16
    %6 = vector.broadcast %cst_15 : bf16 to vector<2x1x10x1x8xbf16>
    %c0_16 = arith.constant 0 : index
    %c0_17 = arith.constant 0 : index
    %c0_18 = arith.constant 0 : index
    %c9_19 = arith.constant 9 : index
    %c0_20 = arith.constant 0 : index
    %7 = vector.load %arg9[%c0_16, %c0_17, %c0_18, %c9_19, %c0_20] : memref<2x1x10x10x8xbf16, #tpu.memory_space<vmem>>, vector<2x1x10x1x8xbf16>
    tpu.vector_store %arg9[%c0_16, %c0_17, %c0_18, %c9_19, %c0_20], %6 {strides = array<i32>} : memref<2x1x10x10x8xbf16, #tpu.memory_space<vmem>>, vector<2x1x10x1x8xbf16>,
    %cst_21 = arith.constant 0.000000e+00 : bf16
    %8 = vector.broadcast %cst_21 : bf16 to vector<2x1x10x8xbf16>
    %c0_22 = arith.constant 0 : index
    %c0_23 = arith.constant 0 : index
    %c0_24 = arith.constant 0 : index
    %c0_25 = arith.constant 0 : index
    %9 = vector.load %arg10[%c0_22, %c0_23, %c0_24, %c0_25] : memref<2x10x10x8xbf16, #tpu.memory_space<vmem>>, vector<2x1x10x8xbf16>
    tpu.vector_store %arg10[%c0_22, %c0_23, %c0_24, %c0_25], %8 {strides = array<i32>} : memref<2x10x10x8xbf16, #tpu.memory_space<vmem>>, vector<2x1x10x8xbf16>,
    %cst_26 = arith.constant 0.000000e+00 : bf16
    %10 = vector.broadcast %cst_26 : bf16 to vector<2x1x10x8xbf16>
    %c0_27 = arith.constant 0 : index
    %c9_28 = arith.constant 9 : index
    %c0_29 = arith.constant 0 : index
    %c0_30 = arith.constant 0 : index
    %11 = vector.load %arg10[%c0_27, %c9_28, %c0_29, %c0_30] : memref<2x10x10x8xbf16, #tpu.memory_space<vmem>>, vector<2x1x10x8xbf16>
    tpu.vector_store %arg10[%c0_27, %c9_28, %c0_29, %c0_30], %10 {strides = array<i32>} : memref<2x10x10x8xbf16, #tpu.memory_space<vmem>>, vector<2x1x10x8xbf16>,
    %cst_31 = arith.constant 0.000000e+00 : bf16
    %12 = vector.broadcast %cst_31 : bf16 to vector<2x10x1x8xbf16>
    %c0_32 = arith.constant 0 : index
    %c0_33 = arith.constant 0 : index
    %c0_34 = arith.constant 0 : index
    %c0_35 = arith.constant 0 : index
    %13 = vector.load %arg10[%c0_32, %c0_33, %c0_34, %c0_35] : memref<2x10x10x8xbf16, #tpu.memory_space<vmem>>, vector<2x10x1x8xbf16>
    tpu.vector_store %arg10[%c0_32, %c0_33, %c0_34, %c0_35], %12 {strides = array<i32>} : memref<2x10x10x8xbf16, #tpu.memory_space<vmem>>, vector<2x10x1x8xbf16>,
    %cst_36 = arith.constant 0.000000e+00 : bf16
    %14 = vector.broadcast %cst_36 : bf16 to vector<2x10x1x8xbf16>
    %c0_37 = arith.constant 0 : index
    %c0_38 = arith.constant 0 : index
    %c9_39 = arith.constant 9 : index
    %c0_40 = arith.constant 0 : index
    %15 = vector.load %arg10[%c0_37, %c0_38, %c9_39, %c0_40] : memref<2x10x10x8xbf16, #tpu.memory_space<vmem>>, vector<2x10x1x8xbf16>
    tpu.vector_store %arg10[%c0_37, %c0_38, %c9_39, %c0_40], %14 {strides = array<i32>} : memref<2x10x10x8xbf16, #tpu.memory_space<vmem>>, vector<2x10x1x8xbf16>,
    %c0_41 = arith.constant 0 : index
    %c0_42 = arith.constant 0 : index
    %16 = vector.load %arg2[%c0_41, %c0_42] : memref<1x8xf32, #tpu.memory_space<vmem>>, vector<1x8xf32>
    %c0_43 = arith.constant 0 : index
    %c0_44 = arith.constant 0 : index
    %17 = vector.load %arg3[%c0_43, %c0_44] : memref<1x8xf32, #tpu.memory_space<vmem>>, vector<1x8xf32>
    %c0_45 = arith.constant 0 : index
    %c0_46 = arith.constant 0 : index
    %c0_47 = arith.constant 0 : index
    %c0_48 = arith.constant 0 : index
    %c0_49 = arith.constant 0 : index
    %18 = vector.load %arg1[%c0_45, %c0_46, %c0_47, %c0_48, %c0_49] : memref<2x1x8x8x8xbf16, #tpu.memory_space<vmem>>, vector<2x1x8x8x8xbf16>
    %19 = vector.shape_cast %18 : vector<2x1x8x8x8xbf16> to vector<2x8x8x8xbf16>
    %20 = arith.extf %19 : vector<2x8x8x8xbf16> to vector<2x8x8x8xf32>
    %21 = vector.shape_cast %16 : vector<1x8xf32> to vector<1x1x1x8xf32>
    %22 = vector.broadcast %21 : vector<1x1x1x8xf32> to vector<2x8x8x8xf32>
    %23 = arith.mulf %20, %22 : vector<2x8x8x8xf32>
    %24 = vector.shape_cast %17 : vector<1x8xf32> to vector<1x1x1x8xf32>
    %25 = vector.broadcast %24 : vector<1x1x1x8xf32> to vector<2x8x8x8xf32>
    %26 = arith.addf %23, %25 : vector<2x8x8x8xf32>
    %cst_50 = arith.constant 0.000000e+00 : f32
    %27 = vector.broadcast %cst_50 : f32 to vector<2x8x8x8xf32>
    %28 = arith.maximumf %26, %27 : vector<2x8x8x8xf32>
    %29 = arith.truncf %28 : vector<2x8x8x8xf32> to vector<2x8x8x8xbf16>
    %c0_51 = arith.constant 0 : index
    %c0_52 = arith.constant 0 : index
    %c1 = arith.constant 1 : index
    %c1_53 = arith.constant 1 : index
    %c0_54 = arith.constant 0 : index
    %30 = vector.load %arg9[%c0_51, %c0_52, %c1, %c1_53, %c0_54] : memref<2x1x10x10x8xbf16, #tpu.memory_space<vmem>>, vector<2x1x8x8x8xbf16>
    %31 = vector.shape_cast %30 : vector<2x1x8x8x8xbf16> to vector<2x8x8x8xbf16>
    %32 = vector.shape_cast %29 : vector<2x8x8x8xbf16> to vector<2x1x8x8x8xbf16>
    tpu.vector_store %arg9[%c0_51, %c0_52, %c1, %c1_53, %c0_54], %32 {strides = array<i32>} : memref<2x1x10x10x8xbf16, #tpu.memory_space<vmem>>, vector<2x1x8x8x8xbf16>,
    %c0_55 = arith.constant 0 : index
    %c0_56 = arith.constant 0 : index
    %c0_57 = arith.constant 0 : index
    %c0_58 = arith.constant 0 : index
    %c0_59 = arith.constant 0 : index
    %33 = vector.load %arg1[%c0_55, %c0_56, %c0_57, %c0_58, %c0_59] : memref<2x1x8x8x8xbf16, #tpu.memory_space<vmem>>, vector<2x1x8x8x8xbf16>
    %34 = vector.shape_cast %33 : vector<2x1x8x8x8xbf16> to vector<2x8x8x8xbf16>
    %35 = vector.shape_cast %34 : vector<2x8x8x8xbf16> to vector<128x8xbf16>
    %36 = arith.extf %35 : vector<128x8xbf16> to vector<128x8xf32>
    %c0_60 = arith.constant 0 : index
    %c0_61 = arith.constant 0 : index
    %c0_62 = arith.constant 0 : index
    %c0_63 = arith.constant 0 : index
    %c0_64 = arith.constant 0 : index
    %37 = vector.load %arg9[%c0_60, %c0_61, %c0_62, %c0_63, %c0_64] : memref<2x1x10x10x8xbf16, #tpu.memory_space<vmem>>, vector<2x1x8x8x8xbf16>
    %38 = vector.shape_cast %37 : vector<2x1x8x8x8xbf16> to vector<2x8x8x8xbf16>
    %c0_65 = arith.constant 0 : index
    %c0_66 = arith.constant 0 : index
    %c0_67 = arith.constant 0 : index
    %c0_68 = arith.constant 0 : index
    %39 = vector.load %arg11[%c0_65, %c0_66, %c0_67, %c0_68] : memref<2x8x8x72xbf16, #tpu.memory_space<vmem>>, vector<2x8x8x8xbf16>
    tpu.vector_store %arg11[%c0_65, %c0_66, %c0_67, %c0_68], %38 {strides = array<i32>} : memref<2x8x8x72xbf16, #tpu.memory_space<vmem>>, vector<2x8x8x8xbf16>,
    %c0_69 = arith.constant 0 : index
    %c0_70 = arith.constant 0 : index
    %c0_71 = arith.constant 0 : index
    %c1_72 = arith.constant 1 : index
    %c0_73 = arith.constant 0 : index
    %40 = vector.load %arg9[%c0_69, %c0_70, %c0_71, %c1_72, %c0_73] : memref<2x1x10x10x8xbf16, #tpu.memory_space<vmem>>, vector<2x1x8x8x8xbf16>
    %41 = vector.shape_cast %40 : vector<2x1x8x8x8xbf16> to vector<2x8x8x8xbf16>
    %c0_74 = arith.constant 0 : index
    %c0_75 = arith.constant 0 : index
    %c0_76 = arith.constant 0 : index
    %c8 = arith.constant 8 : index
    %42 = vector.load %arg11[%c0_74, %c0_75, %c0_76, %c8] : memref<2x8x8x72xbf16, #tpu.memory_space<vmem>>, vector<2x8x8x8xbf16>
    tpu.vector_store %arg11[%c0_74, %c0_75, %c0_76, %c8], %41 {strides = array<i32>} : memref<2x8x8x72xbf16, #tpu.memory_space<vmem>>, vector<2x8x8x8xbf16>,
    %c0_77 = arith.constant 0 : index
    %c0_78 = arith.constant 0 : index
    %c0_79 = arith.constant 0 : index
    %c2 = arith.constant 2 : index
    %c0_80 = arith.constant 0 : index
    %43 = vector.load %arg9[%c0_77, %c0_78, %c0_79, %c2, %c0_80] : memref<2x1x10x10x8xbf16, #tpu.memory_space<vmem>>, vector<2x1x8x8x8xbf16>
    %44 = vector.shape_cast %43 : vector<2x1x8x8x8xbf16> to vector<2x8x8x8xbf16>
    %c0_81 = arith.constant 0 : index
    %c0_82 = arith.constant 0 : index
    %c0_83 = arith.constant 0 : index
    %c16 = arith.constant 16 : index
    %45 = vector.load %arg11[%c0_81, %c0_82, %c0_83, %c16] : memref<2x8x8x72xbf16, #tpu.memory_space<vmem>>, vector<2x8x8x8xbf16>
    tpu.vector_store %arg11[%c0_81, %c0_82, %c0_83, %c16], %44 {strides = array<i32>} : memref<2x8x8x72xbf16, #tpu.memory_space<vmem>>, vector<2x8x8x8xbf16>,
    %c0_84 = arith.constant 0 : index
    %c0_85 = arith.constant 0 : index
    %c1_86 = arith.constant 1 : index
    %c0_87 = arith.constant 0 : index
    %c0_88 = arith.constant 0 : index
    %46 = vector.load %arg9[%c0_84, %c0_85, %c1_86, %c0_87, %c0_88] : memref<2x1x10x10x8xbf16, #tpu.memory_space<vmem>>, vector<2x1x8x8x8xbf16>
    %47 = vector.shape_cast %46 : vector<2x1x8x8x8xbf16> to vector<2x8x8x8xbf16>
    %c0_89 = arith.constant 0 : index
    %c0_90 = arith.constant 0 : index
    %c0_91 = arith.constant 0 : index
    %c24 = arith.constant 24 : index
    %48 = vector.load %arg11[%c0_89, %c0_90, %c0_91, %c24] : memref<2x8x8x72xbf16, #tpu.memory_space<vmem>>, vector<2x8x8x8xbf16>
    tpu.vector_store %arg11[%c0_89, %c0_90, %c0_91, %c24], %47 {strides = array<i32>} : memref<2x8x8x72xbf16, #tpu.memory_space<vmem>>, vector<2x8x8x8xbf16>,
    %c0_92 = arith.constant 0 : index
    %c0_93 = arith.constant 0 : index
    %c1_94 = arith.constant 1 : index
    %c1_95 = arith.constant 1 : index
    %c0_96 = arith.constant 0 : index
    %49 = vector.load %arg9[%c0_92, %c0_93, %c1_94, %c1_95, %c0_96] : memref<2x1x10x10x8xbf16, #tpu.memory_space<vmem>>, vector<2x1x8x8x8xbf16>
    %50 = vector.shape_cast %49 : vector<2x1x8x8x8xbf16> to vector<2x8x8x8xbf16>
    %c0_97 = arith.constant 0 : index
    %c0_98 = arith.constant 0 : index
    %c0_99 = arith.constant 0 : index
    %c32 = arith.constant 32 : index
    %51 = vector.load %arg11[%c0_97, %c0_98, %c0_99, %c32] : memref<2x8x8x72xbf16, #tpu.memory_space<vmem>>, vector<2x8x8x8xbf16>
    tpu.vector_store %arg11[%c0_97, %c0_98, %c0_99, %c32], %50 {strides = array<i32>} : memref<2x8x8x72xbf16, #tpu.memory_space<vmem>>, vector<2x8x8x8xbf16>,
    %c0_100 = arith.constant 0 : index
    %c0_101 = arith.constant 0 : index
    %c1_102 = arith.constant 1 : index
    %c2_103 = arith.constant 2 : index
    %c0_104 = arith.constant 0 : index
    %52 = vector.load %arg9[%c0_100, %c0_101, %c1_102, %c2_103, %c0_104] : memref<2x1x10x10x8xbf16, #tpu.memory_space<vmem>>, vector<2x1x8x8x8xbf16>
    %53 = vector.shape_cast %52 : vector<2x1x8x8x8xbf16> to vector<2x8x8x8xbf16>
    %c0_105 = arith.constant 0 : index
    %c0_106 = arith.constant 0 : index
    %c0_107 = arith.constant 0 : index
    %c40 = arith.constant 40 : index
    %54 = vector.load %arg11[%c0_105, %c0_106, %c0_107, %c40] : memref<2x8x8x72xbf16, #tpu.memory_space<vmem>>, vector<2x8x8x8xbf16>
    tpu.vector_store %arg11[%c0_105, %c0_106, %c0_107, %c40], %53 {strides = array<i32>} : memref<2x8x8x72xbf16, #tpu.memory_space<vmem>>, vector<2x8x8x8xbf16>,
    %c0_108 = arith.constant 0 : index
    %c0_109 = arith.constant 0 : index
    %c2_110 = arith.constant 2 : index
    %c0_111 = arith.constant 0 : index
    %c0_112 = arith.constant 0 : index
    %55 = vector.load %arg9[%c0_108, %c0_109, %c2_110, %c0_111, %c0_112] : memref<2x1x10x10x8xbf16, #tpu.memory_space<vmem>>, vector<2x1x8x8x8xbf16>
    %56 = vector.shape_cast %55 : vector<2x1x8x8x8xbf16> to vector<2x8x8x8xbf16>
    %c0_113 = arith.constant 0 : index
    %c0_114 = arith.constant 0 : index
    %c0_115 = arith.constant 0 : index
    %c48 = arith.constant 48 : index
    %57 = vector.load %arg11[%c0_113, %c0_114, %c0_115, %c48] : memref<2x8x8x72xbf16, #tpu.memory_space<vmem>>, vector<2x8x8x8xbf16>
    tpu.vector_store %arg11[%c0_113, %c0_114, %c0_115, %c48], %56 {strides = array<i32>} : memref<2x8x8x72xbf16, #tpu.memory_space<vmem>>, vector<2x8x8x8xbf16>,
    %c0_116 = arith.constant 0 : index
    %c0_117 = arith.constant 0 : index
    %c2_118 = arith.constant 2 : index
    %c1_119 = arith.constant 1 : index
    %c0_120 = arith.constant 0 : index
    %58 = vector.load %arg9[%c0_116, %c0_117, %c2_118, %c1_119, %c0_120] : memref<2x1x10x10x8xbf16, #tpu.memory_space<vmem>>, vector<2x1x8x8x8xbf16>
    %59 = vector.shape_cast %58 : vector<2x1x8x8x8xbf16> to vector<2x8x8x8xbf16>
    %c0_121 = arith.constant 0 : index
    %c0_122 = arith.constant 0 : index
    %c0_123 = arith.constant 0 : index
    %c56 = arith.constant 56 : index
    %60 = vector.load %arg11[%c0_121, %c0_122, %c0_123, %c56] : memref<2x8x8x72xbf16, #tpu.memory_space<vmem>>, vector<2x8x8x8xbf16>
    tpu.vector_store %arg11[%c0_121, %c0_122, %c0_123, %c56], %59 {strides = array<i32>} : memref<2x8x8x72xbf16, #tpu.memory_space<vmem>>, vector<2x8x8x8xbf16>,
    %c0_124 = arith.constant 0 : index
    %c0_125 = arith.constant 0 : index
    %c2_126 = arith.constant 2 : index
    %c2_127 = arith.constant 2 : index
    %c0_128 = arith.constant 0 : index
    %61 = vector.load %arg9[%c0_124, %c0_125, %c2_126, %c2_127, %c0_128] : memref<2x1x10x10x8xbf16, #tpu.memory_space<vmem>>, vector<2x1x8x8x8xbf16>
    %62 = vector.shape_cast %61 : vector<2x1x8x8x8xbf16> to vector<2x8x8x8xbf16>
    %c0_129 = arith.constant 0 : index
    %c0_130 = arith.constant 0 : index
    %c0_131 = arith.constant 0 : index
    %c64 = arith.constant 64 : index
    %63 = vector.load %arg11[%c0_129, %c0_130, %c0_131, %c64] : memref<2x8x8x72xbf16, #tpu.memory_space<vmem>>, vector<2x8x8x8xbf16>
    tpu.vector_store %arg11[%c0_129, %c0_130, %c0_131, %c64], %62 {strides = array<i32>} : memref<2x8x8x72xbf16, #tpu.memory_space<vmem>>, vector<2x8x8x8xbf16>,
    %c0_132 = arith.constant 0 : index
    %c0_133 = arith.constant 0 : index
    %c0_134 = arith.constant 0 : index
    %c0_135 = arith.constant 0 : index
    %64 = vector.load %arg11[%c0_132, %c0_133, %c0_134, %c0_135] : memref<2x8x8x72xbf16, #tpu.memory_space<vmem>>, vector<2x8x8x72xbf16>
    %65 = vector.shape_cast %64 : vector<2x8x8x72xbf16> to vector<128x72xbf16>
    %c0_136 = arith.constant 0 : index
    %c0_137 = arith.constant 0 : index
    %66 = vector.load %arg4[%c0_136, %c0_137] : memref<72x8xbf16, #tpu.memory_space<vmem>>, vector<72x8xbf16>
    %cst_138 = arith.constant dense<0.000000e+00> : vector<128x8xf32>
    %67 = tpu.matmul %65, %66, %cst_138 {dimension_numbers = #tpu.dot_dimension_numbers<[1], [0], [0], [1], [0, 0, 1, 1], [], []>} : vector<128x72xbf16>, vector<72x8xbf16>, vector<128x8xf32> -> vector<128x8xf32>
    %c0_139 = arith.constant 0 : index
    %c0_140 = arith.constant 0 : index
    %68 = vector.load %arg5[%c0_139, %c0_140] : memref<1x8xf32, #tpu.memory_space<vmem>>, vector<1x8xf32>
    %69 = vector.broadcast %68 : vector<1x8xf32> to vector<128x8xf32>
    %70 = arith.mulf %67, %69 : vector<128x8xf32>
    %c0_141 = arith.constant 0 : index
    %c0_142 = arith.constant 0 : index
    %71 = vector.load %arg6[%c0_141, %c0_142] : memref<1x8xf32, #tpu.memory_space<vmem>>, vector<1x8xf32>
    %72 = vector.broadcast %71 : vector<1x8xf32> to vector<128x8xf32>
    %73 = arith.addf %70, %72 : vector<128x8xf32>
    %cst_143 = arith.constant 0.000000e+00 : f32
    %74 = vector.broadcast %cst_143 : f32 to vector<128x8xf32>
    %75 = arith.maximumf %73, %74 : vector<128x8xf32>
    %76 = arith.truncf %75 : vector<128x8xf32> to vector<128x8xbf16>
    %77 = vector.shape_cast %76 : vector<128x8xbf16> to vector<2x8x8x8xbf16>
    %c0_144 = arith.constant 0 : index
    %c1_145 = arith.constant 1 : index
    %c1_146 = arith.constant 1 : index
    %c0_147 = arith.constant 0 : index
    %78 = vector.load %arg10[%c0_144, %c1_145, %c1_146, %c0_147] : memref<2x10x10x8xbf16, #tpu.memory_space<vmem>>, vector<2x8x8x8xbf16>
    tpu.vector_store %arg10[%c0_144, %c1_145, %c1_146, %c0_147], %77 {strides = array<i32>} : memref<2x10x10x8xbf16, #tpu.memory_space<vmem>>, vector<2x8x8x8xbf16>,
    %c0_148 = arith.constant 0 : index
    %c0_149 = arith.constant 0 : index
    %c0_150 = arith.constant 0 : index
    %c0_151 = arith.constant 0 : index
    %79 = vector.load %arg10[%c0_148, %c0_149, %c0_150, %c0_151] : memref<2x10x10x8xbf16, #tpu.memory_space<vmem>>, vector<2x8x8x8xbf16>
    %c0_152 = arith.constant 0 : index
    %c0_153 = arith.constant 0 : index
    %c0_154 = arith.constant 0 : index
    %c0_155 = arith.constant 0 : index
    %80 = vector.load %arg12[%c0_152, %c0_153, %c0_154, %c0_155] : memref<2x8x8x72xbf16, #tpu.memory_space<vmem>>, vector<2x8x8x8xbf16>
    tpu.vector_store %arg12[%c0_152, %c0_153, %c0_154, %c0_155], %79 {strides = array<i32>} : memref<2x8x8x72xbf16, #tpu.memory_space<vmem>>, vector<2x8x8x8xbf16>,
    %c0_156 = arith.constant 0 : index
    %c0_157 = arith.constant 0 : index
    %c1_158 = arith.constant 1 : index
    %c0_159 = arith.constant 0 : index
    %81 = vector.load %arg10[%c0_156, %c0_157, %c1_158, %c0_159] : memref<2x10x10x8xbf16, #tpu.memory_space<vmem>>, vector<2x8x8x8xbf16>
    %c0_160 = arith.constant 0 : index
    %c0_161 = arith.constant 0 : index
    %c0_162 = arith.constant 0 : index
    %c8_163 = arith.constant 8 : index
    %82 = vector.load %arg12[%c0_160, %c0_161, %c0_162, %c8_163] : memref<2x8x8x72xbf16, #tpu.memory_space<vmem>>, vector<2x8x8x8xbf16>
    tpu.vector_store %arg12[%c0_160, %c0_161, %c0_162, %c8_163], %81 {strides = array<i32>} : memref<2x8x8x72xbf16, #tpu.memory_space<vmem>>, vector<2x8x8x8xbf16>,
    %c0_164 = arith.constant 0 : index
    %c0_165 = arith.constant 0 : index
    %c2_166 = arith.constant 2 : index
    %c0_167 = arith.constant 0 : index
    %83 = vector.load %arg10[%c0_164, %c0_165, %c2_166, %c0_167] : memref<2x10x10x8xbf16, #tpu.memory_space<vmem>>, vector<2x8x8x8xbf16>
    %c0_168 = arith.constant 0 : index
    %c0_169 = arith.constant 0 : index
    %c0_170 = arith.constant 0 : index
    %c16_171 = arith.constant 16 : index
    %84 = vector.load %arg12[%c0_168, %c0_169, %c0_170, %c16_171] : memref<2x8x8x72xbf16, #tpu.memory_space<vmem>>, vector<2x8x8x8xbf16>
    tpu.vector_store %arg12[%c0_168, %c0_169, %c0_170, %c16_171], %83 {strides = array<i32>} : memref<2x8x8x72xbf16, #tpu.memory_space<vmem>>, vector<2x8x8x8xbf16>,
    %c0_172 = arith.constant 0 : index
    %c1_173 = arith.constant 1 : index
    %c0_174 = arith.constant 0 : index
    %c0_175 = arith.constant 0 : index
    %85 = vector.load %arg10[%c0_172, %c1_173, %c0_174, %c0_175] : memref<2x10x10x8xbf16, #tpu.memory_space<vmem>>, vector<2x8x8x8xbf16>
    %c0_176 = arith.constant 0 : index
    %c0_177 = arith.constant 0 : index
    %c0_178 = arith.constant 0 : index
    %c24_179 = arith.constant 24 : index
    %86 = vector.load %arg12[%c0_176, %c0_177, %c0_178, %c24_179] : memref<2x8x8x72xbf16, #tpu.memory_space<vmem>>, vector<2x8x8x8xbf16>
    tpu.vector_store %arg12[%c0_176, %c0_177, %c0_178, %c24_179], %85 {strides = array<i32>} : memref<2x8x8x72xbf16, #tpu.memory_space<vmem>>, vector<2x8x8x8xbf16>,
    %c0_180 = arith.constant 0 : index
    %c1_181 = arith.constant 1 : index
    %c1_182 = arith.constant 1 : index
    %c0_183 = arith.constant 0 : index
    %87 = vector.load %arg10[%c0_180, %c1_181, %c1_182, %c0_183] : memref<2x10x10x8xbf16, #tpu.memory_space<vmem>>, vector<2x8x8x8xbf16>
    %c0_184 = arith.constant 0 : index
    %c0_185 = arith.constant 0 : index
    %c0_186 = arith.constant 0 : index
    %c32_187 = arith.constant 32 : index
    %88 = vector.load %arg12[%c0_184, %c0_185, %c0_186, %c32_187] : memref<2x8x8x72xbf16, #tpu.memory_space<vmem>>, vector<2x8x8x8xbf16>
    tpu.vector_store %arg12[%c0_184, %c0_185, %c0_186, %c32_187], %87 {strides = array<i32>} : memref<2x8x8x72xbf16, #tpu.memory_space<vmem>>, vector<2x8x8x8xbf16>,
    %c0_188 = arith.constant 0 : index
    %c1_189 = arith.constant 1 : index
    %c2_190 = arith.constant 2 : index
    %c0_191 = arith.constant 0 : index
    %89 = vector.load %arg10[%c0_188, %c1_189, %c2_190, %c0_191] : memref<2x10x10x8xbf16, #tpu.memory_space<vmem>>, vector<2x8x8x8xbf16>
    %c0_192 = arith.constant 0 : index
    %c0_193 = arith.constant 0 : index
    %c0_194 = arith.constant 0 : index
    %c40_195 = arith.constant 40 : index
    %90 = vector.load %arg12[%c0_192, %c0_193, %c0_194, %c40_195] : memref<2x8x8x72xbf16, #tpu.memory_space<vmem>>, vector<2x8x8x8xbf16>
    tpu.vector_store %arg12[%c0_192, %c0_193, %c0_194, %c40_195], %89 {strides = array<i32>} : memref<2x8x8x72xbf16, #tpu.memory_space<vmem>>, vector<2x8x8x8xbf16>,
    %c0_196 = arith.constant 0 : index
    %c2_197 = arith.constant 2 : index
    %c0_198 = arith.constant 0 : index
    %c0_199 = arith.constant 0 : index
    %91 = vector.load %arg10[%c0_196, %c2_197, %c0_198, %c0_199] : memref<2x10x10x8xbf16, #tpu.memory_space<vmem>>, vector<2x8x8x8xbf16>
    %c0_200 = arith.constant 0 : index
    %c0_201 = arith.constant 0 : index
    %c0_202 = arith.constant 0 : index
    %c48_203 = arith.constant 48 : index
    %92 = vector.load %arg12[%c0_200, %c0_201, %c0_202, %c48_203] : memref<2x8x8x72xbf16, #tpu.memory_space<vmem>>, vector<2x8x8x8xbf16>
    tpu.vector_store %arg12[%c0_200, %c0_201, %c0_202, %c48_203], %91 {strides = array<i32>} : memref<2x8x8x72xbf16, #tpu.memory_space<vmem>>, vector<2x8x8x8xbf16>,
    %c0_204 = arith.constant 0 : index
    %c2_205 = arith.constant 2 : index
    %c1_206 = arith.constant 1 : index
    %c0_207 = arith.constant 0 : index
    %93 = vector.load %arg10[%c0_204, %c2_205, %c1_206, %c0_207] : memref<2x10x10x8xbf16, #tpu.memory_space<vmem>>, vector<2x8x8x8xbf16>
    %c0_208 = arith.constant 0 : index
    %c0_209 = arith.constant 0 : index
    %c0_210 = arith.constant 0 : index
    %c56_211 = arith.constant 56 : index
    %94 = vector.load %arg12[%c0_208, %c0_209, %c0_210, %c56_211] : memref<2x8x8x72xbf16, #tpu.memory_space<vmem>>, vector<2x8x8x8xbf16>
    tpu.vector_store %arg12[%c0_208, %c0_209, %c0_210, %c56_211], %93 {strides = array<i32>} : memref<2x8x8x72xbf16, #tpu.memory_space<vmem>>, vector<2x8x8x8xbf16>,
    %c0_212 = arith.constant 0 : index
    %c2_213 = arith.constant 2 : index
    %c2_214 = arith.constant 2 : index
    %c0_215 = arith.constant 0 : index
    %95 = vector.load %arg10[%c0_212, %c2_213, %c2_214, %c0_215] : memref<2x10x10x8xbf16, #tpu.memory_space<vmem>>, vector<2x8x8x8xbf16>
    %c0_216 = arith.constant 0 : index
    %c0_217 = arith.constant 0 : index
    %c0_218 = arith.constant 0 : index
    %c64_219 = arith.constant 64 : index
    %96 = vector.load %arg12[%c0_216, %c0_217, %c0_218, %c64_219] : memref<2x8x8x72xbf16, #tpu.memory_space<vmem>>, vector<2x8x8x8xbf16>
    tpu.vector_store %arg12[%c0_216, %c0_217, %c0_218, %c64_219], %95 {strides = array<i32>} : memref<2x8x8x72xbf16, #tpu.memory_space<vmem>>, vector<2x8x8x8xbf16>,
    %c0_220 = arith.constant 0 : index
    %c0_221 = arith.constant 0 : index
    %c0_222 = arith.constant 0 : index
    %c0_223 = arith.constant 0 : index
    %97 = vector.load %arg12[%c0_220, %c0_221, %c0_222, %c0_223] : memref<2x8x8x72xbf16, #tpu.memory_space<vmem>>, vector<2x8x8x72xbf16>
    %98 = vector.shape_cast %97 : vector<2x8x8x72xbf16> to vector<128x72xbf16>
    %c0_224 = arith.constant 0 : index
    %c0_225 = arith.constant 0 : index
    %99 = vector.load %arg7[%c0_224, %c0_225] : memref<72x8xbf16, #tpu.memory_space<vmem>>, vector<72x8xbf16>
    %cst_226 = arith.constant dense<0.000000e+00> : vector<128x8xf32>
    %100 = tpu.matmul %98, %99, %cst_226 {dimension_numbers = #tpu.dot_dimension_numbers<[1], [0], [0], [1], [0, 0, 1, 1], [], []>} : vector<128x72xbf16>, vector<72x8xbf16>, vector<128x8xf32> -> vector<128x8xf32>
    %101 = arith.addf %36, %100 : vector<128x8xf32>
    %102 = arith.truncf %101 : vector<128x8xf32> to vector<128x8xbf16>
    %c0_227 = arith.constant 0 : index
    %c0_228 = arith.constant 0 : index
    %103 = vector.load %arg8[%c0_227, %c0_228] : memref<128x8xbf16, #tpu.memory_space<vmem>>, vector<128x8xbf16>
    tpu.vector_store %arg8[%c0_227, %c0_228], %102 {strides = array<i32>} : memref<128x8xbf16, #tpu.memory_space<vmem>>, vector<128x8xbf16>,
    return
  }
  func.func @transform_0(%arg0: i32) -> (i32, i32, i32, i32, i32) {
    %c0_i32 = arith.constant 0 : i32
    %c0_i32_0 = arith.constant 0 : i32
    %c0_i32_1 = arith.constant 0 : i32
    %c0_i32_2 = arith.constant 0 : i32
    %c0_i32_3 = arith.constant 0 : i32
    return %arg0, %c0_i32, %c0_i32_0, %c0_i32_1, %c0_i32_2 : i32, i32, i32, i32, i32
  }
  func.func @transform_1(%arg0: i32) -> (i32, i32) {
    %c0_i32 = arith.constant 0 : i32
    %c0_i32_0 = arith.constant 0 : i32
    %c0_i32_1 = arith.constant 0 : i32
    return %c0_i32, %c0_i32_0 : i32, i32
  }
  func.func @transform_2(%arg0: i32) -> (i32, i32) {
    %c0_i32 = arith.constant 0 : i32
    %c0_i32_0 = arith.constant 0 : i32
    %c0_i32_1 = arith.constant 0 : i32
    return %c0_i32, %c0_i32_0 : i32, i32
  }
  func.func @transform_3(%arg0: i32) -> (i32, i32) {
    %c0_i32 = arith.constant 0 : i32
    %c0_i32_0 = arith.constant 0 : i32
    %c0_i32_1 = arith.constant 0 : i32
    return %c0_i32, %c0_i32_0 : i32, i32
  }
  func.func @transform_4(%arg0: i32) -> (i32, i32) {
    %c0_i32 = arith.constant 0 : i32
    %c0_i32_0 = arith.constant 0 : i32
    %c0_i32_1 = arith.constant 0 : i32
    return %c0_i32, %c0_i32_0 : i32, i32
  }
  func.func @transform_5(%arg0: i32) -> (i32, i32) {
    %c0_i32 = arith.constant 0 : i32
    %c0_i32_0 = arith.constant 0 : i32
    %c0_i32_1 = arith.constant 0 : i32
    return %c0_i32, %c0_i32_0 : i32, i32
  }
  func.func @transform_6(%arg0: i32) -> (i32, i32) {
    %c0_i32 = arith.constant 0 : i32
    %c0_i32_0 = arith.constant 0 : i32
    %c0_i32_1 = arith.constant 0 : i32
    return %c0_i32, %c0_i32_0 : i32, i32
  }
  func.func @transform_7(%arg0: i32) -> (i32, i32) {
    %c0_i32 = arith.constant 0 : i32
    %c0_i32_0 = arith.constant 0 : i32
    return %arg0, %c0_i32 : i32, i32
  }
}

module attributes {stable_mosaic.version = 11 : i64} {
  func.func @kernel(%arg0: i32, %arg1: memref<2x4x8x8x4xf32, #tpu.memory_space<vmem>>, %arg2: memref<1x4xf32, #tpu.memory_space<vmem>>, %arg3: memref<1x4xf32, #tpu.memory_space<vmem>>, %arg4: memref<36x8xbf16, #tpu.memory_space<vmem>>, %arg5: memref<1x8xf32, #tpu.memory_space<vmem>>, %arg6: memref<1x8xf32, #tpu.memory_space<vmem>>, %arg7: memref<72x8xbf16, #tpu.memory_space<vmem>>, %arg8: memref<4x8xbf16, #tpu.memory_space<vmem>>, %arg9: memref<128x8xbf16, #tpu.memory_space<vmem>>, %arg10: memref<2x4x10x10x4xbf16, #tpu.memory_space<vmem>>, %arg11: memref<2x10x10x8xbf16, #tpu.memory_space<vmem>>, %arg12: memref<2x8x8x36xbf16, #tpu.memory_space<vmem>>, %arg13: memref<2x8x8x72xbf16, #tpu.memory_space<vmem>>) attributes {dimension_semantics = [#tpu.dimension_semantics<parallel>], iteration_bounds = array<i64: 1>, scalar_prefetch = 0 : i64, scratch_operands = 4 : i64, tpu.core_type = #tpu.core_type<tc>, window_params = [{transform_indices = @transform_0, window_bounds = array<i64: 2, 4, 8, 8, 4>}, {pipeline_mode = #tpu.pipeline_mode<synchronous>, transform_indices = @transform_1, window_bounds = array<i64: 1, 4>}, {pipeline_mode = #tpu.pipeline_mode<synchronous>, transform_indices = @transform_2, window_bounds = array<i64: 1, 4>}, {pipeline_mode = #tpu.pipeline_mode<synchronous>, transform_indices = @transform_3, window_bounds = array<i64: 36, 8>}, {pipeline_mode = #tpu.pipeline_mode<synchronous>, transform_indices = @transform_4, window_bounds = array<i64: 1, 8>}, {pipeline_mode = #tpu.pipeline_mode<synchronous>, transform_indices = @transform_5, window_bounds = array<i64: 1, 8>}, {pipeline_mode = #tpu.pipeline_mode<synchronous>, transform_indices = @transform_6, window_bounds = array<i64: 72, 8>}, {pipeline_mode = #tpu.pipeline_mode<synchronous>, transform_indices = @transform_7, window_bounds = array<i64: 4, 8>}, {transform_indices = @transform_8, window_bounds = array<i64: 128, 8>}]} {
    %cst = arith.constant 0.000000e+00 : bf16
    %0 = vector.broadcast %cst : bf16 to vector<2x4x1x10x4xbf16>
    %c0 = arith.constant 0 : index
    %c0_0 = arith.constant 0 : index
    %c0_1 = arith.constant 0 : index
    %c0_2 = arith.constant 0 : index
    %c0_3 = arith.constant 0 : index
    %1 = vector.load %arg10[%c0, %c0_0, %c0_1, %c0_2, %c0_3] : memref<2x4x10x10x4xbf16, #tpu.memory_space<vmem>>, vector<2x4x1x10x4xbf16>
    tpu.vector_store %arg10[%c0, %c0_0, %c0_1, %c0_2, %c0_3], %0 {strides = array<i32>} : memref<2x4x10x10x4xbf16, #tpu.memory_space<vmem>>, vector<2x4x1x10x4xbf16>,
    %cst_4 = arith.constant 0.000000e+00 : bf16
    %2 = vector.broadcast %cst_4 : bf16 to vector<2x4x1x10x4xbf16>
    %c0_5 = arith.constant 0 : index
    %c0_6 = arith.constant 0 : index
    %c9 = arith.constant 9 : index
    %c0_7 = arith.constant 0 : index
    %c0_8 = arith.constant 0 : index
    %3 = vector.load %arg10[%c0_5, %c0_6, %c9, %c0_7, %c0_8] : memref<2x4x10x10x4xbf16, #tpu.memory_space<vmem>>, vector<2x4x1x10x4xbf16>
    tpu.vector_store %arg10[%c0_5, %c0_6, %c9, %c0_7, %c0_8], %2 {strides = array<i32>} : memref<2x4x10x10x4xbf16, #tpu.memory_space<vmem>>, vector<2x4x1x10x4xbf16>,
    %cst_9 = arith.constant 0.000000e+00 : bf16
    %4 = vector.broadcast %cst_9 : bf16 to vector<2x4x10x1x4xbf16>
    %c0_10 = arith.constant 0 : index
    %c0_11 = arith.constant 0 : index
    %c0_12 = arith.constant 0 : index
    %c0_13 = arith.constant 0 : index
    %c0_14 = arith.constant 0 : index
    %5 = vector.load %arg10[%c0_10, %c0_11, %c0_12, %c0_13, %c0_14] : memref<2x4x10x10x4xbf16, #tpu.memory_space<vmem>>, vector<2x4x10x1x4xbf16>
    tpu.vector_store %arg10[%c0_10, %c0_11, %c0_12, %c0_13, %c0_14], %4 {strides = array<i32>} : memref<2x4x10x10x4xbf16, #tpu.memory_space<vmem>>, vector<2x4x10x1x4xbf16>,
    %cst_15 = arith.constant 0.000000e+00 : bf16
    %6 = vector.broadcast %cst_15 : bf16 to vector<2x4x10x1x4xbf16>
    %c0_16 = arith.constant 0 : index
    %c0_17 = arith.constant 0 : index
    %c0_18 = arith.constant 0 : index
    %c9_19 = arith.constant 9 : index
    %c0_20 = arith.constant 0 : index
    %7 = vector.load %arg10[%c0_16, %c0_17, %c0_18, %c9_19, %c0_20] : memref<2x4x10x10x4xbf16, #tpu.memory_space<vmem>>, vector<2x4x10x1x4xbf16>
    tpu.vector_store %arg10[%c0_16, %c0_17, %c0_18, %c9_19, %c0_20], %6 {strides = array<i32>} : memref<2x4x10x10x4xbf16, #tpu.memory_space<vmem>>, vector<2x4x10x1x4xbf16>,
    %cst_21 = arith.constant 0.000000e+00 : bf16
    %8 = vector.broadcast %cst_21 : bf16 to vector<2x1x10x8xbf16>
    %c0_22 = arith.constant 0 : index
    %c0_23 = arith.constant 0 : index
    %c0_24 = arith.constant 0 : index
    %c0_25 = arith.constant 0 : index
    %9 = vector.load %arg11[%c0_22, %c0_23, %c0_24, %c0_25] : memref<2x10x10x8xbf16, #tpu.memory_space<vmem>>, vector<2x1x10x8xbf16>
    tpu.vector_store %arg11[%c0_22, %c0_23, %c0_24, %c0_25], %8 {strides = array<i32>} : memref<2x10x10x8xbf16, #tpu.memory_space<vmem>>, vector<2x1x10x8xbf16>,
    %cst_26 = arith.constant 0.000000e+00 : bf16
    %10 = vector.broadcast %cst_26 : bf16 to vector<2x1x10x8xbf16>
    %c0_27 = arith.constant 0 : index
    %c9_28 = arith.constant 9 : index
    %c0_29 = arith.constant 0 : index
    %c0_30 = arith.constant 0 : index
    %11 = vector.load %arg11[%c0_27, %c9_28, %c0_29, %c0_30] : memref<2x10x10x8xbf16, #tpu.memory_space<vmem>>, vector<2x1x10x8xbf16>
    tpu.vector_store %arg11[%c0_27, %c9_28, %c0_29, %c0_30], %10 {strides = array<i32>} : memref<2x10x10x8xbf16, #tpu.memory_space<vmem>>, vector<2x1x10x8xbf16>,
    %cst_31 = arith.constant 0.000000e+00 : bf16
    %12 = vector.broadcast %cst_31 : bf16 to vector<2x10x1x8xbf16>
    %c0_32 = arith.constant 0 : index
    %c0_33 = arith.constant 0 : index
    %c0_34 = arith.constant 0 : index
    %c0_35 = arith.constant 0 : index
    %13 = vector.load %arg11[%c0_32, %c0_33, %c0_34, %c0_35] : memref<2x10x10x8xbf16, #tpu.memory_space<vmem>>, vector<2x10x1x8xbf16>
    tpu.vector_store %arg11[%c0_32, %c0_33, %c0_34, %c0_35], %12 {strides = array<i32>} : memref<2x10x10x8xbf16, #tpu.memory_space<vmem>>, vector<2x10x1x8xbf16>,
    %cst_36 = arith.constant 0.000000e+00 : bf16
    %14 = vector.broadcast %cst_36 : bf16 to vector<2x10x1x8xbf16>
    %c0_37 = arith.constant 0 : index
    %c0_38 = arith.constant 0 : index
    %c9_39 = arith.constant 9 : index
    %c0_40 = arith.constant 0 : index
    %15 = vector.load %arg11[%c0_37, %c0_38, %c9_39, %c0_40] : memref<2x10x10x8xbf16, #tpu.memory_space<vmem>>, vector<2x10x1x8xbf16>
    tpu.vector_store %arg11[%c0_37, %c0_38, %c9_39, %c0_40], %14 {strides = array<i32>} : memref<2x10x10x8xbf16, #tpu.memory_space<vmem>>, vector<2x10x1x8xbf16>,
    %c0_41 = arith.constant 0 : index
    %c0_42 = arith.constant 0 : index
    %16 = vector.load %arg2[%c0_41, %c0_42] : memref<1x4xf32, #tpu.memory_space<vmem>>, vector<1x4xf32>
    %c0_43 = arith.constant 0 : index
    %c0_44 = arith.constant 0 : index
    %17 = vector.load %arg3[%c0_43, %c0_44] : memref<1x4xf32, #tpu.memory_space<vmem>>, vector<1x4xf32>
    %c0_45 = arith.constant 0 : index
    %c0_46 = arith.constant 0 : index
    %c0_47 = arith.constant 0 : index
    %c0_48 = arith.constant 0 : index
    %c0_49 = arith.constant 0 : index
    %18 = vector.load %arg1[%c0_45, %c0_46, %c0_47, %c0_48, %c0_49] : memref<2x4x8x8x4xf32, #tpu.memory_space<vmem>>, vector<2x1x8x8x4xf32>
    %19 = vector.shape_cast %18 : vector<2x1x8x8x4xf32> to vector<2x8x8x4xf32>
    %20 = vector.shape_cast %16 : vector<1x4xf32> to vector<1x1x1x4xf32>
    %21 = vector.broadcast %20 : vector<1x1x1x4xf32> to vector<2x8x8x4xf32>
    %22 = arith.mulf %19, %21 : vector<2x8x8x4xf32>
    %23 = vector.shape_cast %17 : vector<1x4xf32> to vector<1x1x1x4xf32>
    %24 = vector.broadcast %23 : vector<1x1x1x4xf32> to vector<2x8x8x4xf32>
    %25 = arith.addf %22, %24 : vector<2x8x8x4xf32>
    %cst_50 = arith.constant 0.000000e+00 : f32
    %26 = vector.broadcast %cst_50 : f32 to vector<2x8x8x4xf32>
    %27 = arith.maximumf %25, %26 : vector<2x8x8x4xf32>
    %28 = arith.truncf %27 : vector<2x8x8x4xf32> to vector<2x8x8x4xbf16>
    %c0_51 = arith.constant 0 : index
    %c0_52 = arith.constant 0 : index
    %c1 = arith.constant 1 : index
    %c1_53 = arith.constant 1 : index
    %c0_54 = arith.constant 0 : index
    %29 = vector.load %arg10[%c0_51, %c0_52, %c1, %c1_53, %c0_54] : memref<2x4x10x10x4xbf16, #tpu.memory_space<vmem>>, vector<2x1x8x8x4xbf16>
    %30 = vector.shape_cast %29 : vector<2x1x8x8x4xbf16> to vector<2x8x8x4xbf16>
    %31 = vector.shape_cast %28 : vector<2x8x8x4xbf16> to vector<2x1x8x8x4xbf16>
    tpu.vector_store %arg10[%c0_51, %c0_52, %c1, %c1_53, %c0_54], %31 {strides = array<i32>} : memref<2x4x10x10x4xbf16, #tpu.memory_space<vmem>>, vector<2x1x8x8x4xbf16>,
    %c0_55 = arith.constant 0 : index
    %c1_56 = arith.constant 1 : index
    %c0_57 = arith.constant 0 : index
    %c0_58 = arith.constant 0 : index
    %c0_59 = arith.constant 0 : index
    %32 = vector.load %arg1[%c0_55, %c1_56, %c0_57, %c0_58, %c0_59] : memref<2x4x8x8x4xf32, #tpu.memory_space<vmem>>, vector<2x1x8x8x4xf32>
    %33 = vector.shape_cast %32 : vector<2x1x8x8x4xf32> to vector<2x8x8x4xf32>
    %34 = vector.shape_cast %16 : vector<1x4xf32> to vector<1x1x1x4xf32>
    %35 = vector.broadcast %34 : vector<1x1x1x4xf32> to vector<2x8x8x4xf32>
    %36 = arith.mulf %33, %35 : vector<2x8x8x4xf32>
    %37 = vector.shape_cast %17 : vector<1x4xf32> to vector<1x1x1x4xf32>
    %38 = vector.broadcast %37 : vector<1x1x1x4xf32> to vector<2x8x8x4xf32>
    %39 = arith.addf %36, %38 : vector<2x8x8x4xf32>
    %cst_60 = arith.constant 0.000000e+00 : f32
    %40 = vector.broadcast %cst_60 : f32 to vector<2x8x8x4xf32>
    %41 = arith.maximumf %39, %40 : vector<2x8x8x4xf32>
    %42 = arith.truncf %41 : vector<2x8x8x4xf32> to vector<2x8x8x4xbf16>
    %c0_61 = arith.constant 0 : index
    %c1_62 = arith.constant 1 : index
    %c1_63 = arith.constant 1 : index
    %c1_64 = arith.constant 1 : index
    %c0_65 = arith.constant 0 : index
    %43 = vector.load %arg10[%c0_61, %c1_62, %c1_63, %c1_64, %c0_65] : memref<2x4x10x10x4xbf16, #tpu.memory_space<vmem>>, vector<2x1x8x8x4xbf16>
    %44 = vector.shape_cast %43 : vector<2x1x8x8x4xbf16> to vector<2x8x8x4xbf16>
    %45 = vector.shape_cast %42 : vector<2x8x8x4xbf16> to vector<2x1x8x8x4xbf16>
    tpu.vector_store %arg10[%c0_61, %c1_62, %c1_63, %c1_64, %c0_65], %45 {strides = array<i32>} : memref<2x4x10x10x4xbf16, #tpu.memory_space<vmem>>, vector<2x1x8x8x4xbf16>,
    %c0_66 = arith.constant 0 : index
    %c2 = arith.constant 2 : index
    %c0_67 = arith.constant 0 : index
    %c0_68 = arith.constant 0 : index
    %c0_69 = arith.constant 0 : index
    %46 = vector.load %arg1[%c0_66, %c2, %c0_67, %c0_68, %c0_69] : memref<2x4x8x8x4xf32, #tpu.memory_space<vmem>>, vector<2x1x8x8x4xf32>
    %47 = vector.shape_cast %46 : vector<2x1x8x8x4xf32> to vector<2x8x8x4xf32>
    %48 = vector.shape_cast %16 : vector<1x4xf32> to vector<1x1x1x4xf32>
    %49 = vector.broadcast %48 : vector<1x1x1x4xf32> to vector<2x8x8x4xf32>
    %50 = arith.mulf %47, %49 : vector<2x8x8x4xf32>
    %51 = vector.shape_cast %17 : vector<1x4xf32> to vector<1x1x1x4xf32>
    %52 = vector.broadcast %51 : vector<1x1x1x4xf32> to vector<2x8x8x4xf32>
    %53 = arith.addf %50, %52 : vector<2x8x8x4xf32>
    %cst_70 = arith.constant 0.000000e+00 : f32
    %54 = vector.broadcast %cst_70 : f32 to vector<2x8x8x4xf32>
    %55 = arith.maximumf %53, %54 : vector<2x8x8x4xf32>
    %56 = arith.truncf %55 : vector<2x8x8x4xf32> to vector<2x8x8x4xbf16>
    %c0_71 = arith.constant 0 : index
    %c2_72 = arith.constant 2 : index
    %c1_73 = arith.constant 1 : index
    %c1_74 = arith.constant 1 : index
    %c0_75 = arith.constant 0 : index
    %57 = vector.load %arg10[%c0_71, %c2_72, %c1_73, %c1_74, %c0_75] : memref<2x4x10x10x4xbf16, #tpu.memory_space<vmem>>, vector<2x1x8x8x4xbf16>
    %58 = vector.shape_cast %57 : vector<2x1x8x8x4xbf16> to vector<2x8x8x4xbf16>
    %59 = vector.shape_cast %56 : vector<2x8x8x4xbf16> to vector<2x1x8x8x4xbf16>
    tpu.vector_store %arg10[%c0_71, %c2_72, %c1_73, %c1_74, %c0_75], %59 {strides = array<i32>} : memref<2x4x10x10x4xbf16, #tpu.memory_space<vmem>>, vector<2x1x8x8x4xbf16>,
    %c0_76 = arith.constant 0 : index
    %c3 = arith.constant 3 : index
    %c0_77 = arith.constant 0 : index
    %c0_78 = arith.constant 0 : index
    %c0_79 = arith.constant 0 : index
    %60 = vector.load %arg1[%c0_76, %c3, %c0_77, %c0_78, %c0_79] : memref<2x4x8x8x4xf32, #tpu.memory_space<vmem>>, vector<2x1x8x8x4xf32>
    %61 = vector.shape_cast %60 : vector<2x1x8x8x4xf32> to vector<2x8x8x4xf32>
    %62 = vector.shape_cast %16 : vector<1x4xf32> to vector<1x1x1x4xf32>
    %63 = vector.broadcast %62 : vector<1x1x1x4xf32> to vector<2x8x8x4xf32>
    %64 = arith.mulf %61, %63 : vector<2x8x8x4xf32>
    %65 = vector.shape_cast %17 : vector<1x4xf32> to vector<1x1x1x4xf32>
    %66 = vector.broadcast %65 : vector<1x1x1x4xf32> to vector<2x8x8x4xf32>
    %67 = arith.addf %64, %66 : vector<2x8x8x4xf32>
    %cst_80 = arith.constant 0.000000e+00 : f32
    %68 = vector.broadcast %cst_80 : f32 to vector<2x8x8x4xf32>
    %69 = arith.maximumf %67, %68 : vector<2x8x8x4xf32>
    %70 = arith.truncf %69 : vector<2x8x8x4xf32> to vector<2x8x8x4xbf16>
    %c0_81 = arith.constant 0 : index
    %c3_82 = arith.constant 3 : index
    %c1_83 = arith.constant 1 : index
    %c1_84 = arith.constant 1 : index
    %c0_85 = arith.constant 0 : index
    %71 = vector.load %arg10[%c0_81, %c3_82, %c1_83, %c1_84, %c0_85] : memref<2x4x10x10x4xbf16, #tpu.memory_space<vmem>>, vector<2x1x8x8x4xbf16>
    %72 = vector.shape_cast %71 : vector<2x1x8x8x4xbf16> to vector<2x8x8x4xbf16>
    %73 = vector.shape_cast %70 : vector<2x8x8x4xbf16> to vector<2x1x8x8x4xbf16>
    tpu.vector_store %arg10[%c0_81, %c3_82, %c1_83, %c1_84, %c0_85], %73 {strides = array<i32>} : memref<2x4x10x10x4xbf16, #tpu.memory_space<vmem>>, vector<2x1x8x8x4xbf16>,
    %c0_86 = arith.constant 0 : index
    %c0_87 = arith.constant 0 : index
    %c1_88 = arith.constant 1 : index
    %c1_89 = arith.constant 1 : index
    %c0_90 = arith.constant 0 : index
    %74 = vector.load %arg10[%c0_86, %c0_87, %c1_88, %c1_89, %c0_90] : memref<2x4x10x10x4xbf16, #tpu.memory_space<vmem>>, vector<2x1x8x8x4xbf16>
    %75 = vector.shape_cast %74 : vector<2x1x8x8x4xbf16> to vector<2x8x8x4xbf16>
    %76 = vector.shape_cast %75 : vector<2x8x8x4xbf16> to vector<128x4xbf16>
    %c0_91 = arith.constant 0 : index
    %c0_92 = arith.constant 0 : index
    %77 = vector.load %arg8[%c0_91, %c0_92] : memref<4x8xbf16, #tpu.memory_space<vmem>>, vector<4x8xbf16>
    %cst_93 = arith.constant dense<0.000000e+00> : vector<128x8xf32>
    %78 = tpu.matmul %76, %77, %cst_93 {dimension_numbers = #tpu.dot_dimension_numbers<[1], [0], [0], [1], [0, 0, 1, 1], [], []>} : vector<128x4xbf16>, vector<4x8xbf16>, vector<128x8xf32> -> vector<128x8xf32>
    %c0_94 = arith.constant 0 : index
    %c3_95 = arith.constant 3 : index
    %c0_96 = arith.constant 0 : index
    %c0_97 = arith.constant 0 : index
    %c0_98 = arith.constant 0 : index
    %79 = vector.load %arg10[%c0_94, %c3_95, %c0_96, %c0_97, %c0_98] : memref<2x4x10x10x4xbf16, #tpu.memory_space<vmem>>, vector<2x1x8x8x4xbf16>
    %80 = vector.shape_cast %79 : vector<2x1x8x8x4xbf16> to vector<2x8x8x4xbf16>
    %c0_99 = arith.constant 0 : index
    %c0_100 = arith.constant 0 : index
    %c0_101 = arith.constant 0 : index
    %c0_102 = arith.constant 0 : index
    %81 = vector.load %arg12[%c0_99, %c0_100, %c0_101, %c0_102] : memref<2x8x8x36xbf16, #tpu.memory_space<vmem>>, vector<2x8x8x4xbf16>
    tpu.vector_store %arg12[%c0_99, %c0_100, %c0_101, %c0_102], %80 {strides = array<i32>} : memref<2x8x8x36xbf16, #tpu.memory_space<vmem>>, vector<2x8x8x4xbf16>,
    %c0_103 = arith.constant 0 : index
    %c2_104 = arith.constant 2 : index
    %c0_105 = arith.constant 0 : index
    %c1_106 = arith.constant 1 : index
    %c0_107 = arith.constant 0 : index
    %82 = vector.load %arg10[%c0_103, %c2_104, %c0_105, %c1_106, %c0_107] : memref<2x4x10x10x4xbf16, #tpu.memory_space<vmem>>, vector<2x1x8x8x4xbf16>
    %83 = vector.shape_cast %82 : vector<2x1x8x8x4xbf16> to vector<2x8x8x4xbf16>
    %c0_108 = arith.constant 0 : index
    %c0_109 = arith.constant 0 : index
    %c0_110 = arith.constant 0 : index
    %c4 = arith.constant 4 : index
    %84 = vector.load %arg12[%c0_108, %c0_109, %c0_110, %c4] : memref<2x8x8x36xbf16, #tpu.memory_space<vmem>>, vector<2x8x8x4xbf16>
    tpu.vector_store %arg12[%c0_108, %c0_109, %c0_110, %c4], %83 {strides = array<i32>} : memref<2x8x8x36xbf16, #tpu.memory_space<vmem>>, vector<2x8x8x4xbf16>,
    %c0_111 = arith.constant 0 : index
    %c3_112 = arith.constant 3 : index
    %c0_113 = arith.constant 0 : index
    %c1_114 = arith.constant 1 : index
    %c0_115 = arith.constant 0 : index
    %85 = vector.load %arg10[%c0_111, %c3_112, %c0_113, %c1_114, %c0_115] : memref<2x4x10x10x4xbf16, #tpu.memory_space<vmem>>, vector<2x1x8x8x4xbf16>
    %86 = vector.shape_cast %85 : vector<2x1x8x8x4xbf16> to vector<2x8x8x4xbf16>
    %c0_116 = arith.constant 0 : index
    %c0_117 = arith.constant 0 : index
    %c0_118 = arith.constant 0 : index
    %c8 = arith.constant 8 : index
    %87 = vector.load %arg12[%c0_116, %c0_117, %c0_118, %c8] : memref<2x8x8x36xbf16, #tpu.memory_space<vmem>>, vector<2x8x8x4xbf16>
    tpu.vector_store %arg12[%c0_116, %c0_117, %c0_118, %c8], %86 {strides = array<i32>} : memref<2x8x8x36xbf16, #tpu.memory_space<vmem>>, vector<2x8x8x4xbf16>,
    %c0_119 = arith.constant 0 : index
    %c1_120 = arith.constant 1 : index
    %c1_121 = arith.constant 1 : index
    %c0_122 = arith.constant 0 : index
    %c0_123 = arith.constant 0 : index
    %88 = vector.load %arg10[%c0_119, %c1_120, %c1_121, %c0_122, %c0_123] : memref<2x4x10x10x4xbf16, #tpu.memory_space<vmem>>, vector<2x1x8x8x4xbf16>
    %89 = vector.shape_cast %88 : vector<2x1x8x8x4xbf16> to vector<2x8x8x4xbf16>
    %c0_124 = arith.constant 0 : index
    %c0_125 = arith.constant 0 : index
    %c0_126 = arith.constant 0 : index
    %c12 = arith.constant 12 : index
    %90 = vector.load %arg12[%c0_124, %c0_125, %c0_126, %c12] : memref<2x8x8x36xbf16, #tpu.memory_space<vmem>>, vector<2x8x8x4xbf16>
    tpu.vector_store %arg12[%c0_124, %c0_125, %c0_126, %c12], %89 {strides = array<i32>} : memref<2x8x8x36xbf16, #tpu.memory_space<vmem>>, vector<2x8x8x4xbf16>,
    %c0_127 = arith.constant 0 : index
    %c0_128 = arith.constant 0 : index
    %c1_129 = arith.constant 1 : index
    %c1_130 = arith.constant 1 : index
    %c0_131 = arith.constant 0 : index
    %91 = vector.load %arg10[%c0_127, %c0_128, %c1_129, %c1_130, %c0_131] : memref<2x4x10x10x4xbf16, #tpu.memory_space<vmem>>, vector<2x1x8x8x4xbf16>
    %92 = vector.shape_cast %91 : vector<2x1x8x8x4xbf16> to vector<2x8x8x4xbf16>
    %c0_132 = arith.constant 0 : index
    %c0_133 = arith.constant 0 : index
    %c0_134 = arith.constant 0 : index
    %c16 = arith.constant 16 : index
    %93 = vector.load %arg12[%c0_132, %c0_133, %c0_134, %c16] : memref<2x8x8x36xbf16, #tpu.memory_space<vmem>>, vector<2x8x8x4xbf16>
    tpu.vector_store %arg12[%c0_132, %c0_133, %c0_134, %c16], %92 {strides = array<i32>} : memref<2x8x8x36xbf16, #tpu.memory_space<vmem>>, vector<2x8x8x4xbf16>,
    %c0_135 = arith.constant 0 : index
    %c1_136 = arith.constant 1 : index
    %c1_137 = arith.constant 1 : index
    %c1_138 = arith.constant 1 : index
    %c0_139 = arith.constant 0 : index
    %94 = vector.load %arg10[%c0_135, %c1_136, %c1_137, %c1_138, %c0_139] : memref<2x4x10x10x4xbf16, #tpu.memory_space<vmem>>, vector<2x1x8x8x4xbf16>
    %95 = vector.shape_cast %94 : vector<2x1x8x8x4xbf16> to vector<2x8x8x4xbf16>
    %c0_140 = arith.constant 0 : index
    %c0_141 = arith.constant 0 : index
    %c0_142 = arith.constant 0 : index
    %c20 = arith.constant 20 : index
    %96 = vector.load %arg12[%c0_140, %c0_141, %c0_142, %c20] : memref<2x8x8x36xbf16, #tpu.memory_space<vmem>>, vector<2x8x8x4xbf16>
    tpu.vector_store %arg12[%c0_140, %c0_141, %c0_142, %c20], %95 {strides = array<i32>} : memref<2x8x8x36xbf16, #tpu.memory_space<vmem>>, vector<2x8x8x4xbf16>,
    %c0_143 = arith.constant 0 : index
    %c3_144 = arith.constant 3 : index
    %c1_145 = arith.constant 1 : index
    %c0_146 = arith.constant 0 : index
    %c0_147 = arith.constant 0 : index
    %97 = vector.load %arg10[%c0_143, %c3_144, %c1_145, %c0_146, %c0_147] : memref<2x4x10x10x4xbf16, #tpu.memory_space<vmem>>, vector<2x1x8x8x4xbf16>
    %98 = vector.shape_cast %97 : vector<2x1x8x8x4xbf16> to vector<2x8x8x4xbf16>
    %c0_148 = arith.constant 0 : index
    %c0_149 = arith.constant 0 : index
    %c0_150 = arith.constant 0 : index
    %c24 = arith.constant 24 : index
    %99 = vector.load %arg12[%c0_148, %c0_149, %c0_150, %c24] : memref<2x8x8x36xbf16, #tpu.memory_space<vmem>>, vector<2x8x8x4xbf16>
    tpu.vector_store %arg12[%c0_148, %c0_149, %c0_150, %c24], %98 {strides = array<i32>} : memref<2x8x8x36xbf16, #tpu.memory_space<vmem>>, vector<2x8x8x4xbf16>,
    %c0_151 = arith.constant 0 : index
    %c2_152 = arith.constant 2 : index
    %c1_153 = arith.constant 1 : index
    %c1_154 = arith.constant 1 : index
    %c0_155 = arith.constant 0 : index
    %100 = vector.load %arg10[%c0_151, %c2_152, %c1_153, %c1_154, %c0_155] : memref<2x4x10x10x4xbf16, #tpu.memory_space<vmem>>, vector<2x1x8x8x4xbf16>
    %101 = vector.shape_cast %100 : vector<2x1x8x8x4xbf16> to vector<2x8x8x4xbf16>
    %c0_156 = arith.constant 0 : index
    %c0_157 = arith.constant 0 : index
    %c0_158 = arith.constant 0 : index
    %c28 = arith.constant 28 : index
    %102 = vector.load %arg12[%c0_156, %c0_157, %c0_158, %c28] : memref<2x8x8x36xbf16, #tpu.memory_space<vmem>>, vector<2x8x8x4xbf16>
    tpu.vector_store %arg12[%c0_156, %c0_157, %c0_158, %c28], %101 {strides = array<i32>} : memref<2x8x8x36xbf16, #tpu.memory_space<vmem>>, vector<2x8x8x4xbf16>,
    %c0_159 = arith.constant 0 : index
    %c3_160 = arith.constant 3 : index
    %c1_161 = arith.constant 1 : index
    %c1_162 = arith.constant 1 : index
    %c0_163 = arith.constant 0 : index
    %103 = vector.load %arg10[%c0_159, %c3_160, %c1_161, %c1_162, %c0_163] : memref<2x4x10x10x4xbf16, #tpu.memory_space<vmem>>, vector<2x1x8x8x4xbf16>
    %104 = vector.shape_cast %103 : vector<2x1x8x8x4xbf16> to vector<2x8x8x4xbf16>
    %c0_164 = arith.constant 0 : index
    %c0_165 = arith.constant 0 : index
    %c0_166 = arith.constant 0 : index
    %c32 = arith.constant 32 : index
    %105 = vector.load %arg12[%c0_164, %c0_165, %c0_166, %c32] : memref<2x8x8x36xbf16, #tpu.memory_space<vmem>>, vector<2x8x8x4xbf16>
    tpu.vector_store %arg12[%c0_164, %c0_165, %c0_166, %c32], %104 {strides = array<i32>} : memref<2x8x8x36xbf16, #tpu.memory_space<vmem>>, vector<2x8x8x4xbf16>,
    %c0_167 = arith.constant 0 : index
    %c0_168 = arith.constant 0 : index
    %c0_169 = arith.constant 0 : index
    %c0_170 = arith.constant 0 : index
    %106 = vector.load %arg12[%c0_167, %c0_168, %c0_169, %c0_170] : memref<2x8x8x36xbf16, #tpu.memory_space<vmem>>, vector<2x8x8x36xbf16>
    %107 = vector.shape_cast %106 : vector<2x8x8x36xbf16> to vector<128x36xbf16>
    %c0_171 = arith.constant 0 : index
    %c0_172 = arith.constant 0 : index
    %108 = vector.load %arg4[%c0_171, %c0_172] : memref<36x8xbf16, #tpu.memory_space<vmem>>, vector<36x8xbf16>
    %cst_173 = arith.constant dense<0.000000e+00> : vector<128x8xf32>
    %109 = tpu.matmul %107, %108, %cst_173 {dimension_numbers = #tpu.dot_dimension_numbers<[1], [0], [0], [1], [0, 0, 1, 1], [], []>} : vector<128x36xbf16>, vector<36x8xbf16>, vector<128x8xf32> -> vector<128x8xf32>
    %c0_174 = arith.constant 0 : index
    %c0_175 = arith.constant 0 : index
    %110 = vector.load %arg5[%c0_174, %c0_175] : memref<1x8xf32, #tpu.memory_space<vmem>>, vector<1x8xf32>
    %111 = vector.broadcast %110 : vector<1x8xf32> to vector<128x8xf32>
    %112 = arith.mulf %109, %111 : vector<128x8xf32>
    %c0_176 = arith.constant 0 : index
    %c0_177 = arith.constant 0 : index
    %113 = vector.load %arg6[%c0_176, %c0_177] : memref<1x8xf32, #tpu.memory_space<vmem>>, vector<1x8xf32>
    %114 = vector.broadcast %113 : vector<1x8xf32> to vector<128x8xf32>
    %115 = arith.addf %112, %114 : vector<128x8xf32>
    %cst_178 = arith.constant 0.000000e+00 : f32
    %116 = vector.broadcast %cst_178 : f32 to vector<128x8xf32>
    %117 = arith.maximumf %115, %116 : vector<128x8xf32>
    %118 = arith.truncf %117 : vector<128x8xf32> to vector<128x8xbf16>
    %119 = vector.shape_cast %118 : vector<128x8xbf16> to vector<2x8x8x8xbf16>
    %c0_179 = arith.constant 0 : index
    %c1_180 = arith.constant 1 : index
    %c1_181 = arith.constant 1 : index
    %c0_182 = arith.constant 0 : index
    %120 = vector.load %arg11[%c0_179, %c1_180, %c1_181, %c0_182] : memref<2x10x10x8xbf16, #tpu.memory_space<vmem>>, vector<2x8x8x8xbf16>
    tpu.vector_store %arg11[%c0_179, %c1_180, %c1_181, %c0_182], %119 {strides = array<i32>} : memref<2x10x10x8xbf16, #tpu.memory_space<vmem>>, vector<2x8x8x8xbf16>,
    %c0_183 = arith.constant 0 : index
    %c0_184 = arith.constant 0 : index
    %c0_185 = arith.constant 0 : index
    %c0_186 = arith.constant 0 : index
    %121 = vector.load %arg11[%c0_183, %c0_184, %c0_185, %c0_186] : memref<2x10x10x8xbf16, #tpu.memory_space<vmem>>, vector<2x8x8x8xbf16>
    %c0_187 = arith.constant 0 : index
    %c0_188 = arith.constant 0 : index
    %c0_189 = arith.constant 0 : index
    %c0_190 = arith.constant 0 : index
    %122 = vector.load %arg13[%c0_187, %c0_188, %c0_189, %c0_190] : memref<2x8x8x72xbf16, #tpu.memory_space<vmem>>, vector<2x8x8x8xbf16>
    tpu.vector_store %arg13[%c0_187, %c0_188, %c0_189, %c0_190], %121 {strides = array<i32>} : memref<2x8x8x72xbf16, #tpu.memory_space<vmem>>, vector<2x8x8x8xbf16>,
    %c0_191 = arith.constant 0 : index
    %c0_192 = arith.constant 0 : index
    %c1_193 = arith.constant 1 : index
    %c0_194 = arith.constant 0 : index
    %123 = vector.load %arg11[%c0_191, %c0_192, %c1_193, %c0_194] : memref<2x10x10x8xbf16, #tpu.memory_space<vmem>>, vector<2x8x8x8xbf16>
    %c0_195 = arith.constant 0 : index
    %c0_196 = arith.constant 0 : index
    %c0_197 = arith.constant 0 : index
    %c8_198 = arith.constant 8 : index
    %124 = vector.load %arg13[%c0_195, %c0_196, %c0_197, %c8_198] : memref<2x8x8x72xbf16, #tpu.memory_space<vmem>>, vector<2x8x8x8xbf16>
    tpu.vector_store %arg13[%c0_195, %c0_196, %c0_197, %c8_198], %123 {strides = array<i32>} : memref<2x8x8x72xbf16, #tpu.memory_space<vmem>>, vector<2x8x8x8xbf16>,
    %c0_199 = arith.constant 0 : index
    %c0_200 = arith.constant 0 : index
    %c2_201 = arith.constant 2 : index
    %c0_202 = arith.constant 0 : index
    %125 = vector.load %arg11[%c0_199, %c0_200, %c2_201, %c0_202] : memref<2x10x10x8xbf16, #tpu.memory_space<vmem>>, vector<2x8x8x8xbf16>
    %c0_203 = arith.constant 0 : index
    %c0_204 = arith.constant 0 : index
    %c0_205 = arith.constant 0 : index
    %c16_206 = arith.constant 16 : index
    %126 = vector.load %arg13[%c0_203, %c0_204, %c0_205, %c16_206] : memref<2x8x8x72xbf16, #tpu.memory_space<vmem>>, vector<2x8x8x8xbf16>
    tpu.vector_store %arg13[%c0_203, %c0_204, %c0_205, %c16_206], %125 {strides = array<i32>} : memref<2x8x8x72xbf16, #tpu.memory_space<vmem>>, vector<2x8x8x8xbf16>,
    %c0_207 = arith.constant 0 : index
    %c1_208 = arith.constant 1 : index
    %c0_209 = arith.constant 0 : index
    %c0_210 = arith.constant 0 : index
    %127 = vector.load %arg11[%c0_207, %c1_208, %c0_209, %c0_210] : memref<2x10x10x8xbf16, #tpu.memory_space<vmem>>, vector<2x8x8x8xbf16>
    %c0_211 = arith.constant 0 : index
    %c0_212 = arith.constant 0 : index
    %c0_213 = arith.constant 0 : index
    %c24_214 = arith.constant 24 : index
    %128 = vector.load %arg13[%c0_211, %c0_212, %c0_213, %c24_214] : memref<2x8x8x72xbf16, #tpu.memory_space<vmem>>, vector<2x8x8x8xbf16>
    tpu.vector_store %arg13[%c0_211, %c0_212, %c0_213, %c24_214], %127 {strides = array<i32>} : memref<2x8x8x72xbf16, #tpu.memory_space<vmem>>, vector<2x8x8x8xbf16>,
    %c0_215 = arith.constant 0 : index
    %c1_216 = arith.constant 1 : index
    %c1_217 = arith.constant 1 : index
    %c0_218 = arith.constant 0 : index
    %129 = vector.load %arg11[%c0_215, %c1_216, %c1_217, %c0_218] : memref<2x10x10x8xbf16, #tpu.memory_space<vmem>>, vector<2x8x8x8xbf16>
    %c0_219 = arith.constant 0 : index
    %c0_220 = arith.constant 0 : index
    %c0_221 = arith.constant 0 : index
    %c32_222 = arith.constant 32 : index
    %130 = vector.load %arg13[%c0_219, %c0_220, %c0_221, %c32_222] : memref<2x8x8x72xbf16, #tpu.memory_space<vmem>>, vector<2x8x8x8xbf16>
    tpu.vector_store %arg13[%c0_219, %c0_220, %c0_221, %c32_222], %129 {strides = array<i32>} : memref<2x8x8x72xbf16, #tpu.memory_space<vmem>>, vector<2x8x8x8xbf16>,
    %c0_223 = arith.constant 0 : index
    %c1_224 = arith.constant 1 : index
    %c2_225 = arith.constant 2 : index
    %c0_226 = arith.constant 0 : index
    %131 = vector.load %arg11[%c0_223, %c1_224, %c2_225, %c0_226] : memref<2x10x10x8xbf16, #tpu.memory_space<vmem>>, vector<2x8x8x8xbf16>
    %c0_227 = arith.constant 0 : index
    %c0_228 = arith.constant 0 : index
    %c0_229 = arith.constant 0 : index
    %c40 = arith.constant 40 : index
    %132 = vector.load %arg13[%c0_227, %c0_228, %c0_229, %c40] : memref<2x8x8x72xbf16, #tpu.memory_space<vmem>>, vector<2x8x8x8xbf16>
    tpu.vector_store %arg13[%c0_227, %c0_228, %c0_229, %c40], %131 {strides = array<i32>} : memref<2x8x8x72xbf16, #tpu.memory_space<vmem>>, vector<2x8x8x8xbf16>,
    %c0_230 = arith.constant 0 : index
    %c2_231 = arith.constant 2 : index
    %c0_232 = arith.constant 0 : index
    %c0_233 = arith.constant 0 : index
    %133 = vector.load %arg11[%c0_230, %c2_231, %c0_232, %c0_233] : memref<2x10x10x8xbf16, #tpu.memory_space<vmem>>, vector<2x8x8x8xbf16>
    %c0_234 = arith.constant 0 : index
    %c0_235 = arith.constant 0 : index
    %c0_236 = arith.constant 0 : index
    %c48 = arith.constant 48 : index
    %134 = vector.load %arg13[%c0_234, %c0_235, %c0_236, %c48] : memref<2x8x8x72xbf16, #tpu.memory_space<vmem>>, vector<2x8x8x8xbf16>
    tpu.vector_store %arg13[%c0_234, %c0_235, %c0_236, %c48], %133 {strides = array<i32>} : memref<2x8x8x72xbf16, #tpu.memory_space<vmem>>, vector<2x8x8x8xbf16>,
    %c0_237 = arith.constant 0 : index
    %c2_238 = arith.constant 2 : index
    %c1_239 = arith.constant 1 : index
    %c0_240 = arith.constant 0 : index
    %135 = vector.load %arg11[%c0_237, %c2_238, %c1_239, %c0_240] : memref<2x10x10x8xbf16, #tpu.memory_space<vmem>>, vector<2x8x8x8xbf16>
    %c0_241 = arith.constant 0 : index
    %c0_242 = arith.constant 0 : index
    %c0_243 = arith.constant 0 : index
    %c56 = arith.constant 56 : index
    %136 = vector.load %arg13[%c0_241, %c0_242, %c0_243, %c56] : memref<2x8x8x72xbf16, #tpu.memory_space<vmem>>, vector<2x8x8x8xbf16>
    tpu.vector_store %arg13[%c0_241, %c0_242, %c0_243, %c56], %135 {strides = array<i32>} : memref<2x8x8x72xbf16, #tpu.memory_space<vmem>>, vector<2x8x8x8xbf16>,
    %c0_244 = arith.constant 0 : index
    %c2_245 = arith.constant 2 : index
    %c2_246 = arith.constant 2 : index
    %c0_247 = arith.constant 0 : index
    %137 = vector.load %arg11[%c0_244, %c2_245, %c2_246, %c0_247] : memref<2x10x10x8xbf16, #tpu.memory_space<vmem>>, vector<2x8x8x8xbf16>
    %c0_248 = arith.constant 0 : index
    %c0_249 = arith.constant 0 : index
    %c0_250 = arith.constant 0 : index
    %c64 = arith.constant 64 : index
    %138 = vector.load %arg13[%c0_248, %c0_249, %c0_250, %c64] : memref<2x8x8x72xbf16, #tpu.memory_space<vmem>>, vector<2x8x8x8xbf16>
    tpu.vector_store %arg13[%c0_248, %c0_249, %c0_250, %c64], %137 {strides = array<i32>} : memref<2x8x8x72xbf16, #tpu.memory_space<vmem>>, vector<2x8x8x8xbf16>,
    %c0_251 = arith.constant 0 : index
    %c0_252 = arith.constant 0 : index
    %c0_253 = arith.constant 0 : index
    %c0_254 = arith.constant 0 : index
    %139 = vector.load %arg13[%c0_251, %c0_252, %c0_253, %c0_254] : memref<2x8x8x72xbf16, #tpu.memory_space<vmem>>, vector<2x8x8x72xbf16>
    %140 = vector.shape_cast %139 : vector<2x8x8x72xbf16> to vector<128x72xbf16>
    %c0_255 = arith.constant 0 : index
    %c0_256 = arith.constant 0 : index
    %141 = vector.load %arg7[%c0_255, %c0_256] : memref<72x8xbf16, #tpu.memory_space<vmem>>, vector<72x8xbf16>
    %cst_257 = arith.constant dense<0.000000e+00> : vector<128x8xf32>
    %142 = tpu.matmul %140, %141, %cst_257 {dimension_numbers = #tpu.dot_dimension_numbers<[1], [0], [0], [1], [0, 0, 1, 1], [], []>} : vector<128x72xbf16>, vector<72x8xbf16>, vector<128x8xf32> -> vector<128x8xf32>
    %143 = arith.addf %78, %142 : vector<128x8xf32>
    %144 = arith.truncf %143 : vector<128x8xf32> to vector<128x8xbf16>
    %c0_258 = arith.constant 0 : index
    %c0_259 = arith.constant 0 : index
    %145 = vector.load %arg9[%c0_258, %c0_259] : memref<128x8xbf16, #tpu.memory_space<vmem>>, vector<128x8xbf16>
    tpu.vector_store %arg9[%c0_258, %c0_259], %144 {strides = array<i32>} : memref<128x8xbf16, #tpu.memory_space<vmem>>, vector<128x8xbf16>,
    return
  }
  func.func @transform_0(%arg0: i32) -> (i32, i32, i32, i32, i32) {
    %c0_i32 = arith.constant 0 : i32
    %c0_i32_0 = arith.constant 0 : i32
    %c0_i32_1 = arith.constant 0 : i32
    %c0_i32_2 = arith.constant 0 : i32
    %c0_i32_3 = arith.constant 0 : i32
    return %arg0, %c0_i32, %c0_i32_0, %c0_i32_1, %c0_i32_2 : i32, i32, i32, i32, i32
  }
  func.func @transform_1(%arg0: i32) -> (i32, i32) {
    %c0_i32 = arith.constant 0 : i32
    %c0_i32_0 = arith.constant 0 : i32
    %c0_i32_1 = arith.constant 0 : i32
    return %c0_i32, %c0_i32_0 : i32, i32
  }
  func.func @transform_2(%arg0: i32) -> (i32, i32) {
    %c0_i32 = arith.constant 0 : i32
    %c0_i32_0 = arith.constant 0 : i32
    %c0_i32_1 = arith.constant 0 : i32
    return %c0_i32, %c0_i32_0 : i32, i32
  }
  func.func @transform_3(%arg0: i32) -> (i32, i32) {
    %c0_i32 = arith.constant 0 : i32
    %c0_i32_0 = arith.constant 0 : i32
    %c0_i32_1 = arith.constant 0 : i32
    return %c0_i32, %c0_i32_0 : i32, i32
  }
  func.func @transform_4(%arg0: i32) -> (i32, i32) {
    %c0_i32 = arith.constant 0 : i32
    %c0_i32_0 = arith.constant 0 : i32
    %c0_i32_1 = arith.constant 0 : i32
    return %c0_i32, %c0_i32_0 : i32, i32
  }
  func.func @transform_5(%arg0: i32) -> (i32, i32) {
    %c0_i32 = arith.constant 0 : i32
    %c0_i32_0 = arith.constant 0 : i32
    %c0_i32_1 = arith.constant 0 : i32
    return %c0_i32, %c0_i32_0 : i32, i32
  }
  func.func @transform_6(%arg0: i32) -> (i32, i32) {
    %c0_i32 = arith.constant 0 : i32
    %c0_i32_0 = arith.constant 0 : i32
    %c0_i32_1 = arith.constant 0 : i32
    return %c0_i32, %c0_i32_0 : i32, i32
  }
  func.func @transform_7(%arg0: i32) -> (i32, i32) {
    %c0_i32 = arith.constant 0 : i32
    %c0_i32_0 = arith.constant 0 : i32
    %c0_i32_1 = arith.constant 0 : i32
    return %c0_i32, %c0_i32_0 : i32, i32
  }
  func.func @transform_8(%arg0: i32) -> (i32, i32) {
    %c0_i32 = arith.constant 0 : i32
    %c0_i32_0 = arith.constant 0 : i32
    return %arg0, %c0_i32 : i32, i32
  }
}

</mosaic_0001>

<llo_original>
// kernel: network_block_forward.3
$region0: #{network_block_forward.3}
  #allocation0 [shape = 'u32[]', space=smem, size = 0x4, offset = 0x4, fixed_abs, tag = 'smem constant byte address 0x4 - core index']
  #allocation1 [shape = 'u32[144,128]{1,0:T(1,128)}', space=vmem, size = 0x12000, scoped, tag = 'internal scratch']
  #allocation2 [shape = 'bf16[2,1,10,10,8]{4,3,2,1,0:T(8,128)(2,1)}', space=vmem, size = 0x14000, scoped, tag = 'scratch operand']
  #allocation3 [shape = 'bf16[2,10,10,8]{3,2,1,0:T(8,128)(2,1)}', space=vmem, size = 0x14000, scoped, tag = 'scratch operand']
  #allocation4 [shape = 'bf16[2,8,8,72]{3,2,1,0:T(8,128)(2,1)}', space=vmem, size = 0x8000, scoped, tag = 'scratch operand']
  #allocation5 [shape = 'bf16[2,8,8,72]{3,2,1,0:T(8,128)(2,1)}', space=vmem, size = 0x8000, scoped, tag = 'scratch operand']
  %s0 = inlined_call_operand.vmem [shape: bf16[2,1,8,8,8], index: 0, kind: input, shape index: {}]
  %s1 = inlined_call_operand.vmem [shape: f32[1,8], index: 1, kind: input, shape index: {}]
  %s2 = inlined_call_operand.vmem [shape: f32[1,8], index: 2, kind: input, shape index: {}]
  %s3 = inlined_call_operand.vmem [shape: bf16[72,8], index: 3, kind: input, shape index: {}]
  %s4 = inlined_call_operand.vmem [shape: f32[1,8], index: 4, kind: input, shape index: {}]
  %s5 = inlined_call_operand.vmem [shape: f32[1,8], index: 5, kind: input, shape index: {}]
  %s6 = inlined_call_operand.vmem [shape: bf16[72,8], index: 6, kind: input, shape index: {}]
  %s7 = inlined_call_operand.vmem [shape: bf16[128,8], index: 7, kind: output, shape index: {}]
  %s8 = sld [smem:[#allocation0]]
  $region38: #{network_block_forward.3} parent=0
    _
  %s10 = ssub.s32 1, %s8
  %s11 = scalar_select 0, %s10, %s8
  // Predicated region
  $region2: #{network_block_forward.3} parent=0 // pred_check
    _
  $region3: #{network_block_forward.3} parent=0 // pred_check_branch
    %13 = sbr.rel (0) target = $region5
  $region4: #{network_block_forward.3} parent=0 // pred_region
    _
  $region5: #{network_block_forward.3} parent=0 // pred_fallthru
    _
  // Predicated region
  $region6: #{network_block_forward.3} parent=0 // pred_check
    _
  $region7: #{network_block_forward.3} parent=0 // pred_check_branch
    %15 = sbr.rel (0) target = $region9
  $region8: #{network_block_forward.3} parent=0 // pred_region
    _
  $region9: #{network_block_forward.3} parent=0 // pred_fallthru
    _
  // Predicated region
  $region10: #{network_block_forward.3} parent=0 // pred_check
    _
  $region11: #{network_block_forward.3} parent=0 // pred_check_branch
    %17 = sbr.rel (0) target = $region13
  $region12: #{network_block_forward.3} parent=0 // pred_region
    _
  $region13: #{network_block_forward.3} parent=0 // pred_fallthru
    _
  // Predicated region
  $region14: #{network_block_forward.3} parent=0 // pred_check
    _
  $region15: #{network_block_forward.3} parent=0 // pred_check_branch
    %19 = sbr.rel (0) target = $region17
  $region16: #{network_block_forward.3} parent=0 // pred_region
    _
  $region17: #{network_block_forward.3} parent=0 // pred_fallthru
    _
  // Predicated region
  $region18: #{network_block_forward.3} parent=0 // pred_check
    _
  $region19: #{network_block_forward.3} parent=0 // pred_check_branch
    %21 = sbr.rel (0) target = $region21
  $region20: #{network_block_forward.3} parent=0 // pred_region
    _
  $region21: #{network_block_forward.3} parent=0 // pred_fallthru
    _
  // Predicated region
  $region22: #{network_block_forward.3} parent=0 // pred_check
    _
  $region23: #{network_block_forward.3} parent=0 // pred_check_branch
    %23 = sbr.rel (0) target = $region25
  $region24: #{network_block_forward.3} parent=0 // pred_region
    _
  $region25: #{network_block_forward.3} parent=0 // pred_fallthru
    _
  // Predicated region
  $region26: #{network_block_forward.3} parent=0 // pred_check
    _
  $region27: #{network_block_forward.3} parent=0 // pred_check_branch
    %25 = sbr.rel (0) target = $region29
  $region28: #{network_block_forward.3} parent=0 // pred_region
    _
  $region29: #{network_block_forward.3} parent=0 // pred_fallthru
    _
  %vm27 = vcmask 60416
  %28 = vst.msk [vmem:[#allocation2] sm:$0xf] %vm27, 0
  %vm29 = vcmask 57344
  %30 = vst.msk [vmem:[#allocation2 + $0x4] sm:$0x1] %vm29, 0
  %31 = vst.msk [vmem:[#allocation2 + $0x50] sm:$0xf] %vm27, 0
  %32 = vst.msk [vmem:[#allocation2 + $0x54] sm:$0x1] %vm29, 0
  %s33 = scalar_lea.vmem [#allocation2], 72
  %34 = vst.msk [vmem:[%s33] sm:$0xf] %vm27, 0
  %35 = vst.msk [vmem:[%s33 + $0x4] sm:$0x1] %vm29, 0
  %36 = vst.msk [vmem:[%s33 + $0x50] sm:$0xf] %vm27, 0
  %37 = vst.msk [vmem:[%s33 + $0x54] sm:$0x1] %vm29, 0
  %vm38 = vcmask 57344
  %vm39 = vsmask.f32 256
  %vm40 = vmand %vm38, %vm39
  %v41 = vld [vmem:[#allocation2] sm:$0x1]
  %v42 = vsel %vm40, 0, %v41
  %43 = vst [vmem:[#allocation2] sm:$0x1] %v42
  %v44 = vld [vmem:[#allocation2 + $0x8] sm:$0x1]
  %v45 = vsel %vm40, 0, %v44
  %46 = vst [vmem:[#allocation2 + $0x8] sm:$0x1] %v45
  %v47 = vld [vmem:[#allocation2 + $0x10] sm:$0x1]
  %v48 = vsel %vm40, 0, %v47
  %49 = vst [vmem:[#allocation2 + $0x10] sm:$0x1] %v48
  %v50 = vld [vmem:[#allocation2 + $0x18] sm:$0x1]
  %v51 = vsel %vm40, 0, %v50
  %52 = vst [vmem:[#allocation2 + $0x18] sm:$0x1] %v51
  %v53 = vld [vmem:[#allocation2 + $0x20] sm:$0x1]
  %v54 = vsel %vm40, 0, %v53
  %55 = vst [vmem:[#allocation2 + $0x20] sm:$0x1] %v54
  %v56 = vld [vmem:[#allocation2 + $0x28] sm:$0x1]
  %v57 = vsel %vm40, 0, %v56
  %58 = vst [vmem:[#allocation2 + $0x28] sm:$0x1] %v57
  %v59 = vld [vmem:[#allocation2 + $0x30] sm:$0x1]
  %v60 = vsel %vm40, 0, %v59
  %61 = vst [vmem:[#allocation2 + $0x30] sm:$0x1] %v60
  %v62 = vld [vmem:[#allocation2 + $0x38] sm:$0x1]
  %v63 = vsel %vm40, 0, %v62
  %64 = vst [vmem:[#allocation2 + $0x38] sm:$0x1] %v63
  %v65 = vld [vmem:[#allocation2 + $0x40] sm:$0x1]
  %v66 = vsel %vm40, 0, %v65
  %67 = vst [vmem:[#allocation2 + $0x40] sm:$0x1] %v66
  %v68 = vld [vmem:[#allocation2 + $0x48] sm:$0x1]
  %v69 = vsel %vm40, 0, %v68
  %70 = vst [vmem:[#allocation2 + $0x48] sm:$0x1] %v69
  %v71 = vld [vmem:[#allocation2 + $0x50] sm:$0x1]
  %v72 = vsel %vm40, 0, %v71
  %73 = vst [vmem:[#allocation2 + $0x50] sm:$0x1] %v72
  %v74 = vld [vmem:[#allocation2 + $0x58] sm:$0x1]
  %v75 = vsel %vm40, 0, %v74
  %76 = vst [vmem:[#allocation2 + $0x58] sm:$0x1] %v75
  %v77 = vld [vmem:[#allocation2 + $0x60] sm:$0x1]
  %v78 = vsel %vm40, 0, %v77
  %79 = vst [vmem:[#allocation2 + $0x60] sm:$0x1] %v78
  %v80 = vld [vmem:[#allocation2 + $0x68] sm:$0x1]
  %v81 = vsel %vm40, 0, %v80
  %82 = vst [vmem:[#allocation2 + $0x68] sm:$0x1] %v81
  %v83 = vld [vmem:[#allocation2 + $0x70] sm:$0x1]
  %v84 = vsel %vm40, 0, %v83
  %85 = vst [vmem:[#allocation2 + $0x70] sm:$0x1] %v84
  %v86 = vld [vmem:[#allocation2 + $0x78] sm:$0x1]
  %v87 = vsel %vm40, 0, %v86
  %88 = vst [vmem:[#allocation2 + $0x78] sm:$0x1] %v87
  %v89 = vld [vmem:[#allocation2 + $0x80] sm:$0x1]
  %v90 = vsel %vm40, 0, %v89
  %91 = vst [vmem:[#allocation2 + $0x80] sm:$0x1] %v90
  %v92 = vld [vmem:[#allocation2 + $0x88] sm:$0x1]
  %v93 = vsel %vm40, 0, %v92
  %94 = vst [vmem:[#allocation2 + $0x88] sm:$0x1] %v93
  %v95 = vld [vmem:[#allocation2 + $0x90] sm:$0x1]
  %v96 = vsel %vm40, 0, %v95
  %97 = vst [vmem:[#allocation2 + $0x90] sm:$0x1] %v96
  %v98 = vld [vmem:[#allocation2 + $0x98] sm:$0x1]
  %v99 = vsel %vm40, 0, %v98
  %100 = vst [vmem:[#allocation2 + $0x98] sm:$0x1] %v99
  %vm101 = vsmask.f32 7938
  %vm102 = vmand %vm38, %vm101
  %v103 = vld [vmem:[#allocation2 + $0x4] sm:$0x1]
  %v104 = vsel %vm102, 0, %v103
  %105 = vst [vmem:[#allocation2 + $0x4] sm:$0x1] %v104
  %v106 = vld [vmem:[#allocation2 + $0xc] sm:$0x1]
  %v107 = vsel %vm102, 0, %v106
  %108 = vst [vmem:[#allocation2 + $0xc] sm:$0x1] %v107
  %v109 = vld [vmem:[#allocation2 + $0x14] sm:$0x1]
  %v110 = vsel %vm102, 0, %v109
  %111 = vst [vmem:[#allocation2 + $0x14] sm:$0x1] %v110
  %v112 = vld [vmem:[#allocation2 + $0x1c] sm:$0x1]
  %v113 = vsel %vm102, 0, %v112
  %114 = vst [vmem:[#allocation2 + $0x1c] sm:$0x1] %v113
  %v115 = vld [vmem:[#allocation2 + $0x24] sm:$0x1]
  %v116 = vsel %vm102, 0, %v115
  %117 = vst [vmem:[#allocation2 + $0x24] sm:$0x1] %v116
  %v118 = vld [vmem:[#allocation2 + $0x2c] sm:$0x1]
  %v119 = vsel %vm102, 0, %v118
  %120 = vst [vmem:[#allocation2 + $0x2c] sm:$0x1] %v119
  %v121 = vld [vmem:[#allocation2 + $0x34] sm:$0x1]
  %v122 = vsel %vm102, 0, %v121
  %123 = vst [vmem:[#allocation2 + $0x34] sm:$0x1] %v122
  %v124 = vld [vmem:[#allocation2 + $0x3c] sm:$0x1]
  %v125 = vsel %vm102, 0, %v124
  %126 = vst [vmem:[#allocation2 + $0x3c] sm:$0x1] %v125
  %v127 = vld [vmem:[#allocation2 + $0x44] sm:$0x1]
  %v128 = vsel %vm102, 0, %v127
  %129 = vst [vmem:[#allocation2 + $0x44] sm:$0x1] %v128
  %v130 = vld [vmem:[#allocation2 + $0x4c] sm:$0x1]
  %v131 = vsel %vm102, 0, %v130
  %132 = vst [vmem:[#allocation2 + $0x4c] sm:$0x1] %v131
  %v133 = vld [vmem:[#allocation2 + $0x54] sm:$0x1]
  %v134 = vsel %vm102, 0, %v133
  %135 = vst [vmem:[#allocation2 + $0x54] sm:$0x1] %v134
  %v136 = vld [vmem:[#allocation2 + $0x5c] sm:$0x1]
  %v137 = vsel %vm102, 0, %v136
  %138 = vst [vmem:[#allocation2 + $0x5c] sm:$0x1] %v137
  %v139 = vld [vmem:[#allocation2 + $0x64] sm:$0x1]
  %v140 = vsel %vm102, 0, %v139
  %141 = vst [vmem:[#allocation2 + $0x64] sm:$0x1] %v140
  %v142 = vld [vmem:[#allocation2 + $0x6c] sm:$0x1]
  %v143 = vsel %vm102, 0, %v142
  %144 = vst [vmem:[#allocation2 + $0x6c] sm:$0x1] %v143
  %v145 = vld [vmem:[#allocation2 + $0x74] sm:$0x1]
  %v146 = vsel %vm102, 0, %v145
  %147 = vst [vmem:[#allocation2 + $0x74] sm:$0x1] %v146
  %v148 = vld [vmem:[#allocation2 + $0x7c] sm:$0x1]
  %v149 = vsel %vm102, 0, %v148
  %150 = vst [vmem:[#allocation2 + $0x7c] sm:$0x1] %v149
  %v151 = vld [vmem:[#allocation2 + $0x84] sm:$0x1]
  %v152 = vsel %vm102, 0, %v151
  %153 = vst [vmem:[#allocation2 + $0x84] sm:$0x1] %v152
  %v154 = vld [vmem:[#allocation2 + $0x8c] sm:$0x1]
  %v155 = vsel %vm102, 0, %v154
  %156 = vst [vmem:[#allocation2 + $0x8c] sm:$0x1] %v155
  %v157 = vld [vmem:[#allocation2 + $0x94] sm:$0x1]
  %v158 = vsel %vm102, 0, %v157
  %159 = vst [vmem:[#allocation2 + $0x94] sm:$0x1] %v158
  %v160 = vld [vmem:[#allocation2 + $0x9c] sm:$0x1]
  %v161 = vsel %vm102, 0, %v160
  %162 = vst [vmem:[#allocation2 + $0x9c] sm:$0x1] %v161
  %163 = vst.msk [vmem:[#allocation3] sm:$0xf] %vm27, 0
  %164 = vst.msk [vmem:[#allocation3 + $0x4] sm:$0x1] %vm29, 0
  %165 = vst.msk [vmem:[#allocation3 + $0x50] sm:$0xf] %vm27, 0
  %166 = vst.msk [vmem:[#allocation3 + $0x54] sm:$0x1] %vm29, 0
  %s167 = scalar_lea.vmem [#allocation3], 72
  %168 = vst.msk [vmem:[%s167] sm:$0xf] %vm27, 0
  %169 = vst.msk [vmem:[%s167 + $0x4] sm:$0x1] %vm29, 0
  %170 = vst.msk [vmem:[%s167 + $0x50] sm:$0xf] %vm27, 0
  %171 = vst.msk [vmem:[%s167 + $0x54] sm:$0x1] %vm29, 0
  %v172 = vld [vmem:[#allocation3] sm:$0x1]
  %v173 = vsel %vm40, 0, %v172
  %174 = vst [vmem:[#allocation3] sm:$0x1] %v173
  %v175 = vld [vmem:[#allocation3 + $0x8] sm:$0x1]
  %v176 = vsel %vm40, 0, %v175
  %177 = vst [vmem:[#allocation3 + $0x8] sm:$0x1] %v176
  %v178 = vld [vmem:[#allocation3 + $0x10] sm:$0x1]
  %v179 = vsel %vm40, 0, %v178
  %180 = vst [vmem:[#allocation3 + $0x10] sm:$0x1] %v179
  %v181 = vld [vmem:[#allocation3 + $0x18] sm:$0x1]
  %v182 = vsel %vm40, 0, %v181
  %183 = vst [vmem:[#allocation3 + $0x18] sm:$0x1] %v182
  %v184 = vld [vmem:[#allocation3 + $0x20] sm:$0x1]
  %v185 = vsel %vm40, 0, %v184
  %186 = vst [vmem:[#allocation3 + $0x20] sm:$0x1] %v185
  %v187 = vld [vmem:[#allocation3 + $0x28] sm:$0x1]
  %v188 = vsel %vm40, 0, %v187
  %189 = vst [vmem:[#allocation3 + $0x28] sm:$0x1] %v188
  %v190 = vld [vmem:[#allocation3 + $0x30] sm:$0x1]
  %v191 = vsel %vm40, 0, %v190
  %192 = vst [vmem:[#allocation3 + $0x30] sm:$0x1] %v191
  %v193 = vld [vmem:[#allocation3 + $0x38] sm:$0x1]
  %v194 = vsel %vm40, 0, %v193
  %195 = vst [vmem:[#allocation3 + $0x38] sm:$0x1] %v194
  %v196 = vld [vmem:[#allocation3 + $0x40] sm:$0x1]
  %v197 = vsel %vm40, 0, %v196
  %198 = vst [vmem:[#allocation3 + $0x40] sm:$0x1] %v197
  %v199 = vld [vmem:[#allocation3 + $0x48] sm:$0x1]
  %v200 = vsel %vm40, 0, %v199
  %201 = vst [vmem:[#allocation3 + $0x48] sm:$0x1] %v200
  %v202 = vld [vmem:[#allocation3 + $0x50] sm:$0x1]
  %v203 = vsel %vm40, 0, %v202
  %204 = vst [vmem:[#allocation3 + $0x50] sm:$0x1] %v203
  %v205 = vld [vmem:[#allocation3 + $0x58] sm:$0x1]
  %v206 = vsel %vm40, 0, %v205
  %207 = vst [vmem:[#allocation3 + $0x58] sm:$0x1] %v206
  %v208 = vld [vmem:[#allocation3 + $0x60] sm:$0x1]
  %v209 = vsel %vm40, 0, %v208
  %210 = vst [vmem:[#allocation3 + $0x60] sm:$0x1] %v209
  %v211 = vld [vmem:[#allocation3 + $0x68] sm:$0x1]
  %v212 = vsel %vm40, 0, %v211
  %213 = vst [vmem:[#allocation3 + $0x68] sm:$0x1] %v212
  %v214 = vld [vmem:[#allocation3 + $0x70] sm:$0x1]
  %v215 = vsel %vm40, 0, %v214
  %216 = vst [vmem:[#allocation3 + $0x70] sm:$0x1] %v215
  %v217 = vld [vmem:[#allocation3 + $0x78] sm:$0x1]
  %v218 = vsel %vm40, 0, %v217
  %219 = vst [vmem:[#allocation3 + $0x78] sm:$0x1] %v218
  %v220 = vld [vmem:[#allocation3 + $0x80] sm:$0x1]
  %v221 = vsel %vm40, 0, %v220
  %222 = vst [vmem:[#allocation3 + $0x80] sm:$0x1] %v221
  %v223 = vld [vmem:[#allocation3 + $0x88] sm:$0x1]
  %v224 = vsel %vm40, 0, %v223
  %225 = vst [vmem:[#allocation3 + $0x88] sm:$0x1] %v224
  %v226 = vld [vmem:[#allocation3 + $0x90] sm:$0x1]
  %v227 = vsel %vm40, 0, %v226
  %228 = vst [vmem:[#allocation3 + $0x90] sm:$0x1] %v227
  %v229 = vld [vmem:[#allocation3 + $0x98] sm:$0x1]
  %v230 = vsel %vm40, 0, %v229
  %231 = vst [vmem:[#allocation3 + $0x98] sm:$0x1] %v230
  %v232 = vld [vmem:[#allocation3 + $0x4] sm:$0x1]
  %v233 = vsel %vm102, 0, %v232
  %234 = vst [vmem:[#allocation3 + $0x4] sm:$0x1] %v233
  %v235 = vld [vmem:[#allocation3 + $0xc] sm:$0x1]
  %v236 = vsel %vm102, 0, %v235
  %237 = vst [vmem:[#allocation3 + $0xc] sm:$0x1] %v236
  %v238 = vld [vmem:[#allocation3 + $0x14] sm:$0x1]
  %v239 = vsel %vm102, 0, %v238
  %240 = vst [vmem:[#allocation3 + $0x14] sm:$0x1] %v239
  %v241 = vld [vmem:[#allocation3 + $0x1c] sm:$0x1]
  %v242 = vsel %vm102, 0, %v241
  %243 = vst [vmem:[#allocation3 + $0x1c] sm:$0x1] %v242
  %v244 = vld [vmem:[#allocation3 + $0x24] sm:$0x1]
  %v245 = vsel %vm102, 0, %v244
  %246 = vst [vmem:[#allocation3 + $0x24] sm:$0x1] %v245
  %v247 = vld [vmem:[#allocation3 + $0x2c] sm:$0x1]
  %v248 = vsel %vm102, 0, %v247
  %249 = vst [vmem:[#allocation3 + $0x2c] sm:$0x1] %v248
  %v250 = vld [vmem:[#allocation3 + $0x34] sm:$0x1]
  %v251 = vsel %vm102, 0, %v250
  %252 = vst [vmem:[#allocation3 + $0x34] sm:$0x1] %v251
  %v253 = vld [vmem:[#allocation3 + $0x3c] sm:$0x1]
  %v254 = vsel %vm102, 0, %v253
  %255 = vst [vmem:[#allocation3 + $0x3c] sm:$0x1] %v254
  %v256 = vld [vmem:[#allocation3 + $0x44] sm:$0x1]
  %v257 = vsel %vm102, 0, %v256
  %258 = vst [vmem:[#allocation3 + $0x44] sm:$0x1] %v257
  %v259 = vld [vmem:[#allocation3 + $0x4c] sm:$0x1]
  %v260 = vsel %vm102, 0, %v259
  %261 = vst [vmem:[#allocation3 + $0x4c] sm:$0x1] %v260
  %v262 = vld [vmem:[#allocation3 + $0x54] sm:$0x1]
  %v263 = vsel %vm102, 0, %v262
  %264 = vst [vmem:[#allocation3 + $0x54] sm:$0x1] %v263
  %v265 = vld [vmem:[#allocation3 + $0x5c] sm:$0x1]
  %v266 = vsel %vm102, 0, %v265
  %267 = vst [vmem:[#allocation3 + $0x5c] sm:$0x1] %v266
  %v268 = vld [vmem:[#allocation3 + $0x64] sm:$0x1]
  %v269 = vsel %vm102, 0, %v268
  %270 = vst [vmem:[#allocation3 + $0x64] sm:$0x1] %v269
  %v271 = vld [vmem:[#allocation3 + $0x6c] sm:$0x1]
  %v272 = vsel %vm102, 0, %v271
  %273 = vst [vmem:[#allocation3 + $0x6c] sm:$0x1] %v272
  %v274 = vld [vmem:[#allocation3 + $0x74] sm:$0x1]
  %v275 = vsel %vm102, 0, %v274
  %276 = vst [vmem:[#allocation3 + $0x74] sm:$0x1] %v275
  %v277 = vld [vmem:[#allocation3 + $0x7c] sm:$0x1]
  %v278 = vsel %vm102, 0, %v277
  %279 = vst [vmem:[#allocation3 + $0x7c] sm:$0x1] %v278
  %v280 = vld [vmem:[#allocation3 + $0x84] sm:$0x1]
  %v281 = vsel %vm102, 0, %v280
  %282 = vst [vmem:[#allocation3 + $0x84] sm:$0x1] %v281
  %v283 = vld [vmem:[#allocation3 + $0x8c] sm:$0x1]
  %v284 = vsel %vm102, 0, %v283
  %285 = vst [vmem:[#allocation3 + $0x8c] sm:$0x1] %v284
  %v286 = vld [vmem:[#allocation3 + $0x94] sm:$0x1]
  %v287 = vsel %vm102, 0, %v286
  %288 = vst [vmem:[#allocation3 + $0x94] sm:$0x1] %v287
  %v289 = vld [vmem:[#allocation3 + $0x9c] sm:$0x1]
  %v290 = vsel %vm102, 0, %v289
  %291 = vst [vmem:[#allocation3 + $0x9c] sm:$0x1] %v290
  %v292 = vld [vmem:[%s1] sm:$0x1]
  %v293 = vld [vmem:[%s2] sm:$0x1]
  %v294 = vld [vmem:[%s0] sm:$0xf]
  %v295 = vld [vmem:[%s0 + $0x4] sm:$0xf]
  %v296 = vld [vmem:[%s0 + $0x8] sm:$0xf]
  %v297 = vld [vmem:[%s0 + $0xc] sm:$0xf]
  %v298 = vld [vmem:[%s0 + $0x10] sm:$0xf]
  %v299 = vld [vmem:[%s0 + $0x14] sm:$0xf]
  %v300 = vld [vmem:[%s0 + $0x18] sm:$0xf]
  %v301 = vld [vmem:[%s0 + $0x1c] sm:$0xf]
  %v302 = vld [vmem:[%s0 + $0x20] sm:$0xf]
  %v303 = vld [vmem:[%s0 + $0x24] sm:$0xf]
  %v304 = vld [vmem:[%s0 + $0x28] sm:$0xf]
  %v305 = vld [vmem:[%s0 + $0x2c] sm:$0xf]
  %v306 = vld [vmem:[%s0 + $0x30] sm:$0xf]
  %v307 = vld [vmem:[%s0 + $0x34] sm:$0xf]
  %v308 = vld [vmem:[%s0 + $0x38] sm:$0xf]
  %v309 = vld [vmem:[%s0 + $0x3c] sm:$0xf]
  %v310 = vunpack.c.l.bf16 %v294
  %v311 = vunpack.c.l.bf16 %v295
  %v312 = vunpack.c.l.bf16 %v296
  %v313 = vunpack.c.l.bf16 %v297
  %v314 = vunpack.c.l.bf16 %v298
  %v315 = vunpack.c.l.bf16 %v299
  %v316 = vunpack.c.l.bf16 %v300
  %v317 = vunpack.c.l.bf16 %v301
  %v318 = vunpack.c.l.bf16 %v302
  %v319 = vunpack.c.l.bf16 %v303
  %v320 = vunpack.c.l.bf16 %v304
  %v321 = vunpack.c.l.bf16 %v305
  %v322 = vunpack.c.l.bf16 %v306
  %v323 = vunpack.c.l.bf16 %v307
  %v324 = vunpack.c.l.bf16 %v308
  %v325 = vunpack.c.l.bf16 %v309
  %v327 = vlaneseq
  %v328 = vshrl.u32 %v327, 7
  %v329 = vsub.s32 0, %v328
  %v330 = vrot.slane %v292, %v329
  %v332 = vmul.f32 %v310, %v330
  %v333 = vmul.f32 %v311, %v330
  %v334 = vmul.f32 %v312, %v330
  %v335 = vmul.f32 %v313, %v330
  %v336 = vmul.f32 %v314, %v330
  %v337 = vmul.f32 %v315, %v330
  %v338 = vmul.f32 %v316, %v330
  %v339 = vmul.f32 %v317, %v330
  %v340 = vmul.f32 %v318, %v330
  %v341 = vmul.f32 %v319, %v330
  %v342 = vmul.f32 %v320, %v330
  %v343 = vmul.f32 %v321, %v330
  %v344 = vmul.f32 %v322, %v330
  %v345 = vmul.f32 %v323, %v330
  %v346 = vmul.f32 %v324, %v330
  %v347 = vmul.f32 %v325, %v330
  %v349 = vlaneseq
  %v350 = vshrl.u32 %v349, 7
  %v351 = vsub.s32 0, %v350
  %v352 = vrot.slane %v293, %v351
  %v354 = vadd.f32 %v332, %v352
  %v355 = vadd.f32 %v333, %v352
  %v356 = vadd.f32 %v334, %v352
  %v357 = vadd.f32 %v335, %v352
  %v358 = vadd.f32 %v336, %v352
  %v359 = vadd.f32 %v337, %v352
  %v360 = vadd.f32 %v338, %v352
  %v361 = vadd.f32 %v339, %v352
  %v362 = vadd.f32 %v340, %v352
  %v363 = vadd.f32 %v341, %v352
  %v364 = vadd.f32 %v342, %v352
  %v365 = vadd.f32 %v343, %v352
  %v366 = vadd.f32 %v344, %v352
  %v367 = vadd.f32 %v345, %v352
  %v368 = vadd.f32 %v346, %v352
  %v369 = vadd.f32 %v347, %v352
  %v370 = vmax.f32 %v354, 0.0
  %v371 = vmax.f32 %v355, 0.0
  %v372 = vmax.f32 %v356, 0.0
  %v373 = vmax.f32 %v357, 0.0
  %v374 = vmax.f32 %v358, 0.0
  %v375 = vmax.f32 %v359, 0.0
  %v376 = vmax.f32 %v360, 0.0
  %v377 = vmax.f32 %v361, 0.0
  %v378 = vmax.f32 %v362, 0.0
  %v379 = vmax.f32 %v363, 0.0
  %v380 = vmax.f32 %v364, 0.0
  %v381 = vmax.f32 %v365, 0.0
  %v382 = vmax.f32 %v366, 0.0
  %v383 = vmax.f32 %v367, 0.0
  %v384 = vmax.f32 %v368, 0.0
  %v385 = vmax.f32 %v369, 0.0
  %v386 = vpack.c.bf16 %v370, %v370
  %v387 = vpack.c.bf16 %v371, %v371
  %v388 = vpack.c.bf16 %v372, %v372
  %v389 = vpack.c.bf16 %v373, %v373
  %v390 = vpack.c.bf16 %v374, %v374
  %v391 = vpack.c.bf16 %v375, %v375
  %v392 = vpack.c.bf16 %v376, %v376
  %v393 = vpack.c.bf16 %v377, %v377
  %v394 = vpack.c.bf16 %v378, %v378
  %v395 = vpack.c.bf16 %v379, %v379
  %v396 = vpack.c.bf16 %v380, %v380
  %v397 = vpack.c.bf16 %v381, %v381
  %v398 = vpack.c.bf16 %v382, %v382
  %v399 = vpack.c.bf16 %v383, %v383
  %v400 = vpack.c.bf16 %v384, %v384
  %v401 = vpack.c.bf16 %v385, %v385
  %v418 = vunpack.c.l.b16 %v386
  %v419 = vunpack.c.l.b16 %v387
  %v420 = vunpack.c.l.b16 %v388
  %v421 = vunpack.c.l.b16 %v389
  %v422 = vunpack.c.l.b16 %v390
  %v423 = vunpack.c.l.b16 %v391
  %v424 = vunpack.c.l.b16 %v392
  %v425 = vunpack.c.l.b16 %v393
  %v426 = vunpack.c.l.b16 %v394
  %v427 = vunpack.c.l.b16 %v395
  %v428 = vunpack.c.l.b16 %v396
  %v429 = vunpack.c.l.b16 %v397
  %v430 = vunpack.c.l.b16 %v398
  %v431 = vunpack.c.l.b16 %v399
  %v432 = vunpack.c.l.b16 %v400
  %v433 = vunpack.c.l.b16 %v401
  %v434 = vpack.c.b16 %v418, %v418
  %v435 = vpack.c.b16 %v419, %v419
  %v436 = vpack.c.b16 %v420, %v420
  %v437 = vpack.c.b16 %v421, %v421
  %v438 = vpack.c.b16 %v422, %v422
  %v439 = vpack.c.b16 %v423, %v423
  %v440 = vpack.c.b16 %v424, %v424
  %v441 = vpack.c.b16 %v425, %v425
  %v442 = vpack.c.b16 %v426, %v426
  %v443 = vpack.c.b16 %v427, %v427
  %v444 = vpack.c.b16 %v428, %v428
  %v445 = vpack.c.b16 %v429, %v429
  %v446 = vpack.c.b16 %v430, %v430
  %v447 = vpack.c.b16 %v431, %v431
  %v448 = vpack.c.b16 %v432, %v432
  %v449 = vpack.c.b16 %v433, %v433
  %v451 = vshrl.u32 %v434, 16
  %v453 = vrot.slane %v451, 7
  %v454 = vshll.u32 %v434, 16
  %v456 = vor.u32 %v453, %v454
  %v457 = vrot.slane %v453, 4
  %v459 = vshrl.u32 %v435, 16
  %v461 = vrot.slane %v459, 7
  %v462 = vshll.u32 %v435, 16
  %v464 = vor.u32 %v461, %v462
  %v465 = vrot.slane %v461, 4
  %v467 = vshrl.u32 %v436, 16
  %v469 = vrot.slane %v467, 7
  %v470 = vshll.u32 %v436, 16
  %v472 = vor.u32 %v469, %v470
  %v473 = vrot.slane %v469, 4
  %v475 = vshrl.u32 %v437, 16
  %v477 = vrot.slane %v475, 7
  %v478 = vshll.u32 %v437, 16
  %v480 = vor.u32 %v477, %v478
  %v481 = vrot.slane %v477, 4
  %v483 = vshrl.u32 %v438, 16
  %v485 = vrot.slane %v483, 7
  %v486 = vshll.u32 %v438, 16
  %v488 = vor.u32 %v485, %v486
  %v489 = vrot.slane %v485, 4
  %v491 = vshrl.u32 %v439, 16
  %v493 = vrot.slane %v491, 7
  %v494 = vshll.u32 %v439, 16
  %v496 = vor.u32 %v493, %v494
  %v497 = vrot.slane %v493, 4
  %v499 = vshrl.u32 %v440, 16
  %v501 = vrot.slane %v499, 7
  %v502 = vshll.u32 %v440, 16
  %v504 = vor.u32 %v501, %v502
  %v505 = vrot.slane %v501, 4
  %v507 = vshrl.u32 %v441, 16
  %v509 = vrot.slane %v507, 7
  %v510 = vshll.u32 %v441, 16
  %v512 = vor.u32 %v509, %v510
  %v513 = vrot.slane %v509, 4
  %v515 = vshrl.u32 %v442, 16
  %v517 = vrot.slane %v515, 7
  %v518 = vshll.u32 %v442, 16
  %v520 = vor.u32 %v517, %v518
  %v521 = vrot.slane %v517, 4
  %v523 = vshrl.u32 %v443, 16
  %v525 = vrot.slane %v523, 7
  %v526 = vshll.u32 %v443, 16
  %v528 = vor.u32 %v525, %v526
  %v529 = vrot.slane %v525, 4
  %v531 = vshrl.u32 %v444, 16
  %v533 = vrot.slane %v531, 7
  %v534 = vshll.u32 %v444, 16
  %v536 = vor.u32 %v533, %v534
  %v537 = vrot.slane %v533, 4
  %v539 = vshrl.u32 %v445, 16
  %v541 = vrot.slane %v539, 7
  %v542 = vshll.u32 %v445, 16
  %v544 = vor.u32 %v541, %v542
  %v545 = vrot.slane %v541, 4
  %v547 = vshrl.u32 %v446, 16
  %v549 = vrot.slane %v547, 7
  %v550 = vshll.u32 %v446, 16
  %v552 = vor.u32 %v549, %v550
  %v553 = vrot.slane %v549, 4
  %v555 = vshrl.u32 %v447, 16
  %v557 = vrot.slane %v555, 7
  %v558 = vshll.u32 %v447, 16
  %v560 = vor.u32 %v557, %v558
  %v561 = vrot.slane %v557, 4
  %v563 = vshrl.u32 %v448, 16
  %v565 = vrot.slane %v563, 7
  %v566 = vshll.u32 %v448, 16
  %v568 = vor.u32 %v565, %v566
  %v569 = vrot.slane %v565, 4
  %v571 = vshrl.u32 %v449, 16
  %v573 = vrot.slane %v571, 7
  %v574 = vshll.u32 %v449, 16
  %v576 = vor.u32 %v573, %v574
  %v577 = vrot.slane %v573, 4
  %s610 = scalar_lea.vmem [#allocation2], 8
  %vm611 = vcmask 60416
  %vm612 = vmand %vm611, %vm101
  %v613 = vld [vmem:[%s610] sm:$0xf]
  %v614 = vsel %vm612, %v456, %v613
  %615 = vst [vmem:[%s610] sm:$0xf] %v614
  %v616 = vld [vmem:[%s610 + $0x4] sm:$0x1]
  %v617 = vsel %vm40, %v457, %v616
  %618 = vst [vmem:[%s610 + $0x4] sm:$0x1] %v617
  %v619 = vld [vmem:[%s610 + $0x8] sm:$0xf]
  %v620 = vsel %vm612, %v464, %v619
  %621 = vst [vmem:[%s610 + $0x8] sm:$0xf] %v620
  %v622 = vld [vmem:[%s610 + $0xc] sm:$0x1]
  %v623 = vsel %vm40, %v465, %v622
  %624 = vst [vmem:[%s610 + $0xc] sm:$0x1] %v623
  %v625 = vld [vmem:[%s610 + $0x10] sm:$0xf]
  %v626 = vsel %vm612, %v472, %v625
  %627 = vst [vmem:[%s610 + $0x10] sm:$0xf] %v626
  %v628 = vld [vmem:[%s610 + $0x14] sm:$0x1]
  %v629 = vsel %vm40, %v473, %v628
  %630 = vst [vmem:[%s610 + $0x14] sm:$0x1] %v629
  %v631 = vld [vmem:[%s610 + $0x18] sm:$0xf]
  %v632 = vsel %vm612, %v480, %v631
  %633 = vst [vmem:[%s610 + $0x18] sm:$0xf] %v632
  %v634 = vld [vmem:[%s610 + $0x1c] sm:$0x1]
  %v635 = vsel %vm40, %v481, %v634
  %636 = vst [vmem:[%s610 + $0x1c] sm:$0x1] %v635
  %v637 = vld [vmem:[%s610 + $0x20] sm:$0xf]
  %v638 = vsel %vm612, %v488, %v637
  %639 = vst [vmem:[%s610 + $0x20] sm:$0xf] %v638
  %v640 = vld [vmem:[%s610 + $0x24] sm:$0x1]
  %v641 = vsel %vm40, %v489, %v640
  %642 = vst [vmem:[%s610 + $0x24] sm:$0x1] %v641
  %v643 = vld [vmem:[%s610 + $0x28] sm:$0xf]
  %v644 = vsel %vm612, %v496, %v643
  %645 = vst [vmem:[%s610 + $0x28] sm:$0xf] %v644
  %v646 = vld [vmem:[%s610 + $0x2c] sm:$0x1]
  %v647 = vsel %vm40, %v497, %v646
  %648 = vst [vmem:[%s610 + $0x2c] sm:$0x1] %v647
  %v649 = vld [vmem:[%s610 + $0x30] sm:$0xf]
  %v650 = vsel %vm612, %v504, %v649
  %651 = vst [vmem:[%s610 + $0x30] sm:$0xf] %v650
  %v652 = vld [vmem:[%s610 + $0x34] sm:$0x1]
  %v653 = vsel %vm40, %v505, %v652
  %654 = vst [vmem:[%s610 + $0x34] sm:$0x1] %v653
  %v655 = vld [vmem:[%s610 + $0x38] sm:$0xf]
  %v656 = vsel %vm612, %v512, %v655
  %657 = vst [vmem:[%s610 + $0x38] sm:$0xf] %v656
  %v658 = vld [vmem:[%s610 + $0x3c] sm:$0x1]
  %v659 = vsel %vm40, %v513, %v658
  %660 = vst [vmem:[%s610 + $0x3c] sm:$0x1] %v659
  %v661 = vld [vmem:[%s610 + $0x50] sm:$0xf]
  %v662 = vsel %vm612, %v520, %v661
  %663 = vst [vmem:[%s610 + $0x50] sm:$0xf] %v662
  %v664 = vld [vmem:[%s610 + $0x54] sm:$0x1]
  %v665 = vsel %vm40, %v521, %v664
  %666 = vst [vmem:[%s610 + $0x54] sm:$0x1] %v665
  %v667 = vld [vmem:[%s610 + $0x58] sm:$0xf]
  %v668 = vsel %vm612, %v528, %v667
  %669 = vst [vmem:[%s610 + $0x58] sm:$0xf] %v668
  %v670 = vld [vmem:[%s610 + $0x5c] sm:$0x1]
  %v671 = vsel %vm40, %v529, %v670
  %672 = vst [vmem:[%s610 + $0x5c] sm:$0x1] %v671
  %v673 = vld [vmem:[%s610 + $0x60] sm:$0xf]
  %v674 = vsel %vm612, %v536, %v673
  %675 = vst [vmem:[%s610 + $0x60] sm:$0xf] %v674
  %v676 = vld [vmem:[%s610 + $0x64] sm:$0x1]
  %v677 = vsel %vm40, %v537, %v676
  %678 = vst [vmem:[%s610 + $0x64] sm:$0x1] %v677
  %v679 = vld [vmem:[%s610 + $0x68] sm:$0xf]
  %v680 = vsel %vm612, %v544, %v679
  %681 = vst [vmem:[%s610 + $0x68] sm:$0xf] %v680
  %v682 = vld [vmem:[%s610 + $0x6c] sm:$0x1]
  %v683 = vsel %vm40, %v545, %v682
  %684 = vst [vmem:[%s610 + $0x6c] sm:$0x1] %v683
  %v685 = vld [vmem:[%s610 + $0x70] sm:$0xf]
  %v686 = vsel %vm612, %v552, %v685
  %687 = vst [vmem:[%s610 + $0x70] sm:$0xf] %v686
  %v688 = vld [vmem:[%s610 + $0x74] sm:$0x1]
  %v689 = vsel %vm40, %v553, %v688
  %690 = vst [vmem:[%s610 + $0x74] sm:$0x1] %v689
  %v691 = vld [vmem:[%s610 + $0x78] sm:$0xf]
  %v692 = vsel %vm612, %v560, %v691
  %693 = vst [vmem:[%s610 + $0x78] sm:$0xf] %v692
  %v694 = vld [vmem:[%s610 + $0x7c] sm:$0x1]
  %v695 = vsel %vm40, %v561, %v694
  %696 = vst [vmem:[%s610 + $0x7c] sm:$0x1] %v695
  %v697 = vld [vmem:[%s610 + $0x80] sm:$0xf]
  %v698 = vsel %vm612, %v568, %v697
  %699 = vst [vmem:[%s610 + $0x80] sm:$0xf] %v698
  %v700 = vld [vmem:[%s610 + $0x84] sm:$0x1]
  %v701 = vsel %vm40, %v569, %v700
  %702 = vst [vmem:[%s610 + $0x84] sm:$0x1] %v701
  %v703 = vld [vmem:[%s610 + $0x88] sm:$0xf]
  %v704 = vsel %vm612, %v576, %v703
  %705 = vst [vmem:[%s610 + $0x88] sm:$0xf] %v704
  %v706 = vld [vmem:[%s610 + $0x8c] sm:$0x1]
  %v707 = vsel %vm40, %v577, %v706
  %708 = vst [vmem:[%s610 + $0x8c] sm:$0x1] %v707
  %v709 = vld [vmem:[%s0] sm:$0xf]
  %v710 = vld [vmem:[%s0 + $0x4] sm:$0xf]
  %v711 = vld [vmem:[%s0 + $0x8] sm:$0xf]
  %v712 = vld [vmem:[%s0 + $0xc] sm:$0xf]
  %v713 = vld [vmem:[%s0 + $0x10] sm:$0xf]
  %v714 = vld [vmem:[%s0 + $0x14] sm:$0xf]
  %v715 = vld [vmem:[%s0 + $0x18] sm:$0xf]
  %v716 = vld [vmem:[%s0 + $0x1c] sm:$0xf]
  %v717 = vld [vmem:[%s0 + $0x20] sm:$0xf]
  %v718 = vld [vmem:[%s0 + $0x24] sm:$0xf]
  %v719 = vld [vmem:[%s0 + $0x28] sm:$0xf]
  %v720 = vld [vmem:[%s0 + $0x2c] sm:$0xf]
  %v721 = vld [vmem:[%s0 + $0x30] sm:$0xf]
  %v722 = vld [vmem:[%s0 + $0x34] sm:$0xf]
  %v723 = vld [vmem:[%s0 + $0x38] sm:$0xf]
  %v724 = vld [vmem:[%s0 + $0x3c] sm:$0xf]
  %v725 = vunpack.c.l.bf16 %v709
  %v726 = vunpack.c.l.bf16 %v710
  %v727 = vunpack.c.l.bf16 %v711
  %v728 = vunpack.c.l.bf16 %v712
  %v729 = vunpack.c.l.bf16 %v713
  %v730 = vunpack.c.l.bf16 %v714
  %v731 = vunpack.c.l.bf16 %v715
  %v732 = vunpack.c.l.bf16 %v716
  %v733 = vunpack.c.l.bf16 %v717
  %v734 = vunpack.c.l.bf16 %v718
  %v735 = vunpack.c.l.bf16 %v719
  %v736 = vunpack.c.l.bf16 %v720
  %v737 = vunpack.c.l.bf16 %v721
  %v738 = vunpack.c.l.bf16 %v722
  %v739 = vunpack.c.l.bf16 %v723
  %v740 = vunpack.c.l.bf16 %v724
  %v741 = vld [vmem:[#allocation2] sm:$0xf]
  %v742 = vld [vmem:[#allocation2 + $0x8] sm:$0xf]
  %v743 = vld [vmem:[#allocation2 + $0x10] sm:$0xf]
  %v744 = vld [vmem:[#allocation2 + $0x18] sm:$0xf]
  %v745 = vld [vmem:[#allocation2 + $0x20] sm:$0xf]
  %v746 = vld [vmem:[#allocation2 + $0x28] sm:$0xf]
  %v747 = vld [vmem:[#allocation2 + $0x30] sm:$0xf]
  %v748 = vld [vmem:[#allocation2 + $0x38] sm:$0xf]
  %v749 = vld [vmem:[#allocation2 + $0x50] sm:$0xf]
  %v750 = vld [vmem:[#allocation2 + $0x58] sm:$0xf]
  %v751 = vld [vmem:[#allocation2 + $0x60] sm:$0xf]
  %v752 = vld [vmem:[#allocation2 + $0x68] sm:$0xf]
  %v753 = vld [vmem:[#allocation2 + $0x70] sm:$0xf]
  %v754 = vld [vmem:[#allocation2 + $0x78] sm:$0xf]
  %v755 = vld [vmem:[#allocation2 + $0x80] sm:$0xf]
  %v756 = vld [vmem:[#allocation2 + $0x88] sm:$0xf]
  %757 = vst.msk [vmem:[#allocation4] sm:$0xf] %vm27, %v741
  %758 = vst.msk [vmem:[#allocation4 + $0x4] sm:$0xf] %vm27, %v742
  %759 = vst.msk [vmem:[#allocation4 + $0x8] sm:$0xf] %vm27, %v743
  %760 = vst.msk [vmem:[#allocation4 + $0xc] sm:$0xf] %vm27, %v744
  %761 = vst.msk [vmem:[#allocation4 + $0x10] sm:$0xf] %vm27, %v745
  %762 = vst.msk [vmem:[#allocation4 + $0x14] sm:$0xf] %vm27, %v746
  %763 = vst.msk [vmem:[#allocation4 + $0x18] sm:$0xf] %vm27, %v747
  %764 = vst.msk [vmem:[#allocation4 + $0x1c] sm:$0xf] %vm27, %v748
  %765 = vst.msk [vmem:[#allocation4 + $0x20] sm:$0xf] %vm27, %v749
  %766 = vst.msk [vmem:[#allocation4 + $0x24] sm:$0xf] %vm27, %v750
  %767 = vst.msk [vmem:[#allocation4 + $0x28] sm:$0xf] %vm27, %v751
  %768 = vst.msk [vmem:[#allocation4 + $0x2c] sm:$0xf] %vm27, %v752
  %769 = vst.msk [vmem:[#allocation4 + $0x30] sm:$0xf] %vm27, %v753
  %770 = vst.msk [vmem:[#allocation4 + $0x34] sm:$0xf] %vm27, %v754
  %771 = vst.msk [vmem:[#allocation4 + $0x38] sm:$0xf] %vm27, %v755
  %772 = vst.msk [vmem:[#allocation4 + $0x3c] sm:$0xf] %vm27, %v756
  %v773 = vld [vmem:[#allocation2] sm:$0xf]
  %v774 = vld [vmem:[#allocation2 + $0x4] sm:$0x1]
  %v775 = vld [vmem:[#allocation2 + $0x8] sm:$0xf]
  %v776 = vld [vmem:[#allocation2 + $0xc] sm:$0x1]
  %v777 = vld [vmem:[#allocation2 + $0x10] sm:$0xf]
  %v778 = vld [vmem:[#allocation2 + $0x14] sm:$0x1]
  %v779 = vld [vmem:[#allocation2 + $0x18] sm:$0xf]
  %v780 = vld [vmem:[#allocation2 + $0x1c] sm:$0x1]
  %v781 = vld [vmem:[#allocation2 + $0x20] sm:$0xf]
  %v782 = vld [vmem:[#allocation2 + $0x24] sm:$0x1]
  %v783 = vld [vmem:[#allocation2 + $0x28] sm:$0xf]
  %v784 = vld [vmem:[#allocation2 + $0x2c] sm:$0x1]
  %v785 = vld [vmem:[#allocation2 + $0x30] sm:$0xf]
  %v786 = vld [vmem:[#allocation2 + $0x34] sm:$0x1]
  %v787 = vld [vmem:[#allocation2 + $0x38] sm:$0xf]
  %v788 = vld [vmem:[#allocation2 + $0x3c] sm:$0x1]
  %v789 = vld [vmem:[#allocation2 + $0x50] sm:$0xf]
  %v790 = vld [vmem:[#allocation2 + $0x54] sm:$0x1]
  %v791 = vld [vmem:[#allocation2 + $0x58] sm:$0xf]
  %v792 = vld [vmem:[#allocation2 + $0x5c] sm:$0x1]
  %v793 = vld [vmem:[#allocation2 + $0x60] sm:$0xf]
  %v794 = vld [vmem:[#allocation2 + $0x64] sm:$0x1]
  %v795 = vld [vmem:[#allocation2 + $0x68] sm:$0xf]
  %v796 = vld [vmem:[#allocation2 + $0x6c] sm:$0x1]
  %v797 = vld [vmem:[#allocation2 + $0x70] sm:$0xf]
  %v798 = vld [vmem:[#allocation2 + $0x74] sm:$0x1]
  %v799 = vld [vmem:[#allocation2 + $0x78] sm:$0xf]
  %v800 = vld [vmem:[#allocation2 + $0x7c] sm:$0x1]
  %v801 = vld [vmem:[#allocation2 + $0x80] sm:$0xf]
  %v802 = vld [vmem:[#allocation2 + $0x84] sm:$0x1]
  %v803 = vld [vmem:[#allocation2 + $0x88] sm:$0xf]
  %v804 = vld [vmem:[#allocation2 + $0x8c] sm:$0x1]
  %vm805 = vsmask.f32 3328
  %vm806 = vsmask.f32 7440
  %vm807 = vmor %vm805, %vm806
  %v809 = vshrl.u32 %v773, 16
  %v811 = vrot.slane %v809, 4
  %v812 = vshll.u32 %v773, 16
  %v814 = vrot.slane %v812, 5
  %v815 = vor.u32 %v811, %v814
  %v816 = vrot.slane %v815, 4
  %v818 = vshll.u32 %v774, 16
  %v820 = vrot.slane %v818, 5
  %v821 = vsel %vm807, %v816, %v820
  %v823 = vshrl.u32 %v775, 16
  %v825 = vrot.slane %v823, 4
  %v826 = vshll.u32 %v775, 16
  %v828 = vrot.slane %v826, 5
  %v829 = vor.u32 %v825, %v828
  %v830 = vrot.slane %v829, 4
  %v832 = vshll.u32 %v776, 16
  %v834 = vrot.slane %v832, 5
  %v835 = vsel %vm807, %v830, %v834
  %v837 = vshrl.u32 %v777, 16
  %v839 = vrot.slane %v837, 4
  %v840 = vshll.u32 %v777, 16
  %v842 = vrot.slane %v840, 5
  %v843 = vor.u32 %v839, %v842
  %v844 = vrot.slane %v843, 4
  %v846 = vshll.u32 %v778, 16
  %v848 = vrot.slane %v846, 5
  %v849 = vsel %vm807, %v844, %v848
  %v851 = vshrl.u32 %v779, 16
  %v853 = vrot.slane %v851, 4
  %v854 = vshll.u32 %v779, 16
  %v856 = vrot.slane %v854, 5
  %v857 = vor.u32 %v853, %v856
  %v858 = vrot.slane %v857, 4
  %v860 = vshll.u32 %v780, 16
  %v862 = vrot.slane %v860, 5
  %v863 = vsel %vm807, %v858, %v862
  %v865 = vshrl.u32 %v781, 16
  %v867 = vrot.slane %v865, 4
  %v868 = vshll.u32 %v781, 16
  %v870 = vrot.slane %v868, 5
  %v871 = vor.u32 %v867, %v870
  %v872 = vrot.slane %v871, 4
  %v874 = vshll.u32 %v782, 16
  %v876 = vrot.slane %v874, 5
  %v877 = vsel %vm807, %v872, %v876
  %v879 = vshrl.u32 %v783, 16
  %v881 = vrot.slane %v879, 4
  %v882 = vshll.u32 %v783, 16
  %v884 = vrot.slane %v882, 5
  %v885 = vor.u32 %v881, %v884
  %v886 = vrot.slane %v885, 4
  %v888 = vshll.u32 %v784, 16
  %v890 = vrot.slane %v888, 5
  %v891 = vsel %vm807, %v886, %v890
  %v893 = vshrl.u32 %v785, 16
  %v895 = vrot.slane %v893, 4
  %v896 = vshll.u32 %v785, 16
  %v898 = vrot.slane %v896, 5
  %v899 = vor.u32 %v895, %v898
  %v900 = vrot.slane %v899, 4
  %v902 = vshll.u32 %v786, 16
  %v904 = vrot.slane %v902, 5
  %v905 = vsel %vm807, %v900, %v904
  %v907 = vshrl.u32 %v787, 16
  %v909 = vrot.slane %v907, 4
  %v910 = vshll.u32 %v787, 16
  %v912 = vrot.slane %v910, 5
  %v913 = vor.u32 %v909, %v912
  %v914 = vrot.slane %v913, 4
  %v916 = vshll.u32 %v788, 16
  %v918 = vrot.slane %v916, 5
  %v919 = vsel %vm807, %v914, %v918
  %v921 = vshrl.u32 %v789, 16
  %v923 = vrot.slane %v921, 4
  %v924 = vshll.u32 %v789, 16
  %v926 = vrot.slane %v924, 5
  %v927 = vor.u32 %v923, %v926
  %v928 = vrot.slane %v927, 4
  %v930 = vshll.u32 %v790, 16
  %v932 = vrot.slane %v930, 5
  %v933 = vsel %vm807, %v928, %v932
  %v935 = vshrl.u32 %v791, 16
  %v937 = vrot.slane %v935, 4
  %v938 = vshll.u32 %v791, 16
  %v940 = vrot.slane %v938, 5
  %v941 = vor.u32 %v937, %v940
  %v942 = vrot.slane %v941, 4
  %v944 = vshll.u32 %v792, 16
  %v946 = vrot.slane %v944, 5
  %v947 = vsel %vm807, %v942, %v946
  %v949 = vshrl.u32 %v793, 16
  %v951 = vrot.slane %v949, 4
  %v952 = vshll.u32 %v793, 16
  %v954 = vrot.slane %v952, 5
  %v955 = vor.u32 %v951, %v954
  %v956 = vrot.slane %v955, 4
  %v958 = vshll.u32 %v794, 16
  %v960 = vrot.slane %v958, 5
  %v961 = vsel %vm807, %v956, %v960
  %v963 = vshrl.u32 %v795, 16
  %v965 = vrot.slane %v963, 4
  %v966 = vshll.u32 %v795, 16
  %v968 = vrot.slane %v966, 5
  %v969 = vor.u32 %v965, %v968
  %v970 = vrot.slane %v969, 4
  %v972 = vshll.u32 %v796, 16
  %v974 = vrot.slane %v972, 5
  %v975 = vsel %vm807, %v970, %v974
  %v977 = vshrl.u32 %v797, 16
  %v979 = vrot.slane %v977, 4
  %v980 = vshll.u32 %v797, 16
  %v982 = vrot.slane %v980, 5
  %v983 = vor.u32 %v979, %v982
  %v984 = vrot.slane %v983, 4
  %v986 = vshll.u32 %v798, 16
  %v988 = vrot.slane %v986, 5
  %v989 = vsel %vm807, %v984, %v988
  %v991 = vshrl.u32 %v799, 16
  %v993 = vrot.slane %v991, 4
  %v994 = vshll.u32 %v799, 16
  %v996 = vrot.slane %v994, 5
  %v997 = vor.u32 %v993, %v996
  %v998 = vrot.slane %v997, 4
  %v1000 = vshll.u32 %v800, 16
  %v1002 = vrot.slane %v1000, 5
  %v1003 = vsel %vm807, %v998, %v1002
  %v1005 = vshrl.u32 %v801, 16
  %v1007 = vrot.slane %v1005, 4
  %v1008 = vshll.u32 %v801, 16
  %v1010 = vrot.slane %v1008, 5
  %v1011 = vor.u32 %v1007, %v1010
  %v1012 = vrot.slane %v1011, 4
  %v1014 = vshll.u32 %v802, 16
  %v1016 = vrot.slane %v1014, 5
  %v1017 = vsel %vm807, %v1012, %v1016
  %v1019 = vshrl.u32 %v803, 16
  %v1021 = vrot.slane %v1019, 4
  %v1022 = vshll.u32 %v803, 16
  %v1024 = vrot.slane %v1022, 5
  %v1025 = vor.u32 %v1021, %v1024
  %v1026 = vrot.slane %v1025, 4
  %v1028 = vshll.u32 %v804, 16
  %v1030 = vrot.slane %v1028, 5
  %v1031 = vsel %vm807, %v1026, %v1030
  %1032 = vrot.lane.b32.xlu0 %v821, 8
  %v1033 = vpop.permute.xlu0 %1032
  %1034 = vrot.lane.b32.xlu0 %v835, 8
  %v1035 = vpop.permute.xlu0 %1034
  %1036 = vrot.lane.b32.xlu0 %v849, 8
  %v1037 = vpop.permute.xlu0 %1036
  %1038 = vrot.lane.b32.xlu0 %v863, 8
  %v1039 = vpop.permute.xlu0 %1038
  %1040 = vrot.lane.b32.xlu0 %v877, 8
  %v1041 = vpop.permute.xlu0 %1040
  %1042 = vrot.lane.b32.xlu0 %v891, 8
  %v1043 = vpop.permute.xlu0 %1042
  %1044 = vrot.lane.b32.xlu0 %v905, 8
  %v1045 = vpop.permute.xlu0 %1044
  %1046 = vrot.lane.b32.xlu0 %v919, 8
  %v1047 = vpop.permute.xlu0 %1046
  %1048 = vrot.lane.b32.xlu0 %v933, 8
  %v1049 = vpop.permute.xlu0 %1048
  %1050 = vrot.lane.b32.xlu0 %v947, 8
  %v1051 = vpop.permute.xlu0 %1050
  %1052 = vrot.lane.b32.xlu0 %v961, 8
  %v1053 = vpop.permute.xlu0 %1052
  %1054 = vrot.lane.b32.xlu0 %v975, 8
  %v1055 = vpop.permute.xlu0 %1054
  %1056 = vrot.lane.b32.xlu0 %v989, 8
  %v1057 = vpop.permute.xlu0 %1056
  %1058 = vrot.lane.b32.xlu0 %v1003, 8
  %v1059 = vpop.permute.xlu0 %1058
  %1060 = vrot.lane.b32.xlu0 %v1017, 8
  %v1061 = vpop.permute.xlu0 %1060
  %1062 = vrot.lane.b32.xlu0 %v1031, 8
  %v1063 = vpop.permute.xlu0 %1062
  %vm1080 = vcmask 126016
  %1081 = vst.msk [vmem:[#allocation4] sm:$0xf] %vm1080, %v1033
  %1082 = vst.msk [vmem:[#allocation4 + $0x4] sm:$0xf] %vm1080, %v1035
  %1083 = vst.msk [vmem:[#allocation4 + $0x8] sm:$0xf] %vm1080, %v1037
  %1084 = vst.msk [vmem:[#allocation4 + $0xc] sm:$0xf] %vm1080, %v1039
  %1085 = vst.msk [vmem:[#allocation4 + $0x10] sm:$0xf] %vm1080, %v1041
  %1086 = vst.msk [vmem:[#allocation4 + $0x14] sm:$0xf] %vm1080, %v1043
  %1087 = vst.msk [vmem:[#allocation4 + $0x18] sm:$0xf] %vm1080, %v1045
  %1088 = vst.msk [vmem:[#allocation4 + $0x1c] sm:$0xf] %vm1080, %v1047
  %1089 = vst.msk [vmem:[#allocation4 + $0x20] sm:$0xf] %vm1080, %v1049
  %1090 = vst.msk [vmem:[#allocation4 + $0x24] sm:$0xf] %vm1080, %v1051
  %1091 = vst.msk [vmem:[#allocation4 + $0x28] sm:$0xf] %vm1080, %v1053
  %1092 = vst.msk [vmem:[#allocation4 + $0x2c] sm:$0xf] %vm1080, %v1055
  %1093 = vst.msk [vmem:[#allocation4 + $0x30] sm:$0xf] %vm1080, %v1057
  %1094 = vst.msk [vmem:[#allocation4 + $0x34] sm:$0xf] %vm1080, %v1059
  %1095 = vst.msk [vmem:[#allocation4 + $0x38] sm:$0xf] %vm1080, %v1061
  %1096 = vst.msk [vmem:[#allocation4 + $0x3c] sm:$0xf] %vm1080, %v1063
  %v1097 = vld [vmem:[#allocation2] sm:$0xe]
  %v1098 = vld [vmem:[#allocation2 + $0x4] sm:$0x1]
  %v1099 = vld [vmem:[#allocation2 + $0x8] sm:$0xe]
  %v1100 = vld [vmem:[#allocation2 + $0xc] sm:$0x1]
  %v1101 = vld [vmem:[#allocation2 + $0x10] sm:$0xe]
  %v1102 = vld [vmem:[#allocation2 + $0x14] sm:$0x1]
  %v1103 = vld [vmem:[#allocation2 + $0x18] sm:$0xe]
  %v1104 = vld [vmem:[#allocation2 + $0x1c] sm:$0x1]
  %v1105 = vld [vmem:[#allocation2 + $0x20] sm:$0xe]
  %v1106 = vld [vmem:[#allocation2 + $0x24] sm:$0x1]
  %v1107 = vld [vmem:[#allocation2 + $0x28] sm:$0xe]
  %v1108 = vld [vmem:[#allocation2 + $0x2c] sm:$0x1]
  %v1109 = vld [vmem:[#allocation2 + $0x30] sm:$0xe]
  %v1110 = vld [vmem:[#allocation2 + $0x34] sm:$0x1]
  %v1111 = vld [vmem:[#allocation2 + $0x38] sm:$0xe]
  %v1112 = vld [vmem:[#allocation2 + $0x3c] sm:$0x1]
  %v1113 = vld [vmem:[#allocation2 + $0x50] sm:$0xe]
  %v1114 = vld [vmem:[#allocation2 + $0x54] sm:$0x1]
  %v1115 = vld [vmem:[#allocation2 + $0x58] sm:$0xe]
  %v1116 = vld [vmem:[#allocation2 + $0x5c] sm:$0x1]
  %v1117 = vld [vmem:[#allocation2 + $0x60] sm:$0xe]
  %v1118 = vld [vmem:[#allocation2 + $0x64] sm:$0x1]
  %v1119 = vld [vmem:[#allocation2 + $0x68] sm:$0xe]
  %v1120 = vld [vmem:[#allocation2 + $0x6c] sm:$0x1]
  %v1121 = vld [vmem:[#allocation2 + $0x70] sm:$0xe]
  %v1122 = vld [vmem:[#allocation2 + $0x74] sm:$0x1]
  %v1123 = vld [vmem:[#allocation2 + $0x78] sm:$0xe]
  %v1124 = vld [vmem:[#allocation2 + $0x7c] sm:$0x1]
  %v1125 = vld [vmem:[#allocation2 + $0x80] sm:$0xe]
  %v1126 = vld [vmem:[#allocation2 + $0x84] sm:$0x1]
  %v1127 = vld [vmem:[#allocation2 + $0x88] sm:$0xe]
  %v1128 = vld [vmem:[#allocation2 + $0x8c] sm:$0x1]
  %vm1161 = vcmask 1042432
  %vm1162 = vcmask 1046532
  %vm1163 = vmor %vm1161, %vm1162
  %v1164 = vrot.slane %v1097, 5
  %v1165 = vrot.slane %v1164, 4
  %v1166 = vrot.slane %v1098, 5
  %v1167 = vsel %vm1163, %v1165, %v1166
  %v1168 = vrot.slane %v1099, 5
  %v1169 = vrot.slane %v1168, 4
  %v1170 = vrot.slane %v1100, 5
  %v1171 = vsel %vm1163, %v1169, %v1170
  %v1172 = vrot.slane %v1101, 5
  %v1173 = vrot.slane %v1172, 4
  %v1174 = vrot.slane %v1102, 5
  %v1175 = vsel %vm1163, %v1173, %v1174
  %v1176 = vrot.slane %v1103, 5
  %v1177 = vrot.slane %v1176, 4
  %v1178 = vrot.slane %v1104, 5
  %v1179 = vsel %vm1163, %v1177, %v1178
  %v1180 = vrot.slane %v1105, 5
  %v1181 = vrot.slane %v1180, 4
  %v1182 = vrot.slane %v1106, 5
  %v1183 = vsel %vm1163, %v1181, %v1182
  %v1184 = vrot.slane %v1107, 5
  %v1185 = vrot.slane %v1184, 4
  %v1186 = vrot.slane %v1108, 5
  %v1187 = vsel %vm1163, %v1185, %v1186
  %v1188 = vrot.slane %v1109, 5
  %v1189 = vrot.slane %v1188, 4
  %v1190 = vrot.slane %v1110, 5
  %v1191 = vsel %vm1163, %v1189, %v1190
  %v1192 = vrot.slane %v1111, 5
  %v1193 = vrot.slane %v1192, 4
  %v1194 = vrot.slane %v1112, 5
  %v1195 = vsel %vm1163, %v1193, %v1194
  %v1196 = vrot.slane %v1113, 5
  %v1197 = vrot.slane %v1196, 4
  %v1198 = vrot.slane %v1114, 5
  %v1199 = vsel %vm1163, %v1197, %v1198
  %v1200 = vrot.slane %v1115, 5
  %v1201 = vrot.slane %v1200, 4
  %v1202 = vrot.slane %v1116, 5
  %v1203 = vsel %vm1163, %v1201, %v1202
  %v1204 = vrot.slane %v1117, 5
  %v1205 = vrot.slane %v1204, 4
  %v1206 = vrot.slane %v1118, 5
  %v1207 = vsel %vm1163, %v1205, %v1206
  %v1208 = vrot.slane %v1119, 5
  %v1209 = vrot.slane %v1208, 4
  %v1210 = vrot.slane %v1120, 5
  %v1211 = vsel %vm1163, %v1209, %v1210
  %v1212 = vrot.slane %v1121, 5
  %v1213 = vrot.slane %v1212, 4
  %v1214 = vrot.slane %v1122, 5
  %v1215 = vsel %vm1163, %v1213, %v1214
  %v1216 = vrot.slane %v1123, 5
  %v1217 = vrot.slane %v1216, 4
  %v1218 = vrot.slane %v1124, 5
  %v1219 = vsel %vm1163, %v1217, %v1218
  %v1220 = vrot.slane %v1125, 5
  %v1221 = vrot.slane %v1220, 4
  %v1222 = vrot.slane %v1126, 5
  %v1223 = vsel %vm1163, %v1221, %v1222
  %v1224 = vrot.slane %v1127, 5
  %v1225 = vrot.slane %v1224, 4
  %v1226 = vrot.slane %v1128, 5
  %v1227 = vsel %vm1163, %v1225, %v1226
  %1228 = vrot.lane.b32.xlu0 %v1167, 16
  %v1229 = vpop.permute.xlu0 %1228
  %1230 = vrot.lane.b32.xlu0 %v1171, 16
  %v1231 = vpop.permute.xlu0 %1230
  %1232 = vrot.lane.b32.xlu0 %v1175, 16
  %v1233 = vpop.permute.xlu0 %1232
  %1234 = vrot.lane.b32.xlu0 %v1179, 16
  %v1235 = vpop.permute.xlu0 %1234
  %1236 = vrot.lane.b32.xlu0 %v1183, 16
  %v1237 = vpop.permute.xlu0 %1236
  %1238 = vrot.lane.b32.xlu0 %v1187, 16
  %v1239 = vpop.permute.xlu0 %1238
  %1240 = vrot.lane.b32.xlu0 %v1191, 16
  %v1241 = vpop.permute.xlu0 %1240
  %1242 = vrot.lane.b32.xlu0 %v1195, 16
  %v1243 = vpop.permute.xlu0 %1242
  %1244 = vrot.lane.b32.xlu0 %v1199, 16
  %v1245 = vpop.permute.xlu0 %1244
  %1246 = vrot.lane.b32.xlu0 %v1203, 16
  %v1247 = vpop.permute.xlu0 %1246
  %1248 = vrot.lane.b32.xlu0 %v1207, 16
  %v1249 = vpop.permute.xlu0 %1248
  %1250 = vrot.lane.b32.xlu0 %v1211, 16
  %v1251 = vpop.permute.xlu0 %1250
  %1252 = vrot.lane.b32.xlu0 %v1215, 16
  %v1253 = vpop.permute.xlu0 %1252
  %1254 = vrot.lane.b32.xlu0 %v1219, 16
  %v1255 = vpop.permute.xlu0 %1254
  %1256 = vrot.lane.b32.xlu0 %v1223, 16
  %v1257 = vpop.permute.xlu0 %1256
  %1258 = vrot.lane.b32.xlu0 %v1227, 16
  %v1259 = vpop.permute.xlu0 %1258
  %vm1276 = vcmask 191616
  %1277 = vst.msk [vmem:[#allocation4] sm:$0xf] %vm1276, %v1229
  %1278 = vst.msk [vmem:[#allocation4 + $0x4] sm:$0xf] %vm1276, %v1231
  %1279 = vst.msk [vmem:[#allocation4 + $0x8] sm:$0xf] %vm1276, %v1233
  %1280 = vst.msk [vmem:[#allocation4 + $0xc] sm:$0xf] %vm1276, %v1235
  %1281 = vst.msk [vmem:[#allocation4 + $0x10] sm:$0xf] %vm1276, %v1237
  %1282 = vst.msk [vmem:[#allocation4 + $0x14] sm:$0xf] %vm1276, %v1239
  %1283 = vst.msk [vmem:[#allocation4 + $0x18] sm:$0xf] %vm1276, %v1241
  %1284 = vst.msk [vmem:[#allocation4 + $0x1c] sm:$0xf] %vm1276, %v1243
  %1285 = vst.msk [vmem:[#allocation4 + $0x20] sm:$0xf] %vm1276, %v1245
  %1286 = vst.msk [vmem:[#allocation4 + $0x24] sm:$0xf] %vm1276, %v1247
  %1287 = vst.msk [vmem:[#allocation4 + $0x28] sm:$0xf] %vm1276, %v1249
  %1288 = vst.msk [vmem:[#allocation4 + $0x2c] sm:$0xf] %vm1276, %v1251
  %1289 = vst.msk [vmem:[#allocation4 + $0x30] sm:$0xf] %vm1276, %v1253
  %1290 = vst.msk [vmem:[#allocation4 + $0x34] sm:$0xf] %vm1276, %v1255
  %1291 = vst.msk [vmem:[#allocation4 + $0x38] sm:$0xf] %vm1276, %v1257
  %1292 = vst.msk [vmem:[#allocation4 + $0x3c] sm:$0xf] %vm1276, %v1259
  %v1293 = vld [vmem:[%s610] sm:$0xf]
  %v1294 = vld [vmem:[%s610 + $0x8] sm:$0xf]
  %v1295 = vld [vmem:[%s610 + $0x10] sm:$0xf]
  %v1296 = vld [vmem:[%s610 + $0x18] sm:$0xf]
  %v1297 = vld [vmem:[%s610 + $0x20] sm:$0xf]
  %v1298 = vld [vmem:[%s610 + $0x28] sm:$0xf]
  %v1299 = vld [vmem:[%s610 + $0x30] sm:$0xf]
  %v1300 = vld [vmem:[%s610 + $0x38] sm:$0xf]
  %v1301 = vld [vmem:[%s610 + $0x50] sm:$0xf]
  %v1302 = vld [vmem:[%s610 + $0x58] sm:$0xf]
  %v1303 = vld [vmem:[%s610 + $0x60] sm:$0xf]
  %v1304 = vld [vmem:[%s610 + $0x68] sm:$0xf]
  %v1305 = vld [vmem:[%s610 + $0x70] sm:$0xf]
  %v1306 = vld [vmem:[%s610 + $0x78] sm:$0xf]
  %v1307 = vld [vmem:[%s610 + $0x80] sm:$0xf]
  %v1308 = vld [vmem:[%s610 + $0x88] sm:$0xf]
  %1325 = vrot.lane.b32.xlu0 %v1293, 24
  %v1326 = vpop.permute.xlu0 %1325
  %1327 = vrot.lane.b32.xlu0 %v1294, 24
  %v1328 = vpop.permute.xlu0 %1327
  %1329 = vrot.lane.b32.xlu0 %v1295, 24
  %v1330 = vpop.permute.xlu0 %1329
  %1331 = vrot.lane.b32.xlu0 %v1296, 24
  %v1332 = vpop.permute.xlu0 %1331
  %1333 = vrot.lane.b32.xlu0 %v1297, 24
  %v1334 = vpop.permute.xlu0 %1333
  %1335 = vrot.lane.b32.xlu0 %v1298, 24
  %v1336 = vpop.permute.xlu0 %1335
  %1337 = vrot.lane.b32.xlu0 %v1299, 24
  %v1338 = vpop.permute.xlu0 %1337
  %1339 = vrot.lane.b32.xlu0 %v1300, 24
  %v1340 = vpop.permute.xlu0 %1339
  %1341 = vrot.lane.b32.xlu0 %v1301, 24
  %v1342 = vpop.permute.xlu0 %1341
  %1343 = vrot.lane.b32.xlu0 %v1302, 24
  %v1344 = vpop.permute.xlu0 %1343
  %1345 = vrot.lane.b32.xlu0 %v1303, 24
  %v1346 = vpop.permute.xlu0 %1345
  %1347 = vrot.lane.b32.xlu0 %v1304, 24
  %v1348 = vpop.permute.xlu0 %1347
  %1349 = vrot.lane.b32.xlu0 %v1305, 24
  %v1350 = vpop.permute.xlu0 %1349
  %1351 = vrot.lane.b32.xlu0 %v1306, 24
  %v1352 = vpop.permute.xlu0 %1351
  %1353 = vrot.lane.b32.xlu0 %v1307, 24
  %v1354 = vpop.permute.xlu0 %1353
  %1355 = vrot.lane.b32.xlu0 %v1308, 24
  %v1356 = vpop.permute.xlu0 %1355
  %vm1373 = vcmask 257216
  %1374 = vst.msk [vmem:[#allocation4] sm:$0xf] %vm1373, %v1326
  %1375 = vst.msk [vmem:[#allocation4 + $0x4] sm:$0xf] %vm1373, %v1328
  %1376 = vst.msk [vmem:[#allocation4 + $0x8] sm:$0xf] %vm1373, %v1330
  %1377 = vst.msk [vmem:[#allocation4 + $0xc] sm:$0xf] %vm1373, %v1332
  %1378 = vst.msk [vmem:[#allocation4 + $0x10] sm:$0xf] %vm1373, %v1334
  %1379 = vst.msk [vmem:[#allocation4 + $0x14] sm:$0xf] %vm1373, %v1336
  %1380 = vst.msk [vmem:[#allocation4 + $0x18] sm:$0xf] %vm1373, %v1338
  %1381 = vst.msk [vmem:[#allocation4 + $0x1c] sm:$0xf] %vm1373, %v1340
  %1382 = vst.msk [vmem:[#allocation4 + $0x20] sm:$0xf] %vm1373, %v1342
  %1383 = vst.msk [vmem:[#allocation4 + $0x24] sm:$0xf] %vm1373, %v1344
  %1384 = vst.msk [vmem:[#allocation4 + $0x28] sm:$0xf] %vm1373, %v1346
  %1385 = vst.msk [vmem:[#allocation4 + $0x2c] sm:$0xf] %vm1373, %v1348
  %1386 = vst.msk [vmem:[#allocation4 + $0x30] sm:$0xf] %vm1373, %v1350
  %1387 = vst.msk [vmem:[#allocation4 + $0x34] sm:$0xf] %vm1373, %v1352
  %1388 = vst.msk [vmem:[#allocation4 + $0x38] sm:$0xf] %vm1373, %v1354
  %1389 = vst.msk [vmem:[#allocation4 + $0x3c] sm:$0xf] %vm1373, %v1356
  %v1390 = vld [vmem:[%s610] sm:$0xf]
  %v1391 = vld [vmem:[%s610 + $0x4] sm:$0x1]
  %v1392 = vld [vmem:[%s610 + $0x8] sm:$0xf]
  %v1393 = vld [vmem:[%s610 + $0xc] sm:$0x1]
  %v1394 = vld [vmem:[%s610 + $0x10] sm:$0xf]
  %v1395 = vld [vmem:[%s610 + $0x14] sm:$0x1]
  %v1396 = vld [vmem:[%s610 + $0x18] sm:$0xf]
  %v1397 = vld [vmem:[%s610 + $0x1c] sm:$0x1]
  %v1398 = vld [vmem:[%s610 + $0x20] sm:$0xf]
  %v1399 = vld [vmem:[%s610 + $0x24] sm:$0x1]
  %v1400 = vld [vmem:[%s610 + $0x28] sm:$0xf]
  %v1401 = vld [vmem:[%s610 + $0x2c] sm:$0x1]
  %v1402 = vld [vmem:[%s610 + $0x30] sm:$0xf]
  %v1403 = vld [vmem:[%s610 + $0x34] sm:$0x1]
  %v1404 = vld [vmem:[%s610 + $0x38] sm:$0xf]
  %v1405 = vld [vmem:[%s610 + $0x3c] sm:$0x1]
  %v1406 = vld [vmem:[%s610 + $0x50] sm:$0xf]
  %v1407 = vld [vmem:[%s610 + $0x54] sm:$0x1]
  %v1408 = vld [vmem:[%s610 + $0x58] sm:$0xf]
  %v1409 = vld [vmem:[%s610 + $0x5c] sm:$0x1]
  %v1410 = vld [vmem:[%s610 + $0x60] sm:$0xf]
  %v1411 = vld [vmem:[%s610 + $0x64] sm:$0x1]
  %v1412 = vld [vmem:[%s610 + $0x68] sm:$0xf]
  %v1413 = vld [vmem:[%s610 + $0x6c] sm:$0x1]
  %v1414 = vld [vmem:[%s610 + $0x70] sm:$0xf]
  %v1415 = vld [vmem:[%s610 + $0x74] sm:$0x1]
  %v1416 = vld [vmem:[%s610 + $0x78] sm:$0xf]
  %v1417 = vld [vmem:[%s610 + $0x7c] sm:$0x1]
  %v1418 = vld [vmem:[%s610 + $0x80] sm:$0xf]
  %v1419 = vld [vmem:[%s610 + $0x84] sm:$0x1]
  %v1420 = vld [vmem:[%s610 + $0x88] sm:$0xf]
  %v1421 = vld [vmem:[%s610 + $0x8c] sm:$0x1]
  %v1423 = vshrl.u32 %v1390, 16
  %v1425 = vrot.slane %v1423, 4
  %v1426 = vshll.u32 %v1390, 16
  %v1428 = vrot.slane %v1426, 5
  %v1429 = vor.u32 %v1425, %v1428
  %v1430 = vrot.slane %v1429, 4
  %v1432 = vshll.u32 %v1391, 16
  %v1434 = vrot.slane %v1432, 5
  %v1435 = vsel %vm807, %v1430, %v1434
  %v1437 = vshrl.u32 %v1392, 16
  %v1439 = vrot.slane %v1437, 4
  %v1440 = vshll.u32 %v1392, 16
  %v1442 = vrot.slane %v1440, 5
  %v1443 = vor.u32 %v1439, %v1442
  %v1444 = vrot.slane %v1443, 4
  %v1446 = vshll.u32 %v1393, 16
  %v1448 = vrot.slane %v1446, 5
  %v1449 = vsel %vm807, %v1444, %v1448
  %v1451 = vshrl.u32 %v1394, 16
  %v1453 = vrot.slane %v1451, 4
  %v1454 = vshll.u32 %v1394, 16
  %v1456 = vrot.slane %v1454, 5
  %v1457 = vor.u32 %v1453, %v1456
  %v1458 = vrot.slane %v1457, 4
  %v1460 = vshll.u32 %v1395, 16
  %v1462 = vrot.slane %v1460, 5
  %v1463 = vsel %vm807, %v1458, %v1462
  %v1465 = vshrl.u32 %v1396, 16
  %v1467 = vrot.slane %v1465, 4
  %v1468 = vshll.u32 %v1396, 16
  %v1470 = vrot.slane %v1468, 5
  %v1471 = vor.u32 %v1467, %v1470
  %v1472 = vrot.slane %v1471, 4
  %v1474 = vshll.u32 %v1397, 16
  %v1476 = vrot.slane %v1474, 5
  %v1477 = vsel %vm807, %v1472, %v1476
  %v1479 = vshrl.u32 %v1398, 16
  %v1481 = vrot.slane %v1479, 4
  %v1482 = vshll.u32 %v1398, 16
  %v1484 = vrot.slane %v1482, 5
  %v1485 = vor.u32 %v1481, %v1484
  %v1486 = vrot.slane %v1485, 4
  %v1488 = vshll.u32 %v1399, 16
  %v1490 = vrot.slane %v1488, 5
  %v1491 = vsel %vm807, %v1486, %v1490
  %v1493 = vshrl.u32 %v1400, 16
  %v1495 = vrot.slane %v1493, 4
  %v1496 = vshll.u32 %v1400, 16
  %v1498 = vrot.slane %v1496, 5
  %v1499 = vor.u32 %v1495, %v1498
  %v1500 = vrot.slane %v1499, 4
  %v1502 = vshll.u32 %v1401, 16
  %v1504 = vrot.slane %v1502, 5
  %v1505 = vsel %vm807, %v1500, %v1504
  %v1507 = vshrl.u32 %v1402, 16
  %v1509 = vrot.slane %v1507, 4
  %v1510 = vshll.u32 %v1402, 16
  %v1512 = vrot.slane %v1510, 5
  %v1513 = vor.u32 %v1509, %v1512
  %v1514 = vrot.slane %v1513, 4
  %v1516 = vshll.u32 %v1403, 16
  %v1518 = vrot.slane %v1516, 5
  %v1519 = vsel %vm807, %v1514, %v1518
  %v1521 = vshrl.u32 %v1404, 16
  %v1523 = vrot.slane %v1521, 4
  %v1524 = vshll.u32 %v1404, 16
  %v1526 = vrot.slane %v1524, 5
  %v1527 = vor.u32 %v1523, %v1526
  %v1528 = vrot.slane %v1527, 4
  %v1530 = vshll.u32 %v1405, 16
  %v1532 = vrot.slane %v1530, 5
  %v1533 = vsel %vm807, %v1528, %v1532
  %v1535 = vshrl.u32 %v1406, 16
  %v1537 = vrot.slane %v1535, 4
  %v1538 = vshll.u32 %v1406, 16
  %v1540 = vrot.slane %v1538, 5
  %v1541 = vor.u32 %v1537, %v1540
  %v1542 = vrot.slane %v1541, 4
  %v1544 = vshll.u32 %v1407, 16
  %v1546 = vrot.slane %v1544, 5
  %v1547 = vsel %vm807, %v1542, %v1546
  %v1549 = vshrl.u32 %v1408, 16
  %v1551 = vrot.slane %v1549, 4
  %v1552 = vshll.u32 %v1408, 16
  %v1554 = vrot.slane %v1552, 5
  %v1555 = vor.u32 %v1551, %v1554
  %v1556 = vrot.slane %v1555, 4
  %v1558 = vshll.u32 %v1409, 16
  %v1560 = vrot.slane %v1558, 5
  %v1561 = vsel %vm807, %v1556, %v1560
  %v1563 = vshrl.u32 %v1410, 16
  %v1565 = vrot.slane %v1563, 4
  %v1566 = vshll.u32 %v1410, 16
  %v1568 = vrot.slane %v1566, 5
  %v1569 = vor.u32 %v1565, %v1568
  %v1570 = vrot.slane %v1569, 4
  %v1572 = vshll.u32 %v1411, 16
  %v1574 = vrot.slane %v1572, 5
  %v1575 = vsel %vm807, %v1570, %v1574
  %v1577 = vshrl.u32 %v1412, 16
  %v1579 = vrot.slane %v1577, 4
  %v1580 = vshll.u32 %v1412, 16
  %v1582 = vrot.slane %v1580, 5
  %v1583 = vor.u32 %v1579, %v1582
  %v1584 = vrot.slane %v1583, 4
  %v1586 = vshll.u32 %v1413, 16
  %v1588 = vrot.slane %v1586, 5
  %v1589 = vsel %vm807, %v1584, %v1588
  %v1591 = vshrl.u32 %v1414, 16
  %v1593 = vrot.slane %v1591, 4
  %v1594 = vshll.u32 %v1414, 16
  %v1596 = vrot.slane %v1594, 5
  %v1597 = vor.u32 %v1593, %v1596
  %v1598 = vrot.slane %v1597, 4
  %v1600 = vshll.u32 %v1415, 16
  %v1602 = vrot.slane %v1600, 5
  %v1603 = vsel %vm807, %v1598, %v1602
  %v1605 = vshrl.u32 %v1416, 16
  %v1607 = vrot.slane %v1605, 4
  %v1608 = vshll.u32 %v1416, 16
  %v1610 = vrot.slane %v1608, 5
  %v1611 = vor.u32 %v1607, %v1610
  %v1612 = vrot.slane %v1611, 4
  %v1614 = vshll.u32 %v1417, 16
  %v1616 = vrot.slane %v1614, 5
  %v1617 = vsel %vm807, %v1612, %v1616
  %v1619 = vshrl.u32 %v1418, 16
  %v1621 = vrot.slane %v1619, 4
  %v1622 = vshll.u32 %v1418, 16
  %v1624 = vrot.slane %v1622, 5
  %v1625 = vor.u32 %v1621, %v1624
  %v1626 = vrot.slane %v1625, 4
  %v1628 = vshll.u32 %v1419, 16
  %v1630 = vrot.slane %v1628, 5
  %v1631 = vsel %vm807, %v1626, %v1630
  %v1633 = vshrl.u32 %v1420, 16
  %v1635 = vrot.slane %v1633, 4
  %v1636 = vshll.u32 %v1420, 16
  %v1638 = vrot.slane %v1636, 5
  %v1639 = vor.u32 %v1635, %v1638
  %v1640 = vrot.slane %v1639, 4
  %v1642 = vshll.u32 %v1421, 16
  %v1644 = vrot.slane %v1642, 5
  %v1645 = vsel %vm807, %v1640, %v1644
  %1646 = vrot.lane.b32.xlu0 %v1435, 32
  %v1647 = vpop.permute.xlu0 %1646
  %1648 = vrot.lane.b32.xlu0 %v1449, 32
  %v1649 = vpop.permute.xlu0 %1648
  %1650 = vrot.lane.b32.xlu0 %v1463, 32
  %v1651 = vpop.permute.xlu0 %1650
  %1652 = vrot.lane.b32.xlu0 %v1477, 32
  %v1653 = vpop.permute.xlu0 %1652
  %1654 = vrot.lane.b32.xlu0 %v1491, 32
  %v1655 = vpop.permute.xlu0 %1654
  %1656 = vrot.lane.b32.xlu0 %v1505, 32
  %v1657 = vpop.permute.xlu0 %1656
  %1658 = vrot.lane.b32.xlu0 %v1519, 32
  %v1659 = vpop.permute.xlu0 %1658
  %1660 = vrot.lane.b32.xlu0 %v1533, 32
  %v1661 = vpop.permute.xlu0 %1660
  %1662 = vrot.lane.b32.xlu0 %v1547, 32
  %v1663 = vpop.permute.xlu0 %1662
  %1664 = vrot.lane.b32.xlu0 %v1561, 32
  %v1665 = vpop.permute.xlu0 %1664
  %1666 = vrot.lane.b32.xlu0 %v1575, 32
  %v1667 = vpop.permute.xlu0 %1666
  %1668 = vrot.lane.b32.xlu0 %v1589, 32
  %v1669 = vpop.permute.xlu0 %1668
  %1670 = vrot.lane.b32.xlu0 %v1603, 32
  %v1671 = vpop.permute.xlu0 %1670
  %1672 = vrot.lane.b32.xlu0 %v1617, 32
  %v1673 = vpop.permute.xlu0 %1672
  %1674 = vrot.lane.b32.xlu0 %v1631, 32
  %v1675 = vpop.permute.xlu0 %1674
  %1676 = vrot.lane.b32.xlu0 %v1645, 32
  %v1677 = vpop.permute.xlu0 %1676
  %vm1694 = vcmask 322816
  %1695 = vst.msk [vmem:[#allocation4] sm:$0xf] %vm1694, %v1647
  %1696 = vst.msk [vmem:[#allocation4 + $0x4] sm:$0xf] %vm1694, %v1649
  %1697 = vst.msk [vmem:[#allocation4 + $0x8] sm:$0xf] %vm1694, %v1651
  %1698 = vst.msk [vmem:[#allocation4 + $0xc] sm:$0xf] %vm1694, %v1653
  %1699 = vst.msk [vmem:[#allocation4 + $0x10] sm:$0xf] %vm1694, %v1655
  %1700 = vst.msk [vmem:[#allocation4 + $0x14] sm:$0xf] %vm1694, %v1657
  %1701 = vst.msk [vmem:[#allocation4 + $0x18] sm:$0xf] %vm1694, %v1659
  %1702 = vst.msk [vmem:[#allocation4 + $0x1c] sm:$0xf] %vm1694, %v1661
  %1703 = vst.msk [vmem:[#allocation4 + $0x20] sm:$0xf] %vm1694, %v1663
  %1704 = vst.msk [vmem:[#allocation4 + $0x24] sm:$0xf] %vm1694, %v1665
  %1705 = vst.msk [vmem:[#allocation4 + $0x28] sm:$0xf] %vm1694, %v1667
  %1706 = vst.msk [vmem:[#allocation4 + $0x2c] sm:$0xf] %vm1694, %v1669
  %1707 = vst.msk [vmem:[#allocation4 + $0x30] sm:$0xf] %vm1694, %v1671
  %1708 = vst.msk [vmem:[#allocation4 + $0x34] sm:$0xf] %vm1694, %v1673
  %1709 = vst.msk [vmem:[#allocation4 + $0x38] sm:$0xf] %vm1694, %v1675
  %1710 = vst.msk [vmem:[#allocation4 + $0x3c] sm:$0xf] %vm1694, %v1677
  %v1711 = vld [vmem:[%s610] sm:$0xe]
  %v1712 = vld [vmem:[%s610 + $0x4] sm:$0x1]
  %v1713 = vld [vmem:[%s610 + $0x8] sm:$0xe]
  %v1714 = vld [vmem:[%s610 + $0xc] sm:$0x1]
  %v1715 = vld [vmem:[%s610 + $0x10] sm:$0xe]
  %v1716 = vld [vmem:[%s610 + $0x14] sm:$0x1]
  %v1717 = vld [vmem:[%s610 + $0x18] sm:$0xe]
  %v1718 = vld [vmem:[%s610 + $0x1c] sm:$0x1]
  %v1719 = vld [vmem:[%s610 + $0x20] sm:$0xe]
  %v1720 = vld [vmem:[%s610 + $0x24] sm:$0x1]
  %v1721 = vld [vmem:[%s610 + $0x28] sm:$0xe]
  %v1722 = vld [vmem:[%s610 + $0x2c] sm:$0x1]
  %v1723 = vld [vmem:[%s610 + $0x30] sm:$0xe]
  %v1724 = vld [vmem:[%s610 + $0x34] sm:$0x1]
  %v1725 = vld [vmem:[%s610 + $0x38] sm:$0xe]
  %v1726 = vld [vmem:[%s610 + $0x3c] sm:$0x1]
  %v1727 = vld [vmem:[%s610 + $0x50] sm:$0xe]
  %v1728 = vld [vmem:[%s610 + $0x54] sm:$0x1]
  %v1729 = vld [vmem:[%s610 + $0x58] sm:$0xe]
  %v1730 = vld [vmem:[%s610 + $0x5c] sm:$0x1]
  %v1731 = vld [vmem:[%s610 + $0x60] sm:$0xe]
  %v1732 = vld [vmem:[%s610 + $0x64] sm:$0x1]
  %v1733 = vld [vmem:[%s610 + $0x68] sm:$0xe]
  %v1734 = vld [vmem:[%s610 + $0x6c] sm:$0x1]
  %v1735 = vld [vmem:[%s610 + $0x70] sm:$0xe]
  %v1736 = vld [vmem:[%s610 + $0x74] sm:$0x1]
  %v1737 = vld [vmem:[%s610 + $0x78] sm:$0xe]
  %v1738 = vld [vmem:[%s610 + $0x7c] sm:$0x1]
  %v1739 = vld [vmem:[%s610 + $0x80] sm:$0xe]
  %v1740 = vld [vmem:[%s610 + $0x84] sm:$0x1]
  %v1741 = vld [vmem:[%s610 + $0x88] sm:$0xe]
  %v1742 = vld [vmem:[%s610 + $0x8c] sm:$0x1]
  %v1775 = vrot.slane %v1711, 5
  %v1776 = vrot.slane %v1775, 4
  %v1777 = vrot.slane %v1712, 5
  %v1778 = vsel %vm1163, %v1776, %v1777
  %v1779 = vrot.slane %v1713, 5
  %v1780 = vrot.slane %v1779, 4
  %v1781 = vrot.slane %v1714, 5
  %v1782 = vsel %vm1163, %v1780, %v1781
  %v1783 = vrot.slane %v1715, 5
  %v1784 = vrot.slane %v1783, 4
  %v1785 = vrot.slane %v1716, 5
  %v1786 = vsel %vm1163, %v1784, %v1785
  %v1787 = vrot.slane %v1717, 5
  %v1788 = vrot.slane %v1787, 4
  %v1789 = vrot.slane %v1718, 5
  %v1790 = vsel %vm1163, %v1788, %v1789
  %v1791 = vrot.slane %v1719, 5
  %v1792 = vrot.slane %v1791, 4
  %v1793 = vrot.slane %v1720, 5
  %v1794 = vsel %vm1163, %v1792, %v1793
  %v1795 = vrot.slane %v1721, 5
  %v1796 = vrot.slane %v1795, 4
  %v1797 = vrot.slane %v1722, 5
  %v1798 = vsel %vm1163, %v1796, %v1797
  %v1799 = vrot.slane %v1723, 5
  %v1800 = vrot.slane %v1799, 4
  %v1801 = vrot.slane %v1724, 5
  %v1802 = vsel %vm1163, %v1800, %v1801
  %v1803 = vrot.slane %v1725, 5
  %v1804 = vrot.slane %v1803, 4
  %v1805 = vrot.slane %v1726, 5
  %v1806 = vsel %vm1163, %v1804, %v1805
  %v1807 = vrot.slane %v1727, 5
  %v1808 = vrot.slane %v1807, 4
  %v1809 = vrot.slane %v1728, 5
  %v1810 = vsel %vm1163, %v1808, %v1809
  %v1811 = vrot.slane %v1729, 5
  %v1812 = vrot.slane %v1811, 4
  %v1813 = vrot.slane %v1730, 5
  %v1814 = vsel %vm1163, %v1812, %v1813
  %v1815 = vrot.slane %v1731, 5
  %v1816 = vrot.slane %v1815, 4
  %v1817 = vrot.slane %v1732, 5
  %v1818 = vsel %vm1163, %v1816, %v1817
  %v1819 = vrot.slane %v1733, 5
  %v1820 = vrot.slane %v1819, 4
  %v1821 = vrot.slane %v1734, 5
  %v1822 = vsel %vm1163, %v1820, %v1821
  %v1823 = vrot.slane %v1735, 5
  %v1824 = vrot.slane %v1823, 4
  %v1825 = vrot.slane %v1736, 5
  %v1826 = vsel %vm1163, %v1824, %v1825
  %v1827 = vrot.slane %v1737, 5
  %v1828 = vrot.slane %v1827, 4
  %v1829 = vrot.slane %v1738, 5
  %v1830 = vsel %vm1163, %v1828, %v1829
  %v1831 = vrot.slane %v1739, 5
  %v1832 = vrot.slane %v1831, 4
  %v1833 = vrot.slane %v1740, 5
  %v1834 = vsel %vm1163, %v1832, %v1833
  %v1835 = vrot.slane %v1741, 5
  %v1836 = vrot.slane %v1835, 4
  %v1837 = vrot.slane %v1742, 5
  %v1838 = vsel %vm1163, %v1836, %v1837
  %1839 = vrot.lane.b32.xlu0 %v1778, 40
  %v1840 = vpop.permute.xlu0 %1839
  %1841 = vrot.lane.b32.xlu0 %v1782, 40
  %v1842 = vpop.permute.xlu0 %1841
  %1843 = vrot.lane.b32.xlu0 %v1786, 40
  %v1844 = vpop.permute.xlu0 %1843
  %1845 = vrot.lane.b32.xlu0 %v1790, 40
  %v1846 = vpop.permute.xlu0 %1845
  %1847 = vrot.lane.b32.xlu0 %v1794, 40
  %v1848 = vpop.permute.xlu0 %1847
  %1849 = vrot.lane.b32.xlu0 %v1798, 40
  %v1850 = vpop.permute.xlu0 %1849
  %1851 = vrot.lane.b32.xlu0 %v1802, 40
  %v1852 = vpop.permute.xlu0 %1851
  %1853 = vrot.lane.b32.xlu0 %v1806, 40
  %v1854 = vpop.permute.xlu0 %1853
  %1855 = vrot.lane.b32.xlu0 %v1810, 40
  %v1856 = vpop.permute.xlu0 %1855
  %1857 = vrot.lane.b32.xlu0 %v1814, 40
  %v1858 = vpop.permute.xlu0 %1857
  %1859 = vrot.lane.b32.xlu0 %v1818, 40
  %v1860 = vpop.permute.xlu0 %1859
  %1861 = vrot.lane.b32.xlu0 %v1822, 40
  %v1862 = vpop.permute.xlu0 %1861
  %1863 = vrot.lane.b32.xlu0 %v1826, 40
  %v1864 = vpop.permute.xlu0 %1863
  %1865 = vrot.lane.b32.xlu0 %v1830, 40
  %v1866 = vpop.permute.xlu0 %1865
  %1867 = vrot.lane.b32.xlu0 %v1834, 40
  %v1868 = vpop.permute.xlu0 %1867
  %1869 = vrot.lane.b32.xlu0 %v1838, 40
  %v1870 = vpop.permute.xlu0 %1869
  %vm1887 = vcmask 388416
  %1888 = vst.msk [vmem:[#allocation4] sm:$0xf] %vm1887, %v1840
  %1889 = vst.msk [vmem:[#allocation4 + $0x4] sm:$0xf] %vm1887, %v1842
  %1890 = vst.msk [vmem:[#allocation4 + $0x8] sm:$0xf] %vm1887, %v1844
  %1891 = vst.msk [vmem:[#allocation4 + $0xc] sm:$0xf] %vm1887, %v1846
  %1892 = vst.msk [vmem:[#allocation4 + $0x10] sm:$0xf] %vm1887, %v1848
  %1893 = vst.msk [vmem:[#allocation4 + $0x14] sm:$0xf] %vm1887, %v1850
  %1894 = vst.msk [vmem:[#allocation4 + $0x18] sm:$0xf] %vm1887, %v1852
  %1895 = vst.msk [vmem:[#allocation4 + $0x1c] sm:$0xf] %vm1887, %v1854
  %1896 = vst.msk [vmem:[#allocation4 + $0x20] sm:$0xf] %vm1887, %v1856
  %1897 = vst.msk [vmem:[#allocation4 + $0x24] sm:$0xf] %vm1887, %v1858
  %1898 = vst.msk [vmem:[#allocation4 + $0x28] sm:$0xf] %vm1887, %v1860
  %1899 = vst.msk [vmem:[#allocation4 + $0x2c] sm:$0xf] %vm1887, %v1862
  %1900 = vst.msk [vmem:[#allocation4 + $0x30] sm:$0xf] %vm1887, %v1864
  %1901 = vst.msk [vmem:[#allocation4 + $0x34] sm:$0xf] %vm1887, %v1866
  %1902 = vst.msk [vmem:[#allocation4 + $0x38] sm:$0xf] %vm1887, %v1868
  %1903 = vst.msk [vmem:[#allocation4 + $0x3c] sm:$0xf] %vm1887, %v1870
  %s1904 = scalar_lea.vmem [#allocation2], 16
  %v1905 = vld [vmem:[%s1904] sm:$0xf]
  %v1906 = vld [vmem:[%s1904 + $0x8] sm:$0xf]
  %v1907 = vld [vmem:[%s1904 + $0x10] sm:$0xf]
  %v1908 = vld [vmem:[%s1904 + $0x18] sm:$0xf]
  %v1909 = vld [vmem:[%s1904 + $0x20] sm:$0xf]
  %v1910 = vld [vmem:[%s1904 + $0x28] sm:$0xf]
  %v1911 = vld [vmem:[%s1904 + $0x30] sm:$0xf]
  %v1912 = vld [vmem:[%s1904 + $0x38] sm:$0xf]
  %v1913 = vld [vmem:[%s1904 + $0x50] sm:$0xf]
  %v1914 = vld [vmem:[%s1904 + $0x58] sm:$0xf]
  %v1915 = vld [vmem:[%s1904 + $0x60] sm:$0xf]
  %v1916 = vld [vmem:[%s1904 + $0x68] sm:$0xf]
  %v1917 = vld [vmem:[%s1904 + $0x70] sm:$0xf]
  %v1918 = vld [vmem:[%s1904 + $0x78] sm:$0xf]
  %v1919 = vld [vmem:[%s1904 + $0x80] sm:$0xf]
  %v1920 = vld [vmem:[%s1904 + $0x88] sm:$0xf]
  %1937 = vrot.lane.b32.xlu0 %v1905, 48
  %v1938 = vpop.permute.xlu0 %1937
  %1939 = vrot.lane.b32.xlu0 %v1906, 48
  %v1940 = vpop.permute.xlu0 %1939
  %1941 = vrot.lane.b32.xlu0 %v1907, 48
  %v1942 = vpop.permute.xlu0 %1941
  %1943 = vrot.lane.b32.xlu0 %v1908, 48
  %v1944 = vpop.permute.xlu0 %1943
  %1945 = vrot.lane.b32.xlu0 %v1909, 48
  %v1946 = vpop.permute.xlu0 %1945
  %1947 = vrot.lane.b32.xlu0 %v1910, 48
  %v1948 = vpop.permute.xlu0 %1947
  %1949 = vrot.lane.b32.xlu0 %v1911, 48
  %v1950 = vpop.permute.xlu0 %1949
  %1951 = vrot.lane.b32.xlu0 %v1912, 48
  %v1952 = vpop.permute.xlu0 %1951
  %1953 = vrot.lane.b32.xlu0 %v1913, 48
  %v1954 = vpop.permute.xlu0 %1953
  %1955 = vrot.lane.b32.xlu0 %v1914, 48
  %v1956 = vpop.permute.xlu0 %1955
  %1957 = vrot.lane.b32.xlu0 %v1915, 48
  %v1958 = vpop.permute.xlu0 %1957
  %1959 = vrot.lane.b32.xlu0 %v1916, 48
  %v1960 = vpop.permute.xlu0 %1959
  %1961 = vrot.lane.b32.xlu0 %v1917, 48
  %v1962 = vpop.permute.xlu0 %1961
  %1963 = vrot.lane.b32.xlu0 %v1918, 48
  %v1964 = vpop.permute.xlu0 %1963
  %1965 = vrot.lane.b32.xlu0 %v1919, 48
  %v1966 = vpop.permute.xlu0 %1965
  %1967 = vrot.lane.b32.xlu0 %v1920, 48
  %v1968 = vpop.permute.xlu0 %1967
  %vm1985 = vcmask 454016
  %1986 = vst.msk [vmem:[#allocation4] sm:$0xf] %vm1985, %v1938
  %1987 = vst.msk [vmem:[#allocation4 + $0x4] sm:$0xf] %vm1985, %v1940
  %1988 = vst.msk [vmem:[#allocation4 + $0x8] sm:$0xf] %vm1985, %v1942
  %1989 = vst.msk [vmem:[#allocation4 + $0xc] sm:$0xf] %vm1985, %v1944
  %1990 = vst.msk [vmem:[#allocation4 + $0x10] sm:$0xf] %vm1985, %v1946
  %1991 = vst.msk [vmem:[#allocation4 + $0x14] sm:$0xf] %vm1985, %v1948
  %1992 = vst.msk [vmem:[#allocation4 + $0x18] sm:$0xf] %vm1985, %v1950
  %1993 = vst.msk [vmem:[#allocation4 + $0x1c] sm:$0xf] %vm1985, %v1952
  %1994 = vst.msk [vmem:[#allocation4 + $0x20] sm:$0xf] %vm1985, %v1954
  %1995 = vst.msk [vmem:[#allocation4 + $0x24] sm:$0xf] %vm1985, %v1956
  %1996 = vst.msk [vmem:[#allocation4 + $0x28] sm:$0xf] %vm1985, %v1958
  %1997 = vst.msk [vmem:[#allocation4 + $0x2c] sm:$0xf] %vm1985, %v1960
  %1998 = vst.msk [vmem:[#allocation4 + $0x30] sm:$0xf] %vm1985, %v1962
  %1999 = vst.msk [vmem:[#allocation4 + $0x34] sm:$0xf] %vm1985, %v1964
  %2000 = vst.msk [vmem:[#allocation4 + $0x38] sm:$0xf] %vm1985, %v1966
  %2001 = vst.msk [vmem:[#allocation4 + $0x3c] sm:$0xf] %vm1985, %v1968
  %v2002 = vld [vmem:[%s1904] sm:$0xf]
  %v2003 = vld [vmem:[%s1904 + $0x4] sm:$0x1]
  %v2004 = vld [vmem:[%s1904 + $0x8] sm:$0xf]
  %v2005 = vld [vmem:[%s1904 + $0xc] sm:$0x1]
  %v2006 = vld [vmem:[%s1904 + $0x10] sm:$0xf]
  %v2007 = vld [vmem:[%s1904 + $0x14] sm:$0x1]
  %v2008 = vld [vmem:[%s1904 + $0x18] sm:$0xf]
  %v2009 = vld [vmem:[%s1904 + $0x1c] sm:$0x1]
  %v2010 = vld [vmem:[%s1904 + $0x20] sm:$0xf]
  %v2011 = vld [vmem:[%s1904 + $0x24] sm:$0x1]
  %v2012 = vld [vmem:[%s1904 + $0x28] sm:$0xf]
  %v2013 = vld [vmem:[%s1904 + $0x2c] sm:$0x1]
  %v2014 = vld [vmem:[%s1904 + $0x30] sm:$0xf]
  %v2015 = vld [vmem:[%s1904 + $0x34] sm:$0x1]
  %v2016 = vld [vmem:[%s1904 + $0x38] sm:$0xf]
  %v2017 = vld [vmem:[%s1904 + $0x3c] sm:$0x1]
  %v2018 = vld [vmem:[%s1904 + $0x50] sm:$0xf]
  %v2019 = vld [vmem:[%s1904 + $0x54] sm:$0x1]
  %v2020 = vld [vmem:[%s1904 + $0x58] sm:$0xf]
  %v2021 = vld [vmem:[%s1904 + $0x5c] sm:$0x1]
  %v2022 = vld [vmem:[%s1904 + $0x60] sm:$0xf]
  %v2023 = vld [vmem:[%s1904 + $0x64] sm:$0x1]
  %v2024 = vld [vmem:[%s1904 + $0x68] sm:$0xf]
  %v2025 = vld [vmem:[%s1904 + $0x6c] sm:$0x1]
  %v2026 = vld [vmem:[%s1904 + $0x70] sm:$0xf]
  %v2027 = vld [vmem:[%s1904 + $0x74] sm:$0x1]
  %v2028 = vld [vmem:[%s1904 + $0x78] sm:$0xf]
  %v2029 = vld [vmem:[%s1904 + $0x7c] sm:$0x1]
  %v2030 = vld [vmem:[%s1904 + $0x80] sm:$0xf]
  %v2031 = vld [vmem:[%s1904 + $0x84] sm:$0x1]
  %v2032 = vld [vmem:[%s1904 + $0x88] sm:$0xf]
  %v2033 = vld [vmem:[%s1904 + $0x8c] sm:$0x1]
  %v2035 = vshrl.u32 %v2002, 16
  %v2037 = vrot.slane %v2035, 4
  %v2038 = vshll.u32 %v2002, 16
  %v2040 = vrot.slane %v2038, 5
  %v2041 = vor.u32 %v2037, %v2040
  %v2042 = vrot.slane %v2041, 4
  %v2044 = vshll.u32 %v2003, 16
  %v2046 = vrot.slane %v2044, 5
  %v2047 = vsel %vm807, %v2042, %v2046
  %v2049 = vshrl.u32 %v2004, 16
  %v2051 = vrot.slane %v2049, 4
  %v2052 = vshll.u32 %v2004, 16
  %v2054 = vrot.slane %v2052, 5
  %v2055 = vor.u32 %v2051, %v2054
  %v2056 = vrot.slane %v2055, 4
  %v2058 = vshll.u32 %v2005, 16
  %v2060 = vrot.slane %v2058, 5
  %v2061 = vsel %vm807, %v2056, %v2060
  %v2063 = vshrl.u32 %v2006, 16
  %v2065 = vrot.slane %v2063, 4
  %v2066 = vshll.u32 %v2006, 16
  %v2068 = vrot.slane %v2066, 5
  %v2069 = vor.u32 %v2065, %v2068
  %v2070 = vrot.slane %v2069, 4
  %v2072 = vshll.u32 %v2007, 16
  %v2074 = vrot.slane %v2072, 5
  %v2075 = vsel %vm807, %v2070, %v2074
  %v2077 = vshrl.u32 %v2008, 16
  %v2079 = vrot.slane %v2077, 4
  %v2080 = vshll.u32 %v2008, 16
  %v2082 = vrot.slane %v2080, 5
  %v2083 = vor.u32 %v2079, %v2082
  %v2084 = vrot.slane %v2083, 4
  %v2086 = vshll.u32 %v2009, 16
  %v2088 = vrot.slane %v2086, 5
  %v2089 = vsel %vm807, %v2084, %v2088
  %v2091 = vshrl.u32 %v2010, 16
  %v2093 = vrot.slane %v2091, 4
  %v2094 = vshll.u32 %v2010, 16
  %v2096 = vrot.slane %v2094, 5
  %v2097 = vor.u32 %v2093, %v2096
  %v2098 = vrot.slane %v2097, 4
  %v2100 = vshll.u32 %v2011, 16
  %v2102 = vrot.slane %v2100, 5
  %v2103 = vsel %vm807, %v2098, %v2102
  %v2105 = vshrl.u32 %v2012, 16
  %v2107 = vrot.slane %v2105, 4
  %v2108 = vshll.u32 %v2012, 16
  %v2110 = vrot.slane %v2108, 5
  %v2111 = vor.u32 %v2107, %v2110
  %v2112 = vrot.slane %v2111, 4
  %v2114 = vshll.u32 %v2013, 16
  %v2116 = vrot.slane %v2114, 5
  %v2117 = vsel %vm807, %v2112, %v2116
  %v2119 = vshrl.u32 %v2014, 16
  %v2121 = vrot.slane %v2119, 4
  %v2122 = vshll.u32 %v2014, 16
  %v2124 = vrot.slane %v2122, 5
  %v2125 = vor.u32 %v2121, %v2124
  %v2126 = vrot.slane %v2125, 4
  %v2128 = vshll.u32 %v2015, 16
  %v2130 = vrot.slane %v2128, 5
  %v2131 = vsel %vm807, %v2126, %v2130
  %v2133 = vshrl.u32 %v2016, 16
  %v2135 = vrot.slane %v2133, 4
  %v2136 = vshll.u32 %v2016, 16
  %v2138 = vrot.slane %v2136, 5
  %v2139 = vor.u32 %v2135, %v2138
  %v2140 = vrot.slane %v2139, 4
  %v2142 = vshll.u32 %v2017, 16
  %v2144 = vrot.slane %v2142, 5
  %v2145 = vsel %vm807, %v2140, %v2144
  %v2147 = vshrl.u32 %v2018, 16
  %v2149 = vrot.slane %v2147, 4
  %v2150 = vshll.u32 %v2018, 16
  %v2152 = vrot.slane %v2150, 5
  %v2153 = vor.u32 %v2149, %v2152
  %v2154 = vrot.slane %v2153, 4
  %v2156 = vshll.u32 %v2019, 16
  %v2158 = vrot.slane %v2156, 5
  %v2159 = vsel %vm807, %v2154, %v2158
  %v2161 = vshrl.u32 %v2020, 16
  %v2163 = vrot.slane %v2161, 4
  %v2164 = vshll.u32 %v2020, 16
  %v2166 = vrot.slane %v2164, 5
  %v2167 = vor.u32 %v2163, %v2166
  %v2168 = vrot.slane %v2167, 4
  %v2170 = vshll.u32 %v2021, 16
  %v2172 = vrot.slane %v2170, 5
  %v2173 = vsel %vm807, %v2168, %v2172
  %v2175 = vshrl.u32 %v2022, 16
  %v2177 = vrot.slane %v2175, 4
  %v2178 = vshll.u32 %v2022, 16
  %v2180 = vrot.slane %v2178, 5
  %v2181 = vor.u32 %v2177, %v2180
  %v2182 = vrot.slane %v2181, 4
  %v2184 = vshll.u32 %v2023, 16
  %v2186 = vrot.slane %v2184, 5
  %v2187 = vsel %vm807, %v2182, %v2186
  %v2189 = vshrl.u32 %v2024, 16
  %v2191 = vrot.slane %v2189, 4
  %v2192 = vshll.u32 %v2024, 16
  %v2194 = vrot.slane %v2192, 5
  %v2195 = vor.u32 %v2191, %v2194
  %v2196 = vrot.slane %v2195, 4
  %v2198 = vshll.u32 %v2025, 16
  %v2200 = vrot.slane %v2198, 5
  %v2201 = vsel %vm807, %v2196, %v2200
  %v2203 = vshrl.u32 %v2026, 16
  %v2205 = vrot.slane %v2203, 4
  %v2206 = vshll.u32 %v2026, 16
  %v2208 = vrot.slane %v2206, 5
  %v2209 = vor.u32 %v2205, %v2208
  %v2210 = vrot.slane %v2209, 4
  %v2212 = vshll.u32 %v2027, 16
  %v2214 = vrot.slane %v2212, 5
  %v2215 = vsel %vm807, %v2210, %v2214
  %v2217 = vshrl.u32 %v2028, 16
  %v2219 = vrot.slane %v2217, 4
  %v2220 = vshll.u32 %v2028, 16
  %v2222 = vrot.slane %v2220, 5
  %v2223 = vor.u32 %v2219, %v2222
  %v2224 = vrot.slane %v2223, 4
  %v2226 = vshll.u32 %v2029, 16
  %v2228 = vrot.slane %v2226, 5
  %v2229 = vsel %vm807, %v2224, %v2228
  %v2231 = vshrl.u32 %v2030, 16
  %v2233 = vrot.slane %v2231, 4
  %v2234 = vshll.u32 %v2030, 16
  %v2236 = vrot.slane %v2234, 5
  %v2237 = vor.u32 %v2233, %v2236
  %v2238 = vrot.slane %v2237, 4
  %v2240 = vshll.u32 %v2031, 16
  %v2242 = vrot.slane %v2240, 5
  %v2243 = vsel %vm807, %v2238, %v2242
  %v2245 = vshrl.u32 %v2032, 16
  %v2247 = vrot.slane %v2245, 4
  %v2248 = vshll.u32 %v2032, 16
  %v2250 = vrot.slane %v2248, 5
  %v2251 = vor.u32 %v2247, %v2250
  %v2252 = vrot.slane %v2251, 4
  %v2254 = vshll.u32 %v2033, 16
  %v2256 = vrot.slane %v2254, 5
  %v2257 = vsel %vm807, %v2252, %v2256
  %2258 = vrot.lane.b32.xlu0 %v2047, 56
  %v2259 = vpop.permute.xlu0 %2258
  %2260 = vrot.lane.b32.xlu0 %v2061, 56
  %v2261 = vpop.permute.xlu0 %2260
  %2262 = vrot.lane.b32.xlu0 %v2075, 56
  %v2263 = vpop.permute.xlu0 %2262
  %2264 = vrot.lane.b32.xlu0 %v2089, 56
  %v2265 = vpop.permute.xlu0 %2264
  %2266 = vrot.lane.b32.xlu0 %v2103, 56
  %v2267 = vpop.permute.xlu0 %2266
  %2268 = vrot.lane.b32.xlu0 %v2117, 56
  %v2269 = vpop.permute.xlu0 %2268
  %2270 = vrot.lane.b32.xlu0 %v2131, 56
  %v2271 = vpop.permute.xlu0 %2270
  %2272 = vrot.lane.b32.xlu0 %v2145, 56
  %v2273 = vpop.permute.xlu0 %2272
  %2274 = vrot.lane.b32.xlu0 %v2159, 56
  %v2275 = vpop.permute.xlu0 %2274
  %2276 = vrot.lane.b32.xlu0 %v2173, 56
  %v2277 = vpop.permute.xlu0 %2276
  %2278 = vrot.lane.b32.xlu0 %v2187, 56
  %v2279 = vpop.permute.xlu0 %2278
  %2280 = vrot.lane.b32.xlu0 %v2201, 56
  %v2281 = vpop.permute.xlu0 %2280
  %2282 = vrot.lane.b32.xlu0 %v2215, 56
  %v2283 = vpop.permute.xlu0 %2282
  %2284 = vrot.lane.b32.xlu0 %v2229, 56
  %v2285 = vpop.permute.xlu0 %2284
  %2286 = vrot.lane.b32.xlu0 %v2243, 56
  %v2287 = vpop.permute.xlu0 %2286
  %2288 = vrot.lane.b32.xlu0 %v2257, 56
  %v2289 = vpop.permute.xlu0 %2288
  %vm2306 = vcmask 519616
  %2307 = vst.msk [vmem:[#allocation4] sm:$0xf] %vm2306, %v2259
  %2308 = vst.msk [vmem:[#allocation4 + $0x4] sm:$0xf] %vm2306, %v2261
  %2309 = vst.msk [vmem:[#allocation4 + $0x8] sm:$0xf] %vm2306, %v2263
  %2310 = vst.msk [vmem:[#allocation4 + $0xc] sm:$0xf] %vm2306, %v2265
  %2311 = vst.msk [vmem:[#allocation4 + $0x10] sm:$0xf] %vm2306, %v2267
  %2312 = vst.msk [vmem:[#allocation4 + $0x14] sm:$0xf] %vm2306, %v2269
  %2313 = vst.msk [vmem:[#allocation4 + $0x18] sm:$0xf] %vm2306, %v2271
  %2314 = vst.msk [vmem:[#allocation4 + $0x1c] sm:$0xf] %vm2306, %v2273
  %2315 = vst.msk [vmem:[#allocation4 + $0x20] sm:$0xf] %vm2306, %v2275
  %2316 = vst.msk [vmem:[#allocation4 + $0x24] sm:$0xf] %vm2306, %v2277
  %2317 = vst.msk [vmem:[#allocation4 + $0x28] sm:$0xf] %vm2306, %v2279
  %2318 = vst.msk [vmem:[#allocation4 + $0x2c] sm:$0xf] %vm2306, %v2281
  %2319 = vst.msk [vmem:[#allocation4 + $0x30] sm:$0xf] %vm2306, %v2283
  %2320 = vst.msk [vmem:[#allocation4 + $0x34] sm:$0xf] %vm2306, %v2285
  %2321 = vst.msk [vmem:[#allocation4 + $0x38] sm:$0xf] %vm2306, %v2287
  %2322 = vst.msk [vmem:[#allocation4 + $0x3c] sm:$0xf] %vm2306, %v2289
  %v2323 = vld [vmem:[%s1904] sm:$0xe]
  %v2324 = vld [vmem:[%s1904 + $0x4] sm:$0x1]
  %v2325 = vld [vmem:[%s1904 + $0x8] sm:$0xe]
  %v2326 = vld [vmem:[%s1904 + $0xc] sm:$0x1]
  %v2327 = vld [vmem:[%s1904 + $0x10] sm:$0xe]
  %v2328 = vld [vmem:[%s1904 + $0x14] sm:$0x1]
  %v2329 = vld [vmem:[%s1904 + $0x18] sm:$0xe]
  %v2330 = vld [vmem:[%s1904 + $0x1c] sm:$0x1]
  %v2331 = vld [vmem:[%s1904 + $0x20] sm:$0xe]
  %v2332 = vld [vmem:[%s1904 + $0x24] sm:$0x1]
  %v2333 = vld [vmem:[%s1904 + $0x28] sm:$0xe]
  %v2334 = vld [vmem:[%s1904 + $0x2c] sm:$0x1]
  %v2335 = vld [vmem:[%s1904 + $0x30] sm:$0xe]
  %v2336 = vld [vmem:[%s1904 + $0x34] sm:$0x1]
  %v2337 = vld [vmem:[%s1904 + $0x38] sm:$0xe]
  %v2338 = vld [vmem:[%s1904 + $0x3c] sm:$0x1]
  %v2339 = vld [vmem:[%s1904 + $0x50] sm:$0xe]
  %v2340 = vld [vmem:[%s1904 + $0x54] sm:$0x1]
  %v2341 = vld [vmem:[%s1904 + $0x58] sm:$0xe]
  %v2342 = vld [vmem:[%s1904 + $0x5c] sm:$0x1]
  %v2343 = vld [vmem:[%s1904 + $0x60] sm:$0xe]
  %v2344 = vld [vmem:[%s1904 + $0x64] sm:$0x1]
  %v2345 = vld [vmem:[%s1904 + $0x68] sm:$0xe]
  %v2346 = vld [vmem:[%s1904 + $0x6c] sm:$0x1]
  %v2347 = vld [vmem:[%s1904 + $0x70] sm:$0xe]
  %v2348 = vld [vmem:[%s1904 + $0x74] sm:$0x1]
  %v2349 = vld [vmem:[%s1904 + $0x78] sm:$0xe]
  %v2350 = vld [vmem:[%s1904 + $0x7c] sm:$0x1]
  %v2351 = vld [vmem:[%s1904 + $0x80] sm:$0xe]
  %v2352 = vld [vmem:[%s1904 + $0x84] sm:$0x1]
  %v2353 = vld [vmem:[%s1904 + $0x88] sm:$0xe]
  %v2354 = vld [vmem:[%s1904 + $0x8c] sm:$0x1]
  %v2387 = vrot.slane %v2323, 5
  %v2388 = vrot.slane %v2387, 4
  %v2389 = vrot.slane %v2324, 5
  %v2390 = vsel %vm1163, %v2388, %v2389
  %v2391 = vrot.slane %v2325, 5
  %v2392 = vrot.slane %v2391, 4
  %v2393 = vrot.slane %v2326, 5
  %v2394 = vsel %vm1163, %v2392, %v2393
  %v2395 = vrot.slane %v2327, 5
  %v2396 = vrot.slane %v2395, 4
  %v2397 = vrot.slane %v2328, 5
  %v2398 = vsel %vm1163, %v2396, %v2397
  %v2399 = vrot.slane %v2329, 5
  %v2400 = vrot.slane %v2399, 4
  %v2401 = vrot.slane %v2330, 5
  %v2402 = vsel %vm1163, %v2400, %v2401
  %v2403 = vrot.slane %v2331, 5
  %v2404 = vrot.slane %v2403, 4
  %v2405 = vrot.slane %v2332, 5
  %v2406 = vsel %vm1163, %v2404, %v2405
  %v2407 = vrot.slane %v2333, 5
  %v2408 = vrot.slane %v2407, 4
  %v2409 = vrot.slane %v2334, 5
  %v2410 = vsel %vm1163, %v2408, %v2409
  %v2411 = vrot.slane %v2335, 5
  %v2412 = vrot.slane %v2411, 4
  %v2413 = vrot.slane %v2336, 5
  %v2414 = vsel %vm1163, %v2412, %v2413
  %v2415 = vrot.slane %v2337, 5
  %v2416 = vrot.slane %v2415, 4
  %v2417 = vrot.slane %v2338, 5
  %v2418 = vsel %vm1163, %v2416, %v2417
  %v2419 = vrot.slane %v2339, 5
  %v2420 = vrot.slane %v2419, 4
  %v2421 = vrot.slane %v2340, 5
  %v2422 = vsel %vm1163, %v2420, %v2421
  %v2423 = vrot.slane %v2341, 5
  %v2424 = vrot.slane %v2423, 4
  %v2425 = vrot.slane %v2342, 5
  %v2426 = vsel %vm1163, %v2424, %v2425
  %v2427 = vrot.slane %v2343, 5
  %v2428 = vrot.slane %v2427, 4
  %v2429 = vrot.slane %v2344, 5
  %v2430 = vsel %vm1163, %v2428, %v2429
  %v2431 = vrot.slane %v2345, 5
  %v2432 = vrot.slane %v2431, 4
  %v2433 = vrot.slane %v2346, 5
  %v2434 = vsel %vm1163, %v2432, %v2433
  %v2435 = vrot.slane %v2347, 5
  %v2436 = vrot.slane %v2435, 4
  %v2437 = vrot.slane %v2348, 5
  %v2438 = vsel %vm1163, %v2436, %v2437
  %v2439 = vrot.slane %v2349, 5
  %v2440 = vrot.slane %v2439, 4
  %v2441 = vrot.slane %v2350, 5
  %v2442 = vsel %vm1163, %v2440, %v2441
  %v2443 = vrot.slane %v2351, 5
  %v2444 = vrot.slane %v2443, 4
  %v2445 = vrot.slane %v2352, 5
  %v2446 = vsel %vm1163, %v2444, %v2445
  %v2447 = vrot.slane %v2353, 5
  %v2448 = vrot.slane %v2447, 4
  %v2449 = vrot.slane %v2354, 5
  %v2450 = vsel %vm1163, %v2448, %v2449
  %2451 = vrot.lane.b32.xlu0 %v2390, 64
  %v2452 = vpop.permute.xlu0 %2451
  %2453 = vrot.lane.b32.xlu0 %v2394, 64
  %v2454 = vpop.permute.xlu0 %2453
  %2455 = vrot.lane.b32.xlu0 %v2398, 64
  %v2456 = vpop.permute.xlu0 %2455
  %2457 = vrot.lane.b32.xlu0 %v2402, 64
  %v2458 = vpop.permute.xlu0 %2457
  %2459 = vrot.lane.b32.xlu0 %v2406, 64
  %v2460 = vpop.permute.xlu0 %2459
  %2461 = vrot.lane.b32.xlu0 %v2410, 64
  %v2462 = vpop.permute.xlu0 %2461
  %2463 = vrot.lane.b32.xlu0 %v2414, 64
  %v2464 = vpop.permute.xlu0 %2463
  %2465 = vrot.lane.b32.xlu0 %v2418, 64
  %v2466 = vpop.permute.xlu0 %2465
  %2467 = vrot.lane.b32.xlu0 %v2422, 64
  %v2468 = vpop.permute.xlu0 %2467
  %2469 = vrot.lane.b32.xlu0 %v2426, 64
  %v2470 = vpop.permute.xlu0 %2469
  %2471 = vrot.lane.b32.xlu0 %v2430, 64
  %v2472 = vpop.permute.xlu0 %2471
  %2473 = vrot.lane.b32.xlu0 %v2434, 64
  %v2474 = vpop.permute.xlu0 %2473
  %2475 = vrot.lane.b32.xlu0 %v2438, 64
  %v2476 = vpop.permute.xlu0 %2475
  %2477 = vrot.lane.b32.xlu0 %v2442, 64
  %v2478 = vpop.permute.xlu0 %2477
  %2479 = vrot.lane.b32.xlu0 %v2446, 64
  %v2480 = vpop.permute.xlu0 %2479
  %2481 = vrot.lane.b32.xlu0 %v2450, 64
  %v2482 = vpop.permute.xlu0 %2481
  %vm2499 = vcmask 585216
  %2500 = vst.msk [vmem:[#allocation4] sm:$0xf] %vm2499, %v2452
  %2501 = vst.msk [vmem:[#allocation4 + $0x4] sm:$0xf] %vm2499, %v2454
  %2502 = vst.msk [vmem:[#allocation4 + $0x8] sm:$0xf] %vm2499, %v2456
  %2503 = vst.msk [vmem:[#allocation4 + $0xc] sm:$0xf] %vm2499, %v2458
  %2504 = vst.msk [vmem:[#allocation4 + $0x10] sm:$0xf] %vm2499, %v2460
  %2505 = vst.msk [vmem:[#allocation4 + $0x14] sm:$0xf] %vm2499, %v2462
  %2506 = vst.msk [vmem:[#allocation4 + $0x18] sm:$0xf] %vm2499, %v2464
  %2507 = vst.msk [vmem:[#allocation4 + $0x1c] sm:$0xf] %vm2499, %v2466
  %2508 = vst.msk [vmem:[#allocation4 + $0x20] sm:$0xf] %vm2499, %v2468
  %2509 = vst.msk [vmem:[#allocation4 + $0x24] sm:$0xf] %vm2499, %v2470
  %2510 = vst.msk [vmem:[#allocation4 + $0x28] sm:$0xf] %vm2499, %v2472
  %2511 = vst.msk [vmem:[#allocation4 + $0x2c] sm:$0xf] %vm2499, %v2474
  %2512 = vst.msk [vmem:[#allocation4 + $0x30] sm:$0xf] %vm2499, %v2476
  %2513 = vst.msk [vmem:[#allocation4 + $0x34] sm:$0xf] %vm2499, %v2478
  %2514 = vst.msk [vmem:[#allocation4 + $0x38] sm:$0xf] %vm2499, %v2480
  %2515 = vst.msk [vmem:[#allocation4 + $0x3c] sm:$0xf] %vm2499, %v2482
  %v2516 = vld [vmem:[#allocation4] sm:$0xf]
  %v2517 = vld [vmem:[#allocation4 + $0x4] sm:$0xf]
  %v2518 = vld [vmem:[#allocation4 + $0x8] sm:$0xf]
  %v2519 = vld [vmem:[#allocation4 + $0xc] sm:$0xf]
  %v2520 = vld [vmem:[#allocation4 + $0x10] sm:$0xf]
  %v2521 = vld [vmem:[#allocation4 + $0x14] sm:$0xf]
  %v2522 = vld [vmem:[#allocation4 + $0x18] sm:$0xf]
  %v2523 = vld [vmem:[#allocation4 + $0x1c] sm:$0xf]
  %v2524 = vld [vmem:[#allocation4 + $0x20] sm:$0xf]
  %v2525 = vld [vmem:[#allocation4 + $0x24] sm:$0xf]
  %v2526 = vld [vmem:[#allocation4 + $0x28] sm:$0xf]
  %v2527 = vld [vmem:[#allocation4 + $0x2c] sm:$0xf]
  %v2528 = vld [vmem:[#allocation4 + $0x30] sm:$0xf]
  %v2529 = vld [vmem:[#allocation4 + $0x34] sm:$0xf]
  %v2530 = vld [vmem:[#allocation4 + $0x38] sm:$0xf]
  %v2531 = vld [vmem:[#allocation4 + $0x3c] sm:$0xf]
  %v2532 = vld [vmem:[%s3] sm:$0xf]
  %v2533 = vld [vmem:[%s3 + $0x4] sm:$0xf]
  %v2534 = vld [vmem:[%s3 + $0x8] sm:$0xf]
  %v2535 = vld [vmem:[%s3 + $0xc] sm:$0xf]
  %v2536 = vld [vmem:[%s3 + $0x10] sm:$0xf]
  %v2537 = vld [vmem:[%s3 + $0x14] sm:$0xf]
  %v2538 = vld [vmem:[%s3 + $0x18] sm:$0xf]
  %v2539 = vld [vmem:[%s3 + $0x1c] sm:$0xf]
  %v2540 = vld [vmem:[%s3 + $0x20] sm:$0xf]
  %v2557 = vunpack.c.l.b16 %v2516
  %v2558 = vunpack.c.l.b16 %v2517
  %v2559 = vunpack.c.l.b16 %v2518
  %v2560 = vunpack.c.l.b16 %v2519
  %v2561 = vunpack.c.l.b16 %v2520
  %v2562 = vunpack.c.l.b16 %v2521
  %v2563 = vunpack.c.l.b16 %v2522
  %v2564 = vunpack.c.l.b16 %v2523
  %v2565 = vunpack.c.l.b16 %v2524
  %v2566 = vunpack.c.l.b16 %v2525
  %v2567 = vunpack.c.l.b16 %v2526
  %v2568 = vunpack.c.l.b16 %v2527
  %v2569 = vunpack.c.l.b16 %v2528
  %v2570 = vunpack.c.l.b16 %v2529
  %v2571 = vunpack.c.l.b16 %v2530
  %v2572 = vunpack.c.l.b16 %v2531
  %v2573 = vpack.c.b16 %v2558, %v2557
  %v2574 = vpack.c.b16 %v2560, %v2559
  %v2575 = vpack.c.b16 %v2562, %v2561
  %v2576 = vpack.c.b16 %v2564, %v2563
  %v2577 = vpack.c.b16 %v2566, %v2565
  %v2578 = vpack.c.b16 %v2568, %v2567
  %v2579 = vpack.c.b16 %v2570, %v2569
  %v2580 = vpack.c.b16 %v2572, %v2571
  %v2590 = vunpack.c.l.b16 %v2532
  %v2591 = vunpack.c.l.b16 %v2533
  %v2592 = vunpack.c.l.b16 %v2534
  %v2593 = vunpack.c.l.b16 %v2535
  %v2594 = vunpack.c.l.b16 %v2536
  %v2595 = vunpack.c.l.b16 %v2537
  %v2596 = vunpack.c.l.b16 %v2538
  %v2597 = vunpack.c.l.b16 %v2539
  %v2598 = vunpack.c.l.b16 %v2540
  %v2599 = vpack.c.b16 %v2591, %v2590
  %v2600 = vpack.c.b16 %v2593, %v2592
  %v2601 = vpack.c.b16 %v2595, %v2594
  %v2602 = vpack.c.b16 %v2597, %v2596
  %v2603 = vpack.c.b16 %v2598, %v2598
  %vm2608 = vcmask 588800
  %v2610 = vsel %vm2608, %v2573, 0
  %v2613 = vsel %vm2608, %v2574, 0
  %v2616 = vsel %vm2608, %v2575, 0
  %v2619 = vsel %vm2608, %v2576, 0
  %v2622 = vsel %vm2608, %v2577, 0
  %v2625 = vsel %vm2608, %v2578, 0
  %v2628 = vsel %vm2608, %v2579, 0
  %v2631 = vsel %vm2608, %v2580, 0
  %vm2633 = vcmask 1043456
  %v2635 = vsel %vm2633, %v2603, 0
  %2637 = vmatprep.subr.bf16.mxu0 0
  %2638 = vmatpush1.bf16.msra.mxu0 %v2599
  %2639 = vmatprep.subr.bf16.mxu0 0
  %2640 = vmatpush1.bf16.msra.mxu0 %v2600
  %2641 = vmatprep.subr.bf16.mxu0 0
  %2642 = vmatpush1.bf16.msra.mxu0 %v2601
  %2643 = vmatprep.subr.bf16.mxu0 0
  %2644 = vmatpush1.bf16.msra.mxu0 %v2602
  %2645 = vmatprep.subr.bf16.mxu0 0
  %2646 = vmatpush1.bf16.msra.mxu0 %v2635
  %2647 = vmatprep.subr.bf16.mxu0 0
  %2648 = vmatpush1.bf16.msra.mxu0 0
  %2649 = vmatprep.subr.bf16.mxu0 0
  %2650 = vmatpush1.bf16.msra.mxu0 0
  %2651 = vmatprep.subr.bf16.mxu0 0
  %2652 = vmatpush1.bf16.msra.mxu0 0
  %2653 = vmatprep.subr.bf16.mxu0 0
  %2654 = vmatpush1.bf16.msra.mxu0 0
  %2655 = vmatprep.subr.bf16.mxu0 0
  %2656 = vmatpush1.bf16.msra.mxu0 0
  %2657 = vmatprep.subr.bf16.mxu0 0
  %2658 = vmatpush1.bf16.msra.mxu0 0
  %2659 = vmatprep.subr.bf16.mxu0 0
  %2660 = vmatpush1.bf16.msra.mxu0 0
  %2661 = vmatprep.subr.bf16.mxu0 0
  %2662 = vmatpush1.bf16.msra.mxu0 0
  %2663 = vmatprep.subr.bf16.mxu0 0
  %2664 = vmatpush1.bf16.msra.mxu0 0
  %2665 = vmatprep.subr.bf16.mxu0 0
  %2666 = vmatpush1.bf16.msra.mxu0 0
  %2667 = vmatprep.subr.bf16.mxu0 0
  %2668 = vmatpush1.bf16.msra.mxu0 0
  %2669 = vmatprep.mubr.bf16.mxu0 0
  %2670 = vmatmul.mubr.bf16.gmra.mrb[0].mxu0 %v2610
  %v2671 = vpop.f32.mrb[0].mxu0
  %v2672 = vadd.f32 0.0, %v2671
  %v2673 = vpop.f32.mrb[0].mxu0
  %v2674 = vpop.f32.mrb[0].mxu0
  %v2675 = vadd.f32 0.0, %v2674
  %v2676 = vpop.f32.mrb[0].mxu0
  %2677 = vmatprep.mubr.bf16.mxu0 0
  %2678 = vmatmul.mubr.bf16.gmra.mrb[0].mxu0 %v2613
  %v2679 = vpop.f32.mrb[0].mxu0
  %v2680 = vadd.f32 0.0, %v2679
  %v2681 = vpop.f32.mrb[0].mxu0
  %v2682 = vpop.f32.mrb[0].mxu0
  %v2683 = vadd.f32 0.0, %v2682
  %v2684 = vpop.f32.mrb[0].mxu0
  %2685 = vmatprep.mubr.bf16.mxu0 0
  %2686 = vmatmul.mubr.bf16.gmra.mrb[0].mxu0 %v2616
  %v2687 = vpop.f32.mrb[0].mxu0
  %v2688 = vadd.f32 0.0, %v2687
  %v2689 = vpop.f32.mrb[0].mxu0
  %v2690 = vpop.f32.mrb[0].mxu0
  %v2691 = vadd.f32 0.0, %v2690
  %v2692 = vpop.f32.mrb[0].mxu0
  %2693 = vmatprep.mubr.bf16.mxu0 0
  %2694 = vmatmul.mubr.bf16.gmra.mrb[0].mxu0 %v2619
  %v2695 = vpop.f32.mrb[0].mxu0
  %v2696 = vadd.f32 0.0, %v2695
  %v2697 = vpop.f32.mrb[0].mxu0
  %v2698 = vpop.f32.mrb[0].mxu0
  %v2699 = vadd.f32 0.0, %v2698
  %v2700 = vpop.f32.mrb[0].mxu0
  %2701 = vmatprep.mubr.bf16.mxu0 0
  %2702 = vmatmul.mubr.bf16.gmra.mrb[0].mxu0 %v2622
  %v2703 = vpop.f32.mrb[0].mxu0
  %v2704 = vadd.f32 0.0, %v2703
  %v2705 = vpop.f32.mrb[0].mxu0
  %v2706 = vpop.f32.mrb[0].mxu0
  %v2707 = vadd.f32 0.0, %v2706
  %v2708 = vpop.f32.mrb[0].mxu0
  %2709 = vmatprep.mubr.bf16.mxu0 0
  %2710 = vmatmul.mubr.bf16.gmra.mrb[0].mxu0 %v2625
  %v2711 = vpop.f32.mrb[0].mxu0
  %v2712 = vadd.f32 0.0, %v2711
  %v2713 = vpop.f32.mrb[0].mxu0
  %v2714 = vpop.f32.mrb[0].mxu0
  %v2715 = vadd.f32 0.0, %v2714
  %v2716 = vpop.f32.mrb[0].mxu0
  %2717 = vmatprep.mubr.bf16.mxu0 0
  %2718 = vmatmul.mubr.bf16.gmra.mrb[0].mxu0 %v2628
  %v2719 = vpop.f32.mrb[0].mxu0
  %v2720 = vadd.f32 0.0, %v2719
  %v2721 = vpop.f32.mrb[0].mxu0
  %v2722 = vpop.f32.mrb[0].mxu0
  %v2723 = vadd.f32 0.0, %v2722
  %v2724 = vpop.f32.mrb[0].mxu0
  %2725 = vmatprep.mubr.bf16.mxu0 0
  %2726 = vmatmul.mubr.bf16.gmra.mrb[0].mxu0 %v2631
  %v2727 = vpop.f32.mrb[0].mxu0
  %v2728 = vadd.f32 0.0, %v2727
  %v2729 = vpop.f32.mrb[0].mxu0
  %v2730 = vpop.f32.mrb[0].mxu0
  %v2731 = vadd.f32 0.0, %v2730
  %v2732 = vpop.f32.mrb[0].mxu0
  %2733 = vdwg.mxu0
  %v2734 = vld [vmem:[%s4] sm:$0x1]
  %v2736 = vlaneseq
  %v2737 = vshrl.u32 %v2736, 7
  %v2738 = vsub.s32 0, %v2737
  %v2739 = vrot.slane %v2734, %v2738
  %v2741 = vmul.f32 %v2672, %v2739
  %v2742 = vmul.f32 %v2675, %v2739
  %v2743 = vmul.f32 %v2680, %v2739
  %v2744 = vmul.f32 %v2683, %v2739
  %v2745 = vmul.f32 %v2688, %v2739
  %v2746 = vmul.f32 %v2691, %v2739
  %v2747 = vmul.f32 %v2696, %v2739
  %v2748 = vmul.f32 %v2699, %v2739
  %v2749 = vmul.f32 %v2704, %v2739
  %v2750 = vmul.f32 %v2707, %v2739
  %v2751 = vmul.f32 %v2712, %v2739
  %v2752 = vmul.f32 %v2715, %v2739
  %v2753 = vmul.f32 %v2720, %v2739
  %v2754 = vmul.f32 %v2723, %v2739
  %v2755 = vmul.f32 %v2728, %v2739
  %v2756 = vmul.f32 %v2731, %v2739
  %v2757 = vld [vmem:[%s5] sm:$0x1]
  %v2759 = vlaneseq
  %v2760 = vshrl.u32 %v2759, 7
  %v2761 = vsub.s32 0, %v2760
  %v2762 = vrot.slane %v2757, %v2761
  %v2764 = vadd.f32 %v2741, %v2762
  %v2765 = vadd.f32 %v2742, %v2762
  %v2766 = vadd.f32 %v2743, %v2762
  %v2767 = vadd.f32 %v2744, %v2762
  %v2768 = vadd.f32 %v2745, %v2762
  %v2769 = vadd.f32 %v2746, %v2762
  %v2770 = vadd.f32 %v2747, %v2762
  %v2771 = vadd.f32 %v2748, %v2762
  %v2772 = vadd.f32 %v2749, %v2762
  %v2773 = vadd.f32 %v2750, %v2762
  %v2774 = vadd.f32 %v2751, %v2762
  %v2775 = vadd.f32 %v2752, %v2762
  %v2776 = vadd.f32 %v2753, %v2762
  %v2777 = vadd.f32 %v2754, %v2762
  %v2778 = vadd.f32 %v2755, %v2762
  %v2779 = vadd.f32 %v2756, %v2762
  %v2780 = vmax.f32 %v2764, 0.0
  %v2781 = vmax.f32 %v2765, 0.0
  %v2782 = vmax.f32 %v2766, 0.0
  %v2783 = vmax.f32 %v2767, 0.0
  %v2784 = vmax.f32 %v2768, 0.0
  %v2785 = vmax.f32 %v2769, 0.0
  %v2786 = vmax.f32 %v2770, 0.0
  %v2787 = vmax.f32 %v2771, 0.0
  %v2788 = vmax.f32 %v2772, 0.0
  %v2789 = vmax.f32 %v2773, 0.0
  %v2790 = vmax.f32 %v2774, 0.0
  %v2791 = vmax.f32 %v2775, 0.0
  %v2792 = vmax.f32 %v2776, 0.0
  %v2793 = vmax.f32 %v2777, 0.0
  %v2794 = vmax.f32 %v2778, 0.0
  %v2795 = vmax.f32 %v2779, 0.0
  %v2796 = vpack.c.bf16 %v2781, %v2780
  %v2797 = vpack.c.bf16 %v2783, %v2782
  %v2798 = vpack.c.bf16 %v2785, %v2784
  %v2799 = vpack.c.bf16 %v2787, %v2786
  %v2800 = vpack.c.bf16 %v2789, %v2788
  %v2801 = vpack.c.bf16 %v2791, %v2790
  %v2802 = vpack.c.bf16 %v2793, %v2792
  %v2803 = vpack.c.bf16 %v2795, %v2794
  %v2812 = vunpack.c.l.b16 %v2796
  %v2813 = vunpack.c.h.b16 %v2796
  %v2814 = vunpack.c.l.b16 %v2797
  %v2815 = vunpack.c.h.b16 %v2797
  %v2816 = vunpack.c.l.b16 %v2798
  %v2817 = vunpack.c.h.b16 %v2798
  %v2818 = vunpack.c.l.b16 %v2799
  %v2819 = vunpack.c.h.b16 %v2799
  %v2820 = vunpack.c.l.b16 %v2800
  %v2821 = vunpack.c.h.b16 %v2800
  %v2822 = vunpack.c.l.b16 %v2801
  %v2823 = vunpack.c.h.b16 %v2801
  %v2824 = vunpack.c.l.b16 %v2802
  %v2825 = vunpack.c.h.b16 %v2802
  %v2826 = vunpack.c.l.b16 %v2803
  %v2827 = vunpack.c.h.b16 %v2803
  %v2828 = vpack.c.b16 %v2812, %v2812
  %v2829 = vpack.c.b16 %v2813, %v2813
  %v2830 = vpack.c.b16 %v2814, %v2814
  %v2831 = vpack.c.b16 %v2815, %v2815
  %v2832 = vpack.c.b16 %v2816, %v2816
  %v2833 = vpack.c.b16 %v2817, %v2817
  %v2834 = vpack.c.b16 %v2818, %v2818
  %v2835 = vpack.c.b16 %v2819, %v2819
  %v2836 = vpack.c.b16 %v2820, %v2820
  %v2837 = vpack.c.b16 %v2821, %v2821
  %v2838 = vpack.c.b16 %v2822, %v2822
  %v2839 = vpack.c.b16 %v2823, %v2823
  %v2840 = vpack.c.b16 %v2824, %v2824
  %v2841 = vpack.c.b16 %v2825, %v2825
  %v2842 = vpack.c.b16 %v2826, %v2826
  %v2843 = vpack.c.b16 %v2827, %v2827
  %v2845 = vshrl.u32 %v2828, 16
  %v2847 = vrot.slane %v2845, 7
  %v2848 = vshll.u32 %v2828, 16
  %v2850 = vor.u32 %v2847, %v2848
  %v2851 = vrot.slane %v2847, 4
  %v2853 = vshrl.u32 %v2829, 16
  %v2855 = vrot.slane %v2853, 7
  %v2856 = vshll.u32 %v2829, 16
  %v2858 = vor.u32 %v2855, %v2856
  %v2859 = vrot.slane %v2855, 4
  %v2861 = vshrl.u32 %v2830, 16
  %v2863 = vrot.slane %v2861, 7
  %v2864 = vshll.u32 %v2830, 16
  %v2866 = vor.u32 %v2863, %v2864
  %v2867 = vrot.slane %v2863, 4
  %v2869 = vshrl.u32 %v2831, 16
  %v2871 = vrot.slane %v2869, 7
  %v2872 = vshll.u32 %v2831, 16
  %v2874 = vor.u32 %v2871, %v2872
  %v2875 = vrot.slane %v2871, 4
  %v2877 = vshrl.u32 %v2832, 16
  %v2879 = vrot.slane %v2877, 7
  %v2880 = vshll.u32 %v2832, 16
  %v2882 = vor.u32 %v2879, %v2880
  %v2883 = vrot.slane %v2879, 4
  %v2885 = vshrl.u32 %v2833, 16
  %v2887 = vrot.slane %v2885, 7
  %v2888 = vshll.u32 %v2833, 16
  %v2890 = vor.u32 %v2887, %v2888
  %v2891 = vrot.slane %v2887, 4
  %v2893 = vshrl.u32 %v2834, 16
  %v2895 = vrot.slane %v2893, 7
  %v2896 = vshll.u32 %v2834, 16
  %v2898 = vor.u32 %v2895, %v2896
  %v2899 = vrot.slane %v2895, 4
  %v2901 = vshrl.u32 %v2835, 16
  %v2903 = vrot.slane %v2901, 7
  %v2904 = vshll.u32 %v2835, 16
  %v2906 = vor.u32 %v2903, %v2904
  %v2907 = vrot.slane %v2903, 4
  %v2909 = vshrl.u32 %v2836, 16
  %v2911 = vrot.slane %v2909, 7
  %v2912 = vshll.u32 %v2836, 16
  %v2914 = vor.u32 %v2911, %v2912
  %v2915 = vrot.slane %v2911, 4
  %v2917 = vshrl.u32 %v2837, 16
  %v2919 = vrot.slane %v2917, 7
  %v2920 = vshll.u32 %v2837, 16
  %v2922 = vor.u32 %v2919, %v2920
  %v2923 = vrot.slane %v2919, 4
  %v2925 = vshrl.u32 %v2838, 16
  %v2927 = vrot.slane %v2925, 7
  %v2928 = vshll.u32 %v2838, 16
  %v2930 = vor.u32 %v2927, %v2928
  %v2931 = vrot.slane %v2927, 4
  %v2933 = vshrl.u32 %v2839, 16
  %v2935 = vrot.slane %v2933, 7
  %v2936 = vshll.u32 %v2839, 16
  %v2938 = vor.u32 %v2935, %v2936
  %v2939 = vrot.slane %v2935, 4
  %v2941 = vshrl.u32 %v2840, 16
  %v2943 = vrot.slane %v2941, 7
  %v2944 = vshll.u32 %v2840, 16
  %v2946 = vor.u32 %v2943, %v2944
  %v2947 = vrot.slane %v2943, 4
  %v2949 = vshrl.u32 %v2841, 16
  %v2951 = vrot.slane %v2949, 7
  %v2952 = vshll.u32 %v2841, 16
  %v2954 = vor.u32 %v2951, %v2952
  %v2955 = vrot.slane %v2951, 4
  %v2957 = vshrl.u32 %v2842, 16
  %v2959 = vrot.slane %v2957, 7
  %v2960 = vshll.u32 %v2842, 16
  %v2962 = vor.u32 %v2959, %v2960
  %v2963 = vrot.slane %v2959, 4
  %v2965 = vshrl.u32 %v2843, 16
  %v2967 = vrot.slane %v2965, 7
  %v2968 = vshll.u32 %v2843, 16
  %v2970 = vor.u32 %v2967, %v2968
  %v2971 = vrot.slane %v2967, 4
  %s3004 = scalar_lea.vmem [#allocation3], 8
  %v3005 = vld [vmem:[%s3004] sm:$0xf]
  %v3006 = vsel %vm612, %v2850, %v3005
  %3007 = vst [vmem:[%s3004] sm:$0xf] %v3006
  %v3008 = vld [vmem:[%s3004 + $0x4] sm:$0x1]
  %v3009 = vsel %vm40, %v2851, %v3008
  %3010 = vst [vmem:[%s3004 + $0x4] sm:$0x1] %v3009
  %v3011 = vld [vmem:[%s3004 + $0x8] sm:$0xf]
  %v3012 = vsel %vm612, %v2858, %v3011
  %3013 = vst [vmem:[%s3004 + $0x8] sm:$0xf] %v3012
  %v3014 = vld [vmem:[%s3004 + $0xc] sm:$0x1]
  %v3015 = vsel %vm40, %v2859, %v3014
  %3016 = vst [vmem:[%s3004 + $0xc] sm:$0x1] %v3015
  %v3017 = vld [vmem:[%s3004 + $0x10] sm:$0xf]
  %v3018 = vsel %vm612, %v2866, %v3017
  %3019 = vst [vmem:[%s3004 + $0x10] sm:$0xf] %v3018
  %v3020 = vld [vmem:[%s3004 + $0x14] sm:$0x1]
  %v3021 = vsel %vm40, %v2867, %v3020
  %3022 = vst [vmem:[%s3004 + $0x14] sm:$0x1] %v3021
  %v3023 = vld [vmem:[%s3004 + $0x18] sm:$0xf]
  %v3024 = vsel %vm612, %v2874, %v3023
  %3025 = vst [vmem:[%s3004 + $0x18] sm:$0xf] %v3024
  %v3026 = vld [vmem:[%s3004 + $0x1c] sm:$0x1]
  %v3027 = vsel %vm40, %v2875, %v3026
  %3028 = vst [vmem:[%s3004 + $0x1c] sm:$0x1] %v3027
  %v3029 = vld [vmem:[%s3004 + $0x20] sm:$0xf]
  %v3030 = vsel %vm612, %v2882, %v3029
  %3031 = vst [vmem:[%s3004 + $0x20] sm:$0xf] %v3030
  %v3032 = vld [vmem:[%s3004 + $0x24] sm:$0x1]
  %v3033 = vsel %vm40, %v2883, %v3032
  %3034 = vst [vmem:[%s3004 + $0x24] sm:$0x1] %v3033
  %v3035 = vld [vmem:[%s3004 + $0x28] sm:$0xf]
  %v3036 = vsel %vm612, %v2890, %v3035
  %3037 = vst [vmem:[%s3004 + $0x28] sm:$0xf] %v3036
  %v3038 = vld [vmem:[%s3004 + $0x2c] sm:$0x1]
  %v3039 = vsel %vm40, %v2891, %v3038
  %3040 = vst [vmem:[%s3004 + $0x2c] sm:$0x1] %v3039
  %v3041 = vld [vmem:[%s3004 + $0x30] sm:$0xf]
  %v3042 = vsel %vm612, %v2898, %v3041
  %3043 = vst [vmem:[%s3004 + $0x30] sm:$0xf] %v3042
  %v3044 = vld [vmem:[%s3004 + $0x34] sm:$0x1]
  %v3045 = vsel %vm40, %v2899, %v3044
  %3046 = vst [vmem:[%s3004 + $0x34] sm:$0x1] %v3045
  %v3047 = vld [vmem:[%s3004 + $0x38] sm:$0xf]
  %v3048 = vsel %vm612, %v2906, %v3047
  %3049 = vst [vmem:[%s3004 + $0x38] sm:$0xf] %v3048
  %v3050 = vld [vmem:[%s3004 + $0x3c] sm:$0x1]
  %v3051 = vsel %vm40, %v2907, %v3050
  %3052 = vst [vmem:[%s3004 + $0x3c] sm:$0x1] %v3051
  %v3053 = vld [vmem:[%s3004 + $0x50] sm:$0xf]
  %v3054 = vsel %vm612, %v2914, %v3053
  %3055 = vst [vmem:[%s3004 + $0x50] sm:$0xf] %v3054
  %v3056 = vld [vmem:[%s3004 + $0x54] sm:$0x1]
  %v3057 = vsel %vm40, %v2915, %v3056
  %3058 = vst [vmem:[%s3004 + $0x54] sm:$0x1] %v3057
  %v3059 = vld [vmem:[%s3004 + $0x58] sm:$0xf]
  %v3060 = vsel %vm612, %v2922, %v3059
  %3061 = vst [vmem:[%s3004 + $0x58] sm:$0xf] %v3060
  %v3062 = vld [vmem:[%s3004 + $0x5c] sm:$0x1]
  %v3063 = vsel %vm40, %v2923, %v3062
  %3064 = vst [vmem:[%s3004 + $0x5c] sm:$0x1] %v3063
  %v3065 = vld [vmem:[%s3004 + $0x60] sm:$0xf]
  %v3066 = vsel %vm612, %v2930, %v3065
  %3067 = vst [vmem:[%s3004 + $0x60] sm:$0xf] %v3066
  %v3068 = vld [vmem:[%s3004 + $0x64] sm:$0x1]
  %v3069 = vsel %vm40, %v2931, %v3068
  %3070 = vst [vmem:[%s3004 + $0x64] sm:$0x1] %v3069
  %v3071 = vld [vmem:[%s3004 + $0x68] sm:$0xf]
  %v3072 = vsel %vm612, %v2938, %v3071
  %3073 = vst [vmem:[%s3004 + $0x68] sm:$0xf] %v3072
  %v3074 = vld [vmem:[%s3004 + $0x6c] sm:$0x1]
  %v3075 = vsel %vm40, %v2939, %v3074
  %3076 = vst [vmem:[%s3004 + $0x6c] sm:$0x1] %v3075
  %v3077 = vld [vmem:[%s3004 + $0x70] sm:$0xf]
  %v3078 = vsel %vm612, %v2946, %v3077
  %3079 = vst [vmem:[%s3004 + $0x70] sm:$0xf] %v3078
  %v3080 = vld [vmem:[%s3004 + $0x74] sm:$0x1]
  %v3081 = vsel %vm40, %v2947, %v3080
  %3082 = vst [vmem:[%s3004 + $0x74] sm:$0x1] %v3081
  %v3083 = vld [vmem:[%s3004 + $0x78] sm:$0xf]
  %v3084 = vsel %vm612, %v2954, %v3083
  %3085 = vst [vmem:[%s3004 + $0x78] sm:$0xf] %v3084
  %v3086 = vld [vmem:[%s3004 + $0x7c] sm:$0x1]
  %v3087 = vsel %vm40, %v2955, %v3086
  %3088 = vst [vmem:[%s3004 + $0x7c] sm:$0x1] %v3087
  %v3089 = vld [vmem:[%s3004 + $0x80] sm:$0xf]
  %v3090 = vsel %vm612, %v2962, %v3089
  %3091 = vst [vmem:[%s3004 + $0x80] sm:$0xf] %v3090
  %v3092 = vld [vmem:[%s3004 + $0x84] sm:$0x1]
  %v3093 = vsel %vm40, %v2963, %v3092
  %3094 = vst [vmem:[%s3004 + $0x84] sm:$0x1] %v3093
  %v3095 = vld [vmem:[%s3004 + $0x88] sm:$0xf]
  %v3096 = vsel %vm612, %v2970, %v3095
  %3097 = vst [vmem:[%s3004 + $0x88] sm:$0xf] %v3096
  %v3098 = vld [vmem:[%s3004 + $0x8c] sm:$0x1]
  %v3099 = vsel %vm40, %v2971, %v3098
  %3100 = vst [vmem:[%s3004 + $0x8c] sm:$0x1] %v3099
  %v3101 = vld [vmem:[#allocation3] sm:$0xf]
  %v3102 = vld [vmem:[#allocation3 + $0x8] sm:$0xf]
  %v3103 = vld [vmem:[#allocation3 + $0x10] sm:$0xf]
  %v3104 = vld [vmem:[#allocation3 + $0x18] sm:$0xf]
  %v3105 = vld [vmem:[#allocation3 + $0x20] sm:$0xf]
  %v3106 = vld [vmem:[#allocation3 + $0x28] sm:$0xf]
  %v3107 = vld [vmem:[#allocation3 + $0x30] sm:$0xf]
  %v3108 = vld [vmem:[#allocation3 + $0x38] sm:$0xf]
  %v3109 = vld [vmem:[#allocation3 + $0x50] sm:$0xf]
  %v3110 = vld [vmem:[#allocation3 + $0x58] sm:$0xf]
  %v3111 = vld [vmem:[#allocation3 + $0x60] sm:$0xf]
  %v3112 = vld [vmem:[#allocation3 + $0x68] sm:$0xf]
  %v3113 = vld [vmem:[#allocation3 + $0x70] sm:$0xf]
  %v3114 = vld [vmem:[#allocation3 + $0x78] sm:$0xf]
  %v3115 = vld [vmem:[#allocation3 + $0x80] sm:$0xf]
  %v3116 = vld [vmem:[#allocation3 + $0x88] sm:$0xf]
  %3117 = vst.msk [vmem:[#allocation5] sm:$0xf] %vm27, %v3101
  %3118 = vst.msk [vmem:[#allocation5 + $0x4] sm:$0xf] %vm27, %v3102
  %3119 = vst.msk [vmem:[#allocation5 + $0x8] sm:$0xf] %vm27, %v3103
  %3120 = vst.msk [vmem:[#allocation5 + $0xc] sm:$0xf] %vm27, %v3104
  %3121 = vst.msk [vmem:[#allocation5 + $0x10] sm:$0xf] %vm27, %v3105
  %3122 = vst.msk [vmem:[#allocation5 + $0x14] sm:$0xf] %vm27, %v3106
  %3123 = vst.msk [vmem:[#allocation5 + $0x18] sm:$0xf] %vm27, %v3107
  %3124 = vst.msk [vmem:[#allocation5 + $0x1c] sm:$0xf] %vm27, %v3108
  %3125 = vst.msk [vmem:[#allocation5 + $0x20] sm:$0xf] %vm27, %v3109
  %3126 = vst.msk [vmem:[#allocation5 + $0x24] sm:$0xf] %vm27, %v3110
  %3127 = vst.msk [vmem:[#allocation5 + $0x28] sm:$0xf] %vm27, %v3111
  %3128 = vst.msk [vmem:[#allocation5 + $0x2c] sm:$0xf] %vm27, %v3112
  %3129 = vst.msk [vmem:[#allocation5 + $0x30] sm:$0xf] %vm27, %v3113
  %3130 = vst.msk [vmem:[#allocation5 + $0x34] sm:$0xf] %vm27, %v3114
  %3131 = vst.msk [vmem:[#allocation5 + $0x38] sm:$0xf] %vm27, %v3115
  %3132 = vst.msk [vmem:[#allocation5 + $0x3c] sm:$0xf] %vm27, %v3116
  %v3133 = vld [vmem:[#allocation3] sm:$0xf]
  %v3134 = vld [vmem:[#allocation3 + $0x4] sm:$0x1]
  %v3135 = vld [vmem:[#allocation3 + $0x8] sm:$0xf]
  %v3136 = vld [vmem:[#allocation3 + $0xc] sm:$0x1]
  %v3137 = vld [vmem:[#allocation3 + $0x10] sm:$0xf]
  %v3138 = vld [vmem:[#allocation3 + $0x14] sm:$0x1]
  %v3139 = vld [vmem:[#allocation3 + $0x18] sm:$0xf]
  %v3140 = vld [vmem:[#allocation3 + $0x1c] sm:$0x1]
  %v3141 = vld [vmem:[#allocation3 + $0x20] sm:$0xf]
  %v3142 = vld [vmem:[#allocation3 + $0x24] sm:$0x1]
  %v3143 = vld [vmem:[#allocation3 + $0x28] sm:$0xf]
  %v3144 = vld [vmem:[#allocation3 + $0x2c] sm:$0x1]
  %v3145 = vld [vmem:[#allocation3 + $0x30] sm:$0xf]
  %v3146 = vld [vmem:[#allocation3 + $0x34] sm:$0x1]
  %v3147 = vld [vmem:[#allocation3 + $0x38] sm:$0xf]
  %v3148 = vld [vmem:[#allocation3 + $0x3c] sm:$0x1]
  %v3149 = vld [vmem:[#allocation3 + $0x50] sm:$0xf]
  %v3150 = vld [vmem:[#allocation3 + $0x54] sm:$0x1]
  %v3151 = vld [vmem:[#allocation3 + $0x58] sm:$0xf]
  %v3152 = vld [vmem:[#allocation3 + $0x5c] sm:$0x1]
  %v3153 = vld [vmem:[#allocation3 + $0x60] sm:$0xf]
  %v3154 = vld [vmem:[#allocation3 + $0x64] sm:$0x1]
  %v3155 = vld [vmem:[#allocation3 + $0x68] sm:$0xf]
  %v3156 = vld [vmem:[#allocation3 + $0x6c] sm:$0x1]
  %v3157 = vld [vmem:[#allocation3 + $0x70] sm:$0xf]
  %v3158 = vld [vmem:[#allocation3 + $0x74] sm:$0x1]
  %v3159 = vld [vmem:[#allocation3 + $0x78] sm:$0xf]
  %v3160 = vld [vmem:[#allocation3 + $0x7c] sm:$0x1]
  %v3161 = vld [vmem:[#allocation3 + $0x80] sm:$0xf]
  %v3162 = vld [vmem:[#allocation3 + $0x84] sm:$0x1]
  %v3163 = vld [vmem:[#allocation3 + $0x88] sm:$0xf]
  %v3164 = vld [vmem:[#allocation3 + $0x8c] sm:$0x1]
  %v3166 = vshrl.u32 %v3133, 16
  %v3168 = vrot.slane %v3166, 4
  %v3169 = vshll.u32 %v3133, 16
  %v3171 = vrot.slane %v3169, 5
  %v3172 = vor.u32 %v3168, %v3171
  %v3173 = vrot.slane %v3172, 4
  %v3175 = vshll.u32 %v3134, 16
  %v3177 = vrot.slane %v3175, 5
  %v3178 = vsel %vm807, %v3173, %v3177
  %v3180 = vshrl.u32 %v3135, 16
  %v3182 = vrot.slane %v3180, 4
  %v3183 = vshll.u32 %v3135, 16
  %v3185 = vrot.slane %v3183, 5
  %v3186 = vor.u32 %v3182, %v3185
  %v3187 = vrot.slane %v3186, 4
  %v3189 = vshll.u32 %v3136, 16
  %v3191 = vrot.slane %v3189, 5
  %v3192 = vsel %vm807, %v3187, %v3191
  %v3194 = vshrl.u32 %v3137, 16
  %v3196 = vrot.slane %v3194, 4
  %v3197 = vshll.u32 %v3137, 16
  %v3199 = vrot.slane %v3197, 5
  %v3200 = vor.u32 %v3196, %v3199
  %v3201 = vrot.slane %v3200, 4
  %v3203 = vshll.u32 %v3138, 16
  %v3205 = vrot.slane %v3203, 5
  %v3206 = vsel %vm807, %v3201, %v3205
  %v3208 = vshrl.u32 %v3139, 16
  %v3210 = vrot.slane %v3208, 4
  %v3211 = vshll.u32 %v3139, 16
  %v3213 = vrot.slane %v3211, 5
  %v3214 = vor.u32 %v3210, %v3213
  %v3215 = vrot.slane %v3214, 4
  %v3217 = vshll.u32 %v3140, 16
  %v3219 = vrot.slane %v3217, 5
  %v3220 = vsel %vm807, %v3215, %v3219
  %v3222 = vshrl.u32 %v3141, 16
  %v3224 = vrot.slane %v3222, 4
  %v3225 = vshll.u32 %v3141, 16
  %v3227 = vrot.slane %v3225, 5
  %v3228 = vor.u32 %v3224, %v3227
  %v3229 = vrot.slane %v3228, 4
  %v3231 = vshll.u32 %v3142, 16
  %v3233 = vrot.slane %v3231, 5
  %v3234 = vsel %vm807, %v3229, %v3233
  %v3236 = vshrl.u32 %v3143, 16
  %v3238 = vrot.slane %v3236, 4
  %v3239 = vshll.u32 %v3143, 16
  %v3241 = vrot.slane %v3239, 5
  %v3242 = vor.u32 %v3238, %v3241
  %v3243 = vrot.slane %v3242, 4
  %v3245 = vshll.u32 %v3144, 16
  %v3247 = vrot.slane %v3245, 5
  %v3248 = vsel %vm807, %v3243, %v3247
  %v3250 = vshrl.u32 %v3145, 16
  %v3252 = vrot.slane %v3250, 4
  %v3253 = vshll.u32 %v3145, 16
  %v3255 = vrot.slane %v3253, 5
  %v3256 = vor.u32 %v3252, %v3255
  %v3257 = vrot.slane %v3256, 4
  %v3259 = vshll.u32 %v3146, 16
  %v3261 = vrot.slane %v3259, 5
  %v3262 = vsel %vm807, %v3257, %v3261
  %v3264 = vshrl.u32 %v3147, 16
  %v3266 = vrot.slane %v3264, 4
  %v3267 = vshll.u32 %v3147, 16
  %v3269 = vrot.slane %v3267, 5
  %v3270 = vor.u32 %v3266, %v3269
  %v3271 = vrot.slane %v3270, 4
  %v3273 = vshll.u32 %v3148, 16
  %v3275 = vrot.slane %v3273, 5
  %v3276 = vsel %vm807, %v3271, %v3275
  %v3278 = vshrl.u32 %v3149, 16
  %v3280 = vrot.slane %v3278, 4
  %v3281 = vshll.u32 %v3149, 16
  %v3283 = vrot.slane %v3281, 5
  %v3284 = vor.u32 %v3280, %v3283
  %v3285 = vrot.slane %v3284, 4
  %v3287 = vshll.u32 %v3150, 16
  %v3289 = vrot.slane %v3287, 5
  %v3290 = vsel %vm807, %v3285, %v3289
  %v3292 = vshrl.u32 %v3151, 16
  %v3294 = vrot.slane %v3292, 4
  %v3295 = vshll.u32 %v3151, 16
  %v3297 = vrot.slane %v3295, 5
  %v3298 = vor.u32 %v3294, %v3297
  %v3299 = vrot.slane %v3298, 4
  %v3301 = vshll.u32 %v3152, 16
  %v3303 = vrot.slane %v3301, 5
  %v3304 = vsel %vm807, %v3299, %v3303
  %v3306 = vshrl.u32 %v3153, 16
  %v3308 = vrot.slane %v3306, 4
  %v3309 = vshll.u32 %v3153, 16
  %v3311 = vrot.slane %v3309, 5
  %v3312 = vor.u32 %v3308, %v3311
  %v3313 = vrot.slane %v3312, 4
  %v3315 = vshll.u32 %v3154, 16
  %v3317 = vrot.slane %v3315, 5
  %v3318 = vsel %vm807, %v3313, %v3317
  %v3320 = vshrl.u32 %v3155, 16
  %v3322 = vrot.slane %v3320, 4
  %v3323 = vshll.u32 %v3155, 16
  %v3325 = vrot.slane %v3323, 5
  %v3326 = vor.u32 %v3322, %v3325
  %v3327 = vrot.slane %v3326, 4
  %v3329 = vshll.u32 %v3156, 16
  %v3331 = vrot.slane %v3329, 5
  %v3332 = vsel %vm807, %v3327, %v3331
  %v3334 = vshrl.u32 %v3157, 16
  %v3336 = vrot.slane %v3334, 4
  %v3337 = vshll.u32 %v3157, 16
  %v3339 = vrot.slane %v3337, 5
  %v3340 = vor.u32 %v3336, %v3339
  %v3341 = vrot.slane %v3340, 4
  %v3343 = vshll.u32 %v3158, 16
  %v3345 = vrot.slane %v3343, 5
  %v3346 = vsel %vm807, %v3341, %v3345
  %v3348 = vshrl.u32 %v3159, 16
  %v3350 = vrot.slane %v3348, 4
  %v3351 = vshll.u32 %v3159, 16
  %v3353 = vrot.slane %v3351, 5
  %v3354 = vor.u32 %v3350, %v3353
  %v3355 = vrot.slane %v3354, 4
  %v3357 = vshll.u32 %v3160, 16
  %v3359 = vrot.slane %v3357, 5
  %v3360 = vsel %vm807, %v3355, %v3359
  %v3362 = vshrl.u32 %v3161, 16
  %v3364 = vrot.slane %v3362, 4
  %v3365 = vshll.u32 %v3161, 16
  %v3367 = vrot.slane %v3365, 5
  %v3368 = vor.u32 %v3364, %v3367
  %v3369 = vrot.slane %v3368, 4
  %v3371 = vshll.u32 %v3162, 16
  %v3373 = vrot.slane %v3371, 5
  %v3374 = vsel %vm807, %v3369, %v3373
  %v3376 = vshrl.u32 %v3163, 16
  %v3378 = vrot.slane %v3376, 4
  %v3379 = vshll.u32 %v3163, 16
  %v3381 = vrot.slane %v3379, 5
  %v3382 = vor.u32 %v3378, %v3381
  %v3383 = vrot.slane %v3382, 4
  %v3385 = vshll.u32 %v3164, 16
  %v3387 = vrot.slane %v3385, 5
  %v3388 = vsel %vm807, %v3383, %v3387
  %3389 = vrot.lane.b32.xlu0 %v3178, 8
  %v3390 = vpop.permute.xlu0 %3389
  %3391 = vrot.lane.b32.xlu0 %v3192, 8
  %v3392 = vpop.permute.xlu0 %3391
  %3393 = vrot.lane.b32.xlu0 %v3206, 8
  %v3394 = vpop.permute.xlu0 %3393
  %3395 = vrot.lane.b32.xlu0 %v3220, 8
  %v3396 = vpop.permute.xlu0 %3395
  %3397 = vrot.lane.b32.xlu0 %v3234, 8
  %v3398 = vpop.permute.xlu0 %3397
  %3399 = vrot.lane.b32.xlu0 %v3248, 8
  %v3400 = vpop.permute.xlu0 %3399
  %3401 = vrot.lane.b32.xlu0 %v3262, 8
  %v3402 = vpop.permute.xlu0 %3401
  %3403 = vrot.lane.b32.xlu0 %v3276, 8
  %v3404 = vpop.permute.xlu0 %3403
  %3405 = vrot.lane.b32.xlu0 %v3290, 8
  %v3406 = vpop.permute.xlu0 %3405
  %3407 = vrot.lane.b32.xlu0 %v3304, 8
  %v3408 = vpop.permute.xlu0 %3407
  %3409 = vrot.lane.b32.xlu0 %v3318, 8
  %v3410 = vpop.permute.xlu0 %3409
  %3411 = vrot.lane.b32.xlu0 %v3332, 8
  %v3412 = vpop.permute.xlu0 %3411
  %3413 = vrot.lane.b32.xlu0 %v3346, 8
  %v3414 = vpop.permute.xlu0 %3413
  %3415 = vrot.lane.b32.xlu0 %v3360, 8
  %v3416 = vpop.permute.xlu0 %3415
  %3417 = vrot.lane.b32.xlu0 %v3374, 8
  %v3418 = vpop.permute.xlu0 %3417
  %3419 = vrot.lane.b32.xlu0 %v3388, 8
  %v3420 = vpop.permute.xlu0 %3419
  %3437 = vst.msk [vmem:[#allocation5] sm:$0xf] %vm1080, %v3390
  %3438 = vst.msk [vmem:[#allocation5 + $0x4] sm:$0xf] %vm1080, %v3392
  %3439 = vst.msk [vmem:[#allocation5 + $0x8] sm:$0xf] %vm1080, %v3394
  %3440 = vst.msk [vmem:[#allocation5 + $0xc] sm:$0xf] %vm1080, %v3396
  %3441 = vst.msk [vmem:[#allocation5 + $0x10] sm:$0xf] %vm1080, %v3398
  %3442 = vst.msk [vmem:[#allocation5 + $0x14] sm:$0xf] %vm1080, %v3400
  %3443 = vst.msk [vmem:[#allocation5 + $0x18] sm:$0xf] %vm1080, %v3402
  %3444 = vst.msk [vmem:[#allocation5 + $0x1c] sm:$0xf] %vm1080, %v3404
  %3445 = vst.msk [vmem:[#allocation5 + $0x20] sm:$0xf] %vm1080, %v3406
  %3446 = vst.msk [vmem:[#allocation5 + $0x24] sm:$0xf] %vm1080, %v3408
  %3447 = vst.msk [vmem:[#allocation5 + $0x28] sm:$0xf] %vm1080, %v3410
  %3448 = vst.msk [vmem:[#allocation5 + $0x2c] sm:$0xf] %vm1080, %v3412
  %3449 = vst.msk [vmem:[#allocation5 + $0x30] sm:$0xf] %vm1080, %v3414
  %3450 = vst.msk [vmem:[#allocation5 + $0x34] sm:$0xf] %vm1080, %v3416
  %3451 = vst.msk [vmem:[#allocation5 + $0x38] sm:$0xf] %vm1080, %v3418
  %3452 = vst.msk [vmem:[#allocation5 + $0x3c] sm:$0xf] %vm1080, %v3420
  %v3453 = vld [vmem:[#allocation3] sm:$0xe]
  %v3454 = vld [vmem:[#allocation3 + $0x4] sm:$0x1]
  %v3455 = vld [vmem:[#allocation3 + $0x8] sm:$0xe]
  %v3456 = vld [vmem:[#allocation3 + $0xc] sm:$0x1]
  %v3457 = vld [vmem:[#allocation3 + $0x10] sm:$0xe]
  %v3458 = vld [vmem:[#allocation3 + $0x14] sm:$0x1]
  %v3459 = vld [vmem:[#allocation3 + $0x18] sm:$0xe]
  %v3460 = vld [vmem:[#allocation3 + $0x1c] sm:$0x1]
  %v3461 = vld [vmem:[#allocation3 + $0x20] sm:$0xe]
  %v3462 = vld [vmem:[#allocation3 + $0x24] sm:$0x1]
  %v3463 = vld [vmem:[#allocation3 + $0x28] sm:$0xe]
  %v3464 = vld [vmem:[#allocation3 + $0x2c] sm:$0x1]
  %v3465 = vld [vmem:[#allocation3 + $0x30] sm:$0xe]
  %v3466 = vld [vmem:[#allocation3 + $0x34] sm:$0x1]
  %v3467 = vld [vmem:[#allocation3 + $0x38] sm:$0xe]
  %v3468 = vld [vmem:[#allocation3 + $0x3c] sm:$0x1]
  %v3469 = vld [vmem:[#allocation3 + $0x50] sm:$0xe]
  %v3470 = vld [vmem:[#allocation3 + $0x54] sm:$0x1]
  %v3471 = vld [vmem:[#allocation3 + $0x58] sm:$0xe]
  %v3472 = vld [vmem:[#allocation3 + $0x5c] sm:$0x1]
  %v3473 = vld [vmem:[#allocation3 + $0x60] sm:$0xe]
  %v3474 = vld [vmem:[#allocation3 + $0x64] sm:$0x1]
  %v3475 = vld [vmem:[#allocation3 + $0x68] sm:$0xe]
  %v3476 = vld [vmem:[#allocation3 + $0x6c] sm:$0x1]
  %v3477 = vld [vmem:[#allocation3 + $0x70] sm:$0xe]
  %v3478 = vld [vmem:[#allocation3 + $0x74] sm:$0x1]
  %v3479 = vld [vmem:[#allocation3 + $0x78] sm:$0xe]
  %v3480 = vld [vmem:[#allocation3 + $0x7c] sm:$0x1]
  %v3481 = vld [vmem:[#allocation3 + $0x80] sm:$0xe]
  %v3482 = vld [vmem:[#allocation3 + $0x84] sm:$0x1]
  %v3483 = vld [vmem:[#allocation3 + $0x88] sm:$0xe]
  %v3484 = vld [vmem:[#allocation3 + $0x8c] sm:$0x1]
  %v3517 = vrot.slane %v3453, 5
  %v3518 = vrot.slane %v3517, 4
  %v3519 = vrot.slane %v3454, 5
  %v3520 = vsel %vm1163, %v3518, %v3519
  %v3521 = vrot.slane %v3455, 5
  %v3522 = vrot.slane %v3521, 4
  %v3523 = vrot.slane %v3456, 5
  %v3524 = vsel %vm1163, %v3522, %v3523
  %v3525 = vrot.slane %v3457, 5
  %v3526 = vrot.slane %v3525, 4
  %v3527 = vrot.slane %v3458, 5
  %v3528 = vsel %vm1163, %v3526, %v3527
  %v3529 = vrot.slane %v3459, 5
  %v3530 = vrot.slane %v3529, 4
  %v3531 = vrot.slane %v3460, 5
  %v3532 = vsel %vm1163, %v3530, %v3531
  %v3533 = vrot.slane %v3461, 5
  %v3534 = vrot.slane %v3533, 4
  %v3535 = vrot.slane %v3462, 5
  %v3536 = vsel %vm1163, %v3534, %v3535
  %v3537 = vrot.slane %v3463, 5
  %v3538 = vrot.slane %v3537, 4
  %v3539 = vrot.slane %v3464, 5
  %v3540 = vsel %vm1163, %v3538, %v3539
  %v3541 = vrot.slane %v3465, 5
  %v3542 = vrot.slane %v3541, 4
  %v3543 = vrot.slane %v3466, 5
  %v3544 = vsel %vm1163, %v3542, %v3543
  %v3545 = vrot.slane %v3467, 5
  %v3546 = vrot.slane %v3545, 4
  %v3547 = vrot.slane %v3468, 5
  %v3548 = vsel %vm1163, %v3546, %v3547
  %v3549 = vrot.slane %v3469, 5
  %v3550 = vrot.slane %v3549, 4
  %v3551 = vrot.slane %v3470, 5
  %v3552 = vsel %vm1163, %v3550, %v3551
  %v3553 = vrot.slane %v3471, 5
  %v3554 = vrot.slane %v3553, 4
  %v3555 = vrot.slane %v3472, 5
  %v3556 = vsel %vm1163, %v3554, %v3555
  %v3557 = vrot.slane %v3473, 5
  %v3558 = vrot.slane %v3557, 4
  %v3559 = vrot.slane %v3474, 5
  %v3560 = vsel %vm1163, %v3558, %v3559
  %v3561 = vrot.slane %v3475, 5
  %v3562 = vrot.slane %v3561, 4
  %v3563 = vrot.slane %v3476, 5
  %v3564 = vsel %vm1163, %v3562, %v3563
  %v3565 = vrot.slane %v3477, 5
  %v3566 = vrot.slane %v3565, 4
  %v3567 = vrot.slane %v3478, 5
  %v3568 = vsel %vm1163, %v3566, %v3567
  %v3569 = vrot.slane %v3479, 5
  %v3570 = vrot.slane %v3569, 4
  %v3571 = vrot.slane %v3480, 5
  %v3572 = vsel %vm1163, %v3570, %v3571
  %v3573 = vrot.slane %v3481, 5
  %v3574 = vrot.slane %v3573, 4
  %v3575 = vrot.slane %v3482, 5
  %v3576 = vsel %vm1163, %v3574, %v3575
  %v3577 = vrot.slane %v3483, 5
  %v3578 = vrot.slane %v3577, 4
  %v3579 = vrot.slane %v3484, 5
  %v3580 = vsel %vm1163, %v3578, %v3579
  %3581 = vrot.lane.b32.xlu0 %v3520, 16
  %v3582 = vpop.permute.xlu0 %3581
  %3583 = vrot.lane.b32.xlu0 %v3524, 16
  %v3584 = vpop.permute.xlu0 %3583
  %3585 = vrot.lane.b32.xlu0 %v3528, 16
  %v3586 = vpop.permute.xlu0 %3585
  %3587 = vrot.lane.b32.xlu0 %v3532, 16
  %v3588 = vpop.permute.xlu0 %3587
  %3589 = vrot.lane.b32.xlu0 %v3536, 16
  %v3590 = vpop.permute.xlu0 %3589
  %3591 = vrot.lane.b32.xlu0 %v3540, 16
  %v3592 = vpop.permute.xlu0 %3591
  %3593 = vrot.lane.b32.xlu0 %v3544, 16
  %v3594 = vpop.permute.xlu0 %3593
  %3595 = vrot.lane.b32.xlu0 %v3548, 16
  %v3596 = vpop.permute.xlu0 %3595
  %3597 = vrot.lane.b32.xlu0 %v3552, 16
  %v3598 = vpop.permute.xlu0 %3597
  %3599 = vrot.lane.b32.xlu0 %v3556, 16
  %v3600 = vpop.permute.xlu0 %3599
  %3601 = vrot.lane.b32.xlu0 %v3560, 16
  %v3602 = vpop.permute.xlu0 %3601
  %3603 = vrot.lane.b32.xlu0 %v3564, 16
  %v3604 = vpop.permute.xlu0 %3603
  %3605 = vrot.lane.b32.xlu0 %v3568, 16
  %v3606 = vpop.permute.xlu0 %3605
  %3607 = vrot.lane.b32.xlu0 %v3572, 16
  %v3608 = vpop.permute.xlu0 %3607
  %3609 = vrot.lane.b32.xlu0 %v3576, 16
  %v3610 = vpop.permute.xlu0 %3609
  %3611 = vrot.lane.b32.xlu0 %v3580, 16
  %v3612 = vpop.permute.xlu0 %3611
  %3629 = vst.msk [vmem:[#allocation5] sm:$0xf] %vm1276, %v3582
  %3630 = vst.msk [vmem:[#allocation5 + $0x4] sm:$0xf] %vm1276, %v3584
  %3631 = vst.msk [vmem:[#allocation5 + $0x8] sm:$0xf] %vm1276, %v3586
  %3632 = vst.msk [vmem:[#allocation5 + $0xc] sm:$0xf] %vm1276, %v3588
  %3633 = vst.msk [vmem:[#allocation5 + $0x10] sm:$0xf] %vm1276, %v3590
  %3634 = vst.msk [vmem:[#allocation5 + $0x14] sm:$0xf] %vm1276, %v3592
  %3635 = vst.msk [vmem:[#allocation5 + $0x18] sm:$0xf] %vm1276, %v3594
  %3636 = vst.msk [vmem:[#allocation5 + $0x1c] sm:$0xf] %vm1276, %v3596
  %3637 = vst.msk [vmem:[#allocation5 + $0x20] sm:$0xf] %vm1276, %v3598
  %3638 = vst.msk [vmem:[#allocation5 + $0x24] sm:$0xf] %vm1276, %v3600
  %3639 = vst.msk [vmem:[#allocation5 + $0x28] sm:$0xf] %vm1276, %v3602
  %3640 = vst.msk [vmem:[#allocation5 + $0x2c] sm:$0xf] %vm1276, %v3604
  %3641 = vst.msk [vmem:[#allocation5 + $0x30] sm:$0xf] %vm1276, %v3606
  %3642 = vst.msk [vmem:[#allocation5 + $0x34] sm:$0xf] %vm1276, %v3608
  %3643 = vst.msk [vmem:[#allocation5 + $0x38] sm:$0xf] %vm1276, %v3610
  %3644 = vst.msk [vmem:[#allocation5 + $0x3c] sm:$0xf] %vm1276, %v3612
  %v3645 = vld [vmem:[%s3004] sm:$0xf]
  %v3646 = vld [vmem:[%s3004 + $0x8] sm:$0xf]
  %v3647 = vld [vmem:[%s3004 + $0x10] sm:$0xf]
  %v3648 = vld [vmem:[%s3004 + $0x18] sm:$0xf]
  %v3649 = vld [vmem:[%s3004 + $0x20] sm:$0xf]
  %v3650 = vld [vmem:[%s3004 + $0x28] sm:$0xf]
  %v3651 = vld [vmem:[%s3004 + $0x30] sm:$0xf]
  %v3652 = vld [vmem:[%s3004 + $0x38] sm:$0xf]
  %v3653 = vld [vmem:[%s3004 + $0x50] sm:$0xf]
  %v3654 = vld [vmem:[%s3004 + $0x58] sm:$0xf]
  %v3655 = vld [vmem:[%s3004 + $0x60] sm:$0xf]
  %v3656 = vld [vmem:[%s3004 + $0x68] sm:$0xf]
  %v3657 = vld [vmem:[%s3004 + $0x70] sm:$0xf]
  %v3658 = vld [vmem:[%s3004 + $0x78] sm:$0xf]
  %v3659 = vld [vmem:[%s3004 + $0x80] sm:$0xf]
  %v3660 = vld [vmem:[%s3004 + $0x88] sm:$0xf]
  %3677 = vrot.lane.b32.xlu0 %v3645, 24
  %v3678 = vpop.permute.xlu0 %3677
  %3679 = vrot.lane.b32.xlu0 %v3646, 24
  %v3680 = vpop.permute.xlu0 %3679
  %3681 = vrot.lane.b32.xlu0 %v3647, 24
  %v3682 = vpop.permute.xlu0 %3681
  %3683 = vrot.lane.b32.xlu0 %v3648, 24
  %v3684 = vpop.permute.xlu0 %3683
  %3685 = vrot.lane.b32.xlu0 %v3649, 24
  %v3686 = vpop.permute.xlu0 %3685
  %3687 = vrot.lane.b32.xlu0 %v3650, 24
  %v3688 = vpop.permute.xlu0 %3687
  %3689 = vrot.lane.b32.xlu0 %v3651, 24
  %v3690 = vpop.permute.xlu0 %3689
  %3691 = vrot.lane.b32.xlu0 %v3652, 24
  %v3692 = vpop.permute.xlu0 %3691
  %3693 = vrot.lane.b32.xlu0 %v3653, 24
  %v3694 = vpop.permute.xlu0 %3693
  %3695 = vrot.lane.b32.xlu0 %v3654, 24
  %v3696 = vpop.permute.xlu0 %3695
  %3697 = vrot.lane.b32.xlu0 %v3655, 24
  %v3698 = vpop.permute.xlu0 %3697
  %3699 = vrot.lane.b32.xlu0 %v3656, 24
  %v3700 = vpop.permute.xlu0 %3699
  %3701 = vrot.lane.b32.xlu0 %v3657, 24
  %v3702 = vpop.permute.xlu0 %3701
  %3703 = vrot.lane.b32.xlu0 %v3658, 24
  %v3704 = vpop.permute.xlu0 %3703
  %3705 = vrot.lane.b32.xlu0 %v3659, 24
  %v3706 = vpop.permute.xlu0 %3705
  %3707 = vrot.lane.b32.xlu0 %v3660, 24
  %v3708 = vpop.permute.xlu0 %3707
  %3725 = vst.msk [vmem:[#allocation5] sm:$0xf] %vm1373, %v3678
  %3726 = vst.msk [vmem:[#allocation5 + $0x4] sm:$0xf] %vm1373, %v3680
  %3727 = vst.msk [vmem:[#allocation5 + $0x8] sm:$0xf] %vm1373, %v3682
  %3728 = vst.msk [vmem:[#allocation5 + $0xc] sm:$0xf] %vm1373, %v3684
  %3729 = vst.msk [vmem:[#allocation5 + $0x10] sm:$0xf] %vm1373, %v3686
  %3730 = vst.msk [vmem:[#allocation5 + $0x14] sm:$0xf] %vm1373, %v3688
  %3731 = vst.msk [vmem:[#allocation5 + $0x18] sm:$0xf] %vm1373, %v3690
  %3732 = vst.msk [vmem:[#allocation5 + $0x1c] sm:$0xf] %vm1373, %v3692
  %3733 = vst.msk [vmem:[#allocation5 + $0x20] sm:$0xf] %vm1373, %v3694
  %3734 = vst.msk [vmem:[#allocation5 + $0x24] sm:$0xf] %vm1373, %v3696
  %3735 = vst.msk [vmem:[#allocation5 + $0x28] sm:$0xf] %vm1373, %v3698
  %3736 = vst.msk [vmem:[#allocation5 + $0x2c] sm:$0xf] %vm1373, %v3700
  %3737 = vst.msk [vmem:[#allocation5 + $0x30] sm:$0xf] %vm1373, %v3702
  %3738 = vst.msk [vmem:[#allocation5 + $0x34] sm:$0xf] %vm1373, %v3704
  %3739 = vst.msk [vmem:[#allocation5 + $0x38] sm:$0xf] %vm1373, %v3706
  %3740 = vst.msk [vmem:[#allocation5 + $0x3c] sm:$0xf] %vm1373, %v3708
  %v3741 = vld [vmem:[%s3004] sm:$0xf]
  %v3742 = vld [vmem:[%s3004 + $0x4] sm:$0x1]
  %v3743 = vld [vmem:[%s3004 + $0x8] sm:$0xf]
  %v3744 = vld [vmem:[%s3004 + $0xc] sm:$0x1]
  %v3745 = vld [vmem:[%s3004 + $0x10] sm:$0xf]
  %v3746 = vld [vmem:[%s3004 + $0x14] sm:$0x1]
  %v3747 = vld [vmem:[%s3004 + $0x18] sm:$0xf]
  %v3748 = vld [vmem:[%s3004 + $0x1c] sm:$0x1]
  %v3749 = vld [vmem:[%s3004 + $0x20] sm:$0xf]
  %v3750 = vld [vmem:[%s3004 + $0x24] sm:$0x1]
  %v3751 = vld [vmem:[%s3004 + $0x28] sm:$0xf]
  %v3752 = vld [vmem:[%s3004 + $0x2c] sm:$0x1]
  %v3753 = vld [vmem:[%s3004 + $0x30] sm:$0xf]
  %v3754 = vld [vmem:[%s3004 + $0x34] sm:$0x1]
  %v3755 = vld [vmem:[%s3004 + $0x38] sm:$0xf]
  %v3756 = vld [vmem:[%s3004 + $0x3c] sm:$0x1]
  %v3757 = vld [vmem:[%s3004 + $0x50] sm:$0xf]
  %v3758 = vld [vmem:[%s3004 + $0x54] sm:$0x1]
  %v3759 = vld [vmem:[%s3004 + $0x58] sm:$0xf]
  %v3760 = vld [vmem:[%s3004 + $0x5c] sm:$0x1]
  %v3761 = vld [vmem:[%s3004 + $0x60] sm:$0xf]
  %v3762 = vld [vmem:[%s3004 + $0x64] sm:$0x1]
  %v3763 = vld [vmem:[%s3004 + $0x68] sm:$0xf]
  %v3764 = vld [vmem:[%s3004 + $0x6c] sm:$0x1]
  %v3765 = vld [vmem:[%s3004 + $0x70] sm:$0xf]
  %v3766 = vld [vmem:[%s3004 + $0x74] sm:$0x1]
  %v3767 = vld [vmem:[%s3004 + $0x78] sm:$0xf]
  %v3768 = vld [vmem:[%s3004 + $0x7c] sm:$0x1]
  %v3769 = vld [vmem:[%s3004 + $0x80] sm:$0xf]
  %v3770 = vld [vmem:[%s3004 + $0x84] sm:$0x1]
  %v3771 = vld [vmem:[%s3004 + $0x88] sm:$0xf]
  %v3772 = vld [vmem:[%s3004 + $0x8c] sm:$0x1]
  %v3774 = vshrl.u32 %v3741, 16
  %v3776 = vrot.slane %v3774, 4
  %v3777 = vshll.u32 %v3741, 16
  %v3779 = vrot.slane %v3777, 5
  %v3780 = vor.u32 %v3776, %v3779
  %v3781 = vrot.slane %v3780, 4
  %v3783 = vshll.u32 %v3742, 16
  %v3785 = vrot.slane %v3783, 5
  %v3786 = vsel %vm807, %v3781, %v3785
  %v3788 = vshrl.u32 %v3743, 16
  %v3790 = vrot.slane %v3788, 4
  %v3791 = vshll.u32 %v3743, 16
  %v3793 = vrot.slane %v3791, 5
  %v3794 = vor.u32 %v3790, %v3793
  %v3795 = vrot.slane %v3794, 4
  %v3797 = vshll.u32 %v3744, 16
  %v3799 = vrot.slane %v3797, 5
  %v3800 = vsel %vm807, %v3795, %v3799
  %v3802 = vshrl.u32 %v3745, 16
  %v3804 = vrot.slane %v3802, 4
  %v3805 = vshll.u32 %v3745, 16
  %v3807 = vrot.slane %v3805, 5
  %v3808 = vor.u32 %v3804, %v3807
  %v3809 = vrot.slane %v3808, 4
  %v3811 = vshll.u32 %v3746, 16
  %v3813 = vrot.slane %v3811, 5
  %v3814 = vsel %vm807, %v3809, %v3813
  %v3816 = vshrl.u32 %v3747, 16
  %v3818 = vrot.slane %v3816, 4
  %v3819 = vshll.u32 %v3747, 16
  %v3821 = vrot.slane %v3819, 5
  %v3822 = vor.u32 %v3818, %v3821
  %v3823 = vrot.slane %v3822, 4
  %v3825 = vshll.u32 %v3748, 16
  %v3827 = vrot.slane %v3825, 5
  %v3828 = vsel %vm807, %v3823, %v3827
  %v3830 = vshrl.u32 %v3749, 16
  %v3832 = vrot.slane %v3830, 4
  %v3833 = vshll.u32 %v3749, 16
  %v3835 = vrot.slane %v3833, 5
  %v3836 = vor.u32 %v3832, %v3835
  %v3837 = vrot.slane %v3836, 4
  %v3839 = vshll.u32 %v3750, 16
  %v3841 = vrot.slane %v3839, 5
  %v3842 = vsel %vm807, %v3837, %v3841
  %v3844 = vshrl.u32 %v3751, 16
  %v3846 = vrot.slane %v3844, 4
  %v3847 = vshll.u32 %v3751, 16
  %v3849 = vrot.slane %v3847, 5
  %v3850 = vor.u32 %v3846, %v3849
  %v3851 = vrot.slane %v3850, 4
  %v3853 = vshll.u32 %v3752, 16
  %v3855 = vrot.slane %v3853, 5
  %v3856 = vsel %vm807, %v3851, %v3855
  %v3858 = vshrl.u32 %v3753, 16
  %v3860 = vrot.slane %v3858, 4
  %v3861 = vshll.u32 %v3753, 16
  %v3863 = vrot.slane %v3861, 5
  %v3864 = vor.u32 %v3860, %v3863
  %v3865 = vrot.slane %v3864, 4
  %v3867 = vshll.u32 %v3754, 16
  %v3869 = vrot.slane %v3867, 5
  %v3870 = vsel %vm807, %v3865, %v3869
  %v3872 = vshrl.u32 %v3755, 16
  %v3874 = vrot.slane %v3872, 4
  %v3875 = vshll.u32 %v3755, 16
  %v3877 = vrot.slane %v3875, 5
  %v3878 = vor.u32 %v3874, %v3877
  %v3879 = vrot.slane %v3878, 4
  %v3881 = vshll.u32 %v3756, 16
  %v3883 = vrot.slane %v3881, 5
  %v3884 = vsel %vm807, %v3879, %v3883
  %v3886 = vshrl.u32 %v3757, 16
  %v3888 = vrot.slane %v3886, 4
  %v3889 = vshll.u32 %v3757, 16
  %v3891 = vrot.slane %v3889, 5
  %v3892 = vor.u32 %v3888, %v3891
  %v3893 = vrot.slane %v3892, 4
  %v3895 = vshll.u32 %v3758, 16
  %v3897 = vrot.slane %v3895, 5
  %v3898 = vsel %vm807, %v3893, %v3897
  %v3900 = vshrl.u32 %v3759, 16
  %v3902 = vrot.slane %v3900, 4
  %v3903 = vshll.u32 %v3759, 16
  %v3905 = vrot.slane %v3903, 5
  %v3906 = vor.u32 %v3902, %v3905
  %v3907 = vrot.slane %v3906, 4
  %v3909 = vshll.u32 %v3760, 16
  %v3911 = vrot.slane %v3909, 5
  %v3912 = vsel %vm807, %v3907, %v3911
  %v3914 = vshrl.u32 %v3761, 16
  %v3916 = vrot.slane %v3914, 4
  %v3917 = vshll.u32 %v3761, 16
  %v3919 = vrot.slane %v3917, 5
  %v3920 = vor.u32 %v3916, %v3919
  %v3921 = vrot.slane %v3920, 4
  %v3923 = vshll.u32 %v3762, 16
  %v3925 = vrot.slane %v3923, 5
  %v3926 = vsel %vm807, %v3921, %v3925
  %v3928 = vshrl.u32 %v3763, 16
  %v3930 = vrot.slane %v3928, 4
  %v3931 = vshll.u32 %v3763, 16
  %v3933 = vrot.slane %v3931, 5
  %v3934 = vor.u32 %v3930, %v3933
  %v3935 = vrot.slane %v3934, 4
  %v3937 = vshll.u32 %v3764, 16
  %v3939 = vrot.slane %v3937, 5
  %v3940 = vsel %vm807, %v3935, %v3939
  %v3942 = vshrl.u32 %v3765, 16
  %v3944 = vrot.slane %v3942, 4
  %v3945 = vshll.u32 %v3765, 16
  %v3947 = vrot.slane %v3945, 5
  %v3948 = vor.u32 %v3944, %v3947
  %v3949 = vrot.slane %v3948, 4
  %v3951 = vshll.u32 %v3766, 16
  %v3953 = vrot.slane %v3951, 5
  %v3954 = vsel %vm807, %v3949, %v3953
  %v3956 = vshrl.u32 %v3767, 16
  %v3958 = vrot.slane %v3956, 4
  %v3959 = vshll.u32 %v3767, 16
  %v3961 = vrot.slane %v3959, 5
  %v3962 = vor.u32 %v3958, %v3961
  %v3963 = vrot.slane %v3962, 4
  %v3965 = vshll.u32 %v3768, 16
  %v3967 = vrot.slane %v3965, 5
  %v3968 = vsel %vm807, %v3963, %v3967
  %v3970 = vshrl.u32 %v3769, 16
  %v3972 = vrot.slane %v3970, 4
  %v3973 = vshll.u32 %v3769, 16
  %v3975 = vrot.slane %v3973, 5
  %v3976 = vor.u32 %v3972, %v3975
  %v3977 = vrot.slane %v3976, 4
  %v3979 = vshll.u32 %v3770, 16
  %v3981 = vrot.slane %v3979, 5
  %v3982 = vsel %vm807, %v3977, %v3981
  %v3984 = vshrl.u32 %v3771, 16
  %v3986 = vrot.slane %v3984, 4
  %v3987 = vshll.u32 %v3771, 16
  %v3989 = vrot.slane %v3987, 5
  %v3990 = vor.u32 %v3986, %v3989
  %v3991 = vrot.slane %v3990, 4
  %v3993 = vshll.u32 %v3772, 16
  %v3995 = vrot.slane %v3993, 5
  %v3996 = vsel %vm807, %v3991, %v3995
  %3997 = vrot.lane.b32.xlu0 %v3786, 32
  %v3998 = vpop.permute.xlu0 %3997
  %3999 = vrot.lane.b32.xlu0 %v3800, 32
  %v4000 = vpop.permute.xlu0 %3999
  %4001 = vrot.lane.b32.xlu0 %v3814, 32
  %v4002 = vpop.permute.xlu0 %4001
  %4003 = vrot.lane.b32.xlu0 %v3828, 32
  %v4004 = vpop.permute.xlu0 %4003
  %4005 = vrot.lane.b32.xlu0 %v3842, 32
  %v4006 = vpop.permute.xlu0 %4005
  %4007 = vrot.lane.b32.xlu0 %v3856, 32
  %v4008 = vpop.permute.xlu0 %4007
  %4009 = vrot.lane.b32.xlu0 %v3870, 32
  %v4010 = vpop.permute.xlu0 %4009
  %4011 = vrot.lane.b32.xlu0 %v3884, 32
  %v4012 = vpop.permute.xlu0 %4011
  %4013 = vrot.lane.b32.xlu0 %v3898, 32
  %v4014 = vpop.permute.xlu0 %4013
  %4015 = vrot.lane.b32.xlu0 %v3912, 32
  %v4016 = vpop.permute.xlu0 %4015
  %4017 = vrot.lane.b32.xlu0 %v3926, 32
  %v4018 = vpop.permute.xlu0 %4017
  %4019 = vrot.lane.b32.xlu0 %v3940, 32
  %v4020 = vpop.permute.xlu0 %4019
  %4021 = vrot.lane.b32.xlu0 %v3954, 32
  %v4022 = vpop.permute.xlu0 %4021
  %4023 = vrot.lane.b32.xlu0 %v3968, 32
  %v4024 = vpop.permute.xlu0 %4023
  %4025 = vrot.lane.b32.xlu0 %v3982, 32
  %v4026 = vpop.permute.xlu0 %4025
  %4027 = vrot.lane.b32.xlu0 %v3996, 32
  %v4028 = vpop.permute.xlu0 %4027
  %4045 = vst.msk [vmem:[#allocation5] sm:$0xf] %vm1694, %v3998
  %4046 = vst.msk [vmem:[#allocation5 + $0x4] sm:$0xf] %vm1694, %v4000
  %4047 = vst.msk [vmem:[#allocation5 + $0x8] sm:$0xf] %vm1694, %v4002
  %4048 = vst.msk [vmem:[#allocation5 + $0xc] sm:$0xf] %vm1694, %v4004
  %4049 = vst.msk [vmem:[#allocation5 + $0x10] sm:$0xf] %vm1694, %v4006
  %4050 = vst.msk [vmem:[#allocation5 + $0x14] sm:$0xf] %vm1694, %v4008
  %4051 = vst.msk [vmem:[#allocation5 + $0x18] sm:$0xf] %vm1694, %v4010
  %4052 = vst.msk [vmem:[#allocation5 + $0x1c] sm:$0xf] %vm1694, %v4012
  %4053 = vst.msk [vmem:[#allocation5 + $0x20] sm:$0xf] %vm1694, %v4014
  %4054 = vst.msk [vmem:[#allocation5 + $0x24] sm:$0xf] %vm1694, %v4016
  %4055 = vst.msk [vmem:[#allocation5 + $0x28] sm:$0xf] %vm1694, %v4018
  %4056 = vst.msk [vmem:[#allocation5 + $0x2c] sm:$0xf] %vm1694, %v4020
  %4057 = vst.msk [vmem:[#allocation5 + $0x30] sm:$0xf] %vm1694, %v4022
  %4058 = vst.msk [vmem:[#allocation5 + $0x34] sm:$0xf] %vm1694, %v4024
  %4059 = vst.msk [vmem:[#allocation5 + $0x38] sm:$0xf] %vm1694, %v4026
  %4060 = vst.msk [vmem:[#allocation5 + $0x3c] sm:$0xf] %vm1694, %v4028
  %v4061 = vld [vmem:[%s3004] sm:$0xe]
  %v4062 = vld [vmem:[%s3004 + $0x4] sm:$0x1]
  %v4063 = vld [vmem:[%s3004 + $0x8] sm:$0xe]
  %v4064 = vld [vmem:[%s3004 + $0xc] sm:$0x1]
  %v4065 = vld [vmem:[%s3004 + $0x10] sm:$0xe]
  %v4066 = vld [vmem:[%s3004 + $0x14] sm:$0x1]
  %v4067 = vld [vmem:[%s3004 + $0x18] sm:$0xe]
  %v4068 = vld [vmem:[%s3004 + $0x1c] sm:$0x1]
  %v4069 = vld [vmem:[%s3004 + $0x20] sm:$0xe]
  %v4070 = vld [vmem:[%s3004 + $0x24] sm:$0x1]
  %v4071 = vld [vmem:[%s3004 + $0x28] sm:$0xe]
  %v4072 = vld [vmem:[%s3004 + $0x2c] sm:$0x1]
  %v4073 = vld [vmem:[%s3004 + $0x30] sm:$0xe]
  %v4074 = vld [vmem:[%s3004 + $0x34] sm:$0x1]
  %v4075 = vld [vmem:[%s3004 + $0x38] sm:$0xe]
  %v4076 = vld [vmem:[%s3004 + $0x3c] sm:$0x1]
  %v4077 = vld [vmem:[%s3004 + $0x50] sm:$0xe]
  %v4078 = vld [vmem:[%s3004 + $0x54] sm:$0x1]
  %v4079 = vld [vmem:[%s3004 + $0x58] sm:$0xe]
  %v4080 = vld [vmem:[%s3004 + $0x5c] sm:$0x1]
  %v4081 = vld [vmem:[%s3004 + $0x60] sm:$0xe]
  %v4082 = vld [vmem:[%s3004 + $0x64] sm:$0x1]
  %v4083 = vld [vmem:[%s3004 + $0x68] sm:$0xe]
  %v4084 = vld [vmem:[%s3004 + $0x6c] sm:$0x1]
  %v4085 = vld [vmem:[%s3004 + $0x70] sm:$0xe]
  %v4086 = vld [vmem:[%s3004 + $0x74] sm:$0x1]
  %v4087 = vld [vmem:[%s3004 + $0x78] sm:$0xe]
  %v4088 = vld [vmem:[%s3004 + $0x7c] sm:$0x1]
  %v4089 = vld [vmem:[%s3004 + $0x80] sm:$0xe]
  %v4090 = vld [vmem:[%s3004 + $0x84] sm:$0x1]
  %v4091 = vld [vmem:[%s3004 + $0x88] sm:$0xe]
  %v4092 = vld [vmem:[%s3004 + $0x8c] sm:$0x1]
  %v4125 = vrot.slane %v4061, 5
  %v4126 = vrot.slane %v4125, 4
  %v4127 = vrot.slane %v4062, 5
  %v4128 = vsel %vm1163, %v4126, %v4127
  %v4129 = vrot.slane %v4063, 5
  %v4130 = vrot.slane %v4129, 4
  %v4131 = vrot.slane %v4064, 5
  %v4132 = vsel %vm1163, %v4130, %v4131
  %v4133 = vrot.slane %v4065, 5
  %v4134 = vrot.slane %v4133, 4
  %v4135 = vrot.slane %v4066, 5
  %v4136 = vsel %vm1163, %v4134, %v4135
  %v4137 = vrot.slane %v4067, 5
  %v4138 = vrot.slane %v4137, 4
  %v4139 = vrot.slane %v4068, 5
  %v4140 = vsel %vm1163, %v4138, %v4139
  %v4141 = vrot.slane %v4069, 5
  %v4142 = vrot.slane %v4141, 4
  %v4143 = vrot.slane %v4070, 5
  %v4144 = vsel %vm1163, %v4142, %v4143
  %v4145 = vrot.slane %v4071, 5
  %v4146 = vrot.slane %v4145, 4
  %v4147 = vrot.slane %v4072, 5
  %v4148 = vsel %vm1163, %v4146, %v4147
  %v4149 = vrot.slane %v4073, 5
  %v4150 = vrot.slane %v4149, 4
  %v4151 = vrot.slane %v4074, 5
  %v4152 = vsel %vm1163, %v4150, %v4151
  %v4153 = vrot.slane %v4075, 5
  %v4154 = vrot.slane %v4153, 4
  %v4155 = vrot.slane %v4076, 5
  %v4156 = vsel %vm1163, %v4154, %v4155
  %v4157 = vrot.slane %v4077, 5
  %v4158 = vrot.slane %v4157, 4
  %v4159 = vrot.slane %v4078, 5
  %v4160 = vsel %vm1163, %v4158, %v4159
  %v4161 = vrot.slane %v4079, 5
  %v4162 = vrot.slane %v4161, 4
  %v4163 = vrot.slane %v4080, 5
  %v4164 = vsel %vm1163, %v4162, %v4163
  %v4165 = vrot.slane %v4081, 5
  %v4166 = vrot.slane %v4165, 4
  %v4167 = vrot.slane %v4082, 5
  %v4168 = vsel %vm1163, %v4166, %v4167
  %v4169 = vrot.slane %v4083, 5
  %v4170 = vrot.slane %v4169, 4
  %v4171 = vrot.slane %v4084, 5
  %v4172 = vsel %vm1163, %v4170, %v4171
  %v4173 = vrot.slane %v4085, 5
  %v4174 = vrot.slane %v4173, 4
  %v4175 = vrot.slane %v4086, 5
  %v4176 = vsel %vm1163, %v4174, %v4175
  %v4177 = vrot.slane %v4087, 5
  %v4178 = vrot.slane %v4177, 4
  %v4179 = vrot.slane %v4088, 5
  %v4180 = vsel %vm1163, %v4178, %v4179
  %v4181 = vrot.slane %v4089, 5
  %v4182 = vrot.slane %v4181, 4
  %v4183 = vrot.slane %v4090, 5
  %v4184 = vsel %vm1163, %v4182, %v4183
  %v4185 = vrot.slane %v4091, 5
  %v4186 = vrot.slane %v4185, 4
  %v4187 = vrot.slane %v4092, 5
  %v4188 = vsel %vm1163, %v4186, %v4187
  %4189 = vrot.lane.b32.xlu0 %v4128, 40
  %v4190 = vpop.permute.xlu0 %4189
  %4191 = vrot.lane.b32.xlu0 %v4132, 40
  %v4192 = vpop.permute.xlu0 %4191
  %4193 = vrot.lane.b32.xlu0 %v4136, 40
  %v4194 = vpop.permute.xlu0 %4193
  %4195 = vrot.lane.b32.xlu0 %v4140, 40
  %v4196 = vpop.permute.xlu0 %4195
  %4197 = vrot.lane.b32.xlu0 %v4144, 40
  %v4198 = vpop.permute.xlu0 %4197
  %4199 = vrot.lane.b32.xlu0 %v4148, 40
  %v4200 = vpop.permute.xlu0 %4199
  %4201 = vrot.lane.b32.xlu0 %v4152, 40
  %v4202 = vpop.permute.xlu0 %4201
  %4203 = vrot.lane.b32.xlu0 %v4156, 40
  %v4204 = vpop.permute.xlu0 %4203
  %4205 = vrot.lane.b32.xlu0 %v4160, 40
  %v4206 = vpop.permute.xlu0 %4205
  %4207 = vrot.lane.b32.xlu0 %v4164, 40
  %v4208 = vpop.permute.xlu0 %4207
  %4209 = vrot.lane.b32.xlu0 %v4168, 40
  %v4210 = vpop.permute.xlu0 %4209
  %4211 = vrot.lane.b32.xlu0 %v4172, 40
  %v4212 = vpop.permute.xlu0 %4211
  %4213 = vrot.lane.b32.xlu0 %v4176, 40
  %v4214 = vpop.permute.xlu0 %4213
  %4215 = vrot.lane.b32.xlu0 %v4180, 40
  %v4216 = vpop.permute.xlu0 %4215
  %4217 = vrot.lane.b32.xlu0 %v4184, 40
  %v4218 = vpop.permute.xlu0 %4217
  %4219 = vrot.lane.b32.xlu0 %v4188, 40
  %v4220 = vpop.permute.xlu0 %4219
  %4237 = vst.msk [vmem:[#allocation5] sm:$0xf] %vm1887, %v4190
  %4238 = vst.msk [vmem:[#allocation5 + $0x4] sm:$0xf] %vm1887, %v4192
  %4239 = vst.msk [vmem:[#allocation5 + $0x8] sm:$0xf] %vm1887, %v4194
  %4240 = vst.msk [vmem:[#allocation5 + $0xc] sm:$0xf] %vm1887, %v4196
  %4241 = vst.msk [vmem:[#allocation5 + $0x10] sm:$0xf] %vm1887, %v4198
  %4242 = vst.msk [vmem:[#allocation5 + $0x14] sm:$0xf] %vm1887, %v4200
  %4243 = vst.msk [vmem:[#allocation5 + $0x18] sm:$0xf] %vm1887, %v4202
  %4244 = vst.msk [vmem:[#allocation5 + $0x1c] sm:$0xf] %vm1887, %v4204
  %4245 = vst.msk [vmem:[#allocation5 + $0x20] sm:$0xf] %vm1887, %v4206
  %4246 = vst.msk [vmem:[#allocation5 + $0x24] sm:$0xf] %vm1887, %v4208
  %4247 = vst.msk [vmem:[#allocation5 + $0x28] sm:$0xf] %vm1887, %v4210
  %4248 = vst.msk [vmem:[#allocation5 + $0x2c] sm:$0xf] %vm1887, %v4212
  %4249 = vst.msk [vmem:[#allocation5 + $0x30] sm:$0xf] %vm1887, %v4214
  %4250 = vst.msk [vmem:[#allocation5 + $0x34] sm:$0xf] %vm1887, %v4216
  %4251 = vst.msk [vmem:[#allocation5 + $0x38] sm:$0xf] %vm1887, %v4218
  %4252 = vst.msk [vmem:[#allocation5 + $0x3c] sm:$0xf] %vm1887, %v4220
  %s4253 = scalar_lea.vmem [#allocation3], 16
  %v4254 = vld [vmem:[%s4253] sm:$0xf]
  %v4255 = vld [vmem:[%s4253 + $0x8] sm:$0xf]
  %v4256 = vld [vmem:[%s4253 + $0x10] sm:$0xf]
  %v4257 = vld [vmem:[%s4253 + $0x18] sm:$0xf]
  %v4258 = vld [vmem:[%s4253 + $0x20] sm:$0xf]
  %v4259 = vld [vmem:[%s4253 + $0x28] sm:$0xf]
  %v4260 = vld [vmem:[%s4253 + $0x30] sm:$0xf]
  %v4261 = vld [vmem:[%s4253 + $0x38] sm:$0xf]
  %v4262 = vld [vmem:[%s4253 + $0x50] sm:$0xf]
  %v4263 = vld [vmem:[%s4253 + $0x58] sm:$0xf]
  %v4264 = vld [vmem:[%s4253 + $0x60] sm:$0xf]
  %v4265 = vld [vmem:[%s4253 + $0x68] sm:$0xf]
  %v4266 = vld [vmem:[%s4253 + $0x70] sm:$0xf]
  %v4267 = vld [vmem:[%s4253 + $0x78] sm:$0xf]
  %v4268 = vld [vmem:[%s4253 + $0x80] sm:$0xf]
  %v4269 = vld [vmem:[%s4253 + $0x88] sm:$0xf]
  %4286 = vrot.lane.b32.xlu0 %v4254, 48
  %v4287 = vpop.permute.xlu0 %4286
  %4288 = vrot.lane.b32.xlu0 %v4255, 48
  %v4289 = vpop.permute.xlu0 %4288
  %4290 = vrot.lane.b32.xlu0 %v4256, 48
  %v4291 = vpop.permute.xlu0 %4290
  %4292 = vrot.lane.b32.xlu0 %v4257, 48
  %v4293 = vpop.permute.xlu0 %4292
  %4294 = vrot.lane.b32.xlu0 %v4258, 48
  %v4295 = vpop.permute.xlu0 %4294
  %4296 = vrot.lane.b32.xlu0 %v4259, 48
  %v4297 = vpop.permute.xlu0 %4296
  %4298 = vrot.lane.b32.xlu0 %v4260, 48
  %v4299 = vpop.permute.xlu0 %4298
  %4300 = vrot.lane.b32.xlu0 %v4261, 48
  %v4301 = vpop.permute.xlu0 %4300
  %4302 = vrot.lane.b32.xlu0 %v4262, 48
  %v4303 = vpop.permute.xlu0 %4302
  %4304 = vrot.lane.b32.xlu0 %v4263, 48
  %v4305 = vpop.permute.xlu0 %4304
  %4306 = vrot.lane.b32.xlu0 %v4264, 48
  %v4307 = vpop.permute.xlu0 %4306
  %4308 = vrot.lane.b32.xlu0 %v4265, 48
  %v4309 = vpop.permute.xlu0 %4308
  %4310 = vrot.lane.b32.xlu0 %v4266, 48
  %v4311 = vpop.permute.xlu0 %4310
  %4312 = vrot.lane.b32.xlu0 %v4267, 48
  %v4313 = vpop.permute.xlu0 %4312
  %4314 = vrot.lane.b32.xlu0 %v4268, 48
  %v4315 = vpop.permute.xlu0 %4314
  %4316 = vrot.lane.b32.xlu0 %v4269, 48
  %v4317 = vpop.permute.xlu0 %4316
  %4334 = vst.msk [vmem:[#allocation5] sm:$0xf] %vm1985, %v4287
  %4335 = vst.msk [vmem:[#allocation5 + $0x4] sm:$0xf] %vm1985, %v4289
  %4336 = vst.msk [vmem:[#allocation5 + $0x8] sm:$0xf] %vm1985, %v4291
  %4337 = vst.msk [vmem:[#allocation5 + $0xc] sm:$0xf] %vm1985, %v4293
  %4338 = vst.msk [vmem:[#allocation5 + $0x10] sm:$0xf] %vm1985, %v4295
  %4339 = vst.msk [vmem:[#allocation5 + $0x14] sm:$0xf] %vm1985, %v4297
  %4340 = vst.msk [vmem:[#allocation5 + $0x18] sm:$0xf] %vm1985, %v4299
  %4341 = vst.msk [vmem:[#allocation5 + $0x1c] sm:$0xf] %vm1985, %v4301
  %4342 = vst.msk [vmem:[#allocation5 + $0x20] sm:$0xf] %vm1985, %v4303
  %4343 = vst.msk [vmem:[#allocation5 + $0x24] sm:$0xf] %vm1985, %v4305
  %4344 = vst.msk [vmem:[#allocation5 + $0x28] sm:$0xf] %vm1985, %v4307
  %4345 = vst.msk [vmem:[#allocation5 + $0x2c] sm:$0xf] %vm1985, %v4309
  %4346 = vst.msk [vmem:[#allocation5 + $0x30] sm:$0xf] %vm1985, %v4311
  %4347 = vst.msk [vmem:[#allocation5 + $0x34] sm:$0xf] %vm1985, %v4313
  %4348 = vst.msk [vmem:[#allocation5 + $0x38] sm:$0xf] %vm1985, %v4315
  %4349 = vst.msk [vmem:[#allocation5 + $0x3c] sm:$0xf] %vm1985, %v4317
  %v4350 = vld [vmem:[%s4253] sm:$0xf]
  %v4351 = vld [vmem:[%s4253 + $0x4] sm:$0x1]
  %v4352 = vld [vmem:[%s4253 + $0x8] sm:$0xf]
  %v4353 = vld [vmem:[%s4253 + $0xc] sm:$0x1]
  %v4354 = vld [vmem:[%s4253 + $0x10] sm:$0xf]
  %v4355 = vld [vmem:[%s4253 + $0x14] sm:$0x1]
  %v4356 = vld [vmem:[%s4253 + $0x18] sm:$0xf]
  %v4357 = vld [vmem:[%s4253 + $0x1c] sm:$0x1]
  %v4358 = vld [vmem:[%s4253 + $0x20] sm:$0xf]
  %v4359 = vld [vmem:[%s4253 + $0x24] sm:$0x1]
  %v4360 = vld [vmem:[%s4253 + $0x28] sm:$0xf]
  %v4361 = vld [vmem:[%s4253 + $0x2c] sm:$0x1]
  %v4362 = vld [vmem:[%s4253 + $0x30] sm:$0xf]
  %v4363 = vld [vmem:[%s4253 + $0x34] sm:$0x1]
  %v4364 = vld [vmem:[%s4253 + $0x38] sm:$0xf]
  %v4365 = vld [vmem:[%s4253 + $0x3c] sm:$0x1]
  %v4366 = vld [vmem:[%s4253 + $0x50] sm:$0xf]
  %v4367 = vld [vmem:[%s4253 + $0x54] sm:$0x1]
  %v4368 = vld [vmem:[%s4253 + $0x58] sm:$0xf]
  %v4369 = vld [vmem:[%s4253 + $0x5c] sm:$0x1]
  %v4370 = vld [vmem:[%s4253 + $0x60] sm:$0xf]
  %v4371 = vld [vmem:[%s4253 + $0x64] sm:$0x1]
  %v4372 = vld [vmem:[%s4253 + $0x68] sm:$0xf]
  %v4373 = vld [vmem:[%s4253 + $0x6c] sm:$0x1]
  %v4374 = vld [vmem:[%s4253 + $0x70] sm:$0xf]
  %v4375 = vld [vmem:[%s4253 + $0x74] sm:$0x1]
  %v4376 = vld [vmem:[%s4253 + $0x78] sm:$0xf]
  %v4377 = vld [vmem:[%s4253 + $0x7c] sm:$0x1]
  %v4378 = vld [vmem:[%s4253 + $0x80] sm:$0xf]
  %v4379 = vld [vmem:[%s4253 + $0x84] sm:$0x1]
  %v4380 = vld [vmem:[%s4253 + $0x88] sm:$0xf]
  %v4381 = vld [vmem:[%s4253 + $0x8c] sm:$0x1]
  %v4383 = vshrl.u32 %v4350, 16
  %v4385 = vrot.slane %v4383, 4
  %v4386 = vshll.u32 %v4350, 16
  %v4388 = vrot.slane %v4386, 5
  %v4389 = vor.u32 %v4385, %v4388
  %v4390 = vrot.slane %v4389, 4
  %v4392 = vshll.u32 %v4351, 16
  %v4394 = vrot.slane %v4392, 5
  %v4395 = vsel %vm807, %v4390, %v4394
  %v4397 = vshrl.u32 %v4352, 16
  %v4399 = vrot.slane %v4397, 4
  %v4400 = vshll.u32 %v4352, 16
  %v4402 = vrot.slane %v4400, 5
  %v4403 = vor.u32 %v4399, %v4402
  %v4404 = vrot.slane %v4403, 4
  %v4406 = vshll.u32 %v4353, 16
  %v4408 = vrot.slane %v4406, 5
  %v4409 = vsel %vm807, %v4404, %v4408
  %v4411 = vshrl.u32 %v4354, 16
  %v4413 = vrot.slane %v4411, 4
  %v4414 = vshll.u32 %v4354, 16
  %v4416 = vrot.slane %v4414, 5
  %v4417 = vor.u32 %v4413, %v4416
  %v4418 = vrot.slane %v4417, 4
  %v4420 = vshll.u32 %v4355, 16
  %v4422 = vrot.slane %v4420, 5
  %v4423 = vsel %vm807, %v4418, %v4422
  %v4425 = vshrl.u32 %v4356, 16
  %v4427 = vrot.slane %v4425, 4
  %v4428 = vshll.u32 %v4356, 16
  %v4430 = vrot.slane %v4428, 5
  %v4431 = vor.u32 %v4427, %v4430
  %v4432 = vrot.slane %v4431, 4
  %v4434 = vshll.u32 %v4357, 16
  %v4436 = vrot.slane %v4434, 5
  %v4437 = vsel %vm807, %v4432, %v4436
  %v4439 = vshrl.u32 %v4358, 16
  %v4441 = vrot.slane %v4439, 4
  %v4442 = vshll.u32 %v4358, 16
  %v4444 = vrot.slane %v4442, 5
  %v4445 = vor.u32 %v4441, %v4444
  %v4446 = vrot.slane %v4445, 4
  %v4448 = vshll.u32 %v4359, 16
  %v4450 = vrot.slane %v4448, 5
  %v4451 = vsel %vm807, %v4446, %v4450
  %v4453 = vshrl.u32 %v4360, 16
  %v4455 = vrot.slane %v4453, 4
  %v4456 = vshll.u32 %v4360, 16
  %v4458 = vrot.slane %v4456, 5
  %v4459 = vor.u32 %v4455, %v4458
  %v4460 = vrot.slane %v4459, 4
  %v4462 = vshll.u32 %v4361, 16
  %v4464 = vrot.slane %v4462, 5
  %v4465 = vsel %vm807, %v4460, %v4464
  %v4467 = vshrl.u32 %v4362, 16
  %v4469 = vrot.slane %v4467, 4
  %v4470 = vshll.u32 %v4362, 16
  %v4472 = vrot.slane %v4470, 5
  %v4473 = vor.u32 %v4469, %v4472
  %v4474 = vrot.slane %v4473, 4
  %v4476 = vshll.u32 %v4363, 16
  %v4478 = vrot.slane %v4476, 5
  %v4479 = vsel %vm807, %v4474, %v4478
  %v4481 = vshrl.u32 %v4364, 16
  %v4483 = vrot.slane %v4481, 4
  %v4484 = vshll.u32 %v4364, 16
  %v4486 = vrot.slane %v4484, 5
  %v4487 = vor.u32 %v4483, %v4486
  %v4488 = vrot.slane %v4487, 4
  %v4490 = vshll.u32 %v4365, 16
  %v4492 = vrot.slane %v4490, 5
  %v4493 = vsel %vm807, %v4488, %v4492
  %v4495 = vshrl.u32 %v4366, 16
  %v4497 = vrot.slane %v4495, 4
  %v4498 = vshll.u32 %v4366, 16
  %v4500 = vrot.slane %v4498, 5
  %v4501 = vor.u32 %v4497, %v4500
  %v4502 = vrot.slane %v4501, 4
  %v4504 = vshll.u32 %v4367, 16
  %v4506 = vrot.slane %v4504, 5
  %v4507 = vsel %vm807, %v4502, %v4506
  %v4509 = vshrl.u32 %v4368, 16
  %v4511 = vrot.slane %v4509, 4
  %v4512 = vshll.u32 %v4368, 16
  %v4514 = vrot.slane %v4512, 5
  %v4515 = vor.u32 %v4511, %v4514
  %v4516 = vrot.slane %v4515, 4
  %v4518 = vshll.u32 %v4369, 16
  %v4520 = vrot.slane %v4518, 5
  %v4521 = vsel %vm807, %v4516, %v4520
  %v4523 = vshrl.u32 %v4370, 16
  %v4525 = vrot.slane %v4523, 4
  %v4526 = vshll.u32 %v4370, 16
  %v4528 = vrot.slane %v4526, 5
  %v4529 = vor.u32 %v4525, %v4528
  %v4530 = vrot.slane %v4529, 4
  %v4532 = vshll.u32 %v4371, 16
  %v4534 = vrot.slane %v4532, 5
  %v4535 = vsel %vm807, %v4530, %v4534
  %v4537 = vshrl.u32 %v4372, 16
  %v4539 = vrot.slane %v4537, 4
  %v4540 = vshll.u32 %v4372, 16
  %v4542 = vrot.slane %v4540, 5
  %v4543 = vor.u32 %v4539, %v4542
  %v4544 = vrot.slane %v4543, 4
  %v4546 = vshll.u32 %v4373, 16
  %v4548 = vrot.slane %v4546, 5
  %v4549 = vsel %vm807, %v4544, %v4548
  %v4551 = vshrl.u32 %v4374, 16
  %v4553 = vrot.slane %v4551, 4
  %v4554 = vshll.u32 %v4374, 16
  %v4556 = vrot.slane %v4554, 5
  %v4557 = vor.u32 %v4553, %v4556
  %v4558 = vrot.slane %v4557, 4
  %v4560 = vshll.u32 %v4375, 16
  %v4562 = vrot.slane %v4560, 5
  %v4563 = vsel %vm807, %v4558, %v4562
  %v4565 = vshrl.u32 %v4376, 16
  %v4567 = vrot.slane %v4565, 4
  %v4568 = vshll.u32 %v4376, 16
  %v4570 = vrot.slane %v4568, 5
  %v4571 = vor.u32 %v4567, %v4570
  %v4572 = vrot.slane %v4571, 4
  %v4574 = vshll.u32 %v4377, 16
  %v4576 = vrot.slane %v4574, 5
  %v4577 = vsel %vm807, %v4572, %v4576
  %v4579 = vshrl.u32 %v4378, 16
  %v4581 = vrot.slane %v4579, 4
  %v4582 = vshll.u32 %v4378, 16
  %v4584 = vrot.slane %v4582, 5
  %v4585 = vor.u32 %v4581, %v4584
  %v4586 = vrot.slane %v4585, 4
  %v4588 = vshll.u32 %v4379, 16
  %v4590 = vrot.slane %v4588, 5
  %v4591 = vsel %vm807, %v4586, %v4590
  %v4593 = vshrl.u32 %v4380, 16
  %v4595 = vrot.slane %v4593, 4
  %v4596 = vshll.u32 %v4380, 16
  %v4598 = vrot.slane %v4596, 5
  %v4599 = vor.u32 %v4595, %v4598
  %v4600 = vrot.slane %v4599, 4
  %v4602 = vshll.u32 %v4381, 16
  %v4604 = vrot.slane %v4602, 5
  %v4605 = vsel %vm807, %v4600, %v4604
  %4606 = vrot.lane.b32.xlu0 %v4395, 56
  %v4607 = vpop.permute.xlu0 %4606
  %4608 = vrot.lane.b32.xlu0 %v4409, 56
  %v4609 = vpop.permute.xlu0 %4608
  %4610 = vrot.lane.b32.xlu0 %v4423, 56
  %v4611 = vpop.permute.xlu0 %4610
  %4612 = vrot.lane.b32.xlu0 %v4437, 56
  %v4613 = vpop.permute.xlu0 %4612
  %4614 = vrot.lane.b32.xlu0 %v4451, 56
  %v4615 = vpop.permute.xlu0 %4614
  %4616 = vrot.lane.b32.xlu0 %v4465, 56
  %v4617 = vpop.permute.xlu0 %4616
  %4618 = vrot.lane.b32.xlu0 %v4479, 56
  %v4619 = vpop.permute.xlu0 %4618
  %4620 = vrot.lane.b32.xlu0 %v4493, 56
  %v4621 = vpop.permute.xlu0 %4620
  %4622 = vrot.lane.b32.xlu0 %v4507, 56
  %v4623 = vpop.permute.xlu0 %4622
  %4624 = vrot.lane.b32.xlu0 %v4521, 56
  %v4625 = vpop.permute.xlu0 %4624
  %4626 = vrot.lane.b32.xlu0 %v4535, 56
  %v4627 = vpop.permute.xlu0 %4626
  %4628 = vrot.lane.b32.xlu0 %v4549, 56
  %v4629 = vpop.permute.xlu0 %4628
  %4630 = vrot.lane.b32.xlu0 %v4563, 56
  %v4631 = vpop.permute.xlu0 %4630
  %4632 = vrot.lane.b32.xlu0 %v4577, 56
  %v4633 = vpop.permute.xlu0 %4632
  %4634 = vrot.lane.b32.xlu0 %v4591, 56
  %v4635 = vpop.permute.xlu0 %4634
  %4636 = vrot.lane.b32.xlu0 %v4605, 56
  %v4637 = vpop.permute.xlu0 %4636
  %4654 = vst.msk [vmem:[#allocation5] sm:$0xf] %vm2306, %v4607
  %4655 = vst.msk [vmem:[#allocation5 + $0x4] sm:$0xf] %vm2306, %v4609
  %4656 = vst.msk [vmem:[#allocation5 + $0x8] sm:$0xf] %vm2306, %v4611
  %4657 = vst.msk [vmem:[#allocation5 + $0xc] sm:$0xf] %vm2306, %v4613
  %4658 = vst.msk [vmem:[#allocation5 + $0x10] sm:$0xf] %vm2306, %v4615
  %4659 = vst.msk [vmem:[#allocation5 + $0x14] sm:$0xf] %vm2306, %v4617
  %4660 = vst.msk [vmem:[#allocation5 + $0x18] sm:$0xf] %vm2306, %v4619
  %4661 = vst.msk [vmem:[#allocation5 + $0x1c] sm:$0xf] %vm2306, %v4621
  %4662 = vst.msk [vmem:[#allocation5 + $0x20] sm:$0xf] %vm2306, %v4623
  %4663 = vst.msk [vmem:[#allocation5 + $0x24] sm:$0xf] %vm2306, %v4625
  %4664 = vst.msk [vmem:[#allocation5 + $0x28] sm:$0xf] %vm2306, %v4627
  %4665 = vst.msk [vmem:[#allocation5 + $0x2c] sm:$0xf] %vm2306, %v4629
  %4666 = vst.msk [vmem:[#allocation5 + $0x30] sm:$0xf] %vm2306, %v4631
  %4667 = vst.msk [vmem:[#allocation5 + $0x34] sm:$0xf] %vm2306, %v4633
  %4668 = vst.msk [vmem:[#allocation5 + $0x38] sm:$0xf] %vm2306, %v4635
  %4669 = vst.msk [vmem:[#allocation5 + $0x3c] sm:$0xf] %vm2306, %v4637
  %v4670 = vld [vmem:[%s4253] sm:$0xe]
  %v4671 = vld [vmem:[%s4253 + $0x4] sm:$0x1]
  %v4672 = vld [vmem:[%s4253 + $0x8] sm:$0xe]
  %v4673 = vld [vmem:[%s4253 + $0xc] sm:$0x1]
  %v4674 = vld [vmem:[%s4253 + $0x10] sm:$0xe]
  %v4675 = vld [vmem:[%s4253 + $0x14] sm:$0x1]
  %v4676 = vld [vmem:[%s4253 + $0x18] sm:$0xe]
  %v4677 = vld [vmem:[%s4253 + $0x1c] sm:$0x1]
  %v4678 = vld [vmem:[%s4253 + $0x20] sm:$0xe]
  %v4679 = vld [vmem:[%s4253 + $0x24] sm:$0x1]
  %v4680 = vld [vmem:[%s4253 + $0x28] sm:$0xe]
  %v4681 = vld [vmem:[%s4253 + $0x2c] sm:$0x1]
  %v4682 = vld [vmem:[%s4253 + $0x30] sm:$0xe]
  %v4683 = vld [vmem:[%s4253 + $0x34] sm:$0x1]
  %v4684 = vld [vmem:[%s4253 + $0x38] sm:$0xe]
  %v4685 = vld [vmem:[%s4253 + $0x3c] sm:$0x1]
  %v4686 = vld [vmem:[%s4253 + $0x50] sm:$0xe]
  %v4687 = vld [vmem:[%s4253 + $0x54] sm:$0x1]
  %v4688 = vld [vmem:[%s4253 + $0x58] sm:$0xe]
  %v4689 = vld [vmem:[%s4253 + $0x5c] sm:$0x1]
  %v4690 = vld [vmem:[%s4253 + $0x60] sm:$0xe]
  %v4691 = vld [vmem:[%s4253 + $0x64] sm:$0x1]
  %v4692 = vld [vmem:[%s4253 + $0x68] sm:$0xe]
  %v4693 = vld [vmem:[%s4253 + $0x6c] sm:$0x1]
  %v4694 = vld [vmem:[%s4253 + $0x70] sm:$0xe]
  %v4695 = vld [vmem:[%s4253 + $0x74] sm:$0x1]
  %v4696 = vld [vmem:[%s4253 + $0x78] sm:$0xe]
  %v4697 = vld [vmem:[%s4253 + $0x7c] sm:$0x1]
  %v4698 = vld [vmem:[%s4253 + $0x80] sm:$0xe]
  %v4699 = vld [vmem:[%s4253 + $0x84] sm:$0x1]
  %v4700 = vld [vmem:[%s4253 + $0x88] sm:$0xe]
  %v4701 = vld [vmem:[%s4253 + $0x8c] sm:$0x1]
  %v4734 = vrot.slane %v4670, 5
  %v4735 = vrot.slane %v4734, 4
  %v4736 = vrot.slane %v4671, 5
  %v4737 = vsel %vm1163, %v4735, %v4736
  %v4738 = vrot.slane %v4672, 5
  %v4739 = vrot.slane %v4738, 4
  %v4740 = vrot.slane %v4673, 5
  %v4741 = vsel %vm1163, %v4739, %v4740
  %v4742 = vrot.slane %v4674, 5
  %v4743 = vrot.slane %v4742, 4
  %v4744 = vrot.slane %v4675, 5
  %v4745 = vsel %vm1163, %v4743, %v4744
  %v4746 = vrot.slane %v4676, 5
  %v4747 = vrot.slane %v4746, 4
  %v4748 = vrot.slane %v4677, 5
  %v4749 = vsel %vm1163, %v4747, %v4748
  %v4750 = vrot.slane %v4678, 5
  %v4751 = vrot.slane %v4750, 4
  %v4752 = vrot.slane %v4679, 5
  %v4753 = vsel %vm1163, %v4751, %v4752
  %v4754 = vrot.slane %v4680, 5
  %v4755 = vrot.slane %v4754, 4
  %v4756 = vrot.slane %v4681, 5
  %v4757 = vsel %vm1163, %v4755, %v4756
  %v4758 = vrot.slane %v4682, 5
  %v4759 = vrot.slane %v4758, 4
  %v4760 = vrot.slane %v4683, 5
  %v4761 = vsel %vm1163, %v4759, %v4760
  %v4762 = vrot.slane %v4684, 5
  %v4763 = vrot.slane %v4762, 4
  %v4764 = vrot.slane %v4685, 5
  %v4765 = vsel %vm1163, %v4763, %v4764
  %v4766 = vrot.slane %v4686, 5
  %v4767 = vrot.slane %v4766, 4
  %v4768 = vrot.slane %v4687, 5
  %v4769 = vsel %vm1163, %v4767, %v4768
  %v4770 = vrot.slane %v4688, 5
  %v4771 = vrot.slane %v4770, 4
  %v4772 = vrot.slane %v4689, 5
  %v4773 = vsel %vm1163, %v4771, %v4772
  %v4774 = vrot.slane %v4690, 5
  %v4775 = vrot.slane %v4774, 4
  %v4776 = vrot.slane %v4691, 5
  %v4777 = vsel %vm1163, %v4775, %v4776
  %v4778 = vrot.slane %v4692, 5
  %v4779 = vrot.slane %v4778, 4
  %v4780 = vrot.slane %v4693, 5
  %v4781 = vsel %vm1163, %v4779, %v4780
  %v4782 = vrot.slane %v4694, 5
  %v4783 = vrot.slane %v4782, 4
  %v4784 = vrot.slane %v4695, 5
  %v4785 = vsel %vm1163, %v4783, %v4784
  %v4786 = vrot.slane %v4696, 5
  %v4787 = vrot.slane %v4786, 4
  %v4788 = vrot.slane %v4697, 5
  %v4789 = vsel %vm1163, %v4787, %v4788
  %v4790 = vrot.slane %v4698, 5
  %v4791 = vrot.slane %v4790, 4
  %v4792 = vrot.slane %v4699, 5
  %v4793 = vsel %vm1163, %v4791, %v4792
  %v4794 = vrot.slane %v4700, 5
  %v4795 = vrot.slane %v4794, 4
  %v4796 = vrot.slane %v4701, 5
  %v4797 = vsel %vm1163, %v4795, %v4796
  %4798 = vrot.lane.b32.xlu0 %v4737, 64
  %v4799 = vpop.permute.xlu0 %4798
  %4800 = vrot.lane.b32.xlu0 %v4741, 64
  %v4801 = vpop.permute.xlu0 %4800
  %4802 = vrot.lane.b32.xlu0 %v4745, 64
  %v4803 = vpop.permute.xlu0 %4802
  %4804 = vrot.lane.b32.xlu0 %v4749, 64
  %v4805 = vpop.permute.xlu0 %4804
  %4806 = vrot.lane.b32.xlu0 %v4753, 64
  %v4807 = vpop.permute.xlu0 %4806
  %4808 = vrot.lane.b32.xlu0 %v4757, 64
  %v4809 = vpop.permute.xlu0 %4808
  %4810 = vrot.lane.b32.xlu0 %v4761, 64
  %v4811 = vpop.permute.xlu0 %4810
  %4812 = vrot.lane.b32.xlu0 %v4765, 64
  %v4813 = vpop.permute.xlu0 %4812
  %4814 = vrot.lane.b32.xlu0 %v4769, 64
  %v4815 = vpop.permute.xlu0 %4814
  %4816 = vrot.lane.b32.xlu0 %v4773, 64
  %v4817 = vpop.permute.xlu0 %4816
  %4818 = vrot.lane.b32.xlu0 %v4777, 64
  %v4819 = vpop.permute.xlu0 %4818
  %4820 = vrot.lane.b32.xlu0 %v4781, 64
  %v4821 = vpop.permute.xlu0 %4820
  %4822 = vrot.lane.b32.xlu0 %v4785, 64
  %v4823 = vpop.permute.xlu0 %4822
  %4824 = vrot.lane.b32.xlu0 %v4789, 64
  %v4825 = vpop.permute.xlu0 %4824
  %4826 = vrot.lane.b32.xlu0 %v4793, 64
  %v4827 = vpop.permute.xlu0 %4826
  %4828 = vrot.lane.b32.xlu0 %v4797, 64
  %v4829 = vpop.permute.xlu0 %4828
  %4846 = vst.msk [vmem:[#allocation5] sm:$0xf] %vm2499, %v4799
  %4847 = vst.msk [vmem:[#allocation5 + $0x4] sm:$0xf] %vm2499, %v4801
  %4848 = vst.msk [vmem:[#allocation5 + $0x8] sm:$0xf] %vm2499, %v4803
  %4849 = vst.msk [vmem:[#allocation5 + $0xc] sm:$0xf] %vm2499, %v4805
  %4850 = vst.msk [vmem:[#allocation5 + $0x10] sm:$0xf] %vm2499, %v4807
  %4851 = vst.msk [vmem:[#allocation5 + $0x14] sm:$0xf] %vm2499, %v4809
  %4852 = vst.msk [vmem:[#allocation5 + $0x18] sm:$0xf] %vm2499, %v4811
  %4853 = vst.msk [vmem:[#allocation5 + $0x1c] sm:$0xf] %vm2499, %v4813
  %4854 = vst.msk [vmem:[#allocation5 + $0x20] sm:$0xf] %vm2499, %v4815
  %4855 = vst.msk [vmem:[#allocation5 + $0x24] sm:$0xf] %vm2499, %v4817
  %4856 = vst.msk [vmem:[#allocation5 + $0x28] sm:$0xf] %vm2499, %v4819
  %4857 = vst.msk [vmem:[#allocation5 + $0x2c] sm:$0xf] %vm2499, %v4821
  %4858 = vst.msk [vmem:[#allocation5 + $0x30] sm:$0xf] %vm2499, %v4823
  %4859 = vst.msk [vmem:[#allocation5 + $0x34] sm:$0xf] %vm2499, %v4825
  %4860 = vst.msk [vmem:[#allocation5 + $0x38] sm:$0xf] %vm2499, %v4827
  %4861 = vst.msk [vmem:[#allocation5 + $0x3c] sm:$0xf] %vm2499, %v4829
  %v4862 = vld [vmem:[#allocation5] sm:$0xf]
  %v4863 = vld [vmem:[#allocation5 + $0x4] sm:$0xf]
  %v4864 = vld [vmem:[#allocation5 + $0x8] sm:$0xf]
  %v4865 = vld [vmem:[#allocation5 + $0xc] sm:$0xf]
  %v4866 = vld [vmem:[#allocation5 + $0x10] sm:$0xf]
  %v4867 = vld [vmem:[#allocation5 + $0x14] sm:$0xf]
  %v4868 = vld [vmem:[#allocation5 + $0x18] sm:$0xf]
  %v4869 = vld [vmem:[#allocation5 + $0x1c] sm:$0xf]
  %v4870 = vld [vmem:[#allocation5 + $0x20] sm:$0xf]
  %v4871 = vld [vmem:[#allocation5 + $0x24] sm:$0xf]
  %v4872 = vld [vmem:[#allocation5 + $0x28] sm:$0xf]
  %v4873 = vld [vmem:[#allocation5 + $0x2c] sm:$0xf]
  %v4874 = vld [vmem:[#allocation5 + $0x30] sm:$0xf]
  %v4875 = vld [vmem:[#allocation5 + $0x34] sm:$0xf]
  %v4876 = vld [vmem:[#allocation5 + $0x38] sm:$0xf]
  %v4877 = vld [vmem:[#allocation5 + $0x3c] sm:$0xf]
  %v4878 = vld [vmem:[%s6] sm:$0xf]
  %v4879 = vld [vmem:[%s6 + $0x4] sm:$0xf]
  %v4880 = vld [vmem:[%s6 + $0x8] sm:$0xf]
  %v4881 = vld [vmem:[%s6 + $0xc] sm:$0xf]
  %v4882 = vld [vmem:[%s6 + $0x10] sm:$0xf]
  %v4883 = vld [vmem:[%s6 + $0x14] sm:$0xf]
  %v4884 = vld [vmem:[%s6 + $0x18] sm:$0xf]
  %v4885 = vld [vmem:[%s6 + $0x1c] sm:$0xf]
  %v4886 = vld [vmem:[%s6 + $0x20] sm:$0xf]
  %v4903 = vunpack.c.l.b16 %v4862
  %v4904 = vunpack.c.l.b16 %v4863
  %v4905 = vunpack.c.l.b16 %v4864
  %v4906 = vunpack.c.l.b16 %v4865
  %v4907 = vunpack.c.l.b16 %v4866
  %v4908 = vunpack.c.l.b16 %v4867
  %v4909 = vunpack.c.l.b16 %v4868
  %v4910 = vunpack.c.l.b16 %v4869
  %v4911 = vunpack.c.l.b16 %v4870
  %v4912 = vunpack.c.l.b16 %v4871
  %v4913 = vunpack.c.l.b16 %v4872
  %v4914 = vunpack.c.l.b16 %v4873
  %v4915 = vunpack.c.l.b16 %v4874
  %v4916 = vunpack.c.l.b16 %v4875
  %v4917 = vunpack.c.l.b16 %v4876
  %v4918 = vunpack.c.l.b16 %v4877
  %v4919 = vpack.c.b16 %v4904, %v4903
  %v4920 = vpack.c.b16 %v4906, %v4905
  %v4921 = vpack.c.b16 %v4908, %v4907
  %v4922 = vpack.c.b16 %v4910, %v4909
  %v4923 = vpack.c.b16 %v4912, %v4911
  %v4924 = vpack.c.b16 %v4914, %v4913
  %v4925 = vpack.c.b16 %v4916, %v4915
  %v4926 = vpack.c.b16 %v4918, %v4917
  %v4936 = vunpack.c.l.b16 %v4878
  %v4937 = vunpack.c.l.b16 %v4879
  %v4938 = vunpack.c.l.b16 %v4880
  %v4939 = vunpack.c.l.b16 %v4881
  %v4940 = vunpack.c.l.b16 %v4882
  %v4941 = vunpack.c.l.b16 %v4883
  %v4942 = vunpack.c.l.b16 %v4884
  %v4943 = vunpack.c.l.b16 %v4885
  %v4944 = vunpack.c.l.b16 %v4886
  %v4945 = vpack.c.b16 %v4937, %v4936
  %v4946 = vpack.c.b16 %v4939, %v4938
  %v4947 = vpack.c.b16 %v4941, %v4940
  %v4948 = vpack.c.b16 %v4943, %v4942
  %v4949 = vpack.c.b16 %v4944, %v4944
  %v4955 = vsel %vm2608, %v4919, 0
  %v4958 = vsel %vm2608, %v4920, 0
  %v4961 = vsel %vm2608, %v4921, 0
  %v4964 = vsel %vm2608, %v4922, 0
  %v4967 = vsel %vm2608, %v4923, 0
  %v4970 = vsel %vm2608, %v4924, 0
  %v4973 = vsel %vm2608, %v4925, 0
  %v4976 = vsel %vm2608, %v4926, 0
  %v4979 = vsel %vm2633, %v4949, 0
  %4981 = vmatprep.subr.bf16.mxu0 0
  %4982 = vmatpush1.bf16.msra.mxu0 %v4945
  %4983 = vmatprep.subr.bf16.mxu0 0
  %4984 = vmatpush1.bf16.msra.mxu0 %v4946
  %4985 = vmatprep.subr.bf16.mxu0 0
  %4986 = vmatpush1.bf16.msra.mxu0 %v4947
  %4987 = vmatprep.subr.bf16.mxu0 0
  %4988 = vmatpush1.bf16.msra.mxu0 %v4948
  %4989 = vmatprep.subr.bf16.mxu0 0
  %4990 = vmatpush1.bf16.msra.mxu0 %v4979
  %4991 = vmatprep.subr.bf16.mxu0 0
  %4992 = vmatpush1.bf16.msra.mxu0 0
  %4993 = vmatprep.subr.bf16.mxu0 0
  %4994 = vmatpush1.bf16.msra.mxu0 0
  %4995 = vmatprep.subr.bf16.mxu0 0
  %4996 = vmatpush1.bf16.msra.mxu0 0
  %4997 = vmatprep.subr.bf16.mxu0 0
  %4998 = vmatpush1.bf16.msra.mxu0 0
  %4999 = vmatprep.subr.bf16.mxu0 0
  %5000 = vmatpush1.bf16.msra.mxu0 0
  %5001 = vmatprep.subr.bf16.mxu0 0
  %5002 = vmatpush1.bf16.msra.mxu0 0
  %5003 = vmatprep.subr.bf16.mxu0 0
  %5004 = vmatpush1.bf16.msra.mxu0 0
  %5005 = vmatprep.subr.bf16.mxu0 0
  %5006 = vmatpush1.bf16.msra.mxu0 0
  %5007 = vmatprep.subr.bf16.mxu0 0
  %5008 = vmatpush1.bf16.msra.mxu0 0
  %5009 = vmatprep.subr.bf16.mxu0 0
  %5010 = vmatpush1.bf16.msra.mxu0 0
  %5011 = vmatprep.subr.bf16.mxu0 0
  %5012 = vmatpush1.bf16.msra.mxu0 0
  %5013 = vmatprep.mubr.bf16.mxu0 0
  %5014 = vmatmul.mubr.bf16.gmra.mrb[0].mxu0 %v4955
  %v5015 = vpop.f32.mrb[0].mxu0
  %v5016 = vadd.f32 0.0, %v5015
  %v5017 = vpop.f32.mrb[0].mxu0
  %v5018 = vpop.f32.mrb[0].mxu0
  %v5019 = vadd.f32 0.0, %v5018
  %v5020 = vpop.f32.mrb[0].mxu0
  %5021 = vmatprep.mubr.bf16.mxu0 0
  %5022 = vmatmul.mubr.bf16.gmra.mrb[0].mxu0 %v4958
  %v5023 = vpop.f32.mrb[0].mxu0
  %v5024 = vadd.f32 0.0, %v5023
  %v5025 = vpop.f32.mrb[0].mxu0
  %v5026 = vpop.f32.mrb[0].mxu0
  %v5027 = vadd.f32 0.0, %v5026
  %v5028 = vpop.f32.mrb[0].mxu0
  %5029 = vmatprep.mubr.bf16.mxu0 0
  %5030 = vmatmul.mubr.bf16.gmra.mrb[0].mxu0 %v4961
  %v5031 = vpop.f32.mrb[0].mxu0
  %v5032 = vadd.f32 0.0, %v5031
  %v5033 = vpop.f32.mrb[0].mxu0
  %v5034 = vpop.f32.mrb[0].mxu0
  %v5035 = vadd.f32 0.0, %v5034
  %v5036 = vpop.f32.mrb[0].mxu0
  %5037 = vmatprep.mubr.bf16.mxu0 0
  %5038 = vmatmul.mubr.bf16.gmra.mrb[0].mxu0 %v4964
  %v5039 = vpop.f32.mrb[0].mxu0
  %v5040 = vadd.f32 0.0, %v5039
  %v5041 = vpop.f32.mrb[0].mxu0
  %v5042 = vpop.f32.mrb[0].mxu0
  %v5043 = vadd.f32 0.0, %v5042
  %v5044 = vpop.f32.mrb[0].mxu0
  %5045 = vmatprep.mubr.bf16.mxu0 0
  %5046 = vmatmul.mubr.bf16.gmra.mrb[0].mxu0 %v4967
  %v5047 = vpop.f32.mrb[0].mxu0
  %v5048 = vadd.f32 0.0, %v5047
  %v5049 = vpop.f32.mrb[0].mxu0
  %v5050 = vpop.f32.mrb[0].mxu0
  %v5051 = vadd.f32 0.0, %v5050
  %v5052 = vpop.f32.mrb[0].mxu0
  %5053 = vmatprep.mubr.bf16.mxu0 0
  %5054 = vmatmul.mubr.bf16.gmra.mrb[0].mxu0 %v4970
  %v5055 = vpop.f32.mrb[0].mxu0
  %v5056 = vadd.f32 0.0, %v5055
  %v5057 = vpop.f32.mrb[0].mxu0
  %v5058 = vpop.f32.mrb[0].mxu0
  %v5059 = vadd.f32 0.0, %v5058
  %v5060 = vpop.f32.mrb[0].mxu0
  %5061 = vmatprep.mubr.bf16.mxu0 0
  %5062 = vmatmul.mubr.bf16.gmra.mrb[0].mxu0 %v4973
  %v5063 = vpop.f32.mrb[0].mxu0
  %v5064 = vadd.f32 0.0, %v5063
  %v5065 = vpop.f32.mrb[0].mxu0
  %v5066 = vpop.f32.mrb[0].mxu0
  %v5067 = vadd.f32 0.0, %v5066
  %v5068 = vpop.f32.mrb[0].mxu0
  %5069 = vmatprep.mubr.bf16.mxu0 0
  %5070 = vmatmul.mubr.bf16.gmra.mrb[0].mxu0 %v4976
  %v5071 = vpop.f32.mrb[0].mxu0
  %v5072 = vadd.f32 0.0, %v5071
  %v5073 = vpop.f32.mrb[0].mxu0
  %v5074 = vpop.f32.mrb[0].mxu0
  %v5075 = vadd.f32 0.0, %v5074
  %v5076 = vpop.f32.mrb[0].mxu0
  %5077 = vdwg.mxu0
  %v5078 = vadd.f32 %v725, %v5016
  %v5079 = vadd.f32 %v726, %v5019
  %v5080 = vadd.f32 %v727, %v5024
  %v5081 = vadd.f32 %v728, %v5027
  %v5082 = vadd.f32 %v729, %v5032
  %v5083 = vadd.f32 %v730, %v5035
  %v5084 = vadd.f32 %v731, %v5040
  %v5085 = vadd.f32 %v732, %v5043
  %v5086 = vadd.f32 %v733, %v5048
  %v5087 = vadd.f32 %v734, %v5051
  %v5088 = vadd.f32 %v735, %v5056
  %v5089 = vadd.f32 %v736, %v5059
  %v5090 = vadd.f32 %v737, %v5064
  %v5091 = vadd.f32 %v738, %v5067
  %v5092 = vadd.f32 %v739, %v5072
  %v5093 = vadd.f32 %v740, %v5075
  %v5094 = vpack.c.bf16 %v5079, %v5078
  %v5095 = vpack.c.bf16 %v5081, %v5080
  %v5096 = vpack.c.bf16 %v5083, %v5082
  %v5097 = vpack.c.bf16 %v5085, %v5084
  %v5098 = vpack.c.bf16 %v5087, %v5086
  %v5099 = vpack.c.bf16 %v5089, %v5088
  %v5100 = vpack.c.bf16 %v5091, %v5090
  %v5101 = vpack.c.bf16 %v5093, %v5092
  %v5110 = vunpack.c.l.b16 %v5094
  %v5111 = vunpack.c.h.b16 %v5094
  %v5112 = vunpack.c.l.b16 %v5095
  %v5113 = vunpack.c.h.b16 %v5095
  %v5114 = vunpack.c.l.b16 %v5096
  %v5115 = vunpack.c.h.b16 %v5096
  %v5116 = vunpack.c.l.b16 %v5097
  %v5117 = vunpack.c.h.b16 %v5097
  %v5118 = vunpack.c.l.b16 %v5098
  %v5119 = vunpack.c.h.b16 %v5098
  %v5120 = vunpack.c.l.b16 %v5099
  %v5121 = vunpack.c.h.b16 %v5099
  %v5122 = vunpack.c.l.b16 %v5100
  %v5123 = vunpack.c.h.b16 %v5100
  %v5124 = vunpack.c.l.b16 %v5101
  %v5125 = vunpack.c.h.b16 %v5101
  %v5126 = vpack.c.b16 %v5110, %v5110
  %v5127 = vpack.c.b16 %v5111, %v5111
  %v5128 = vpack.c.b16 %v5112, %v5112
  %v5129 = vpack.c.b16 %v5113, %v5113
  %v5130 = vpack.c.b16 %v5114, %v5114
  %v5131 = vpack.c.b16 %v5115, %v5115
  %v5132 = vpack.c.b16 %v5116, %v5116
  %v5133 = vpack.c.b16 %v5117, %v5117
  %v5134 = vpack.c.b16 %v5118, %v5118
  %v5135 = vpack.c.b16 %v5119, %v5119
  %v5136 = vpack.c.b16 %v5120, %v5120
  %v5137 = vpack.c.b16 %v5121, %v5121
  %v5138 = vpack.c.b16 %v5122, %v5122
  %v5139 = vpack.c.b16 %v5123, %v5123
  %v5140 = vpack.c.b16 %v5124, %v5124
  %v5141 = vpack.c.b16 %v5125, %v5125
  %5158 = vst.msk [vmem:[%s7] sm:$0xf] %vm27, %v5126
  %5159 = vst.msk [vmem:[%s7 + $0x4] sm:$0xf] %vm27, %v5127
  %5160 = vst.msk [vmem:[%s7 + $0x8] sm:$0xf] %vm27, %v5128
  %5161 = vst.msk [vmem:[%s7 + $0xc] sm:$0xf] %vm27, %v5129
  %5162 = vst.msk [vmem:[%s7 + $0x10] sm:$0xf] %vm27, %v5130
  %5163 = vst.msk [vmem:[%s7 + $0x14] sm:$0xf] %vm27, %v5131
  %5164 = vst.msk [vmem:[%s7 + $0x18] sm:$0xf] %vm27, %v5132
  %5165 = vst.msk [vmem:[%s7 + $0x1c] sm:$0xf] %vm27, %v5133
  %5166 = vst.msk [vmem:[%s7 + $0x20] sm:$0xf] %vm27, %v5134
  %5167 = vst.msk [vmem:[%s7 + $0x24] sm:$0xf] %vm27, %v5135
  %5168 = vst.msk [vmem:[%s7 + $0x28] sm:$0xf] %vm27, %v5136
  %5169 = vst.msk [vmem:[%s7 + $0x2c] sm:$0xf] %vm27, %v5137
  %5170 = vst.msk [vmem:[%s7 + $0x30] sm:$0xf] %vm27, %v5138
  %5171 = vst.msk [vmem:[%s7 + $0x34] sm:$0xf] %vm27, %v5139
  %5172 = vst.msk [vmem:[%s7 + $0x38] sm:$0xf] %vm27, %v5140
  %5173 = vst.msk [vmem:[%s7 + $0x3c] sm:$0xf] %vm27, %v5141
  // Predicated region
  $region30: #{network_block_forward.3} parent=0 // pred_check
    _
  $region31: #{network_block_forward.3} parent=0 // pred_check_branch
    %5175 = sbr.rel (0) target = $region33
  $region32: #{network_block_forward.3} parent=0 // pred_region
    _
  $region33: #{network_block_forward.3} parent=0 // pred_fallthru
    _
  // Predicated region
  $region34: #{network_block_forward.3} parent=0 // pred_check
    _
  $region35: #{network_block_forward.3} parent=0 // pred_check_branch
    %5177 = sbr.rel (0) target = $region37
  $region36: #{network_block_forward.3} parent=0 // pred_region
    _
  $region37: #{network_block_forward.3} parent=0 // pred_fallthru
    _

// kernel: network_block_forward.2
$region0: #{network_block_forward.2}
  #allocation0 [shape = 'u32[]', space=smem, size = 0x4, offset = 0x4, fixed_abs, tag = 'smem constant byte address 0x4 - core index']
  #allocation1 [shape = 'u32[144,128]{1,0:T(1,128)}', space=vmem, size = 0x12000, scoped, tag = 'internal scratch']
  #allocation2 [shape = 'bf16[2,4,10,10,4]{4,3,2,1,0:T(8,128)(2,1)}', space=vmem, size = 0x50000, scoped, tag = 'scratch operand']
  #allocation3 [shape = 'bf16[2,10,10,8]{3,2,1,0:T(8,128)(2,1)}', space=vmem, size = 0x14000, scoped, tag = 'scratch operand']
  #allocation4 [shape = 'bf16[2,8,8,36]{3,2,1,0:T(8,128)(2,1)}', space=vmem, size = 0x8000, scoped, tag = 'scratch operand']
  #allocation5 [shape = 'bf16[2,8,8,72]{3,2,1,0:T(8,128)(2,1)}', space=vmem, size = 0x8000, scoped, tag = 'scratch operand']
  %s0 = inlined_call_operand.vmem [shape: f32[2,4,8,8,4], index: 0, kind: input, shape index: {}]
  %s1 = inlined_call_operand.vmem [shape: f32[1,4], index: 1, kind: input, shape index: {}]
  %s2 = inlined_call_operand.vmem [shape: f32[1,4], index: 2, kind: input, shape index: {}]
  %s3 = inlined_call_operand.vmem [shape: bf16[36,8], index: 3, kind: input, shape index: {}]
  %s4 = inlined_call_operand.vmem [shape: f32[1,8], index: 4, kind: input, shape index: {}]
  %s5 = inlined_call_operand.vmem [shape: f32[1,8], index: 5, kind: input, shape index: {}]
  %s6 = inlined_call_operand.vmem [shape: bf16[72,8], index: 6, kind: input, shape index: {}]
  %s7 = inlined_call_operand.vmem [shape: bf16[4,8], index: 7, kind: input, shape index: {}]
  %s8 = inlined_call_operand.vmem [shape: bf16[128,8], index: 8, kind: output, shape index: {}]
  %s9 = sld [smem:[#allocation0]]
  $region42: #{network_block_forward.2} parent=0
    _
  %s11 = ssub.s32 1, %s9
  %s12 = scalar_select 0, %s11, %s9
  // Predicated region
  $region2: #{network_block_forward.2} parent=0 // pred_check
    _
  $region3: #{network_block_forward.2} parent=0 // pred_check_branch
    %14 = sbr.rel (0) target = $region5
  $region4: #{network_block_forward.2} parent=0 // pred_region
    _
  $region5: #{network_block_forward.2} parent=0 // pred_fallthru
    _
  // Predicated region
  $region6: #{network_block_forward.2} parent=0 // pred_check
    _
  $region7: #{network_block_forward.2} parent=0 // pred_check_branch
    %16 = sbr.rel (0) target = $region9
  $region8: #{network_block_forward.2} parent=0 // pred_region
    _
  $region9: #{network_block_forward.2} parent=0 // pred_fallthru
    _
  // Predicated region
  $region10: #{network_block_forward.2} parent=0 // pred_check
    _
  $region11: #{network_block_forward.2} parent=0 // pred_check_branch
    %18 = sbr.rel (0) target = $region13
  $region12: #{network_block_forward.2} parent=0 // pred_region
    _
  $region13: #{network_block_forward.2} parent=0 // pred_fallthru
    _
  // Predicated region
  $region14: #{network_block_forward.2} parent=0 // pred_check
    _
  $region15: #{network_block_forward.2} parent=0 // pred_check_branch
    %20 = sbr.rel (0) target = $region17
  $region16: #{network_block_forward.2} parent=0 // pred_region
    _
  $region17: #{network_block_forward.2} parent=0 // pred_fallthru
    _
  // Predicated region
  $region18: #{network_block_forward.2} parent=0 // pred_check
    _
  $region19: #{network_block_forward.2} parent=0 // pred_check_branch
    %22 = sbr.rel (0) target = $region21
  $region20: #{network_block_forward.2} parent=0 // pred_region
    _
  $region21: #{network_block_forward.2} parent=0 // pred_fallthru
    _
  // Predicated region
  $region22: #{network_block_forward.2} parent=0 // pred_check
    _
  $region23: #{network_block_forward.2} parent=0 // pred_check_branch
    %24 = sbr.rel (0) target = $region25
  $region24: #{network_block_forward.2} parent=0 // pred_region
    _
  $region25: #{network_block_forward.2} parent=0 // pred_fallthru
    _
  // Predicated region
  $region26: #{network_block_forward.2} parent=0 // pred_check
    _
  $region27: #{network_block_forward.2} parent=0 // pred_check_branch
    %26 = sbr.rel (0) target = $region29
  $region28: #{network_block_forward.2} parent=0 // pred_region
    _
  $region29: #{network_block_forward.2} parent=0 // pred_fallthru
    _
  // Predicated region
  $region30: #{network_block_forward.2} parent=0 // pred_check
    _
  $region31: #{network_block_forward.2} parent=0 // pred_check_branch
    %28 = sbr.rel (0) target = $region33
  $region32: #{network_block_forward.2} parent=0 // pred_region
    _
  $region33: #{network_block_forward.2} parent=0 // pred_fallthru
    _
  %vm30 = vcmask 27648
  %31 = vst.msk [vmem:[#allocation2] sm:$0xf] %vm30, 0
  %vm32 = vcmask 24576
  %33 = vst.msk [vmem:[#allocation2 + $0x4] sm:$0x1] %vm32, 0
  %34 = vst.msk [vmem:[#allocation2 + $0x50] sm:$0xf] %vm30, 0
  %35 = vst.msk [vmem:[#allocation2 + $0x54] sm:$0x1] %vm32, 0
  %36 = vst.msk [vmem:[#allocation2 + $0xa0] sm:$0xf] %vm30, 0
  %37 = vst.msk [vmem:[#allocation2 + $0xa4] sm:$0x1] %vm32, 0
  %38 = vst.msk [vmem:[#allocation2 + $0xf0] sm:$0xf] %vm30, 0
  %39 = vst.msk [vmem:[#allocation2 + $0xf4] sm:$0x1] %vm32, 0
  %40 = vst.msk [vmem:[#allocation2 + $0x140] sm:$0xf] %vm30, 0
  %41 = vst.msk [vmem:[#allocation2 + $0x144] sm:$0x1] %vm32, 0
  %42 = vst.msk [vmem:[#allocation2 + $0x190] sm:$0xf] %vm30, 0
  %43 = vst.msk [vmem:[#allocation2 + $0x194] sm:$0x1] %vm32, 0
  %44 = vst.msk [vmem:[#allocation2 + $0x1e0] sm:$0xf] %vm30, 0
  %45 = vst.msk [vmem:[#allocation2 + $0x1e4] sm:$0x1] %vm32, 0
  %46 = vst.msk [vmem:[#allocation2 + $0x230] sm:$0xf] %vm30, 0
  %47 = vst.msk [vmem:[#allocation2 + $0x234] sm:$0x1] %vm32, 0
  %s48 = scalar_lea.vmem [#allocation2], 72
  %49 = vst.msk [vmem:[%s48] sm:$0xf] %vm30, 0
  %50 = vst.msk [vmem:[%s48 + $0x4] sm:$0x1] %vm32, 0
  %51 = vst.msk [vmem:[%s48 + $0x50] sm:$0xf] %vm30, 0
  %52 = vst.msk [vmem:[%s48 + $0x54] sm:$0x1] %vm32, 0
  %53 = vst.msk [vmem:[%s48 + $0xa0] sm:$0xf] %vm30, 0
  %54 = vst.msk [vmem:[%s48 + $0xa4] sm:$0x1] %vm32, 0
  %55 = vst.msk [vmem:[%s48 + $0xf0] sm:$0xf] %vm30, 0
  %56 = vst.msk [vmem:[%s48 + $0xf4] sm:$0x1] %vm32, 0
  %57 = vst.msk [vmem:[%s48 + $0x140] sm:$0xf] %vm30, 0
  %58 = vst.msk [vmem:[%s48 + $0x144] sm:$0x1] %vm32, 0
  %59 = vst.msk [vmem:[%s48 + $0x190] sm:$0xf] %vm30, 0
  %60 = vst.msk [vmem:[%s48 + $0x194] sm:$0x1] %vm32, 0
  %61 = vst.msk [vmem:[%s48 + $0x1e0] sm:$0xf] %vm30, 0
  %62 = vst.msk [vmem:[%s48 + $0x1e4] sm:$0x1] %vm32, 0
  %63 = vst.msk [vmem:[%s48 + $0x230] sm:$0xf] %vm30, 0
  %64 = vst.msk [vmem:[%s48 + $0x234] sm:$0x1] %vm32, 0
  %vm65 = vcmask 24576
  %vm66 = vsmask.f32 256
  %vm67 = vmand %vm65, %vm66
  %v68 = vld [vmem:[#allocation2] sm:$0x1]
  %v69 = vsel %vm67, 0, %v68
  %70 = vst [vmem:[#allocation2] sm:$0x1] %v69
  %v71 = vld [vmem:[#allocation2 + $0x8] sm:$0x1]
  %v72 = vsel %vm67, 0, %v71
  %73 = vst [vmem:[#allocation2 + $0x8] sm:$0x1] %v72
  %v74 = vld [vmem:[#allocation2 + $0x10] sm:$0x1]
  %v75 = vsel %vm67, 0, %v74
  %76 = vst [vmem:[#allocation2 + $0x10] sm:$0x1] %v75
  %v77 = vld [vmem:[#allocation2 + $0x18] sm:$0x1]
  %v78 = vsel %vm67, 0, %v77
  %79 = vst [vmem:[#allocation2 + $0x18] sm:$0x1] %v78
  %v80 = vld [vmem:[#allocation2 + $0x20] sm:$0x1]
  %v81 = vsel %vm67, 0, %v80
  %82 = vst [vmem:[#allocation2 + $0x20] sm:$0x1] %v81
  %v83 = vld [vmem:[#allocation2 + $0x28] sm:$0x1]
  %v84 = vsel %vm67, 0, %v83
  %85 = vst [vmem:[#allocation2 + $0x28] sm:$0x1] %v84
  %v86 = vld [vmem:[#allocation2 + $0x30] sm:$0x1]
  %v87 = vsel %vm67, 0, %v86
  %88 = vst [vmem:[#allocation2 + $0x30] sm:$0x1] %v87
  %v89 = vld [vmem:[#allocation2 + $0x38] sm:$0x1]
  %v90 = vsel %vm67, 0, %v89
  %91 = vst [vmem:[#allocation2 + $0x38] sm:$0x1] %v90
  %v92 = vld [vmem:[#allocation2 + $0x40] sm:$0x1]
  %v93 = vsel %vm67, 0, %v92
  %94 = vst [vmem:[#allocation2 + $0x40] sm:$0x1] %v93
  %v95 = vld [vmem:[#allocation2 + $0x48] sm:$0x1]
  %v96 = vsel %vm67, 0, %v95
  %97 = vst [vmem:[#allocation2 + $0x48] sm:$0x1] %v96
  %v98 = vld [vmem:[#allocation2 + $0x50] sm:$0x1]
  %v99 = vsel %vm67, 0, %v98
  %100 = vst [vmem:[#allocation2 + $0x50] sm:$0x1] %v99
  %v101 = vld [vmem:[#allocation2 + $0x58] sm:$0x1]
  %v102 = vsel %vm67, 0, %v101
  %103 = vst [vmem:[#allocation2 + $0x58] sm:$0x1] %v102
  %v104 = vld [vmem:[#allocation2 + $0x60] sm:$0x1]
  %v105 = vsel %vm67, 0, %v104
  %106 = vst [vmem:[#allocation2 + $0x60] sm:$0x1] %v105
  %v107 = vld [vmem:[#allocation2 + $0x68] sm:$0x1]
  %v108 = vsel %vm67, 0, %v107
  %109 = vst [vmem:[#allocation2 + $0x68] sm:$0x1] %v108
  %v110 = vld [vmem:[#allocation2 + $0x70] sm:$0x1]
  %v111 = vsel %vm67, 0, %v110
  %112 = vst [vmem:[#allocation2 + $0x70] sm:$0x1] %v111
  %v113 = vld [vmem:[#allocation2 + $0x78] sm:$0x1]
  %v114 = vsel %vm67, 0, %v113
  %115 = vst [vmem:[#allocation2 + $0x78] sm:$0x1] %v114
  %v116 = vld [vmem:[#allocation2 + $0x80] sm:$0x1]
  %v117 = vsel %vm67, 0, %v116
  %118 = vst [vmem:[#allocation2 + $0x80] sm:$0x1] %v117
  %v119 = vld [vmem:[#allocation2 + $0x88] sm:$0x1]
  %v120 = vsel %vm67, 0, %v119
  %121 = vst [vmem:[#allocation2 + $0x88] sm:$0x1] %v120
  %v122 = vld [vmem:[#allocation2 + $0x90] sm:$0x1]
  %v123 = vsel %vm67, 0, %v122
  %124 = vst [vmem:[#allocation2 + $0x90] sm:$0x1] %v123
  %v125 = vld [vmem:[#allocation2 + $0x98] sm:$0x1]
  %v126 = vsel %vm67, 0, %v125
  %127 = vst [vmem:[#allocation2 + $0x98] sm:$0x1] %v126
  %v128 = vld [vmem:[#allocation2 + $0xa0] sm:$0x1]
  %v129 = vsel %vm67, 0, %v128
  %130 = vst [vmem:[#allocation2 + $0xa0] sm:$0x1] %v129
  %v131 = vld [vmem:[#allocation2 + $0xa8] sm:$0x1]
  %v132 = vsel %vm67, 0, %v131
  %133 = vst [vmem:[#allocation2 + $0xa8] sm:$0x1] %v132
  %v134 = vld [vmem:[#allocation2 + $0xb0] sm:$0x1]
  %v135 = vsel %vm67, 0, %v134
  %136 = vst [vmem:[#allocation2 + $0xb0] sm:$0x1] %v135
  %v137 = vld [vmem:[#allocation2 + $0xb8] sm:$0x1]
  %v138 = vsel %vm67, 0, %v137
  %139 = vst [vmem:[#allocation2 + $0xb8] sm:$0x1] %v138
  %v140 = vld [vmem:[#allocation2 + $0xc0] sm:$0x1]
  %v141 = vsel %vm67, 0, %v140
  %142 = vst [vmem:[#allocation2 + $0xc0] sm:$0x1] %v141
  %v143 = vld [vmem:[#allocation2 + $0xc8] sm:$0x1]
  %v144 = vsel %vm67, 0, %v143
  %145 = vst [vmem:[#allocation2 + $0xc8] sm:$0x1] %v144
  %v146 = vld [vmem:[#allocation2 + $0xd0] sm:$0x1]
  %v147 = vsel %vm67, 0, %v146
  %148 = vst [vmem:[#allocation2 + $0xd0] sm:$0x1] %v147
  %v149 = vld [vmem:[#allocation2 + $0xd8] sm:$0x1]
  %v150 = vsel %vm67, 0, %v149
  %151 = vst [vmem:[#allocation2 + $0xd8] sm:$0x1] %v150
  %v152 = vld [vmem:[#allocation2 + $0xe0] sm:$0x1]
  %v153 = vsel %vm67, 0, %v152
  %154 = vst [vmem:[#allocation2 + $0xe0] sm:$0x1] %v153
  %v155 = vld [vmem:[#allocation2 + $0xe8] sm:$0x1]
  %v156 = vsel %vm67, 0, %v155
  %157 = vst [vmem:[#allocation2 + $0xe8] sm:$0x1] %v156
  %v158 = vld [vmem:[#allocation2 + $0xf0] sm:$0x1]
  %v159 = vsel %vm67, 0, %v158
  %160 = vst [vmem:[#allocation2 + $0xf0] sm:$0x1] %v159
  %v161 = vld [vmem:[#allocation2 + $0xf8] sm:$0x1]
  %v162 = vsel %vm67, 0, %v161
  %163 = vst [vmem:[#allocation2 + $0xf8] sm:$0x1] %v162
  %v164 = vld [vmem:[#allocation2 + $0x100] sm:$0x1]
  %v165 = vsel %vm67, 0, %v164
  %166 = vst [vmem:[#allocation2 + $0x100] sm:$0x1] %v165
  %v167 = vld [vmem:[#allocation2 + $0x108] sm:$0x1]
  %v168 = vsel %vm67, 0, %v167
  %169 = vst [vmem:[#allocation2 + $0x108] sm:$0x1] %v168
  %v170 = vld [vmem:[#allocation2 + $0x110] sm:$0x1]
  %v171 = vsel %vm67, 0, %v170
  %172 = vst [vmem:[#allocation2 + $0x110] sm:$0x1] %v171
  %v173 = vld [vmem:[#allocation2 + $0x118] sm:$0x1]
  %v174 = vsel %vm67, 0, %v173
  %175 = vst [vmem:[#allocation2 + $0x118] sm:$0x1] %v174
  %v176 = vld [vmem:[#allocation2 + $0x120] sm:$0x1]
  %v177 = vsel %vm67, 0, %v176
  %178 = vst [vmem:[#allocation2 + $0x120] sm:$0x1] %v177
  %v179 = vld [vmem:[#allocation2 + $0x128] sm:$0x1]
  %v180 = vsel %vm67, 0, %v179
  %181 = vst [vmem:[#allocation2 + $0x128] sm:$0x1] %v180
  %v182 = vld [vmem:[#allocation2 + $0x130] sm:$0x1]
  %v183 = vsel %vm67, 0, %v182
  %184 = vst [vmem:[#allocation2 + $0x130] sm:$0x1] %v183
  %v185 = vld [vmem:[#allocation2 + $0x138] sm:$0x1]
  %v186 = vsel %vm67, 0, %v185
  %187 = vst [vmem:[#allocation2 + $0x138] sm:$0x1] %v186
  %v188 = vld [vmem:[#allocation2 + $0x140] sm:$0x1]
  %v189 = vsel %vm67, 0, %v188
  %190 = vst [vmem:[#allocation2 + $0x140] sm:$0x1] %v189
  %v191 = vld [vmem:[#allocation2 + $0x148] sm:$0x1]
  %v192 = vsel %vm67, 0, %v191
  %193 = vst [vmem:[#allocation2 + $0x148] sm:$0x1] %v192
  %v194 = vld [vmem:[#allocation2 + $0x150] sm:$0x1]
  %v195 = vsel %vm67, 0, %v194
  %196 = vst [vmem:[#allocation2 + $0x150] sm:$0x1] %v195
  %v197 = vld [vmem:[#allocation2 + $0x158] sm:$0x1]
  %v198 = vsel %vm67, 0, %v197
  %199 = vst [vmem:[#allocation2 + $0x158] sm:$0x1] %v198
  %v200 = vld [vmem:[#allocation2 + $0x160] sm:$0x1]
  %v201 = vsel %vm67, 0, %v200
  %202 = vst [vmem:[#allocation2 + $0x160] sm:$0x1] %v201
  %v203 = vld [vmem:[#allocation2 + $0x168] sm:$0x1]
  %v204 = vsel %vm67, 0, %v203
  %205 = vst [vmem:[#allocation2 + $0x168] sm:$0x1] %v204
  %v206 = vld [vmem:[#allocation2 + $0x170] sm:$0x1]
  %v207 = vsel %vm67, 0, %v206
  %208 = vst [vmem:[#allocation2 + $0x170] sm:$0x1] %v207
  %v209 = vld [vmem:[#allocation2 + $0x178] sm:$0x1]
  %v210 = vsel %vm67, 0, %v209
  %211 = vst [vmem:[#allocation2 + $0x178] sm:$0x1] %v210
  %v212 = vld [vmem:[#allocation2 + $0x180] sm:$0x1]
  %v213 = vsel %vm67, 0, %v212
  %214 = vst [vmem:[#allocation2 + $0x180] sm:$0x1] %v213
  %v215 = vld [vmem:[#allocation2 + $0x188] sm:$0x1]
  %v216 = vsel %vm67, 0, %v215
  %217 = vst [vmem:[#allocation2 + $0x188] sm:$0x1] %v216
  %v218 = vld [vmem:[#allocation2 + $0x190] sm:$0x1]
  %v219 = vsel %vm67, 0, %v218
  %220 = vst [vmem:[#allocation2 + $0x190] sm:$0x1] %v219
  %v221 = vld [vmem:[#allocation2 + $0x198] sm:$0x1]
  %v222 = vsel %vm67, 0, %v221
  %223 = vst [vmem:[#allocation2 + $0x198] sm:$0x1] %v222
  %v224 = vld [vmem:[#allocation2 + $0x1a0] sm:$0x1]
  %v225 = vsel %vm67, 0, %v224
  %226 = vst [vmem:[#allocation2 + $0x1a0] sm:$0x1] %v225
  %v227 = vld [vmem:[#allocation2 + $0x1a8] sm:$0x1]
  %v228 = vsel %vm67, 0, %v227
  %229 = vst [vmem:[#allocation2 + $0x1a8] sm:$0x1] %v228
  %v230 = vld [vmem:[#allocation2 + $0x1b0] sm:$0x1]
  %v231 = vsel %vm67, 0, %v230
  %232 = vst [vmem:[#allocation2 + $0x1b0] sm:$0x1] %v231
  %v233 = vld [vmem:[#allocation2 + $0x1b8] sm:$0x1]
  %v234 = vsel %vm67, 0, %v233
  %235 = vst [vmem:[#allocation2 + $0x1b8] sm:$0x1] %v234
  %v236 = vld [vmem:[#allocation2 + $0x1c0] sm:$0x1]
  %v237 = vsel %vm67, 0, %v236
  %238 = vst [vmem:[#allocation2 + $0x1c0] sm:$0x1] %v237
  %v239 = vld [vmem:[#allocation2 + $0x1c8] sm:$0x1]
  %v240 = vsel %vm67, 0, %v239
  %241 = vst [vmem:[#allocation2 + $0x1c8] sm:$0x1] %v240
  %v242 = vld [vmem:[#allocation2 + $0x1d0] sm:$0x1]
  %v243 = vsel %vm67, 0, %v242
  %244 = vst [vmem:[#allocation2 + $0x1d0] sm:$0x1] %v243
  %v245 = vld [vmem:[#allocation2 + $0x1d8] sm:$0x1]
  %v246 = vsel %vm67, 0, %v245
  %247 = vst [vmem:[#allocation2 + $0x1d8] sm:$0x1] %v246
  %v248 = vld [vmem:[#allocation2 + $0x1e0] sm:$0x1]
  %v249 = vsel %vm67, 0, %v248
  %250 = vst [vmem:[#allocation2 + $0x1e0] sm:$0x1] %v249
  %v251 = vld [vmem:[#allocation2 + $0x1e8] sm:$0x1]
  %v252 = vsel %vm67, 0, %v251
  %253 = vst [vmem:[#allocation2 + $0x1e8] sm:$0x1] %v252
  %v254 = vld [vmem:[#allocation2 + $0x1f0] sm:$0x1]
  %v255 = vsel %vm67, 0, %v254
  %256 = vst [vmem:[#allocation2 + $0x1f0] sm:$0x1] %v255
  %v257 = vld [vmem:[#allocation2 + $0x1f8] sm:$0x1]
  %v258 = vsel %vm67, 0, %v257
  %259 = vst [vmem:[#allocation2 + $0x1f8] sm:$0x1] %v258
  %v260 = vld [vmem:[#allocation2 + $0x200] sm:$0x1]
  %v261 = vsel %vm67, 0, %v260
  %262 = vst [vmem:[#allocation2 + $0x200] sm:$0x1] %v261
  %v263 = vld [vmem:[#allocation2 + $0x208] sm:$0x1]
  %v264 = vsel %vm67, 0, %v263
  %265 = vst [vmem:[#allocation2 + $0x208] sm:$0x1] %v264
  %v266 = vld [vmem:[#allocation2 + $0x210] sm:$0x1]
  %v267 = vsel %vm67, 0, %v266
  %268 = vst [vmem:[#allocation2 + $0x210] sm:$0x1] %v267
  %v269 = vld [vmem:[#allocation2 + $0x218] sm:$0x1]
  %v270 = vsel %vm67, 0, %v269
  %271 = vst [vmem:[#allocation2 + $0x218] sm:$0x1] %v270
  %v272 = vld [vmem:[#allocation2 + $0x220] sm:$0x1]
  %v273 = vsel %vm67, 0, %v272
  %274 = vst [vmem:[#allocation2 + $0x220] sm:$0x1] %v273
  %v275 = vld [vmem:[#allocation2 + $0x228] sm:$0x1]
  %v276 = vsel %vm67, 0, %v275
  %277 = vst [vmem:[#allocation2 + $0x228] sm:$0x1] %v276
  %v278 = vld [vmem:[#allocation2 + $0x230] sm:$0x1]
  %v279 = vsel %vm67, 0, %v278
  %280 = vst [vmem:[#allocation2 + $0x230] sm:$0x1] %v279
  %v281 = vld [vmem:[#allocation2 + $0x238] sm:$0x1]
  %v282 = vsel %vm67, 0, %v281
  %283 = vst [vmem:[#allocation2 + $0x238] sm:$0x1] %v282
  %v284 = vld [vmem:[#allocation2 + $0x240] sm:$0x1]
  %v285 = vsel %vm67, 0, %v284
  %286 = vst [vmem:[#allocation2 + $0x240] sm:$0x1] %v285
  %v287 = vld [vmem:[#allocation2 + $0x248] sm:$0x1]
  %v288 = vsel %vm67, 0, %v287
  %289 = vst [vmem:[#allocation2 + $0x248] sm:$0x1] %v288
  %v290 = vld [vmem:[#allocation2 + $0x250] sm:$0x1]
  %v291 = vsel %vm67, 0, %v290
  %292 = vst [vmem:[#allocation2 + $0x250] sm:$0x1] %v291
  %v293 = vld [vmem:[#allocation2 + $0x258] sm:$0x1]
  %v294 = vsel %vm67, 0, %v293
  %295 = vst [vmem:[#allocation2 + $0x258] sm:$0x1] %v294
  %v296 = vld [vmem:[#allocation2 + $0x260] sm:$0x1]
  %v297 = vsel %vm67, 0, %v296
  %298 = vst [vmem:[#allocation2 + $0x260] sm:$0x1] %v297
  %v299 = vld [vmem:[#allocation2 + $0x268] sm:$0x1]
  %v300 = vsel %vm67, 0, %v299
  %301 = vst [vmem:[#allocation2 + $0x268] sm:$0x1] %v300
  %v302 = vld [vmem:[#allocation2 + $0x270] sm:$0x1]
  %v303 = vsel %vm67, 0, %v302
  %304 = vst [vmem:[#allocation2 + $0x270] sm:$0x1] %v303
  %v305 = vld [vmem:[#allocation2 + $0x278] sm:$0x1]
  %v306 = vsel %vm67, 0, %v305
  %307 = vst [vmem:[#allocation2 + $0x278] sm:$0x1] %v306
  %vm308 = vsmask.f32 7938
  %vm309 = vmand %vm65, %vm308
  %v310 = vld [vmem:[#allocation2 + $0x4] sm:$0x1]
  %v311 = vsel %vm309, 0, %v310
  %312 = vst [vmem:[#allocation2 + $0x4] sm:$0x1] %v311
  %v313 = vld [vmem:[#allocation2 + $0xc] sm:$0x1]
  %v314 = vsel %vm309, 0, %v313
  %315 = vst [vmem:[#allocation2 + $0xc] sm:$0x1] %v314
  %v316 = vld [vmem:[#allocation2 + $0x14] sm:$0x1]
  %v317 = vsel %vm309, 0, %v316
  %318 = vst [vmem:[#allocation2 + $0x14] sm:$0x1] %v317
  %v319 = vld [vmem:[#allocation2 + $0x1c] sm:$0x1]
  %v320 = vsel %vm309, 0, %v319
  %321 = vst [vmem:[#allocation2 + $0x1c] sm:$0x1] %v320
  %v322 = vld [vmem:[#allocation2 + $0x24] sm:$0x1]
  %v323 = vsel %vm309, 0, %v322
  %324 = vst [vmem:[#allocation2 + $0x24] sm:$0x1] %v323
  %v325 = vld [vmem:[#allocation2 + $0x2c] sm:$0x1]
  %v326 = vsel %vm309, 0, %v325
  %327 = vst [vmem:[#allocation2 + $0x2c] sm:$0x1] %v326
  %v328 = vld [vmem:[#allocation2 + $0x34] sm:$0x1]
  %v329 = vsel %vm309, 0, %v328
  %330 = vst [vmem:[#allocation2 + $0x34] sm:$0x1] %v329
  %v331 = vld [vmem:[#allocation2 + $0x3c] sm:$0x1]
  %v332 = vsel %vm309, 0, %v331
  %333 = vst [vmem:[#allocation2 + $0x3c] sm:$0x1] %v332
  %v334 = vld [vmem:[#allocation2 + $0x44] sm:$0x1]
  %v335 = vsel %vm309, 0, %v334
  %336 = vst [vmem:[#allocation2 + $0x44] sm:$0x1] %v335
  %v337 = vld [vmem:[#allocation2 + $0x4c] sm:$0x1]
  %v338 = vsel %vm309, 0, %v337
  %339 = vst [vmem:[#allocation2 + $0x4c] sm:$0x1] %v338
  %v340 = vld [vmem:[#allocation2 + $0x54] sm:$0x1]
  %v341 = vsel %vm309, 0, %v340
  %342 = vst [vmem:[#allocation2 + $0x54] sm:$0x1] %v341
  %v343 = vld [vmem:[#allocation2 + $0x5c] sm:$0x1]
  %v344 = vsel %vm309, 0, %v343
  %345 = vst [vmem:[#allocation2 + $0x5c] sm:$0x1] %v344
  %v346 = vld [vmem:[#allocation2 + $0x64] sm:$0x1]
  %v347 = vsel %vm309, 0, %v346
  %348 = vst [vmem:[#allocation2 + $0x64] sm:$0x1] %v347
  %v349 = vld [vmem:[#allocation2 + $0x6c] sm:$0x1]
  %v350 = vsel %vm309, 0, %v349
  %351 = vst [vmem:[#allocation2 + $0x6c] sm:$0x1] %v350
  %v352 = vld [vmem:[#allocation2 + $0x74] sm:$0x1]
  %v353 = vsel %vm309, 0, %v352
  %354 = vst [vmem:[#allocation2 + $0x74] sm:$0x1] %v353
  %v355 = vld [vmem:[#allocation2 + $0x7c] sm:$0x1]
  %v356 = vsel %vm309, 0, %v355
  %357 = vst [vmem:[#allocation2 + $0x7c] sm:$0x1] %v356
  %v358 = vld [vmem:[#allocation2 + $0x84] sm:$0x1]
  %v359 = vsel %vm309, 0, %v358
  %360 = vst [vmem:[#allocation2 + $0x84] sm:$0x1] %v359
  %v361 = vld [vmem:[#allocation2 + $0x8c] sm:$0x1]
  %v362 = vsel %vm309, 0, %v361
  %363 = vst [vmem:[#allocation2 + $0x8c] sm:$0x1] %v362
  %v364 = vld [vmem:[#allocation2 + $0x94] sm:$0x1]
  %v365 = vsel %vm309, 0, %v364
  %366 = vst [vmem:[#allocation2 + $0x94] sm:$0x1] %v365
  %v367 = vld [vmem:[#allocation2 + $0x9c] sm:$0x1]
  %v368 = vsel %vm309, 0, %v367
  %369 = vst [vmem:[#allocation2 + $0x9c] sm:$0x1] %v368
  %v370 = vld [vmem:[#allocation2 + $0xa4] sm:$0x1]
  %v371 = vsel %vm309, 0, %v370
  %372 = vst [vmem:[#allocation2 + $0xa4] sm:$0x1] %v371
  %v373 = vld [vmem:[#allocation2 + $0xac] sm:$0x1]
  %v374 = vsel %vm309, 0, %v373
  %375 = vst [vmem:[#allocation2 + $0xac] sm:$0x1] %v374
  %v376 = vld [vmem:[#allocation2 + $0xb4] sm:$0x1]
  %v377 = vsel %vm309, 0, %v376
  %378 = vst [vmem:[#allocation2 + $0xb4] sm:$0x1] %v377
  %v379 = vld [vmem:[#allocation2 + $0xbc] sm:$0x1]
  %v380 = vsel %vm309, 0, %v379
  %381 = vst [vmem:[#allocation2 + $0xbc] sm:$0x1] %v380
  %v382 = vld [vmem:[#allocation2 + $0xc4] sm:$0x1]
  %v383 = vsel %vm309, 0, %v382
  %384 = vst [vmem:[#allocation2 + $0xc4] sm:$0x1] %v383
  %v385 = vld [vmem:[#allocation2 + $0xcc] sm:$0x1]
  %v386 = vsel %vm309, 0, %v385
  %387 = vst [vmem:[#allocation2 + $0xcc] sm:$0x1] %v386
  %v388 = vld [vmem:[#allocation2 + $0xd4] sm:$0x1]
  %v389 = vsel %vm309, 0, %v388
  %390 = vst [vmem:[#allocation2 + $0xd4] sm:$0x1] %v389
  %v391 = vld [vmem:[#allocation2 + $0xdc] sm:$0x1]
  %v392 = vsel %vm309, 0, %v391
  %393 = vst [vmem:[#allocation2 + $0xdc] sm:$0x1] %v392
  %v394 = vld [vmem:[#allocation2 + $0xe4] sm:$0x1]
  %v395 = vsel %vm309, 0, %v394
  %396 = vst [vmem:[#allocation2 + $0xe4] sm:$0x1] %v395
  %v397 = vld [vmem:[#allocation2 + $0xec] sm:$0x1]
  %v398 = vsel %vm309, 0, %v397
  %399 = vst [vmem:[#allocation2 + $0xec] sm:$0x1] %v398
  %v400 = vld [vmem:[#allocation2 + $0xf4] sm:$0x1]
  %v401 = vsel %vm309, 0, %v400
  %402 = vst [vmem:[#allocation2 + $0xf4] sm:$0x1] %v401
  %v403 = vld [vmem:[#allocation2 + $0xfc] sm:$0x1]
  %v404 = vsel %vm309, 0, %v403
  %405 = vst [vmem:[#allocation2 + $0xfc] sm:$0x1] %v404
  %v406 = vld [vmem:[#allocation2 + $0x104] sm:$0x1]
  %v407 = vsel %vm309, 0, %v406
  %408 = vst [vmem:[#allocation2 + $0x104] sm:$0x1] %v407
  %v409 = vld [vmem:[#allocation2 + $0x10c] sm:$0x1]
  %v410 = vsel %vm309, 0, %v409
  %411 = vst [vmem:[#allocation2 + $0x10c] sm:$0x1] %v410
  %v412 = vld [vmem:[#allocation2 + $0x114] sm:$0x1]
  %v413 = vsel %vm309, 0, %v412
  %414 = vst [vmem:[#allocation2 + $0x114] sm:$0x1] %v413
  %v415 = vld [vmem:[#allocation2 + $0x11c] sm:$0x1]
  %v416 = vsel %vm309, 0, %v415
  %417 = vst [vmem:[#allocation2 + $0x11c] sm:$0x1] %v416
  %v418 = vld [vmem:[#allocation2 + $0x124] sm:$0x1]
  %v419 = vsel %vm309, 0, %v418
  %420 = vst [vmem:[#allocation2 + $0x124] sm:$0x1] %v419
  %v421 = vld [vmem:[#allocation2 + $0x12c] sm:$0x1]
  %v422 = vsel %vm309, 0, %v421
  %423 = vst [vmem:[#allocation2 + $0x12c] sm:$0x1] %v422
  %v424 = vld [vmem:[#allocation2 + $0x134] sm:$0x1]
  %v425 = vsel %vm309, 0, %v424
  %426 = vst [vmem:[#allocation2 + $0x134] sm:$0x1] %v425
  %v427 = vld [vmem:[#allocation2 + $0x13c] sm:$0x1]
  %v428 = vsel %vm309, 0, %v427
  %429 = vst [vmem:[#allocation2 + $0x13c] sm:$0x1] %v428
  %v430 = vld [vmem:[#allocation2 + $0x144] sm:$0x1]
  %v431 = vsel %vm309, 0, %v430
  %432 = vst [vmem:[#allocation2 + $0x144] sm:$0x1] %v431
  %v433 = vld [vmem:[#allocation2 + $0x14c] sm:$0x1]
  %v434 = vsel %vm309, 0, %v433
  %435 = vst [vmem:[#allocation2 + $0x14c] sm:$0x1] %v434
  %v436 = vld [vmem:[#allocation2 + $0x154] sm:$0x1]
  %v437 = vsel %vm309, 0, %v436
  %438 = vst [vmem:[#allocation2 + $0x154] sm:$0x1] %v437
  %v439 = vld [vmem:[#allocation2 + $0x15c] sm:$0x1]
  %v440 = vsel %vm309, 0, %v439
  %441 = vst [vmem:[#allocation2 + $0x15c] sm:$0x1] %v440
  %v442 = vld [vmem:[#allocation2 + $0x164] sm:$0x1]
  %v443 = vsel %vm309, 0, %v442
  %444 = vst [vmem:[#allocation2 + $0x164] sm:$0x1] %v443
  %v445 = vld [vmem:[#allocation2 + $0x16c] sm:$0x1]
  %v446 = vsel %vm309, 0, %v445
  %447 = vst [vmem:[#allocation2 + $0x16c] sm:$0x1] %v446
  %v448 = vld [vmem:[#allocation2 + $0x174] sm:$0x1]
  %v449 = vsel %vm309, 0, %v448
  %450 = vst [vmem:[#allocation2 + $0x174] sm:$0x1] %v449
  %v451 = vld [vmem:[#allocation2 + $0x17c] sm:$0x1]
  %v452 = vsel %vm309, 0, %v451
  %453 = vst [vmem:[#allocation2 + $0x17c] sm:$0x1] %v452
  %v454 = vld [vmem:[#allocation2 + $0x184] sm:$0x1]
  %v455 = vsel %vm309, 0, %v454
  %456 = vst [vmem:[#allocation2 + $0x184] sm:$0x1] %v455
  %v457 = vld [vmem:[#allocation2 + $0x18c] sm:$0x1]
  %v458 = vsel %vm309, 0, %v457
  %459 = vst [vmem:[#allocation2 + $0x18c] sm:$0x1] %v458
  %v460 = vld [vmem:[#allocation2 + $0x194] sm:$0x1]
  %v461 = vsel %vm309, 0, %v460
  %462 = vst [vmem:[#allocation2 + $0x194] sm:$0x1] %v461
  %v463 = vld [vmem:[#allocation2 + $0x19c] sm:$0x1]
  %v464 = vsel %vm309, 0, %v463
  %465 = vst [vmem:[#allocation2 + $0x19c] sm:$0x1] %v464
  %v466 = vld [vmem:[#allocation2 + $0x1a4] sm:$0x1]
  %v467 = vsel %vm309, 0, %v466
  %468 = vst [vmem:[#allocation2 + $0x1a4] sm:$0x1] %v467
  %v469 = vld [vmem:[#allocation2 + $0x1ac] sm:$0x1]
  %v470 = vsel %vm309, 0, %v469
  %471 = vst [vmem:[#allocation2 + $0x1ac] sm:$0x1] %v470
  %v472 = vld [vmem:[#allocation2 + $0x1b4] sm:$0x1]
  %v473 = vsel %vm309, 0, %v472
  %474 = vst [vmem:[#allocation2 + $0x1b4] sm:$0x1] %v473
  %v475 = vld [vmem:[#allocation2 + $0x1bc] sm:$0x1]
  %v476 = vsel %vm309, 0, %v475
  %477 = vst [vmem:[#allocation2 + $0x1bc] sm:$0x1] %v476
  %v478 = vld [vmem:[#allocation2 + $0x1c4] sm:$0x1]
  %v479 = vsel %vm309, 0, %v478
  %480 = vst [vmem:[#allocation2 + $0x1c4] sm:$0x1] %v479
  %v481 = vld [vmem:[#allocation2 + $0x1cc] sm:$0x1]
  %v482 = vsel %vm309, 0, %v481
  %483 = vst [vmem:[#allocation2 + $0x1cc] sm:$0x1] %v482
  %v484 = vld [vmem:[#allocation2 + $0x1d4] sm:$0x1]
  %v485 = vsel %vm309, 0, %v484
  %486 = vst [vmem:[#allocation2 + $0x1d4] sm:$0x1] %v485
  %v487 = vld [vmem:[#allocation2 + $0x1dc] sm:$0x1]
  %v488 = vsel %vm309, 0, %v487
  %489 = vst [vmem:[#allocation2 + $0x1dc] sm:$0x1] %v488
  %v490 = vld [vmem:[#allocation2 + $0x1e4] sm:$0x1]
  %v491 = vsel %vm309, 0, %v490
  %492 = vst [vmem:[#allocation2 + $0x1e4] sm:$0x1] %v491
  %v493 = vld [vmem:[#allocation2 + $0x1ec] sm:$0x1]
  %v494 = vsel %vm309, 0, %v493
  %495 = vst [vmem:[#allocation2 + $0x1ec] sm:$0x1] %v494
  %v496 = vld [vmem:[#allocation2 + $0x1f4] sm:$0x1]
  %v497 = vsel %vm309, 0, %v496
  %498 = vst [vmem:[#allocation2 + $0x1f4] sm:$0x1] %v497
  %v499 = vld [vmem:[#allocation2 + $0x1fc] sm:$0x1]
  %v500 = vsel %vm309, 0, %v499
  %501 = vst [vmem:[#allocation2 + $0x1fc] sm:$0x1] %v500
  %v502 = vld [vmem:[#allocation2 + $0x204] sm:$0x1]
  %v503 = vsel %vm309, 0, %v502
  %504 = vst [vmem:[#allocation2 + $0x204] sm:$0x1] %v503
  %v505 = vld [vmem:[#allocation2 + $0x20c] sm:$0x1]
  %v506 = vsel %vm309, 0, %v505
  %507 = vst [vmem:[#allocation2 + $0x20c] sm:$0x1] %v506
  %v508 = vld [vmem:[#allocation2 + $0x214] sm:$0x1]
  %v509 = vsel %vm309, 0, %v508
  %510 = vst [vmem:[#allocation2 + $0x214] sm:$0x1] %v509
  %v511 = vld [vmem:[#allocation2 + $0x21c] sm:$0x1]
  %v512 = vsel %vm309, 0, %v511
  %513 = vst [vmem:[#allocation2 + $0x21c] sm:$0x1] %v512
  %v514 = vld [vmem:[#allocation2 + $0x224] sm:$0x1]
  %v515 = vsel %vm309, 0, %v514
  %516 = vst [vmem:[#allocation2 + $0x224] sm:$0x1] %v515
  %v517 = vld [vmem:[#allocation2 + $0x22c] sm:$0x1]
  %v518 = vsel %vm309, 0, %v517
  %519 = vst [vmem:[#allocation2 + $0x22c] sm:$0x1] %v518
  %v520 = vld [vmem:[#allocation2 + $0x234] sm:$0x1]
  %v521 = vsel %vm309, 0, %v520
  %522 = vst [vmem:[#allocation2 + $0x234] sm:$0x1] %v521
  %v523 = vld [vmem:[#allocation2 + $0x23c] sm:$0x1]
  %v524 = vsel %vm309, 0, %v523
  %525 = vst [vmem:[#allocation2 + $0x23c] sm:$0x1] %v524
  %v526 = vld [vmem:[#allocation2 + $0x244] sm:$0x1]
  %v527 = vsel %vm309, 0, %v526
  %528 = vst [vmem:[#allocation2 + $0x244] sm:$0x1] %v527
  %v529 = vld [vmem:[#allocation2 + $0x24c] sm:$0x1]
  %v530 = vsel %vm309, 0, %v529
  %531 = vst [vmem:[#allocation2 + $0x24c] sm:$0x1] %v530
  %v532 = vld [vmem:[#allocation2 + $0x254] sm:$0x1]
  %v533 = vsel %vm309, 0, %v532
  %534 = vst [vmem:[#allocation2 + $0x254] sm:$0x1] %v533
  %v535 = vld [vmem:[#allocation2 + $0x25c] sm:$0x1]
  %v536 = vsel %vm309, 0, %v535
  %537 = vst [vmem:[#allocation2 + $0x25c] sm:$0x1] %v536
  %v538 = vld [vmem:[#allocation2 + $0x264] sm:$0x1]
  %v539 = vsel %vm309, 0, %v538
  %540 = vst [vmem:[#allocation2 + $0x264] sm:$0x1] %v539
  %v541 = vld [vmem:[#allocation2 + $0x26c] sm:$0x1]
  %v542 = vsel %vm309, 0, %v541
  %543 = vst [vmem:[#allocation2 + $0x26c] sm:$0x1] %v542
  %v544 = vld [vmem:[#allocation2 + $0x274] sm:$0x1]
  %v545 = vsel %vm309, 0, %v544
  %546 = vst [vmem:[#allocation2 + $0x274] sm:$0x1] %v545
  %v547 = vld [vmem:[#allocation2 + $0x27c] sm:$0x1]
  %v548 = vsel %vm309, 0, %v547
  %549 = vst [vmem:[#allocation2 + $0x27c] sm:$0x1] %v548
  %vm550 = vcmask 60416
  %551 = vst.msk [vmem:[#allocation3] sm:$0xf] %vm550, 0
  %vm552 = vcmask 57344
  %553 = vst.msk [vmem:[#allocation3 + $0x4] sm:$0x1] %vm552, 0
  %554 = vst.msk [vmem:[#allocation3 + $0x50] sm:$0xf] %vm550, 0
  %555 = vst.msk [vmem:[#allocation3 + $0x54] sm:$0x1] %vm552, 0
  %s556 = scalar_lea.vmem [#allocation3], 72
  %557 = vst.msk [vmem:[%s556] sm:$0xf] %vm550, 0
  %558 = vst.msk [vmem:[%s556 + $0x4] sm:$0x1] %vm552, 0
  %559 = vst.msk [vmem:[%s556 + $0x50] sm:$0xf] %vm550, 0
  %560 = vst.msk [vmem:[%s556 + $0x54] sm:$0x1] %vm552, 0
  %vm561 = vcmask 57344
  %vm562 = vmand %vm561, %vm66
  %v563 = vld [vmem:[#allocation3] sm:$0x1]
  %v564 = vsel %vm562, 0, %v563
  %565 = vst [vmem:[#allocation3] sm:$0x1] %v564
  %v566 = vld [vmem:[#allocation3 + $0x8] sm:$0x1]
  %v567 = vsel %vm562, 0, %v566
  %568 = vst [vmem:[#allocation3 + $0x8] sm:$0x1] %v567
  %v569 = vld [vmem:[#allocation3 + $0x10] sm:$0x1]
  %v570 = vsel %vm562, 0, %v569
  %571 = vst [vmem:[#allocation3 + $0x10] sm:$0x1] %v570
  %v572 = vld [vmem:[#allocation3 + $0x18] sm:$0x1]
  %v573 = vsel %vm562, 0, %v572
  %574 = vst [vmem:[#allocation3 + $0x18] sm:$0x1] %v573
  %v575 = vld [vmem:[#allocation3 + $0x20] sm:$0x1]
  %v576 = vsel %vm562, 0, %v575
  %577 = vst [vmem:[#allocation3 + $0x20] sm:$0x1] %v576
  %v578 = vld [vmem:[#allocation3 + $0x28] sm:$0x1]
  %v579 = vsel %vm562, 0, %v578
  %580 = vst [vmem:[#allocation3 + $0x28] sm:$0x1] %v579
  %v581 = vld [vmem:[#allocation3 + $0x30] sm:$0x1]
  %v582 = vsel %vm562, 0, %v581
  %583 = vst [vmem:[#allocation3 + $0x30] sm:$0x1] %v582
  %v584 = vld [vmem:[#allocation3 + $0x38] sm:$0x1]
  %v585 = vsel %vm562, 0, %v584
  %586 = vst [vmem:[#allocation3 + $0x38] sm:$0x1] %v585
  %v587 = vld [vmem:[#allocation3 + $0x40] sm:$0x1]
  %v588 = vsel %vm562, 0, %v587
  %589 = vst [vmem:[#allocation3 + $0x40] sm:$0x1] %v588
  %v590 = vld [vmem:[#allocation3 + $0x48] sm:$0x1]
  %v591 = vsel %vm562, 0, %v590
  %592 = vst [vmem:[#allocation3 + $0x48] sm:$0x1] %v591
  %v593 = vld [vmem:[#allocation3 + $0x50] sm:$0x1]
  %v594 = vsel %vm562, 0, %v593
  %595 = vst [vmem:[#allocation3 + $0x50] sm:$0x1] %v594
  %v596 = vld [vmem:[#allocation3 + $0x58] sm:$0x1]
  %v597 = vsel %vm562, 0, %v596
  %598 = vst [vmem:[#allocation3 + $0x58] sm:$0x1] %v597
  %v599 = vld [vmem:[#allocation3 + $0x60] sm:$0x1]
  %v600 = vsel %vm562, 0, %v599
  %601 = vst [vmem:[#allocation3 + $0x60] sm:$0x1] %v600
  %v602 = vld [vmem:[#allocation3 + $0x68] sm:$0x1]
  %v603 = vsel %vm562, 0, %v602
  %604 = vst [vmem:[#allocation3 + $0x68] sm:$0x1] %v603
  %v605 = vld [vmem:[#allocation3 + $0x70] sm:$0x1]
  %v606 = vsel %vm562, 0, %v605
  %607 = vst [vmem:[#allocation3 + $0x70] sm:$0x1] %v606
  %v608 = vld [vmem:[#allocation3 + $0x78] sm:$0x1]
  %v609 = vsel %vm562, 0, %v608
  %610 = vst [vmem:[#allocation3 + $0x78] sm:$0x1] %v609
  %v611 = vld [vmem:[#allocation3 + $0x80] sm:$0x1]
  %v612 = vsel %vm562, 0, %v611
  %613 = vst [vmem:[#allocation3 + $0x80] sm:$0x1] %v612
  %v614 = vld [vmem:[#allocation3 + $0x88] sm:$0x1]
  %v615 = vsel %vm562, 0, %v614
  %616 = vst [vmem:[#allocation3 + $0x88] sm:$0x1] %v615
  %v617 = vld [vmem:[#allocation3 + $0x90] sm:$0x1]
  %v618 = vsel %vm562, 0, %v617
  %619 = vst [vmem:[#allocation3 + $0x90] sm:$0x1] %v618
  %v620 = vld [vmem:[#allocation3 + $0x98] sm:$0x1]
  %v621 = vsel %vm562, 0, %v620
  %622 = vst [vmem:[#allocation3 + $0x98] sm:$0x1] %v621
  %vm623 = vmand %vm561, %vm308
  %v624 = vld [vmem:[#allocation3 + $0x4] sm:$0x1]
  %v625 = vsel %vm623, 0, %v624
  %626 = vst [vmem:[#allocation3 + $0x4] sm:$0x1] %v625
  %v627 = vld [vmem:[#allocation3 + $0xc] sm:$0x1]
  %v628 = vsel %vm623, 0, %v627
  %629 = vst [vmem:[#allocation3 + $0xc] sm:$0x1] %v628
  %v630 = vld [vmem:[#allocation3 + $0x14] sm:$0x1]
  %v631 = vsel %vm623, 0, %v630
  %632 = vst [vmem:[#allocation3 + $0x14] sm:$0x1] %v631
  %v633 = vld [vmem:[#allocation3 + $0x1c] sm:$0x1]
  %v634 = vsel %vm623, 0, %v633
  %635 = vst [vmem:[#allocation3 + $0x1c] sm:$0x1] %v634
  %v636 = vld [vmem:[#allocation3 + $0x24] sm:$0x1]
  %v637 = vsel %vm623, 0, %v636
  %638 = vst [vmem:[#allocation3 + $0x24] sm:$0x1] %v637
  %v639 = vld [vmem:[#allocation3 + $0x2c] sm:$0x1]
  %v640 = vsel %vm623, 0, %v639
  %641 = vst [vmem:[#allocation3 + $0x2c] sm:$0x1] %v640
  %v642 = vld [vmem:[#allocation3 + $0x34] sm:$0x1]
  %v643 = vsel %vm623, 0, %v642
  %644 = vst [vmem:[#allocation3 + $0x34] sm:$0x1] %v643
  %v645 = vld [vmem:[#allocation3 + $0x3c] sm:$0x1]
  %v646 = vsel %vm623, 0, %v645
  %647 = vst [vmem:[#allocation3 + $0x3c] sm:$0x1] %v646
  %v648 = vld [vmem:[#allocation3 + $0x44] sm:$0x1]
  %v649 = vsel %vm623, 0, %v648
  %650 = vst [vmem:[#allocation3 + $0x44] sm:$0x1] %v649
  %v651 = vld [vmem:[#allocation3 + $0x4c] sm:$0x1]
  %v652 = vsel %vm623, 0, %v651
  %653 = vst [vmem:[#allocation3 + $0x4c] sm:$0x1] %v652
  %v654 = vld [vmem:[#allocation3 + $0x54] sm:$0x1]
  %v655 = vsel %vm623, 0, %v654
  %656 = vst [vmem:[#allocation3 + $0x54] sm:$0x1] %v655
  %v657 = vld [vmem:[#allocation3 + $0x5c] sm:$0x1]
  %v658 = vsel %vm623, 0, %v657
  %659 = vst [vmem:[#allocation3 + $0x5c] sm:$0x1] %v658
  %v660 = vld [vmem:[#allocation3 + $0x64] sm:$0x1]
  %v661 = vsel %vm623, 0, %v660
  %662 = vst [vmem:[#allocation3 + $0x64] sm:$0x1] %v661
  %v663 = vld [vmem:[#allocation3 + $0x6c] sm:$0x1]
  %v664 = vsel %vm623, 0, %v663
  %665 = vst [vmem:[#allocation3 + $0x6c] sm:$0x1] %v664
  %v666 = vld [vmem:[#allocation3 + $0x74] sm:$0x1]
  %v667 = vsel %vm623, 0, %v666
  %668 = vst [vmem:[#allocation3 + $0x74] sm:$0x1] %v667
  %v669 = vld [vmem:[#allocation3 + $0x7c] sm:$0x1]
  %v670 = vsel %vm623, 0, %v669
  %671 = vst [vmem:[#allocation3 + $0x7c] sm:$0x1] %v670
  %v672 = vld [vmem:[#allocation3 + $0x84] sm:$0x1]
  %v673 = vsel %vm623, 0, %v672
  %674 = vst [vmem:[#allocation3 + $0x84] sm:$0x1] %v673
  %v675 = vld [vmem:[#allocation3 + $0x8c] sm:$0x1]
  %v676 = vsel %vm623, 0, %v675
  %677 = vst [vmem:[#allocation3 + $0x8c] sm:$0x1] %v676
  %v678 = vld [vmem:[#allocation3 + $0x94] sm:$0x1]
  %v679 = vsel %vm623, 0, %v678
  %680 = vst [vmem:[#allocation3 + $0x94] sm:$0x1] %v679
  %v681 = vld [vmem:[#allocation3 + $0x9c] sm:$0x1]
  %v682 = vsel %vm623, 0, %v681
  %683 = vst [vmem:[#allocation3 + $0x9c] sm:$0x1] %v682
  %v684 = vld [vmem:[%s1] sm:$0x1]
  %v685 = vld [vmem:[%s2] sm:$0x1]
  %v686 = vld [vmem:[%s0] sm:$0xff]
  %v687 = vld [vmem:[%s0 + $0x8] sm:$0xff]
  %v688 = vld [vmem:[%s0 + $0x10] sm:$0xff]
  %v689 = vld [vmem:[%s0 + $0x18] sm:$0xff]
  %v690 = vld [vmem:[%s0 + $0x20] sm:$0xff]
  %v691 = vld [vmem:[%s0 + $0x28] sm:$0xff]
  %v692 = vld [vmem:[%s0 + $0x30] sm:$0xff]
  %v693 = vld [vmem:[%s0 + $0x38] sm:$0xff]
  %v694 = vld [vmem:[%s0 + $0x100] sm:$0xff]
  %v695 = vld [vmem:[%s0 + $0x108] sm:$0xff]
  %v696 = vld [vmem:[%s0 + $0x110] sm:$0xff]
  %v697 = vld [vmem:[%s0 + $0x118] sm:$0xff]
  %v698 = vld [vmem:[%s0 + $0x120] sm:$0xff]
  %v699 = vld [vmem:[%s0 + $0x128] sm:$0xff]
  %v700 = vld [vmem:[%s0 + $0x130] sm:$0xff]
  %v701 = vld [vmem:[%s0 + $0x138] sm:$0xff]
  %v703 = vlaneseq
  %v704 = vshrl.u32 %v703, 7
  %v705 = vsub.s32 0, %v704
  %v706 = vrot.slane %v684, %v705
  %v708 = vmul.f32 %v686, %v706
  %v709 = vmul.f32 %v687, %v706
  %v710 = vmul.f32 %v688, %v706
  %v711 = vmul.f32 %v689, %v706
  %v712 = vmul.f32 %v690, %v706
  %v713 = vmul.f32 %v691, %v706
  %v714 = vmul.f32 %v692, %v706
  %v715 = vmul.f32 %v693, %v706
  %v716 = vmul.f32 %v694, %v706
  %v717 = vmul.f32 %v695, %v706
  %v718 = vmul.f32 %v696, %v706
  %v719 = vmul.f32 %v697, %v706
  %v720 = vmul.f32 %v698, %v706
  %v721 = vmul.f32 %v699, %v706
  %v722 = vmul.f32 %v700, %v706
  %v723 = vmul.f32 %v701, %v706
  %v725 = vlaneseq
  %v726 = vshrl.u32 %v725, 7
  %v727 = vsub.s32 0, %v726
  %v728 = vrot.slane %v685, %v727
  %v730 = vadd.f32 %v708, %v728
  %v731 = vadd.f32 %v709, %v728
  %v732 = vadd.f32 %v710, %v728
  %v733 = vadd.f32 %v711, %v728
  %v734 = vadd.f32 %v712, %v728
  %v735 = vadd.f32 %v713, %v728
  %v736 = vadd.f32 %v714, %v728
  %v737 = vadd.f32 %v715, %v728
  %v738 = vadd.f32 %v716, %v728
  %v739 = vadd.f32 %v717, %v728
  %v740 = vadd.f32 %v718, %v728
  %v741 = vadd.f32 %v719, %v728
  %v742 = vadd.f32 %v720, %v728
  %v743 = vadd.f32 %v721, %v728
  %v744 = vadd.f32 %v722, %v728
  %v745 = vadd.f32 %v723, %v728
  %v746 = vmax.f32 %v730, 0.0
  %v747 = vmax.f32 %v731, 0.0
  %v748 = vmax.f32 %v732, 0.0
  %v749 = vmax.f32 %v733, 0.0
  %v750 = vmax.f32 %v734, 0.0
  %v751 = vmax.f32 %v735, 0.0
  %v752 = vmax.f32 %v736, 0.0
  %v753 = vmax.f32 %v737, 0.0
  %v754 = vmax.f32 %v738, 0.0
  %v755 = vmax.f32 %v739, 0.0
  %v756 = vmax.f32 %v740, 0.0
  %v757 = vmax.f32 %v741, 0.0
  %v758 = vmax.f32 %v742, 0.0
  %v759 = vmax.f32 %v743, 0.0
  %v760 = vmax.f32 %v744, 0.0
  %v761 = vmax.f32 %v745, 0.0
  %v762 = vpack.c.bf16 %v746, %v746
  %v763 = vpack.c.bf16 %v747, %v747
  %v764 = vpack.c.bf16 %v748, %v748
  %v765 = vpack.c.bf16 %v749, %v749
  %v766 = vpack.c.bf16 %v750, %v750
  %v767 = vpack.c.bf16 %v751, %v751
  %v768 = vpack.c.bf16 %v752, %v752
  %v769 = vpack.c.bf16 %v753, %v753
  %v770 = vpack.c.bf16 %v754, %v754
  %v771 = vpack.c.bf16 %v755, %v755
  %v772 = vpack.c.bf16 %v756, %v756
  %v773 = vpack.c.bf16 %v757, %v757
  %v774 = vpack.c.bf16 %v758, %v758
  %v775 = vpack.c.bf16 %v759, %v759
  %v776 = vpack.c.bf16 %v760, %v760
  %v777 = vpack.c.bf16 %v761, %v761
  %v794 = vunpack.c.l.b16 %v762
  %v795 = vunpack.c.l.b16 %v763
  %v796 = vunpack.c.l.b16 %v764
  %v797 = vunpack.c.l.b16 %v765
  %v798 = vunpack.c.l.b16 %v766
  %v799 = vunpack.c.l.b16 %v767
  %v800 = vunpack.c.l.b16 %v768
  %v801 = vunpack.c.l.b16 %v769
  %v802 = vunpack.c.l.b16 %v770
  %v803 = vunpack.c.l.b16 %v771
  %v804 = vunpack.c.l.b16 %v772
  %v805 = vunpack.c.l.b16 %v773
  %v806 = vunpack.c.l.b16 %v774
  %v807 = vunpack.c.l.b16 %v775
  %v808 = vunpack.c.l.b16 %v776
  %v809 = vunpack.c.l.b16 %v777
  %v810 = vpack.c.b16 %v794, %v794
  %v811 = vpack.c.b16 %v795, %v795
  %v812 = vpack.c.b16 %v796, %v796
  %v813 = vpack.c.b16 %v797, %v797
  %v814 = vpack.c.b16 %v798, %v798
  %v815 = vpack.c.b16 %v799, %v799
  %v816 = vpack.c.b16 %v800, %v800
  %v817 = vpack.c.b16 %v801, %v801
  %v818 = vpack.c.b16 %v802, %v802
  %v819 = vpack.c.b16 %v803, %v803
  %v820 = vpack.c.b16 %v804, %v804
  %v821 = vpack.c.b16 %v805, %v805
  %v822 = vpack.c.b16 %v806, %v806
  %v823 = vpack.c.b16 %v807, %v807
  %v824 = vpack.c.b16 %v808, %v808
  %v825 = vpack.c.b16 %v809, %v809
  %v827 = vshrl.u32 %v810, 16
  %v829 = vrot.slane %v827, 7
  %v830 = vshll.u32 %v810, 16
  %v832 = vor.u32 %v829, %v830
  %v833 = vrot.slane %v829, 4
  %v835 = vshrl.u32 %v811, 16
  %v837 = vrot.slane %v835, 7
  %v838 = vshll.u32 %v811, 16
  %v840 = vor.u32 %v837, %v838
  %v841 = vrot.slane %v837, 4
  %v843 = vshrl.u32 %v812, 16
  %v845 = vrot.slane %v843, 7
  %v846 = vshll.u32 %v812, 16
  %v848 = vor.u32 %v845, %v846
  %v849 = vrot.slane %v845, 4
  %v851 = vshrl.u32 %v813, 16
  %v853 = vrot.slane %v851, 7
  %v854 = vshll.u32 %v813, 16
  %v856 = vor.u32 %v853, %v854
  %v857 = vrot.slane %v853, 4
  %v859 = vshrl.u32 %v814, 16
  %v861 = vrot.slane %v859, 7
  %v862 = vshll.u32 %v814, 16
  %v864 = vor.u32 %v861, %v862
  %v865 = vrot.slane %v861, 4
  %v867 = vshrl.u32 %v815, 16
  %v869 = vrot.slane %v867, 7
  %v870 = vshll.u32 %v815, 16
  %v872 = vor.u32 %v869, %v870
  %v873 = vrot.slane %v869, 4
  %v875 = vshrl.u32 %v816, 16
  %v877 = vrot.slane %v875, 7
  %v878 = vshll.u32 %v816, 16
  %v880 = vor.u32 %v877, %v878
  %v881 = vrot.slane %v877, 4
  %v883 = vshrl.u32 %v817, 16
  %v885 = vrot.slane %v883, 7
  %v886 = vshll.u32 %v817, 16
  %v888 = vor.u32 %v885, %v886
  %v889 = vrot.slane %v885, 4
  %v891 = vshrl.u32 %v818, 16
  %v893 = vrot.slane %v891, 7
  %v894 = vshll.u32 %v818, 16
  %v896 = vor.u32 %v893, %v894
  %v897 = vrot.slane %v893, 4
  %v899 = vshrl.u32 %v819, 16
  %v901 = vrot.slane %v899, 7
  %v902 = vshll.u32 %v819, 16
  %v904 = vor.u32 %v901, %v902
  %v905 = vrot.slane %v901, 4
  %v907 = vshrl.u32 %v820, 16
  %v909 = vrot.slane %v907, 7
  %v910 = vshll.u32 %v820, 16
  %v912 = vor.u32 %v909, %v910
  %v913 = vrot.slane %v909, 4
  %v915 = vshrl.u32 %v821, 16
  %v917 = vrot.slane %v915, 7
  %v918 = vshll.u32 %v821, 16
  %v920 = vor.u32 %v917, %v918
  %v921 = vrot.slane %v917, 4
  %v923 = vshrl.u32 %v822, 16
  %v925 = vrot.slane %v923, 7
  %v926 = vshll.u32 %v822, 16
  %v928 = vor.u32 %v925, %v926
  %v929 = vrot.slane %v925, 4
  %v931 = vshrl.u32 %v823, 16
  %v933 = vrot.slane %v931, 7
  %v934 = vshll.u32 %v823, 16
  %v936 = vor.u32 %v933, %v934
  %v937 = vrot.slane %v933, 4
  %v939 = vshrl.u32 %v824, 16
  %v941 = vrot.slane %v939, 7
  %v942 = vshll.u32 %v824, 16
  %v944 = vor.u32 %v941, %v942
  %v945 = vrot.slane %v941, 4
  %v947 = vshrl.u32 %v825, 16
  %v949 = vrot.slane %v947, 7
  %v950 = vshll.u32 %v825, 16
  %v952 = vor.u32 %v949, %v950
  %v953 = vrot.slane %v949, 4
  %s986 = scalar_lea.vmem [#allocation2], 8
  %vm987 = vcmask 27648
  %vm988 = vmand %vm987, %vm308
  %v989 = vld [vmem:[%s986] sm:$0xf]
  %v990 = vsel %vm988, %v832, %v989
  %991 = vst [vmem:[%s986] sm:$0xf] %v990
  %v992 = vld [vmem:[%s986 + $0x4] sm:$0x1]
  %v993 = vsel %vm67, %v833, %v992
  %994 = vst [vmem:[%s986 + $0x4] sm:$0x1] %v993
  %v995 = vld [vmem:[%s986 + $0x8] sm:$0xf]
  %v996 = vsel %vm988, %v840, %v995
  %997 = vst [vmem:[%s986 + $0x8] sm:$0xf] %v996
  %v998 = vld [vmem:[%s986 + $0xc] sm:$0x1]
  %v999 = vsel %vm67, %v841, %v998
  %1000 = vst [vmem:[%s986 + $0xc] sm:$0x1] %v999
  %v1001 = vld [vmem:[%s986 + $0x10] sm:$0xf]
  %v1002 = vsel %vm988, %v848, %v1001
  %1003 = vst [vmem:[%s986 + $0x10] sm:$0xf] %v1002
  %v1004 = vld [vmem:[%s986 + $0x14] sm:$0x1]
  %v1005 = vsel %vm67, %v849, %v1004
  %1006 = vst [vmem:[%s986 + $0x14] sm:$0x1] %v1005
  %v1007 = vld [vmem:[%s986 + $0x18] sm:$0xf]
  %v1008 = vsel %vm988, %v856, %v1007
  %1009 = vst [vmem:[%s986 + $0x18] sm:$0xf] %v1008
  %v1010 = vld [vmem:[%s986 + $0x1c] sm:$0x1]
  %v1011 = vsel %vm67, %v857, %v1010
  %1012 = vst [vmem:[%s986 + $0x1c] sm:$0x1] %v1011
  %v1013 = vld [vmem:[%s986 + $0x20] sm:$0xf]
  %v1014 = vsel %vm988, %v864, %v1013
  %1015 = vst [vmem:[%s986 + $0x20] sm:$0xf] %v1014
  %v1016 = vld [vmem:[%s986 + $0x24] sm:$0x1]
  %v1017 = vsel %vm67, %v865, %v1016
  %1018 = vst [vmem:[%s986 + $0x24] sm:$0x1] %v1017
  %v1019 = vld [vmem:[%s986 + $0x28] sm:$0xf]
  %v1020 = vsel %vm988, %v872, %v1019
  %1021 = vst [vmem:[%s986 + $0x28] sm:$0xf] %v1020
  %v1022 = vld [vmem:[%s986 + $0x2c] sm:$0x1]
  %v1023 = vsel %vm67, %v873, %v1022
  %1024 = vst [vmem:[%s986 + $0x2c] sm:$0x1] %v1023
  %v1025 = vld [vmem:[%s986 + $0x30] sm:$0xf]
  %v1026 = vsel %vm988, %v880, %v1025
  %1027 = vst [vmem:[%s986 + $0x30] sm:$0xf] %v1026
  %v1028 = vld [vmem:[%s986 + $0x34] sm:$0x1]
  %v1029 = vsel %vm67, %v881, %v1028
  %1030 = vst [vmem:[%s986 + $0x34] sm:$0x1] %v1029
  %v1031 = vld [vmem:[%s986 + $0x38] sm:$0xf]
  %v1032 = vsel %vm988, %v888, %v1031
  %1033 = vst [vmem:[%s986 + $0x38] sm:$0xf] %v1032
  %v1034 = vld [vmem:[%s986 + $0x3c] sm:$0x1]
  %v1035 = vsel %vm67, %v889, %v1034
  %1036 = vst [vmem:[%s986 + $0x3c] sm:$0x1] %v1035
  %v1037 = vld [vmem:[%s986 + $0x140] sm:$0xf]
  %v1038 = vsel %vm988, %v896, %v1037
  %1039 = vst [vmem:[%s986 + $0x140] sm:$0xf] %v1038
  %v1040 = vld [vmem:[%s986 + $0x144] sm:$0x1]
  %v1041 = vsel %vm67, %v897, %v1040
  %1042 = vst [vmem:[%s986 + $0x144] sm:$0x1] %v1041
  %v1043 = vld [vmem:[%s986 + $0x148] sm:$0xf]
  %v1044 = vsel %vm988, %v904, %v1043
  %1045 = vst [vmem:[%s986 + $0x148] sm:$0xf] %v1044
  %v1046 = vld [vmem:[%s986 + $0x14c] sm:$0x1]
  %v1047 = vsel %vm67, %v905, %v1046
  %1048 = vst [vmem:[%s986 + $0x14c] sm:$0x1] %v1047
  %v1049 = vld [vmem:[%s986 + $0x150] sm:$0xf]
  %v1050 = vsel %vm988, %v912, %v1049
  %1051 = vst [vmem:[%s986 + $0x150] sm:$0xf] %v1050
  %v1052 = vld [vmem:[%s986 + $0x154] sm:$0x1]
  %v1053 = vsel %vm67, %v913, %v1052
  %1054 = vst [vmem:[%s986 + $0x154] sm:$0x1] %v1053
  %v1055 = vld [vmem:[%s986 + $0x158] sm:$0xf]
  %v1056 = vsel %vm988, %v920, %v1055
  %1057 = vst [vmem:[%s986 + $0x158] sm:$0xf] %v1056
  %v1058 = vld [vmem:[%s986 + $0x15c] sm:$0x1]
  %v1059 = vsel %vm67, %v921, %v1058
  %1060 = vst [vmem:[%s986 + $0x15c] sm:$0x1] %v1059
  %v1061 = vld [vmem:[%s986 + $0x160] sm:$0xf]
  %v1062 = vsel %vm988, %v928, %v1061
  %1063 = vst [vmem:[%s986 + $0x160] sm:$0xf] %v1062
  %v1064 = vld [vmem:[%s986 + $0x164] sm:$0x1]
  %v1065 = vsel %vm67, %v929, %v1064
  %1066 = vst [vmem:[%s986 + $0x164] sm:$0x1] %v1065
  %v1067 = vld [vmem:[%s986 + $0x168] sm:$0xf]
  %v1068 = vsel %vm988, %v936, %v1067
  %1069 = vst [vmem:[%s986 + $0x168] sm:$0xf] %v1068
  %v1070 = vld [vmem:[%s986 + $0x16c] sm:$0x1]
  %v1071 = vsel %vm67, %v937, %v1070
  %1072 = vst [vmem:[%s986 + $0x16c] sm:$0x1] %v1071
  %v1073 = vld [vmem:[%s986 + $0x170] sm:$0xf]
  %v1074 = vsel %vm988, %v944, %v1073
  %1075 = vst [vmem:[%s986 + $0x170] sm:$0xf] %v1074
  %v1076 = vld [vmem:[%s986 + $0x174] sm:$0x1]
  %v1077 = vsel %vm67, %v945, %v1076
  %1078 = vst [vmem:[%s986 + $0x174] sm:$0x1] %v1077
  %v1079 = vld [vmem:[%s986 + $0x178] sm:$0xf]
  %v1080 = vsel %vm988, %v952, %v1079
  %1081 = vst [vmem:[%s986 + $0x178] sm:$0xf] %v1080
  %v1082 = vld [vmem:[%s986 + $0x17c] sm:$0x1]
  %v1083 = vsel %vm67, %v953, %v1082
  %1084 = vst [vmem:[%s986 + $0x17c] sm:$0x1] %v1083
  %s1085 = scalar_lea.vmem %s0, 64
  %v1086 = vld [vmem:[%s1085] sm:$0xff]
  %v1087 = vld [vmem:[%s1085 + $0x8] sm:$0xff]
  %v1088 = vld [vmem:[%s1085 + $0x10] sm:$0xff]
  %v1089 = vld [vmem:[%s1085 + $0x18] sm:$0xff]
  %v1090 = vld [vmem:[%s1085 + $0x20] sm:$0xff]
  %v1091 = vld [vmem:[%s1085 + $0x28] sm:$0xff]
  %v1092 = vld [vmem:[%s1085 + $0x30] sm:$0xff]
  %v1093 = vld [vmem:[%s1085 + $0x38] sm:$0xff]
  %v1094 = vld [vmem:[%s1085 + $0x100] sm:$0xff]
  %v1095 = vld [vmem:[%s1085 + $0x108] sm:$0xff]
  %v1096 = vld [vmem:[%s1085 + $0x110] sm:$0xff]
  %v1097 = vld [vmem:[%s1085 + $0x118] sm:$0xff]
  %v1098 = vld [vmem:[%s1085 + $0x120] sm:$0xff]
  %v1099 = vld [vmem:[%s1085 + $0x128] sm:$0xff]
  %v1100 = vld [vmem:[%s1085 + $0x130] sm:$0xff]
  %v1101 = vld [vmem:[%s1085 + $0x138] sm:$0xff]
  %v1102 = vmul.f32 %v1086, %v706
  %v1103 = vmul.f32 %v1087, %v706
  %v1104 = vmul.f32 %v1088, %v706
  %v1105 = vmul.f32 %v1089, %v706
  %v1106 = vmul.f32 %v1090, %v706
  %v1107 = vmul.f32 %v1091, %v706
  %v1108 = vmul.f32 %v1092, %v706
  %v1109 = vmul.f32 %v1093, %v706
  %v1110 = vmul.f32 %v1094, %v706
  %v1111 = vmul.f32 %v1095, %v706
  %v1112 = vmul.f32 %v1096, %v706
  %v1113 = vmul.f32 %v1097, %v706
  %v1114 = vmul.f32 %v1098, %v706
  %v1115 = vmul.f32 %v1099, %v706
  %v1116 = vmul.f32 %v1100, %v706
  %v1117 = vmul.f32 %v1101, %v706
  %v1118 = vadd.f32 %v1102, %v728
  %v1119 = vadd.f32 %v1103, %v728
  %v1120 = vadd.f32 %v1104, %v728
  %v1121 = vadd.f32 %v1105, %v728
  %v1122 = vadd.f32 %v1106, %v728
  %v1123 = vadd.f32 %v1107, %v728
  %v1124 = vadd.f32 %v1108, %v728
  %v1125 = vadd.f32 %v1109, %v728
  %v1126 = vadd.f32 %v1110, %v728
  %v1127 = vadd.f32 %v1111, %v728
  %v1128 = vadd.f32 %v1112, %v728
  %v1129 = vadd.f32 %v1113, %v728
  %v1130 = vadd.f32 %v1114, %v728
  %v1131 = vadd.f32 %v1115, %v728
  %v1132 = vadd.f32 %v1116, %v728
  %v1133 = vadd.f32 %v1117, %v728
  %v1134 = vmax.f32 %v1118, 0.0
  %v1135 = vmax.f32 %v1119, 0.0
  %v1136 = vmax.f32 %v1120, 0.0
  %v1137 = vmax.f32 %v1121, 0.0
  %v1138 = vmax.f32 %v1122, 0.0
  %v1139 = vmax.f32 %v1123, 0.0
  %v1140 = vmax.f32 %v1124, 0.0
  %v1141 = vmax.f32 %v1125, 0.0
  %v1142 = vmax.f32 %v1126, 0.0
  %v1143 = vmax.f32 %v1127, 0.0
  %v1144 = vmax.f32 %v1128, 0.0
  %v1145 = vmax.f32 %v1129, 0.0
  %v1146 = vmax.f32 %v1130, 0.0
  %v1147 = vmax.f32 %v1131, 0.0
  %v1148 = vmax.f32 %v1132, 0.0
  %v1149 = vmax.f32 %v1133, 0.0
  %v1150 = vpack.c.bf16 %v1134, %v1134
  %v1151 = vpack.c.bf16 %v1135, %v1135
  %v1152 = vpack.c.bf16 %v1136, %v1136
  %v1153 = vpack.c.bf16 %v1137, %v1137
  %v1154 = vpack.c.bf16 %v1138, %v1138
  %v1155 = vpack.c.bf16 %v1139, %v1139
  %v1156 = vpack.c.bf16 %v1140, %v1140
  %v1157 = vpack.c.bf16 %v1141, %v1141
  %v1158 = vpack.c.bf16 %v1142, %v1142
  %v1159 = vpack.c.bf16 %v1143, %v1143
  %v1160 = vpack.c.bf16 %v1144, %v1144
  %v1161 = vpack.c.bf16 %v1145, %v1145
  %v1162 = vpack.c.bf16 %v1146, %v1146
  %v1163 = vpack.c.bf16 %v1147, %v1147
  %v1164 = vpack.c.bf16 %v1148, %v1148
  %v1165 = vpack.c.bf16 %v1149, %v1149
  %v1182 = vunpack.c.l.b16 %v1150
  %v1183 = vunpack.c.l.b16 %v1151
  %v1184 = vunpack.c.l.b16 %v1152
  %v1185 = vunpack.c.l.b16 %v1153
  %v1186 = vunpack.c.l.b16 %v1154
  %v1187 = vunpack.c.l.b16 %v1155
  %v1188 = vunpack.c.l.b16 %v1156
  %v1189 = vunpack.c.l.b16 %v1157
  %v1190 = vunpack.c.l.b16 %v1158
  %v1191 = vunpack.c.l.b16 %v1159
  %v1192 = vunpack.c.l.b16 %v1160
  %v1193 = vunpack.c.l.b16 %v1161
  %v1194 = vunpack.c.l.b16 %v1162
  %v1195 = vunpack.c.l.b16 %v1163
  %v1196 = vunpack.c.l.b16 %v1164
  %v1197 = vunpack.c.l.b16 %v1165
  %v1198 = vpack.c.b16 %v1182, %v1182
  %v1199 = vpack.c.b16 %v1183, %v1183
  %v1200 = vpack.c.b16 %v1184, %v1184
  %v1201 = vpack.c.b16 %v1185, %v1185
  %v1202 = vpack.c.b16 %v1186, %v1186
  %v1203 = vpack.c.b16 %v1187, %v1187
  %v1204 = vpack.c.b16 %v1188, %v1188
  %v1205 = vpack.c.b16 %v1189, %v1189
  %v1206 = vpack.c.b16 %v1190, %v1190
  %v1207 = vpack.c.b16 %v1191, %v1191
  %v1208 = vpack.c.b16 %v1192, %v1192
  %v1209 = vpack.c.b16 %v1193, %v1193
  %v1210 = vpack.c.b16 %v1194, %v1194
  %v1211 = vpack.c.b16 %v1195, %v1195
  %v1212 = vpack.c.b16 %v1196, %v1196
  %v1213 = vpack.c.b16 %v1197, %v1197
  %v1215 = vshrl.u32 %v1198, 16
  %v1217 = vrot.slane %v1215, 7
  %v1218 = vshll.u32 %v1198, 16
  %v1220 = vor.u32 %v1217, %v1218
  %v1221 = vrot.slane %v1217, 4
  %v1223 = vshrl.u32 %v1199, 16
  %v1225 = vrot.slane %v1223, 7
  %v1226 = vshll.u32 %v1199, 16
  %v1228 = vor.u32 %v1225, %v1226
  %v1229 = vrot.slane %v1225, 4
  %v1231 = vshrl.u32 %v1200, 16
  %v1233 = vrot.slane %v1231, 7
  %v1234 = vshll.u32 %v1200, 16
  %v1236 = vor.u32 %v1233, %v1234
  %v1237 = vrot.slane %v1233, 4
  %v1239 = vshrl.u32 %v1201, 16
  %v1241 = vrot.slane %v1239, 7
  %v1242 = vshll.u32 %v1201, 16
  %v1244 = vor.u32 %v1241, %v1242
  %v1245 = vrot.slane %v1241, 4
  %v1247 = vshrl.u32 %v1202, 16
  %v1249 = vrot.slane %v1247, 7
  %v1250 = vshll.u32 %v1202, 16
  %v1252 = vor.u32 %v1249, %v1250
  %v1253 = vrot.slane %v1249, 4
  %v1255 = vshrl.u32 %v1203, 16
  %v1257 = vrot.slane %v1255, 7
  %v1258 = vshll.u32 %v1203, 16
  %v1260 = vor.u32 %v1257, %v1258
  %v1261 = vrot.slane %v1257, 4
  %v1263 = vshrl.u32 %v1204, 16
  %v1265 = vrot.slane %v1263, 7
  %v1266 = vshll.u32 %v1204, 16
  %v1268 = vor.u32 %v1265, %v1266
  %v1269 = vrot.slane %v1265, 4
  %v1271 = vshrl.u32 %v1205, 16
  %v1273 = vrot.slane %v1271, 7
  %v1274 = vshll.u32 %v1205, 16
  %v1276 = vor.u32 %v1273, %v1274
  %v1277 = vrot.slane %v1273, 4
  %v1279 = vshrl.u32 %v1206, 16
  %v1281 = vrot.slane %v1279, 7
  %v1282 = vshll.u32 %v1206, 16
  %v1284 = vor.u32 %v1281, %v1282
  %v1285 = vrot.slane %v1281, 4
  %v1287 = vshrl.u32 %v1207, 16
  %v1289 = vrot.slane %v1287, 7
  %v1290 = vshll.u32 %v1207, 16
  %v1292 = vor.u32 %v1289, %v1290
  %v1293 = vrot.slane %v1289, 4
  %v1295 = vshrl.u32 %v1208, 16
  %v1297 = vrot.slane %v1295, 7
  %v1298 = vshll.u32 %v1208, 16
  %v1300 = vor.u32 %v1297, %v1298
  %v1301 = vrot.slane %v1297, 4
  %v1303 = vshrl.u32 %v1209, 16
  %v1305 = vrot.slane %v1303, 7
  %v1306 = vshll.u32 %v1209, 16
  %v1308 = vor.u32 %v1305, %v1306
  %v1309 = vrot.slane %v1305, 4
  %v1311 = vshrl.u32 %v1210, 16
  %v1313 = vrot.slane %v1311, 7
  %v1314 = vshll.u32 %v1210, 16
  %v1316 = vor.u32 %v1313, %v1314
  %v1317 = vrot.slane %v1313, 4
  %v1319 = vshrl.u32 %v1211, 16
  %v1321 = vrot.slane %v1319, 7
  %v1322 = vshll.u32 %v1211, 16
  %v1324 = vor.u32 %v1321, %v1322
  %v1325 = vrot.slane %v1321, 4
  %v1327 = vshrl.u32 %v1212, 16
  %v1329 = vrot.slane %v1327, 7
  %v1330 = vshll.u32 %v1212, 16
  %v1332 = vor.u32 %v1329, %v1330
  %v1333 = vrot.slane %v1329, 4
  %v1335 = vshrl.u32 %v1213, 16
  %v1337 = vrot.slane %v1335, 7
  %v1338 = vshll.u32 %v1213, 16
  %v1340 = vor.u32 %v1337, %v1338
  %v1341 = vrot.slane %v1337, 4
  %s1374 = scalar_lea.vmem [#allocation2], 88
  %v1375 = vld [vmem:[%s1374] sm:$0xf]
  %v1376 = vsel %vm988, %v1220, %v1375
  %1377 = vst [vmem:[%s1374] sm:$0xf] %v1376
  %v1378 = vld [vmem:[%s1374 + $0x4] sm:$0x1]
  %v1379 = vsel %vm67, %v1221, %v1378
  %1380 = vst [vmem:[%s1374 + $0x4] sm:$0x1] %v1379
  %v1381 = vld [vmem:[%s1374 + $0x8] sm:$0xf]
  %v1382 = vsel %vm988, %v1228, %v1381
  %1383 = vst [vmem:[%s1374 + $0x8] sm:$0xf] %v1382
  %v1384 = vld [vmem:[%s1374 + $0xc] sm:$0x1]
  %v1385 = vsel %vm67, %v1229, %v1384
  %1386 = vst [vmem:[%s1374 + $0xc] sm:$0x1] %v1385
  %v1387 = vld [vmem:[%s1374 + $0x10] sm:$0xf]
  %v1388 = vsel %vm988, %v1236, %v1387
  %1389 = vst [vmem:[%s1374 + $0x10] sm:$0xf] %v1388
  %v1390 = vld [vmem:[%s1374 + $0x14] sm:$0x1]
  %v1391 = vsel %vm67, %v1237, %v1390
  %1392 = vst [vmem:[%s1374 + $0x14] sm:$0x1] %v1391
  %v1393 = vld [vmem:[%s1374 + $0x18] sm:$0xf]
  %v1394 = vsel %vm988, %v1244, %v1393
  %1395 = vst [vmem:[%s1374 + $0x18] sm:$0xf] %v1394
  %v1396 = vld [vmem:[%s1374 + $0x1c] sm:$0x1]
  %v1397 = vsel %vm67, %v1245, %v1396
  %1398 = vst [vmem:[%s1374 + $0x1c] sm:$0x1] %v1397
  %v1399 = vld [vmem:[%s1374 + $0x20] sm:$0xf]
  %v1400 = vsel %vm988, %v1252, %v1399
  %1401 = vst [vmem:[%s1374 + $0x20] sm:$0xf] %v1400
  %v1402 = vld [vmem:[%s1374 + $0x24] sm:$0x1]
  %v1403 = vsel %vm67, %v1253, %v1402
  %1404 = vst [vmem:[%s1374 + $0x24] sm:$0x1] %v1403
  %v1405 = vld [vmem:[%s1374 + $0x28] sm:$0xf]
  %v1406 = vsel %vm988, %v1260, %v1405
  %1407 = vst [vmem:[%s1374 + $0x28] sm:$0xf] %v1406
  %v1408 = vld [vmem:[%s1374 + $0x2c] sm:$0x1]
  %v1409 = vsel %vm67, %v1261, %v1408
  %1410 = vst [vmem:[%s1374 + $0x2c] sm:$0x1] %v1409
  %v1411 = vld [vmem:[%s1374 + $0x30] sm:$0xf]
  %v1412 = vsel %vm988, %v1268, %v1411
  %1413 = vst [vmem:[%s1374 + $0x30] sm:$0xf] %v1412
  %v1414 = vld [vmem:[%s1374 + $0x34] sm:$0x1]
  %v1415 = vsel %vm67, %v1269, %v1414
  %1416 = vst [vmem:[%s1374 + $0x34] sm:$0x1] %v1415
  %v1417 = vld [vmem:[%s1374 + $0x38] sm:$0xf]
  %v1418 = vsel %vm988, %v1276, %v1417
  %1419 = vst [vmem:[%s1374 + $0x38] sm:$0xf] %v1418
  %v1420 = vld [vmem:[%s1374 + $0x3c] sm:$0x1]
  %v1421 = vsel %vm67, %v1277, %v1420
  %1422 = vst [vmem:[%s1374 + $0x3c] sm:$0x1] %v1421
  %v1423 = vld [vmem:[%s1374 + $0x140] sm:$0xf]
  %v1424 = vsel %vm988, %v1284, %v1423
  %1425 = vst [vmem:[%s1374 + $0x140] sm:$0xf] %v1424
  %v1426 = vld [vmem:[%s1374 + $0x144] sm:$0x1]
  %v1427 = vsel %vm67, %v1285, %v1426
  %1428 = vst [vmem:[%s1374 + $0x144] sm:$0x1] %v1427
  %v1429 = vld [vmem:[%s1374 + $0x148] sm:$0xf]
  %v1430 = vsel %vm988, %v1292, %v1429
  %1431 = vst [vmem:[%s1374 + $0x148] sm:$0xf] %v1430
  %v1432 = vld [vmem:[%s1374 + $0x14c] sm:$0x1]
  %v1433 = vsel %vm67, %v1293, %v1432
  %1434 = vst [vmem:[%s1374 + $0x14c] sm:$0x1] %v1433
  %v1435 = vld [vmem:[%s1374 + $0x150] sm:$0xf]
  %v1436 = vsel %vm988, %v1300, %v1435
  %1437 = vst [vmem:[%s1374 + $0x150] sm:$0xf] %v1436
  %v1438 = vld [vmem:[%s1374 + $0x154] sm:$0x1]
  %v1439 = vsel %vm67, %v1301, %v1438
  %1440 = vst [vmem:[%s1374 + $0x154] sm:$0x1] %v1439
  %v1441 = vld [vmem:[%s1374 + $0x158] sm:$0xf]
  %v1442 = vsel %vm988, %v1308, %v1441
  %1443 = vst [vmem:[%s1374 + $0x158] sm:$0xf] %v1442
  %v1444 = vld [vmem:[%s1374 + $0x15c] sm:$0x1]
  %v1445 = vsel %vm67, %v1309, %v1444
  %1446 = vst [vmem:[%s1374 + $0x15c] sm:$0x1] %v1445
  %v1447 = vld [vmem:[%s1374 + $0x160] sm:$0xf]
  %v1448 = vsel %vm988, %v1316, %v1447
  %1449 = vst [vmem:[%s1374 + $0x160] sm:$0xf] %v1448
  %v1450 = vld [vmem:[%s1374 + $0x164] sm:$0x1]
  %v1451 = vsel %vm67, %v1317, %v1450
  %1452 = vst [vmem:[%s1374 + $0x164] sm:$0x1] %v1451
  %v1453 = vld [vmem:[%s1374 + $0x168] sm:$0xf]
  %v1454 = vsel %vm988, %v1324, %v1453
  %1455 = vst [vmem:[%s1374 + $0x168] sm:$0xf] %v1454
  %v1456 = vld [vmem:[%s1374 + $0x16c] sm:$0x1]
  %v1457 = vsel %vm67, %v1325, %v1456
  %1458 = vst [vmem:[%s1374 + $0x16c] sm:$0x1] %v1457
  %v1459 = vld [vmem:[%s1374 + $0x170] sm:$0xf]
  %v1460 = vsel %vm988, %v1332, %v1459
  %1461 = vst [vmem:[%s1374 + $0x170] sm:$0xf] %v1460
  %v1462 = vld [vmem:[%s1374 + $0x174] sm:$0x1]
  %v1463 = vsel %vm67, %v1333, %v1462
  %1464 = vst [vmem:[%s1374 + $0x174] sm:$0x1] %v1463
  %v1465 = vld [vmem:[%s1374 + $0x178] sm:$0xf]
  %v1466 = vsel %vm988, %v1340, %v1465
  %1467 = vst [vmem:[%s1374 + $0x178] sm:$0xf] %v1466
  %v1468 = vld [vmem:[%s1374 + $0x17c] sm:$0x1]
  %v1469 = vsel %vm67, %v1341, %v1468
  %1470 = vst [vmem:[%s1374 + $0x17c] sm:$0x1] %v1469
  %s1471 = scalar_lea.vmem %s0, 128
  %v1472 = vld [vmem:[%s1471] sm:$0xff]
  %v1473 = vld [vmem:[%s1471 + $0x8] sm:$0xff]
  %v1474 = vld [vmem:[%s1471 + $0x10] sm:$0xff]
  %v1475 = vld [vmem:[%s1471 + $0x18] sm:$0xff]
  %v1476 = vld [vmem:[%s1471 + $0x20] sm:$0xff]
  %v1477 = vld [vmem:[%s1471 + $0x28] sm:$0xff]
  %v1478 = vld [vmem:[%s1471 + $0x30] sm:$0xff]
  %v1479 = vld [vmem:[%s1471 + $0x38] sm:$0xff]
  %v1480 = vld [vmem:[%s1471 + $0x100] sm:$0xff]
  %v1481 = vld [vmem:[%s1471 + $0x108] sm:$0xff]
  %v1482 = vld [vmem:[%s1471 + $0x110] sm:$0xff]
  %v1483 = vld [vmem:[%s1471 + $0x118] sm:$0xff]
  %v1484 = vld [vmem:[%s1471 + $0x120] sm:$0xff]
  %v1485 = vld [vmem:[%s1471 + $0x128] sm:$0xff]
  %v1486 = vld [vmem:[%s1471 + $0x130] sm:$0xff]
  %v1487 = vld [vmem:[%s1471 + $0x138] sm:$0xff]
  %v1488 = vmul.f32 %v1472, %v706
  %v1489 = vmul.f32 %v1473, %v706
  %v1490 = vmul.f32 %v1474, %v706
  %v1491 = vmul.f32 %v1475, %v706
  %v1492 = vmul.f32 %v1476, %v706
  %v1493 = vmul.f32 %v1477, %v706
  %v1494 = vmul.f32 %v1478, %v706
  %v1495 = vmul.f32 %v1479, %v706
  %v1496 = vmul.f32 %v1480, %v706
  %v1497 = vmul.f32 %v1481, %v706
  %v1498 = vmul.f32 %v1482, %v706
  %v1499 = vmul.f32 %v1483, %v706
  %v1500 = vmul.f32 %v1484, %v706
  %v1501 = vmul.f32 %v1485, %v706
  %v1502 = vmul.f32 %v1486, %v706
  %v1503 = vmul.f32 %v1487, %v706
  %v1504 = vadd.f32 %v1488, %v728
  %v1505 = vadd.f32 %v1489, %v728
  %v1506 = vadd.f32 %v1490, %v728
  %v1507 = vadd.f32 %v1491, %v728
  %v1508 = vadd.f32 %v1492, %v728
  %v1509 = vadd.f32 %v1493, %v728
  %v1510 = vadd.f32 %v1494, %v728
  %v1511 = vadd.f32 %v1495, %v728
  %v1512 = vadd.f32 %v1496, %v728
  %v1513 = vadd.f32 %v1497, %v728
  %v1514 = vadd.f32 %v1498, %v728
  %v1515 = vadd.f32 %v1499, %v728
  %v1516 = vadd.f32 %v1500, %v728
  %v1517 = vadd.f32 %v1501, %v728
  %v1518 = vadd.f32 %v1502, %v728
  %v1519 = vadd.f32 %v1503, %v728
  %v1520 = vmax.f32 %v1504, 0.0
  %v1521 = vmax.f32 %v1505, 0.0
  %v1522 = vmax.f32 %v1506, 0.0
  %v1523 = vmax.f32 %v1507, 0.0
  %v1524 = vmax.f32 %v1508, 0.0
  %v1525 = vmax.f32 %v1509, 0.0
  %v1526 = vmax.f32 %v1510, 0.0
  %v1527 = vmax.f32 %v1511, 0.0
  %v1528 = vmax.f32 %v1512, 0.0
  %v1529 = vmax.f32 %v1513, 0.0
  %v1530 = vmax.f32 %v1514, 0.0
  %v1531 = vmax.f32 %v1515, 0.0
  %v1532 = vmax.f32 %v1516, 0.0
  %v1533 = vmax.f32 %v1517, 0.0
  %v1534 = vmax.f32 %v1518, 0.0
  %v1535 = vmax.f32 %v1519, 0.0
  %v1536 = vpack.c.bf16 %v1520, %v1520
  %v1537 = vpack.c.bf16 %v1521, %v1521
  %v1538 = vpack.c.bf16 %v1522, %v1522
  %v1539 = vpack.c.bf16 %v1523, %v1523
  %v1540 = vpack.c.bf16 %v1524, %v1524
  %v1541 = vpack.c.bf16 %v1525, %v1525
  %v1542 = vpack.c.bf16 %v1526, %v1526
  %v1543 = vpack.c.bf16 %v1527, %v1527
  %v1544 = vpack.c.bf16 %v1528, %v1528
  %v1545 = vpack.c.bf16 %v1529, %v1529
  %v1546 = vpack.c.bf16 %v1530, %v1530
  %v1547 = vpack.c.bf16 %v1531, %v1531
  %v1548 = vpack.c.bf16 %v1532, %v1532
  %v1549 = vpack.c.bf16 %v1533, %v1533
  %v1550 = vpack.c.bf16 %v1534, %v1534
  %v1551 = vpack.c.bf16 %v1535, %v1535
  %v1568 = vunpack.c.l.b16 %v1536
  %v1569 = vunpack.c.l.b16 %v1537
  %v1570 = vunpack.c.l.b16 %v1538
  %v1571 = vunpack.c.l.b16 %v1539
  %v1572 = vunpack.c.l.b16 %v1540
  %v1573 = vunpack.c.l.b16 %v1541
  %v1574 = vunpack.c.l.b16 %v1542
  %v1575 = vunpack.c.l.b16 %v1543
  %v1576 = vunpack.c.l.b16 %v1544
  %v1577 = vunpack.c.l.b16 %v1545
  %v1578 = vunpack.c.l.b16 %v1546
  %v1579 = vunpack.c.l.b16 %v1547
  %v1580 = vunpack.c.l.b16 %v1548
  %v1581 = vunpack.c.l.b16 %v1549
  %v1582 = vunpack.c.l.b16 %v1550
  %v1583 = vunpack.c.l.b16 %v1551
  %v1584 = vpack.c.b16 %v1568, %v1568
  %v1585 = vpack.c.b16 %v1569, %v1569
  %v1586 = vpack.c.b16 %v1570, %v1570
  %v1587 = vpack.c.b16 %v1571, %v1571
  %v1588 = vpack.c.b16 %v1572, %v1572
  %v1589 = vpack.c.b16 %v1573, %v1573
  %v1590 = vpack.c.b16 %v1574, %v1574
  %v1591 = vpack.c.b16 %v1575, %v1575
  %v1592 = vpack.c.b16 %v1576, %v1576
  %v1593 = vpack.c.b16 %v1577, %v1577
  %v1594 = vpack.c.b16 %v1578, %v1578
  %v1595 = vpack.c.b16 %v1579, %v1579
  %v1596 = vpack.c.b16 %v1580, %v1580
  %v1597 = vpack.c.b16 %v1581, %v1581
  %v1598 = vpack.c.b16 %v1582, %v1582
  %v1599 = vpack.c.b16 %v1583, %v1583
  %v1601 = vshrl.u32 %v1584, 16
  %v1603 = vrot.slane %v1601, 7
  %v1604 = vshll.u32 %v1584, 16
  %v1606 = vor.u32 %v1603, %v1604
  %v1607 = vrot.slane %v1603, 4
  %v1609 = vshrl.u32 %v1585, 16
  %v1611 = vrot.slane %v1609, 7
  %v1612 = vshll.u32 %v1585, 16
  %v1614 = vor.u32 %v1611, %v1612
  %v1615 = vrot.slane %v1611, 4
  %v1617 = vshrl.u32 %v1586, 16
  %v1619 = vrot.slane %v1617, 7
  %v1620 = vshll.u32 %v1586, 16
  %v1622 = vor.u32 %v1619, %v1620
  %v1623 = vrot.slane %v1619, 4
  %v1625 = vshrl.u32 %v1587, 16
  %v1627 = vrot.slane %v1625, 7
  %v1628 = vshll.u32 %v1587, 16
  %v1630 = vor.u32 %v1627, %v1628
  %v1631 = vrot.slane %v1627, 4
  %v1633 = vshrl.u32 %v1588, 16
  %v1635 = vrot.slane %v1633, 7
  %v1636 = vshll.u32 %v1588, 16
  %v1638 = vor.u32 %v1635, %v1636
  %v1639 = vrot.slane %v1635, 4
  %v1641 = vshrl.u32 %v1589, 16
  %v1643 = vrot.slane %v1641, 7
  %v1644 = vshll.u32 %v1589, 16
  %v1646 = vor.u32 %v1643, %v1644
  %v1647 = vrot.slane %v1643, 4
  %v1649 = vshrl.u32 %v1590, 16
  %v1651 = vrot.slane %v1649, 7
  %v1652 = vshll.u32 %v1590, 16
  %v1654 = vor.u32 %v1651, %v1652
  %v1655 = vrot.slane %v1651, 4
  %v1657 = vshrl.u32 %v1591, 16
  %v1659 = vrot.slane %v1657, 7
  %v1660 = vshll.u32 %v1591, 16
  %v1662 = vor.u32 %v1659, %v1660
  %v1663 = vrot.slane %v1659, 4
  %v1665 = vshrl.u32 %v1592, 16
  %v1667 = vrot.slane %v1665, 7
  %v1668 = vshll.u32 %v1592, 16
  %v1670 = vor.u32 %v1667, %v1668
  %v1671 = vrot.slane %v1667, 4
  %v1673 = vshrl.u32 %v1593, 16
  %v1675 = vrot.slane %v1673, 7
  %v1676 = vshll.u32 %v1593, 16
  %v1678 = vor.u32 %v1675, %v1676
  %v1679 = vrot.slane %v1675, 4
  %v1681 = vshrl.u32 %v1594, 16
  %v1683 = vrot.slane %v1681, 7
  %v1684 = vshll.u32 %v1594, 16
  %v1686 = vor.u32 %v1683, %v1684
  %v1687 = vrot.slane %v1683, 4
  %v1689 = vshrl.u32 %v1595, 16
  %v1691 = vrot.slane %v1689, 7
  %v1692 = vshll.u32 %v1595, 16
  %v1694 = vor.u32 %v1691, %v1692
  %v1695 = vrot.slane %v1691, 4
  %v1697 = vshrl.u32 %v1596, 16
  %v1699 = vrot.slane %v1697, 7
  %v1700 = vshll.u32 %v1596, 16
  %v1702 = vor.u32 %v1699, %v1700
  %v1703 = vrot.slane %v1699, 4
  %v1705 = vshrl.u32 %v1597, 16
  %v1707 = vrot.slane %v1705, 7
  %v1708 = vshll.u32 %v1597, 16
  %v1710 = vor.u32 %v1707, %v1708
  %v1711 = vrot.slane %v1707, 4
  %v1713 = vshrl.u32 %v1598, 16
  %v1715 = vrot.slane %v1713, 7
  %v1716 = vshll.u32 %v1598, 16
  %v1718 = vor.u32 %v1715, %v1716
  %v1719 = vrot.slane %v1715, 4
  %v1721 = vshrl.u32 %v1599, 16
  %v1723 = vrot.slane %v1721, 7
  %v1724 = vshll.u32 %v1599, 16
  %v1726 = vor.u32 %v1723, %v1724
  %v1727 = vrot.slane %v1723, 4
  %s1760 = scalar_lea.vmem [#allocation2], 168
  %v1761 = vld [vmem:[%s1760] sm:$0xf]
  %v1762 = vsel %vm988, %v1606, %v1761
  %1763 = vst [vmem:[%s1760] sm:$0xf] %v1762
  %v1764 = vld [vmem:[%s1760 + $0x4] sm:$0x1]
  %v1765 = vsel %vm67, %v1607, %v1764
  %1766 = vst [vmem:[%s1760 + $0x4] sm:$0x1] %v1765
  %v1767 = vld [vmem:[%s1760 + $0x8] sm:$0xf]
  %v1768 = vsel %vm988, %v1614, %v1767
  %1769 = vst [vmem:[%s1760 + $0x8] sm:$0xf] %v1768
  %v1770 = vld [vmem:[%s1760 + $0xc] sm:$0x1]
  %v1771 = vsel %vm67, %v1615, %v1770
  %1772 = vst [vmem:[%s1760 + $0xc] sm:$0x1] %v1771
  %v1773 = vld [vmem:[%s1760 + $0x10] sm:$0xf]
  %v1774 = vsel %vm988, %v1622, %v1773
  %1775 = vst [vmem:[%s1760 + $0x10] sm:$0xf] %v1774
  %v1776 = vld [vmem:[%s1760 + $0x14] sm:$0x1]
  %v1777 = vsel %vm67, %v1623, %v1776
  %1778 = vst [vmem:[%s1760 + $0x14] sm:$0x1] %v1777
  %v1779 = vld [vmem:[%s1760 + $0x18] sm:$0xf]
  %v1780 = vsel %vm988, %v1630, %v1779
  %1781 = vst [vmem:[%s1760 + $0x18] sm:$0xf] %v1780
  %v1782 = vld [vmem:[%s1760 + $0x1c] sm:$0x1]
  %v1783 = vsel %vm67, %v1631, %v1782
  %1784 = vst [vmem:[%s1760 + $0x1c] sm:$0x1] %v1783
  %v1785 = vld [vmem:[%s1760 + $0x20] sm:$0xf]
  %v1786 = vsel %vm988, %v1638, %v1785
  %1787 = vst [vmem:[%s1760 + $0x20] sm:$0xf] %v1786
  %v1788 = vld [vmem:[%s1760 + $0x24] sm:$0x1]
  %v1789 = vsel %vm67, %v1639, %v1788
  %1790 = vst [vmem:[%s1760 + $0x24] sm:$0x1] %v1789
  %v1791 = vld [vmem:[%s1760 + $0x28] sm:$0xf]
  %v1792 = vsel %vm988, %v1646, %v1791
  %1793 = vst [vmem:[%s1760 + $0x28] sm:$0xf] %v1792
  %v1794 = vld [vmem:[%s1760 + $0x2c] sm:$0x1]
  %v1795 = vsel %vm67, %v1647, %v1794
  %1796 = vst [vmem:[%s1760 + $0x2c] sm:$0x1] %v1795
  %v1797 = vld [vmem:[%s1760 + $0x30] sm:$0xf]
  %v1798 = vsel %vm988, %v1654, %v1797
  %1799 = vst [vmem:[%s1760 + $0x30] sm:$0xf] %v1798
  %v1800 = vld [vmem:[%s1760 + $0x34] sm:$0x1]
  %v1801 = vsel %vm67, %v1655, %v1800
  %1802 = vst [vmem:[%s1760 + $0x34] sm:$0x1] %v1801
  %v1803 = vld [vmem:[%s1760 + $0x38] sm:$0xf]
  %v1804 = vsel %vm988, %v1662, %v1803
  %1805 = vst [vmem:[%s1760 + $0x38] sm:$0xf] %v1804
  %v1806 = vld [vmem:[%s1760 + $0x3c] sm:$0x1]
  %v1807 = vsel %vm67, %v1663, %v1806
  %1808 = vst [vmem:[%s1760 + $0x3c] sm:$0x1] %v1807
  %v1809 = vld [vmem:[%s1760 + $0x140] sm:$0xf]
  %v1810 = vsel %vm988, %v1670, %v1809
  %1811 = vst [vmem:[%s1760 + $0x140] sm:$0xf] %v1810
  %v1812 = vld [vmem:[%s1760 + $0x144] sm:$0x1]
  %v1813 = vsel %vm67, %v1671, %v1812
  %1814 = vst [vmem:[%s1760 + $0x144] sm:$0x1] %v1813
  %v1815 = vld [vmem:[%s1760 + $0x148] sm:$0xf]
  %v1816 = vsel %vm988, %v1678, %v1815
  %1817 = vst [vmem:[%s1760 + $0x148] sm:$0xf] %v1816
  %v1818 = vld [vmem:[%s1760 + $0x14c] sm:$0x1]
  %v1819 = vsel %vm67, %v1679, %v1818
  %1820 = vst [vmem:[%s1760 + $0x14c] sm:$0x1] %v1819
  %v1821 = vld [vmem:[%s1760 + $0x150] sm:$0xf]
  %v1822 = vsel %vm988, %v1686, %v1821
  %1823 = vst [vmem:[%s1760 + $0x150] sm:$0xf] %v1822
  %v1824 = vld [vmem:[%s1760 + $0x154] sm:$0x1]
  %v1825 = vsel %vm67, %v1687, %v1824
  %1826 = vst [vmem:[%s1760 + $0x154] sm:$0x1] %v1825
  %v1827 = vld [vmem:[%s1760 + $0x158] sm:$0xf]
  %v1828 = vsel %vm988, %v1694, %v1827
  %1829 = vst [vmem:[%s1760 + $0x158] sm:$0xf] %v1828
  %v1830 = vld [vmem:[%s1760 + $0x15c] sm:$0x1]
  %v1831 = vsel %vm67, %v1695, %v1830
  %1832 = vst [vmem:[%s1760 + $0x15c] sm:$0x1] %v1831
  %v1833 = vld [vmem:[%s1760 + $0x160] sm:$0xf]
  %v1834 = vsel %vm988, %v1702, %v1833
  %1835 = vst [vmem:[%s1760 + $0x160] sm:$0xf] %v1834
  %v1836 = vld [vmem:[%s1760 + $0x164] sm:$0x1]
  %v1837 = vsel %vm67, %v1703, %v1836
  %1838 = vst [vmem:[%s1760 + $0x164] sm:$0x1] %v1837
  %v1839 = vld [vmem:[%s1760 + $0x168] sm:$0xf]
  %v1840 = vsel %vm988, %v1710, %v1839
  %1841 = vst [vmem:[%s1760 + $0x168] sm:$0xf] %v1840
  %v1842 = vld [vmem:[%s1760 + $0x16c] sm:$0x1]
  %v1843 = vsel %vm67, %v1711, %v1842
  %1844 = vst [vmem:[%s1760 + $0x16c] sm:$0x1] %v1843
  %v1845 = vld [vmem:[%s1760 + $0x170] sm:$0xf]
  %v1846 = vsel %vm988, %v1718, %v1845
  %1847 = vst [vmem:[%s1760 + $0x170] sm:$0xf] %v1846
  %v1848 = vld [vmem:[%s1760 + $0x174] sm:$0x1]
  %v1849 = vsel %vm67, %v1719, %v1848
  %1850 = vst [vmem:[%s1760 + $0x174] sm:$0x1] %v1849
  %v1851 = vld [vmem:[%s1760 + $0x178] sm:$0xf]
  %v1852 = vsel %vm988, %v1726, %v1851
  %1853 = vst [vmem:[%s1760 + $0x178] sm:$0xf] %v1852
  %v1854 = vld [vmem:[%s1760 + $0x17c] sm:$0x1]
  %v1855 = vsel %vm67, %v1727, %v1854
  %1856 = vst [vmem:[%s1760 + $0x17c] sm:$0x1] %v1855
  %s1857 = scalar_lea.vmem %s0, 192
  %v1858 = vld [vmem:[%s1857] sm:$0xff]
  %v1859 = vld [vmem:[%s1857 + $0x8] sm:$0xff]
  %v1860 = vld [vmem:[%s1857 + $0x10] sm:$0xff]
  %v1861 = vld [vmem:[%s1857 + $0x18] sm:$0xff]
  %v1862 = vld [vmem:[%s1857 + $0x20] sm:$0xff]
  %v1863 = vld [vmem:[%s1857 + $0x28] sm:$0xff]
  %v1864 = vld [vmem:[%s1857 + $0x30] sm:$0xff]
  %v1865 = vld [vmem:[%s1857 + $0x38] sm:$0xff]
  %v1866 = vld [vmem:[%s1857 + $0x100] sm:$0xff]
  %v1867 = vld [vmem:[%s1857 + $0x108] sm:$0xff]
  %v1868 = vld [vmem:[%s1857 + $0x110] sm:$0xff]
  %v1869 = vld [vmem:[%s1857 + $0x118] sm:$0xff]
  %v1870 = vld [vmem:[%s1857 + $0x120] sm:$0xff]
  %v1871 = vld [vmem:[%s1857 + $0x128] sm:$0xff]
  %v1872 = vld [vmem:[%s1857 + $0x130] sm:$0xff]
  %v1873 = vld [vmem:[%s1857 + $0x138] sm:$0xff]
  %v1874 = vmul.f32 %v1858, %v706
  %v1875 = vmul.f32 %v1859, %v706
  %v1876 = vmul.f32 %v1860, %v706
  %v1877 = vmul.f32 %v1861, %v706
  %v1878 = vmul.f32 %v1862, %v706
  %v1879 = vmul.f32 %v1863, %v706
  %v1880 = vmul.f32 %v1864, %v706
  %v1881 = vmul.f32 %v1865, %v706
  %v1882 = vmul.f32 %v1866, %v706
  %v1883 = vmul.f32 %v1867, %v706
  %v1884 = vmul.f32 %v1868, %v706
  %v1885 = vmul.f32 %v1869, %v706
  %v1886 = vmul.f32 %v1870, %v706
  %v1887 = vmul.f32 %v1871, %v706
  %v1888 = vmul.f32 %v1872, %v706
  %v1889 = vmul.f32 %v1873, %v706
  %v1890 = vadd.f32 %v1874, %v728
  %v1891 = vadd.f32 %v1875, %v728
  %v1892 = vadd.f32 %v1876, %v728
  %v1893 = vadd.f32 %v1877, %v728
  %v1894 = vadd.f32 %v1878, %v728
  %v1895 = vadd.f32 %v1879, %v728
  %v1896 = vadd.f32 %v1880, %v728
  %v1897 = vadd.f32 %v1881, %v728
  %v1898 = vadd.f32 %v1882, %v728
  %v1899 = vadd.f32 %v1883, %v728
  %v1900 = vadd.f32 %v1884, %v728
  %v1901 = vadd.f32 %v1885, %v728
  %v1902 = vadd.f32 %v1886, %v728
  %v1903 = vadd.f32 %v1887, %v728
  %v1904 = vadd.f32 %v1888, %v728
  %v1905 = vadd.f32 %v1889, %v728
  %v1906 = vmax.f32 %v1890, 0.0
  %v1907 = vmax.f32 %v1891, 0.0
  %v1908 = vmax.f32 %v1892, 0.0
  %v1909 = vmax.f32 %v1893, 0.0
  %v1910 = vmax.f32 %v1894, 0.0
  %v1911 = vmax.f32 %v1895, 0.0
  %v1912 = vmax.f32 %v1896, 0.0
  %v1913 = vmax.f32 %v1897, 0.0
  %v1914 = vmax.f32 %v1898, 0.0
  %v1915 = vmax.f32 %v1899, 0.0
  %v1916 = vmax.f32 %v1900, 0.0
  %v1917 = vmax.f32 %v1901, 0.0
  %v1918 = vmax.f32 %v1902, 0.0
  %v1919 = vmax.f32 %v1903, 0.0
  %v1920 = vmax.f32 %v1904, 0.0
  %v1921 = vmax.f32 %v1905, 0.0
  %v1922 = vpack.c.bf16 %v1906, %v1906
  %v1923 = vpack.c.bf16 %v1907, %v1907
  %v1924 = vpack.c.bf16 %v1908, %v1908
  %v1925 = vpack.c.bf16 %v1909, %v1909
  %v1926 = vpack.c.bf16 %v1910, %v1910
  %v1927 = vpack.c.bf16 %v1911, %v1911
  %v1928 = vpack.c.bf16 %v1912, %v1912
  %v1929 = vpack.c.bf16 %v1913, %v1913
  %v1930 = vpack.c.bf16 %v1914, %v1914
  %v1931 = vpack.c.bf16 %v1915, %v1915
  %v1932 = vpack.c.bf16 %v1916, %v1916
  %v1933 = vpack.c.bf16 %v1917, %v1917
  %v1934 = vpack.c.bf16 %v1918, %v1918
  %v1935 = vpack.c.bf16 %v1919, %v1919
  %v1936 = vpack.c.bf16 %v1920, %v1920
  %v1937 = vpack.c.bf16 %v1921, %v1921
  %v1954 = vunpack.c.l.b16 %v1922
  %v1955 = vunpack.c.l.b16 %v1923
  %v1956 = vunpack.c.l.b16 %v1924
  %v1957 = vunpack.c.l.b16 %v1925
  %v1958 = vunpack.c.l.b16 %v1926
  %v1959 = vunpack.c.l.b16 %v1927
  %v1960 = vunpack.c.l.b16 %v1928
  %v1961 = vunpack.c.l.b16 %v1929
  %v1962 = vunpack.c.l.b16 %v1930
  %v1963 = vunpack.c.l.b16 %v1931
  %v1964 = vunpack.c.l.b16 %v1932
  %v1965 = vunpack.c.l.b16 %v1933
  %v1966 = vunpack.c.l.b16 %v1934
  %v1967 = vunpack.c.l.b16 %v1935
  %v1968 = vunpack.c.l.b16 %v1936
  %v1969 = vunpack.c.l.b16 %v1937
  %v1970 = vpack.c.b16 %v1954, %v1954
  %v1971 = vpack.c.b16 %v1955, %v1955
  %v1972 = vpack.c.b16 %v1956, %v1956
  %v1973 = vpack.c.b16 %v1957, %v1957
  %v1974 = vpack.c.b16 %v1958, %v1958
  %v1975 = vpack.c.b16 %v1959, %v1959
  %v1976 = vpack.c.b16 %v1960, %v1960
  %v1977 = vpack.c.b16 %v1961, %v1961
  %v1978 = vpack.c.b16 %v1962, %v1962
  %v1979 = vpack.c.b16 %v1963, %v1963
  %v1980 = vpack.c.b16 %v1964, %v1964
  %v1981 = vpack.c.b16 %v1965, %v1965
  %v1982 = vpack.c.b16 %v1966, %v1966
  %v1983 = vpack.c.b16 %v1967, %v1967
  %v1984 = vpack.c.b16 %v1968, %v1968
  %v1985 = vpack.c.b16 %v1969, %v1969
  %v1987 = vshrl.u32 %v1970, 16
  %v1989 = vrot.slane %v1987, 7
  %v1990 = vshll.u32 %v1970, 16
  %v1992 = vor.u32 %v1989, %v1990
  %v1993 = vrot.slane %v1989, 4
  %v1995 = vshrl.u32 %v1971, 16
  %v1997 = vrot.slane %v1995, 7
  %v1998 = vshll.u32 %v1971, 16
  %v2000 = vor.u32 %v1997, %v1998
  %v2001 = vrot.slane %v1997, 4
  %v2003 = vshrl.u32 %v1972, 16
  %v2005 = vrot.slane %v2003, 7
  %v2006 = vshll.u32 %v1972, 16
  %v2008 = vor.u32 %v2005, %v2006
  %v2009 = vrot.slane %v2005, 4
  %v2011 = vshrl.u32 %v1973, 16
  %v2013 = vrot.slane %v2011, 7
  %v2014 = vshll.u32 %v1973, 16
  %v2016 = vor.u32 %v2013, %v2014
  %v2017 = vrot.slane %v2013, 4
  %v2019 = vshrl.u32 %v1974, 16
  %v2021 = vrot.slane %v2019, 7
  %v2022 = vshll.u32 %v1974, 16
  %v2024 = vor.u32 %v2021, %v2022
  %v2025 = vrot.slane %v2021, 4
  %v2027 = vshrl.u32 %v1975, 16
  %v2029 = vrot.slane %v2027, 7
  %v2030 = vshll.u32 %v1975, 16
  %v2032 = vor.u32 %v2029, %v2030
  %v2033 = vrot.slane %v2029, 4
  %v2035 = vshrl.u32 %v1976, 16
  %v2037 = vrot.slane %v2035, 7
  %v2038 = vshll.u32 %v1976, 16
  %v2040 = vor.u32 %v2037, %v2038
  %v2041 = vrot.slane %v2037, 4
  %v2043 = vshrl.u32 %v1977, 16
  %v2045 = vrot.slane %v2043, 7
  %v2046 = vshll.u32 %v1977, 16
  %v2048 = vor.u32 %v2045, %v2046
  %v2049 = vrot.slane %v2045, 4
  %v2051 = vshrl.u32 %v1978, 16
  %v2053 = vrot.slane %v2051, 7
  %v2054 = vshll.u32 %v1978, 16
  %v2056 = vor.u32 %v2053, %v2054
  %v2057 = vrot.slane %v2053, 4
  %v2059 = vshrl.u32 %v1979, 16
  %v2061 = vrot.slane %v2059, 7
  %v2062 = vshll.u32 %v1979, 16
  %v2064 = vor.u32 %v2061, %v2062
  %v2065 = vrot.slane %v2061, 4
  %v2067 = vshrl.u32 %v1980, 16
  %v2069 = vrot.slane %v2067, 7
  %v2070 = vshll.u32 %v1980, 16
  %v2072 = vor.u32 %v2069, %v2070
  %v2073 = vrot.slane %v2069, 4
  %v2075 = vshrl.u32 %v1981, 16
  %v2077 = vrot.slane %v2075, 7
  %v2078 = vshll.u32 %v1981, 16
  %v2080 = vor.u32 %v2077, %v2078
  %v2081 = vrot.slane %v2077, 4
  %v2083 = vshrl.u32 %v1982, 16
  %v2085 = vrot.slane %v2083, 7
  %v2086 = vshll.u32 %v1982, 16
  %v2088 = vor.u32 %v2085, %v2086
  %v2089 = vrot.slane %v2085, 4
  %v2091 = vshrl.u32 %v1983, 16
  %v2093 = vrot.slane %v2091, 7
  %v2094 = vshll.u32 %v1983, 16
  %v2096 = vor.u32 %v2093, %v2094
  %v2097 = vrot.slane %v2093, 4
  %v2099 = vshrl.u32 %v1984, 16
  %v2101 = vrot.slane %v2099, 7
  %v2102 = vshll.u32 %v1984, 16
  %v2104 = vor.u32 %v2101, %v2102
  %v2105 = vrot.slane %v2101, 4
  %v2107 = vshrl.u32 %v1985, 16
  %v2109 = vrot.slane %v2107, 7
  %v2110 = vshll.u32 %v1985, 16
  %v2112 = vor.u32 %v2109, %v2110
  %v2113 = vrot.slane %v2109, 4
  %s2146 = scalar_lea.vmem [#allocation2], 248
  %v2147 = vld [vmem:[%s2146] sm:$0xf]
  %v2148 = vsel %vm988, %v1992, %v2147
  %2149 = vst [vmem:[%s2146] sm:$0xf] %v2148
  %v2150 = vld [vmem:[%s2146 + $0x4] sm:$0x1]
  %v2151 = vsel %vm67, %v1993, %v2150
  %2152 = vst [vmem:[%s2146 + $0x4] sm:$0x1] %v2151
  %v2153 = vld [vmem:[%s2146 + $0x8] sm:$0xf]
  %v2154 = vsel %vm988, %v2000, %v2153
  %2155 = vst [vmem:[%s2146 + $0x8] sm:$0xf] %v2154
  %v2156 = vld [vmem:[%s2146 + $0xc] sm:$0x1]
  %v2157 = vsel %vm67, %v2001, %v2156
  %2158 = vst [vmem:[%s2146 + $0xc] sm:$0x1] %v2157
  %v2159 = vld [vmem:[%s2146 + $0x10] sm:$0xf]
  %v2160 = vsel %vm988, %v2008, %v2159
  %2161 = vst [vmem:[%s2146 + $0x10] sm:$0xf] %v2160
  %v2162 = vld [vmem:[%s2146 + $0x14] sm:$0x1]
  %v2163 = vsel %vm67, %v2009, %v2162
  %2164 = vst [vmem:[%s2146 + $0x14] sm:$0x1] %v2163
  %v2165 = vld [vmem:[%s2146 + $0x18] sm:$0xf]
  %v2166 = vsel %vm988, %v2016, %v2165
  %2167 = vst [vmem:[%s2146 + $0x18] sm:$0xf] %v2166
  %v2168 = vld [vmem:[%s2146 + $0x1c] sm:$0x1]
  %v2169 = vsel %vm67, %v2017, %v2168
  %2170 = vst [vmem:[%s2146 + $0x1c] sm:$0x1] %v2169
  %v2171 = vld [vmem:[%s2146 + $0x20] sm:$0xf]
  %v2172 = vsel %vm988, %v2024, %v2171
  %2173 = vst [vmem:[%s2146 + $0x20] sm:$0xf] %v2172
  %v2174 = vld [vmem:[%s2146 + $0x24] sm:$0x1]
  %v2175 = vsel %vm67, %v2025, %v2174
  %2176 = vst [vmem:[%s2146 + $0x24] sm:$0x1] %v2175
  %v2177 = vld [vmem:[%s2146 + $0x28] sm:$0xf]
  %v2178 = vsel %vm988, %v2032, %v2177
  %2179 = vst [vmem:[%s2146 + $0x28] sm:$0xf] %v2178
  %v2180 = vld [vmem:[%s2146 + $0x2c] sm:$0x1]
  %v2181 = vsel %vm67, %v2033, %v2180
  %2182 = vst [vmem:[%s2146 + $0x2c] sm:$0x1] %v2181
  %v2183 = vld [vmem:[%s2146 + $0x30] sm:$0xf]
  %v2184 = vsel %vm988, %v2040, %v2183
  %2185 = vst [vmem:[%s2146 + $0x30] sm:$0xf] %v2184
  %v2186 = vld [vmem:[%s2146 + $0x34] sm:$0x1]
  %v2187 = vsel %vm67, %v2041, %v2186
  %2188 = vst [vmem:[%s2146 + $0x34] sm:$0x1] %v2187
  %v2189 = vld [vmem:[%s2146 + $0x38] sm:$0xf]
  %v2190 = vsel %vm988, %v2048, %v2189
  %2191 = vst [vmem:[%s2146 + $0x38] sm:$0xf] %v2190
  %v2192 = vld [vmem:[%s2146 + $0x3c] sm:$0x1]
  %v2193 = vsel %vm67, %v2049, %v2192
  %2194 = vst [vmem:[%s2146 + $0x3c] sm:$0x1] %v2193
  %v2195 = vld [vmem:[%s2146 + $0x140] sm:$0xf]
  %v2196 = vsel %vm988, %v2056, %v2195
  %2197 = vst [vmem:[%s2146 + $0x140] sm:$0xf] %v2196
  %v2198 = vld [vmem:[%s2146 + $0x144] sm:$0x1]
  %v2199 = vsel %vm67, %v2057, %v2198
  %2200 = vst [vmem:[%s2146 + $0x144] sm:$0x1] %v2199
  %v2201 = vld [vmem:[%s2146 + $0x148] sm:$0xf]
  %v2202 = vsel %vm988, %v2064, %v2201
  %2203 = vst [vmem:[%s2146 + $0x148] sm:$0xf] %v2202
  %v2204 = vld [vmem:[%s2146 + $0x14c] sm:$0x1]
  %v2205 = vsel %vm67, %v2065, %v2204
  %2206 = vst [vmem:[%s2146 + $0x14c] sm:$0x1] %v2205
  %v2207 = vld [vmem:[%s2146 + $0x150] sm:$0xf]
  %v2208 = vsel %vm988, %v2072, %v2207
  %2209 = vst [vmem:[%s2146 + $0x150] sm:$0xf] %v2208
  %v2210 = vld [vmem:[%s2146 + $0x154] sm:$0x1]
  %v2211 = vsel %vm67, %v2073, %v2210
  %2212 = vst [vmem:[%s2146 + $0x154] sm:$0x1] %v2211
  %v2213 = vld [vmem:[%s2146 + $0x158] sm:$0xf]
  %v2214 = vsel %vm988, %v2080, %v2213
  %2215 = vst [vmem:[%s2146 + $0x158] sm:$0xf] %v2214
  %v2216 = vld [vmem:[%s2146 + $0x15c] sm:$0x1]
  %v2217 = vsel %vm67, %v2081, %v2216
  %2218 = vst [vmem:[%s2146 + $0x15c] sm:$0x1] %v2217
  %v2219 = vld [vmem:[%s2146 + $0x160] sm:$0xf]
  %v2220 = vsel %vm988, %v2088, %v2219
  %2221 = vst [vmem:[%s2146 + $0x160] sm:$0xf] %v2220
  %v2222 = vld [vmem:[%s2146 + $0x164] sm:$0x1]
  %v2223 = vsel %vm67, %v2089, %v2222
  %2224 = vst [vmem:[%s2146 + $0x164] sm:$0x1] %v2223
  %v2225 = vld [vmem:[%s2146 + $0x168] sm:$0xf]
  %v2226 = vsel %vm988, %v2096, %v2225
  %2227 = vst [vmem:[%s2146 + $0x168] sm:$0xf] %v2226
  %v2228 = vld [vmem:[%s2146 + $0x16c] sm:$0x1]
  %v2229 = vsel %vm67, %v2097, %v2228
  %2230 = vst [vmem:[%s2146 + $0x16c] sm:$0x1] %v2229
  %v2231 = vld [vmem:[%s2146 + $0x170] sm:$0xf]
  %v2232 = vsel %vm988, %v2104, %v2231
  %2233 = vst [vmem:[%s2146 + $0x170] sm:$0xf] %v2232
  %v2234 = vld [vmem:[%s2146 + $0x174] sm:$0x1]
  %v2235 = vsel %vm67, %v2105, %v2234
  %2236 = vst [vmem:[%s2146 + $0x174] sm:$0x1] %v2235
  %v2237 = vld [vmem:[%s2146 + $0x178] sm:$0xf]
  %v2238 = vsel %vm988, %v2112, %v2237
  %2239 = vst [vmem:[%s2146 + $0x178] sm:$0xf] %v2238
  %v2240 = vld [vmem:[%s2146 + $0x17c] sm:$0x1]
  %v2241 = vsel %vm67, %v2113, %v2240
  %2242 = vst [vmem:[%s2146 + $0x17c] sm:$0x1] %v2241
  %v2243 = vld [vmem:[%s986] sm:$0xf]
  %v2244 = vld [vmem:[%s986 + $0x4] sm:$0x1]
  %v2245 = vld [vmem:[%s986 + $0x8] sm:$0xf]
  %v2246 = vld [vmem:[%s986 + $0xc] sm:$0x1]
  %v2247 = vld [vmem:[%s986 + $0x10] sm:$0xf]
  %v2248 = vld [vmem:[%s986 + $0x14] sm:$0x1]
  %v2249 = vld [vmem:[%s986 + $0x18] sm:$0xf]
  %v2250 = vld [vmem:[%s986 + $0x1c] sm:$0x1]
  %v2251 = vld [vmem:[%s986 + $0x20] sm:$0xf]
  %v2252 = vld [vmem:[%s986 + $0x24] sm:$0x1]
  %v2253 = vld [vmem:[%s986 + $0x28] sm:$0xf]
  %v2254 = vld [vmem:[%s986 + $0x2c] sm:$0x1]
  %v2255 = vld [vmem:[%s986 + $0x30] sm:$0xf]
  %v2256 = vld [vmem:[%s986 + $0x34] sm:$0x1]
  %v2257 = vld [vmem:[%s986 + $0x38] sm:$0xf]
  %v2258 = vld [vmem:[%s986 + $0x3c] sm:$0x1]
  %v2259 = vld [vmem:[%s986 + $0x140] sm:$0xf]
  %v2260 = vld [vmem:[%s986 + $0x144] sm:$0x1]
  %v2261 = vld [vmem:[%s986 + $0x148] sm:$0xf]
  %v2262 = vld [vmem:[%s986 + $0x14c] sm:$0x1]
  %v2263 = vld [vmem:[%s986 + $0x150] sm:$0xf]
  %v2264 = vld [vmem:[%s986 + $0x154] sm:$0x1]
  %v2265 = vld [vmem:[%s986 + $0x158] sm:$0xf]
  %v2266 = vld [vmem:[%s986 + $0x15c] sm:$0x1]
  %v2267 = vld [vmem:[%s986 + $0x160] sm:$0xf]
  %v2268 = vld [vmem:[%s986 + $0x164] sm:$0x1]
  %v2269 = vld [vmem:[%s986 + $0x168] sm:$0xf]
  %v2270 = vld [vmem:[%s986 + $0x16c] sm:$0x1]
  %v2271 = vld [vmem:[%s986 + $0x170] sm:$0xf]
  %v2272 = vld [vmem:[%s986 + $0x174] sm:$0x1]
  %v2273 = vld [vmem:[%s986 + $0x178] sm:$0xf]
  %v2274 = vld [vmem:[%s986 + $0x17c] sm:$0x1]
  %vm2275 = vsmask.f32 3328
  %vm2276 = vsmask.f32 7440
  %vm2277 = vmor %vm2275, %vm2276
  %v2279 = vshrl.u32 %v2243, 16
  %v2281 = vrot.slane %v2279, 4
  %v2282 = vshll.u32 %v2243, 16
  %v2284 = vrot.slane %v2282, 5
  %v2285 = vor.u32 %v2281, %v2284
  %v2286 = vrot.slane %v2285, 4
  %v2288 = vshll.u32 %v2244, 16
  %v2290 = vrot.slane %v2288, 5
  %v2291 = vsel %vm2277, %v2286, %v2290
  %v2293 = vshrl.u32 %v2245, 16
  %v2295 = vrot.slane %v2293, 4
  %v2296 = vshll.u32 %v2245, 16
  %v2298 = vrot.slane %v2296, 5
  %v2299 = vor.u32 %v2295, %v2298
  %v2300 = vrot.slane %v2299, 4
  %v2302 = vshll.u32 %v2246, 16
  %v2304 = vrot.slane %v2302, 5
  %v2305 = vsel %vm2277, %v2300, %v2304
  %v2307 = vshrl.u32 %v2247, 16
  %v2309 = vrot.slane %v2307, 4
  %v2310 = vshll.u32 %v2247, 16
  %v2312 = vrot.slane %v2310, 5
  %v2313 = vor.u32 %v2309, %v2312
  %v2314 = vrot.slane %v2313, 4
  %v2316 = vshll.u32 %v2248, 16
  %v2318 = vrot.slane %v2316, 5
  %v2319 = vsel %vm2277, %v2314, %v2318
  %v2321 = vshrl.u32 %v2249, 16
  %v2323 = vrot.slane %v2321, 4
  %v2324 = vshll.u32 %v2249, 16
  %v2326 = vrot.slane %v2324, 5
  %v2327 = vor.u32 %v2323, %v2326
  %v2328 = vrot.slane %v2327, 4
  %v2330 = vshll.u32 %v2250, 16
  %v2332 = vrot.slane %v2330, 5
  %v2333 = vsel %vm2277, %v2328, %v2332
  %v2335 = vshrl.u32 %v2251, 16
  %v2337 = vrot.slane %v2335, 4
  %v2338 = vshll.u32 %v2251, 16
  %v2340 = vrot.slane %v2338, 5
  %v2341 = vor.u32 %v2337, %v2340
  %v2342 = vrot.slane %v2341, 4
  %v2344 = vshll.u32 %v2252, 16
  %v2346 = vrot.slane %v2344, 5
  %v2347 = vsel %vm2277, %v2342, %v2346
  %v2349 = vshrl.u32 %v2253, 16
  %v2351 = vrot.slane %v2349, 4
  %v2352 = vshll.u32 %v2253, 16
  %v2354 = vrot.slane %v2352, 5
  %v2355 = vor.u32 %v2351, %v2354
  %v2356 = vrot.slane %v2355, 4
  %v2358 = vshll.u32 %v2254, 16
  %v2360 = vrot.slane %v2358, 5
  %v2361 = vsel %vm2277, %v2356, %v2360
  %v2363 = vshrl.u32 %v2255, 16
  %v2365 = vrot.slane %v2363, 4
  %v2366 = vshll.u32 %v2255, 16
  %v2368 = vrot.slane %v2366, 5
  %v2369 = vor.u32 %v2365, %v2368
  %v2370 = vrot.slane %v2369, 4
  %v2372 = vshll.u32 %v2256, 16
  %v2374 = vrot.slane %v2372, 5
  %v2375 = vsel %vm2277, %v2370, %v2374
  %v2377 = vshrl.u32 %v2257, 16
  %v2379 = vrot.slane %v2377, 4
  %v2380 = vshll.u32 %v2257, 16
  %v2382 = vrot.slane %v2380, 5
  %v2383 = vor.u32 %v2379, %v2382
  %v2384 = vrot.slane %v2383, 4
  %v2386 = vshll.u32 %v2258, 16
  %v2388 = vrot.slane %v2386, 5
  %v2389 = vsel %vm2277, %v2384, %v2388
  %v2391 = vshrl.u32 %v2259, 16
  %v2393 = vrot.slane %v2391, 4
  %v2394 = vshll.u32 %v2259, 16
  %v2396 = vrot.slane %v2394, 5
  %v2397 = vor.u32 %v2393, %v2396
  %v2398 = vrot.slane %v2397, 4
  %v2400 = vshll.u32 %v2260, 16
  %v2402 = vrot.slane %v2400, 5
  %v2403 = vsel %vm2277, %v2398, %v2402
  %v2405 = vshrl.u32 %v2261, 16
  %v2407 = vrot.slane %v2405, 4
  %v2408 = vshll.u32 %v2261, 16
  %v2410 = vrot.slane %v2408, 5
  %v2411 = vor.u32 %v2407, %v2410
  %v2412 = vrot.slane %v2411, 4
  %v2414 = vshll.u32 %v2262, 16
  %v2416 = vrot.slane %v2414, 5
  %v2417 = vsel %vm2277, %v2412, %v2416
  %v2419 = vshrl.u32 %v2263, 16
  %v2421 = vrot.slane %v2419, 4
  %v2422 = vshll.u32 %v2263, 16
  %v2424 = vrot.slane %v2422, 5
  %v2425 = vor.u32 %v2421, %v2424
  %v2426 = vrot.slane %v2425, 4
  %v2428 = vshll.u32 %v2264, 16
  %v2430 = vrot.slane %v2428, 5
  %v2431 = vsel %vm2277, %v2426, %v2430
  %v2433 = vshrl.u32 %v2265, 16
  %v2435 = vrot.slane %v2433, 4
  %v2436 = vshll.u32 %v2265, 16
  %v2438 = vrot.slane %v2436, 5
  %v2439 = vor.u32 %v2435, %v2438
  %v2440 = vrot.slane %v2439, 4
  %v2442 = vshll.u32 %v2266, 16
  %v2444 = vrot.slane %v2442, 5
  %v2445 = vsel %vm2277, %v2440, %v2444
  %v2447 = vshrl.u32 %v2267, 16
  %v2449 = vrot.slane %v2447, 4
  %v2450 = vshll.u32 %v2267, 16
  %v2452 = vrot.slane %v2450, 5
  %v2453 = vor.u32 %v2449, %v2452
  %v2454 = vrot.slane %v2453, 4
  %v2456 = vshll.u32 %v2268, 16
  %v2458 = vrot.slane %v2456, 5
  %v2459 = vsel %vm2277, %v2454, %v2458
  %v2461 = vshrl.u32 %v2269, 16
  %v2463 = vrot.slane %v2461, 4
  %v2464 = vshll.u32 %v2269, 16
  %v2466 = vrot.slane %v2464, 5
  %v2467 = vor.u32 %v2463, %v2466
  %v2468 = vrot.slane %v2467, 4
  %v2470 = vshll.u32 %v2270, 16
  %v2472 = vrot.slane %v2470, 5
  %v2473 = vsel %vm2277, %v2468, %v2472
  %v2475 = vshrl.u32 %v2271, 16
  %v2477 = vrot.slane %v2475, 4
  %v2478 = vshll.u32 %v2271, 16
  %v2480 = vrot.slane %v2478, 5
  %v2481 = vor.u32 %v2477, %v2480
  %v2482 = vrot.slane %v2481, 4
  %v2484 = vshll.u32 %v2272, 16
  %v2486 = vrot.slane %v2484, 5
  %v2487 = vsel %vm2277, %v2482, %v2486
  %v2489 = vshrl.u32 %v2273, 16
  %v2491 = vrot.slane %v2489, 4
  %v2492 = vshll.u32 %v2273, 16
  %v2494 = vrot.slane %v2492, 5
  %v2495 = vor.u32 %v2491, %v2494
  %v2496 = vrot.slane %v2495, 4
  %v2498 = vshll.u32 %v2274, 16
  %v2500 = vrot.slane %v2498, 5
  %v2501 = vsel %vm2277, %v2496, %v2500
  %v2502 = vld [vmem:[%s7] sm:$0x3]
  %s2503 = scalar_lea.vmem [#allocation2], 240
  %v2504 = vld [vmem:[%s2503] sm:$0xf]
  %v2505 = vld [vmem:[%s2503 + $0x8] sm:$0xf]
  %v2506 = vld [vmem:[%s2503 + $0x10] sm:$0xf]
  %v2507 = vld [vmem:[%s2503 + $0x18] sm:$0xf]
  %v2508 = vld [vmem:[%s2503 + $0x20] sm:$0xf]
  %v2509 = vld [vmem:[%s2503 + $0x28] sm:$0xf]
  %v2510 = vld [vmem:[%s2503 + $0x30] sm:$0xf]
  %v2511 = vld [vmem:[%s2503 + $0x38] sm:$0xf]
  %v2512 = vld [vmem:[%s2503 + $0x140] sm:$0xf]
  %v2513 = vld [vmem:[%s2503 + $0x148] sm:$0xf]
  %v2514 = vld [vmem:[%s2503 + $0x150] sm:$0xf]
  %v2515 = vld [vmem:[%s2503 + $0x158] sm:$0xf]
  %v2516 = vld [vmem:[%s2503 + $0x160] sm:$0xf]
  %v2517 = vld [vmem:[%s2503 + $0x168] sm:$0xf]
  %v2518 = vld [vmem:[%s2503 + $0x170] sm:$0xf]
  %v2519 = vld [vmem:[%s2503 + $0x178] sm:$0xf]
  %2520 = vst.msk [vmem:[#allocation4] sm:$0xf] %vm30, %v2504
  %2521 = vst.msk [vmem:[#allocation4 + $0x4] sm:$0xf] %vm30, %v2505
  %2522 = vst.msk [vmem:[#allocation4 + $0x8] sm:$0xf] %vm30, %v2506
  %2523 = vst.msk [vmem:[#allocation4 + $0xc] sm:$0xf] %vm30, %v2507
  %2524 = vst.msk [vmem:[#allocation4 + $0x10] sm:$0xf] %vm30, %v2508
  %2525 = vst.msk [vmem:[#allocation4 + $0x14] sm:$0xf] %vm30, %v2509
  %2526 = vst.msk [vmem:[#allocation4 + $0x18] sm:$0xf] %vm30, %v2510
  %2527 = vst.msk [vmem:[#allocation4 + $0x1c] sm:$0xf] %vm30, %v2511
  %2528 = vst.msk [vmem:[#allocation4 + $0x20] sm:$0xf] %vm30, %v2512
  %2529 = vst.msk [vmem:[#allocation4 + $0x24] sm:$0xf] %vm30, %v2513
  %2530 = vst.msk [vmem:[#allocation4 + $0x28] sm:$0xf] %vm30, %v2514
  %2531 = vst.msk [vmem:[#allocation4 + $0x2c] sm:$0xf] %vm30, %v2515
  %2532 = vst.msk [vmem:[#allocation4 + $0x30] sm:$0xf] %vm30, %v2516
  %2533 = vst.msk [vmem:[#allocation4 + $0x34] sm:$0xf] %vm30, %v2517
  %2534 = vst.msk [vmem:[#allocation4 + $0x38] sm:$0xf] %vm30, %v2518
  %2535 = vst.msk [vmem:[#allocation4 + $0x3c] sm:$0xf] %vm30, %v2519
  %s2536 = scalar_lea.vmem [#allocation2], 160
  %v2537 = vld [vmem:[%s2536] sm:$0xf]
  %v2538 = vld [vmem:[%s2536 + $0x4] sm:$0x1]
  %v2539 = vld [vmem:[%s2536 + $0x8] sm:$0xf]
  %v2540 = vld [vmem:[%s2536 + $0xc] sm:$0x1]
  %v2541 = vld [vmem:[%s2536 + $0x10] sm:$0xf]
  %v2542 = vld [vmem:[%s2536 + $0x14] sm:$0x1]
  %v2543 = vld [vmem:[%s2536 + $0x18] sm:$0xf]
  %v2544 = vld [vmem:[%s2536 + $0x1c] sm:$0x1]
  %v2545 = vld [vmem:[%s2536 + $0x20] sm:$0xf]
  %v2546 = vld [vmem:[%s2536 + $0x24] sm:$0x1]
  %v2547 = vld [vmem:[%s2536 + $0x28] sm:$0xf]
  %v2548 = vld [vmem:[%s2536 + $0x2c] sm:$0x1]
  %v2549 = vld [vmem:[%s2536 + $0x30] sm:$0xf]
  %v2550 = vld [vmem:[%s2536 + $0x34] sm:$0x1]
  %v2551 = vld [vmem:[%s2536 + $0x38] sm:$0xf]
  %v2552 = vld [vmem:[%s2536 + $0x3c] sm:$0x1]
  %v2553 = vld [vmem:[%s2536 + $0x140] sm:$0xf]
  %v2554 = vld [vmem:[%s2536 + $0x144] sm:$0x1]
  %v2555 = vld [vmem:[%s2536 + $0x148] sm:$0xf]
  %v2556 = vld [vmem:[%s2536 + $0x14c] sm:$0x1]
  %v2557 = vld [vmem:[%s2536 + $0x150] sm:$0xf]
  %v2558 = vld [vmem:[%s2536 + $0x154] sm:$0x1]
  %v2559 = vld [vmem:[%s2536 + $0x158] sm:$0xf]
  %v2560 = vld [vmem:[%s2536 + $0x15c] sm:$0x1]
  %v2561 = vld [vmem:[%s2536 + $0x160] sm:$0xf]
  %v2562 = vld [vmem:[%s2536 + $0x164] sm:$0x1]
  %v2563 = vld [vmem:[%s2536 + $0x168] sm:$0xf]
  %v2564 = vld [vmem:[%s2536 + $0x16c] sm:$0x1]
  %v2565 = vld [vmem:[%s2536 + $0x170] sm:$0xf]
  %v2566 = vld [vmem:[%s2536 + $0x174] sm:$0x1]
  %v2567 = vld [vmem:[%s2536 + $0x178] sm:$0xf]
  %v2568 = vld [vmem:[%s2536 + $0x17c] sm:$0x1]
  %v2570 = vshrl.u32 %v2537, 16
  %v2572 = vrot.slane %v2570, 4
  %v2573 = vshll.u32 %v2537, 16
  %v2575 = vrot.slane %v2573, 5
  %v2576 = vor.u32 %v2572, %v2575
  %v2577 = vrot.slane %v2576, 4
  %v2579 = vshll.u32 %v2538, 16
  %v2581 = vrot.slane %v2579, 5
  %v2582 = vsel %vm2277, %v2577, %v2581
  %v2584 = vshrl.u32 %v2539, 16
  %v2586 = vrot.slane %v2584, 4
  %v2587 = vshll.u32 %v2539, 16
  %v2589 = vrot.slane %v2587, 5
  %v2590 = vor.u32 %v2586, %v2589
  %v2591 = vrot.slane %v2590, 4
  %v2593 = vshll.u32 %v2540, 16
  %v2595 = vrot.slane %v2593, 5
  %v2596 = vsel %vm2277, %v2591, %v2595
  %v2598 = vshrl.u32 %v2541, 16
  %v2600 = vrot.slane %v2598, 4
  %v2601 = vshll.u32 %v2541, 16
  %v2603 = vrot.slane %v2601, 5
  %v2604 = vor.u32 %v2600, %v2603
  %v2605 = vrot.slane %v2604, 4
  %v2607 = vshll.u32 %v2542, 16
  %v2609 = vrot.slane %v2607, 5
  %v2610 = vsel %vm2277, %v2605, %v2609
  %v2612 = vshrl.u32 %v2543, 16
  %v2614 = vrot.slane %v2612, 4
  %v2615 = vshll.u32 %v2543, 16
  %v2617 = vrot.slane %v2615, 5
  %v2618 = vor.u32 %v2614, %v2617
  %v2619 = vrot.slane %v2618, 4
  %v2621 = vshll.u32 %v2544, 16
  %v2623 = vrot.slane %v2621, 5
  %v2624 = vsel %vm2277, %v2619, %v2623
  %v2626 = vshrl.u32 %v2545, 16
  %v2628 = vrot.slane %v2626, 4
  %v2629 = vshll.u32 %v2545, 16
  %v2631 = vrot.slane %v2629, 5
  %v2632 = vor.u32 %v2628, %v2631
  %v2633 = vrot.slane %v2632, 4
  %v2635 = vshll.u32 %v2546, 16
  %v2637 = vrot.slane %v2635, 5
  %v2638 = vsel %vm2277, %v2633, %v2637
  %v2640 = vshrl.u32 %v2547, 16
  %v2642 = vrot.slane %v2640, 4
  %v2643 = vshll.u32 %v2547, 16
  %v2645 = vrot.slane %v2643, 5
  %v2646 = vor.u32 %v2642, %v2645
  %v2647 = vrot.slane %v2646, 4
  %v2649 = vshll.u32 %v2548, 16
  %v2651 = vrot.slane %v2649, 5
  %v2652 = vsel %vm2277, %v2647, %v2651
  %v2654 = vshrl.u32 %v2549, 16
  %v2656 = vrot.slane %v2654, 4
  %v2657 = vshll.u32 %v2549, 16
  %v2659 = vrot.slane %v2657, 5
  %v2660 = vor.u32 %v2656, %v2659
  %v2661 = vrot.slane %v2660, 4
  %v2663 = vshll.u32 %v2550, 16
  %v2665 = vrot.slane %v2663, 5
  %v2666 = vsel %vm2277, %v2661, %v2665
  %v2668 = vshrl.u32 %v2551, 16
  %v2670 = vrot.slane %v2668, 4
  %v2671 = vshll.u32 %v2551, 16
  %v2673 = vrot.slane %v2671, 5
  %v2674 = vor.u32 %v2670, %v2673
  %v2675 = vrot.slane %v2674, 4
  %v2677 = vshll.u32 %v2552, 16
  %v2679 = vrot.slane %v2677, 5
  %v2680 = vsel %vm2277, %v2675, %v2679
  %v2682 = vshrl.u32 %v2553, 16
  %v2684 = vrot.slane %v2682, 4
  %v2685 = vshll.u32 %v2553, 16
  %v2687 = vrot.slane %v2685, 5
  %v2688 = vor.u32 %v2684, %v2687
  %v2689 = vrot.slane %v2688, 4
  %v2691 = vshll.u32 %v2554, 16
  %v2693 = vrot.slane %v2691, 5
  %v2694 = vsel %vm2277, %v2689, %v2693
  %v2696 = vshrl.u32 %v2555, 16
  %v2698 = vrot.slane %v2696, 4
  %v2699 = vshll.u32 %v2555, 16
  %v2701 = vrot.slane %v2699, 5
  %v2702 = vor.u32 %v2698, %v2701
  %v2703 = vrot.slane %v2702, 4
  %v2705 = vshll.u32 %v2556, 16
  %v2707 = vrot.slane %v2705, 5
  %v2708 = vsel %vm2277, %v2703, %v2707
  %v2710 = vshrl.u32 %v2557, 16
  %v2712 = vrot.slane %v2710, 4
  %v2713 = vshll.u32 %v2557, 16
  %v2715 = vrot.slane %v2713, 5
  %v2716 = vor.u32 %v2712, %v2715
  %v2717 = vrot.slane %v2716, 4
  %v2719 = vshll.u32 %v2558, 16
  %v2721 = vrot.slane %v2719, 5
  %v2722 = vsel %vm2277, %v2717, %v2721
  %v2724 = vshrl.u32 %v2559, 16
  %v2726 = vrot.slane %v2724, 4
  %v2727 = vshll.u32 %v2559, 16
  %v2729 = vrot.slane %v2727, 5
  %v2730 = vor.u32 %v2726, %v2729
  %v2731 = vrot.slane %v2730, 4
  %v2733 = vshll.u32 %v2560, 16
  %v2735 = vrot.slane %v2733, 5
  %v2736 = vsel %vm2277, %v2731, %v2735
  %v2738 = vshrl.u32 %v2561, 16
  %v2740 = vrot.slane %v2738, 4
  %v2741 = vshll.u32 %v2561, 16
  %v2743 = vrot.slane %v2741, 5
  %v2744 = vor.u32 %v2740, %v2743
  %v2745 = vrot.slane %v2744, 4
  %v2747 = vshll.u32 %v2562, 16
  %v2749 = vrot.slane %v2747, 5
  %v2750 = vsel %vm2277, %v2745, %v2749
  %v2752 = vshrl.u32 %v2563, 16
  %v2754 = vrot.slane %v2752, 4
  %v2755 = vshll.u32 %v2563, 16
  %v2757 = vrot.slane %v2755, 5
  %v2758 = vor.u32 %v2754, %v2757
  %v2759 = vrot.slane %v2758, 4
  %v2761 = vshll.u32 %v2564, 16
  %v2763 = vrot.slane %v2761, 5
  %v2764 = vsel %vm2277, %v2759, %v2763
  %v2766 = vshrl.u32 %v2565, 16
  %v2768 = vrot.slane %v2766, 4
  %v2769 = vshll.u32 %v2565, 16
  %v2771 = vrot.slane %v2769, 5
  %v2772 = vor.u32 %v2768, %v2771
  %v2773 = vrot.slane %v2772, 4
  %v2775 = vshll.u32 %v2566, 16
  %v2777 = vrot.slane %v2775, 5
  %v2778 = vsel %vm2277, %v2773, %v2777
  %v2780 = vshrl.u32 %v2567, 16
  %v2782 = vrot.slane %v2780, 4
  %v2783 = vshll.u32 %v2567, 16
  %v2785 = vrot.slane %v2783, 5
  %v2786 = vor.u32 %v2782, %v2785
  %v2787 = vrot.slane %v2786, 4
  %v2789 = vshll.u32 %v2568, 16
  %v2791 = vrot.slane %v2789, 5
  %v2792 = vsel %vm2277, %v2787, %v2791
  %2793 = vrot.lane.b32.xlu0 %v2582, 4
  %v2794 = vpop.permute.xlu0 %2793
  %2795 = vrot.lane.b32.xlu0 %v2596, 4
  %v2796 = vpop.permute.xlu0 %2795
  %2797 = vrot.lane.b32.xlu0 %v2610, 4
  %v2798 = vpop.permute.xlu0 %2797
  %2799 = vrot.lane.b32.xlu0 %v2624, 4
  %v2800 = vpop.permute.xlu0 %2799
  %2801 = vrot.lane.b32.xlu0 %v2638, 4
  %v2802 = vpop.permute.xlu0 %2801
  %2803 = vrot.lane.b32.xlu0 %v2652, 4
  %v2804 = vpop.permute.xlu0 %2803
  %2805 = vrot.lane.b32.xlu0 %v2666, 4
  %v2806 = vpop.permute.xlu0 %2805
  %2807 = vrot.lane.b32.xlu0 %v2680, 4
  %v2808 = vpop.permute.xlu0 %2807
  %2809 = vrot.lane.b32.xlu0 %v2694, 4
  %v2810 = vpop.permute.xlu0 %2809
  %2811 = vrot.lane.b32.xlu0 %v2708, 4
  %v2812 = vpop.permute.xlu0 %2811
  %2813 = vrot.lane.b32.xlu0 %v2722, 4
  %v2814 = vpop.permute.xlu0 %2813
  %2815 = vrot.lane.b32.xlu0 %v2736, 4
  %v2816 = vpop.permute.xlu0 %2815
  %2817 = vrot.lane.b32.xlu0 %v2750, 4
  %v2818 = vpop.permute.xlu0 %2817
  %2819 = vrot.lane.b32.xlu0 %v2764, 4
  %v2820 = vpop.permute.xlu0 %2819
  %2821 = vrot.lane.b32.xlu0 %v2778, 4
  %v2822 = vpop.permute.xlu0 %2821
  %2823 = vrot.lane.b32.xlu0 %v2792, 4
  %v2824 = vpop.permute.xlu0 %2823
  %vm2841 = vcmask 60448
  %2842 = vst.msk [vmem:[#allocation4] sm:$0xf] %vm2841, %v2794
  %2843 = vst.msk [vmem:[#allocation4 + $0x4] sm:$0xf] %vm2841, %v2796
  %2844 = vst.msk [vmem:[#allocation4 + $0x8] sm:$0xf] %vm2841, %v2798
  %2845 = vst.msk [vmem:[#allocation4 + $0xc] sm:$0xf] %vm2841, %v2800
  %2846 = vst.msk [vmem:[#allocation4 + $0x10] sm:$0xf] %vm2841, %v2802
  %2847 = vst.msk [vmem:[#allocation4 + $0x14] sm:$0xf] %vm2841, %v2804
  %2848 = vst.msk [vmem:[#allocation4 + $0x18] sm:$0xf] %vm2841, %v2806
  %2849 = vst.msk [vmem:[#allocation4 + $0x1c] sm:$0xf] %vm2841, %v2808
  %2850 = vst.msk [vmem:[#allocation4 + $0x20] sm:$0xf] %vm2841, %v2810
  %2851 = vst.msk [vmem:[#allocation4 + $0x24] sm:$0xf] %vm2841, %v2812
  %2852 = vst.msk [vmem:[#allocation4 + $0x28] sm:$0xf] %vm2841, %v2814
  %2853 = vst.msk [vmem:[#allocation4 + $0x2c] sm:$0xf] %vm2841, %v2816
  %2854 = vst.msk [vmem:[#allocation4 + $0x30] sm:$0xf] %vm2841, %v2818
  %2855 = vst.msk [vmem:[#allocation4 + $0x34] sm:$0xf] %vm2841, %v2820
  %2856 = vst.msk [vmem:[#allocation4 + $0x38] sm:$0xf] %vm2841, %v2822
  %2857 = vst.msk [vmem:[#allocation4 + $0x3c] sm:$0xf] %vm2841, %v2824
  %v2858 = vld [vmem:[%s2503] sm:$0xf]
  %v2859 = vld [vmem:[%s2503 + $0x4] sm:$0x1]
  %v2860 = vld [vmem:[%s2503 + $0x8] sm:$0xf]
  %v2861 = vld [vmem:[%s2503 + $0xc] sm:$0x1]
  %v2862 = vld [vmem:[%s2503 + $0x10] sm:$0xf]
  %v2863 = vld [vmem:[%s2503 + $0x14] sm:$0x1]
  %v2864 = vld [vmem:[%s2503 + $0x18] sm:$0xf]
  %v2865 = vld [vmem:[%s2503 + $0x1c] sm:$0x1]
  %v2866 = vld [vmem:[%s2503 + $0x20] sm:$0xf]
  %v2867 = vld [vmem:[%s2503 + $0x24] sm:$0x1]
  %v2868 = vld [vmem:[%s2503 + $0x28] sm:$0xf]
  %v2869 = vld [vmem:[%s2503 + $0x2c] sm:$0x1]
  %v2870 = vld [vmem:[%s2503 + $0x30] sm:$0xf]
  %v2871 = vld [vmem:[%s2503 + $0x34] sm:$0x1]
  %v2872 = vld [vmem:[%s2503 + $0x38] sm:$0xf]
  %v2873 = vld [vmem:[%s2503 + $0x3c] sm:$0x1]
  %v2874 = vld [vmem:[%s2503 + $0x140] sm:$0xf]
  %v2875 = vld [vmem:[%s2503 + $0x144] sm:$0x1]
  %v2876 = vld [vmem:[%s2503 + $0x148] sm:$0xf]
  %v2877 = vld [vmem:[%s2503 + $0x14c] sm:$0x1]
  %v2878 = vld [vmem:[%s2503 + $0x150] sm:$0xf]
  %v2879 = vld [vmem:[%s2503 + $0x154] sm:$0x1]
  %v2880 = vld [vmem:[%s2503 + $0x158] sm:$0xf]
  %v2881 = vld [vmem:[%s2503 + $0x15c] sm:$0x1]
  %v2882 = vld [vmem:[%s2503 + $0x160] sm:$0xf]
  %v2883 = vld [vmem:[%s2503 + $0x164] sm:$0x1]
  %v2884 = vld [vmem:[%s2503 + $0x168] sm:$0xf]
  %v2885 = vld [vmem:[%s2503 + $0x16c] sm:$0x1]
  %v2886 = vld [vmem:[%s2503 + $0x170] sm:$0xf]
  %v2887 = vld [vmem:[%s2503 + $0x174] sm:$0x1]
  %v2888 = vld [vmem:[%s2503 + $0x178] sm:$0xf]
  %v2889 = vld [vmem:[%s2503 + $0x17c] sm:$0x1]
  %v2891 = vshrl.u32 %v2858, 16
  %v2893 = vrot.slane %v2891, 4
  %v2894 = vshll.u32 %v2858, 16
  %v2896 = vrot.slane %v2894, 5
  %v2897 = vor.u32 %v2893, %v2896
  %v2898 = vrot.slane %v2897, 4
  %v2900 = vshll.u32 %v2859, 16
  %v2902 = vrot.slane %v2900, 5
  %v2903 = vsel %vm2277, %v2898, %v2902
  %v2905 = vshrl.u32 %v2860, 16
  %v2907 = vrot.slane %v2905, 4
  %v2908 = vshll.u32 %v2860, 16
  %v2910 = vrot.slane %v2908, 5
  %v2911 = vor.u32 %v2907, %v2910
  %v2912 = vrot.slane %v2911, 4
  %v2914 = vshll.u32 %v2861, 16
  %v2916 = vrot.slane %v2914, 5
  %v2917 = vsel %vm2277, %v2912, %v2916
  %v2919 = vshrl.u32 %v2862, 16
  %v2921 = vrot.slane %v2919, 4
  %v2922 = vshll.u32 %v2862, 16
  %v2924 = vrot.slane %v2922, 5
  %v2925 = vor.u32 %v2921, %v2924
  %v2926 = vrot.slane %v2925, 4
  %v2928 = vshll.u32 %v2863, 16
  %v2930 = vrot.slane %v2928, 5
  %v2931 = vsel %vm2277, %v2926, %v2930
  %v2933 = vshrl.u32 %v2864, 16
  %v2935 = vrot.slane %v2933, 4
  %v2936 = vshll.u32 %v2864, 16
  %v2938 = vrot.slane %v2936, 5
  %v2939 = vor.u32 %v2935, %v2938
  %v2940 = vrot.slane %v2939, 4
  %v2942 = vshll.u32 %v2865, 16
  %v2944 = vrot.slane %v2942, 5
  %v2945 = vsel %vm2277, %v2940, %v2944
  %v2947 = vshrl.u32 %v2866, 16
  %v2949 = vrot.slane %v2947, 4
  %v2950 = vshll.u32 %v2866, 16
  %v2952 = vrot.slane %v2950, 5
  %v2953 = vor.u32 %v2949, %v2952
  %v2954 = vrot.slane %v2953, 4
  %v2956 = vshll.u32 %v2867, 16
  %v2958 = vrot.slane %v2956, 5
  %v2959 = vsel %vm2277, %v2954, %v2958
  %v2961 = vshrl.u32 %v2868, 16
  %v2963 = vrot.slane %v2961, 4
  %v2964 = vshll.u32 %v2868, 16
  %v2966 = vrot.slane %v2964, 5
  %v2967 = vor.u32 %v2963, %v2966
  %v2968 = vrot.slane %v2967, 4
  %v2970 = vshll.u32 %v2869, 16
  %v2972 = vrot.slane %v2970, 5
  %v2973 = vsel %vm2277, %v2968, %v2972
  %v2975 = vshrl.u32 %v2870, 16
  %v2977 = vrot.slane %v2975, 4
  %v2978 = vshll.u32 %v2870, 16
  %v2980 = vrot.slane %v2978, 5
  %v2981 = vor.u32 %v2977, %v2980
  %v2982 = vrot.slane %v2981, 4
  %v2984 = vshll.u32 %v2871, 16
  %v2986 = vrot.slane %v2984, 5
  %v2987 = vsel %vm2277, %v2982, %v2986
  %v2989 = vshrl.u32 %v2872, 16
  %v2991 = vrot.slane %v2989, 4
  %v2992 = vshll.u32 %v2872, 16
  %v2994 = vrot.slane %v2992, 5
  %v2995 = vor.u32 %v2991, %v2994
  %v2996 = vrot.slane %v2995, 4
  %v2998 = vshll.u32 %v2873, 16
  %v3000 = vrot.slane %v2998, 5
  %v3001 = vsel %vm2277, %v2996, %v3000
  %v3003 = vshrl.u32 %v2874, 16
  %v3005 = vrot.slane %v3003, 4
  %v3006 = vshll.u32 %v2874, 16
  %v3008 = vrot.slane %v3006, 5
  %v3009 = vor.u32 %v3005, %v3008
  %v3010 = vrot.slane %v3009, 4
  %v3012 = vshll.u32 %v2875, 16
  %v3014 = vrot.slane %v3012, 5
  %v3015 = vsel %vm2277, %v3010, %v3014
  %v3017 = vshrl.u32 %v2876, 16
  %v3019 = vrot.slane %v3017, 4
  %v3020 = vshll.u32 %v2876, 16
  %v3022 = vrot.slane %v3020, 5
  %v3023 = vor.u32 %v3019, %v3022
  %v3024 = vrot.slane %v3023, 4
  %v3026 = vshll.u32 %v2877, 16
  %v3028 = vrot.slane %v3026, 5
  %v3029 = vsel %vm2277, %v3024, %v3028
  %v3031 = vshrl.u32 %v2878, 16
  %v3033 = vrot.slane %v3031, 4
  %v3034 = vshll.u32 %v2878, 16
  %v3036 = vrot.slane %v3034, 5
  %v3037 = vor.u32 %v3033, %v3036
  %v3038 = vrot.slane %v3037, 4
  %v3040 = vshll.u32 %v2879, 16
  %v3042 = vrot.slane %v3040, 5
  %v3043 = vsel %vm2277, %v3038, %v3042
  %v3045 = vshrl.u32 %v2880, 16
  %v3047 = vrot.slane %v3045, 4
  %v3048 = vshll.u32 %v2880, 16
  %v3050 = vrot.slane %v3048, 5
  %v3051 = vor.u32 %v3047, %v3050
  %v3052 = vrot.slane %v3051, 4
  %v3054 = vshll.u32 %v2881, 16
  %v3056 = vrot.slane %v3054, 5
  %v3057 = vsel %vm2277, %v3052, %v3056
  %v3059 = vshrl.u32 %v2882, 16
  %v3061 = vrot.slane %v3059, 4
  %v3062 = vshll.u32 %v2882, 16
  %v3064 = vrot.slane %v3062, 5
  %v3065 = vor.u32 %v3061, %v3064
  %v3066 = vrot.slane %v3065, 4
  %v3068 = vshll.u32 %v2883, 16
  %v3070 = vrot.slane %v3068, 5
  %v3071 = vsel %vm2277, %v3066, %v3070
  %v3073 = vshrl.u32 %v2884, 16
  %v3075 = vrot.slane %v3073, 4
  %v3076 = vshll.u32 %v2884, 16
  %v3078 = vrot.slane %v3076, 5
  %v3079 = vor.u32 %v3075, %v3078
  %v3080 = vrot.slane %v3079, 4
  %v3082 = vshll.u32 %v2885, 16
  %v3084 = vrot.slane %v3082, 5
  %v3085 = vsel %vm2277, %v3080, %v3084
  %v3087 = vshrl.u32 %v2886, 16
  %v3089 = vrot.slane %v3087, 4
  %v3090 = vshll.u32 %v2886, 16
  %v3092 = vrot.slane %v3090, 5
  %v3093 = vor.u32 %v3089, %v3092
  %v3094 = vrot.slane %v3093, 4
  %v3096 = vshll.u32 %v2887, 16
  %v3098 = vrot.slane %v3096, 5
  %v3099 = vsel %vm2277, %v3094, %v3098
  %v3101 = vshrl.u32 %v2888, 16
  %v3103 = vrot.slane %v3101, 4
  %v3104 = vshll.u32 %v2888, 16
  %v3106 = vrot.slane %v3104, 5
  %v3107 = vor.u32 %v3103, %v3106
  %v3108 = vrot.slane %v3107, 4
  %v3110 = vshll.u32 %v2889, 16
  %v3112 = vrot.slane %v3110, 5
  %v3113 = vsel %vm2277, %v3108, %v3112
  %3114 = vrot.lane.b32.xlu0 %v2903, 8
  %v3115 = vpop.permute.xlu0 %3114
  %3116 = vrot.lane.b32.xlu0 %v2917, 8
  %v3117 = vpop.permute.xlu0 %3116
  %3118 = vrot.lane.b32.xlu0 %v2931, 8
  %v3119 = vpop.permute.xlu0 %3118
  %3120 = vrot.lane.b32.xlu0 %v2945, 8
  %v3121 = vpop.permute.xlu0 %3120
  %3122 = vrot.lane.b32.xlu0 %v2959, 8
  %v3123 = vpop.permute.xlu0 %3122
  %3124 = vrot.lane.b32.xlu0 %v2973, 8
  %v3125 = vpop.permute.xlu0 %3124
  %3126 = vrot.lane.b32.xlu0 %v2987, 8
  %v3127 = vpop.permute.xlu0 %3126
  %3128 = vrot.lane.b32.xlu0 %v3001, 8
  %v3129 = vpop.permute.xlu0 %3128
  %3130 = vrot.lane.b32.xlu0 %v3015, 8
  %v3131 = vpop.permute.xlu0 %3130
  %3132 = vrot.lane.b32.xlu0 %v3029, 8
  %v3133 = vpop.permute.xlu0 %3132
  %3134 = vrot.lane.b32.xlu0 %v3043, 8
  %v3135 = vpop.permute.xlu0 %3134
  %3136 = vrot.lane.b32.xlu0 %v3057, 8
  %v3137 = vpop.permute.xlu0 %3136
  %3138 = vrot.lane.b32.xlu0 %v3071, 8
  %v3139 = vpop.permute.xlu0 %3138
  %3140 = vrot.lane.b32.xlu0 %v3085, 8
  %v3141 = vpop.permute.xlu0 %3140
  %3142 = vrot.lane.b32.xlu0 %v3099, 8
  %v3143 = vpop.permute.xlu0 %3142
  %3144 = vrot.lane.b32.xlu0 %v3113, 8
  %v3145 = vpop.permute.xlu0 %3144
  %vm3162 = vcmask 93248
  %3163 = vst.msk [vmem:[#allocation4] sm:$0xf] %vm3162, %v3115
  %3164 = vst.msk [vmem:[#allocation4 + $0x4] sm:$0xf] %vm3162, %v3117
  %3165 = vst.msk [vmem:[#allocation4 + $0x8] sm:$0xf] %vm3162, %v3119
  %3166 = vst.msk [vmem:[#allocation4 + $0xc] sm:$0xf] %vm3162, %v3121
  %3167 = vst.msk [vmem:[#allocation4 + $0x10] sm:$0xf] %vm3162, %v3123
  %3168 = vst.msk [vmem:[#allocation4 + $0x14] sm:$0xf] %vm3162, %v3125
  %3169 = vst.msk [vmem:[#allocation4 + $0x18] sm:$0xf] %vm3162, %v3127
  %3170 = vst.msk [vmem:[#allocation4 + $0x1c] sm:$0xf] %vm3162, %v3129
  %3171 = vst.msk [vmem:[#allocation4 + $0x20] sm:$0xf] %vm3162, %v3131
  %3172 = vst.msk [vmem:[#allocation4 + $0x24] sm:$0xf] %vm3162, %v3133
  %3173 = vst.msk [vmem:[#allocation4 + $0x28] sm:$0xf] %vm3162, %v3135
  %3174 = vst.msk [vmem:[#allocation4 + $0x2c] sm:$0xf] %vm3162, %v3137
  %3175 = vst.msk [vmem:[#allocation4 + $0x30] sm:$0xf] %vm3162, %v3139
  %3176 = vst.msk [vmem:[#allocation4 + $0x34] sm:$0xf] %vm3162, %v3141
  %3177 = vst.msk [vmem:[#allocation4 + $0x38] sm:$0xf] %vm3162, %v3143
  %3178 = vst.msk [vmem:[#allocation4 + $0x3c] sm:$0xf] %vm3162, %v3145
  %v3179 = vld [vmem:[%s1374] sm:$0xf]
  %v3180 = vld [vmem:[%s1374 + $0x8] sm:$0xf]
  %v3181 = vld [vmem:[%s1374 + $0x10] sm:$0xf]
  %v3182 = vld [vmem:[%s1374 + $0x18] sm:$0xf]
  %v3183 = vld [vmem:[%s1374 + $0x20] sm:$0xf]
  %v3184 = vld [vmem:[%s1374 + $0x28] sm:$0xf]
  %v3185 = vld [vmem:[%s1374 + $0x30] sm:$0xf]
  %v3186 = vld [vmem:[%s1374 + $0x38] sm:$0xf]
  %v3187 = vld [vmem:[%s1374 + $0x140] sm:$0xf]
  %v3188 = vld [vmem:[%s1374 + $0x148] sm:$0xf]
  %v3189 = vld [vmem:[%s1374 + $0x150] sm:$0xf]
  %v3190 = vld [vmem:[%s1374 + $0x158] sm:$0xf]
  %v3191 = vld [vmem:[%s1374 + $0x160] sm:$0xf]
  %v3192 = vld [vmem:[%s1374 + $0x168] sm:$0xf]
  %v3193 = vld [vmem:[%s1374 + $0x170] sm:$0xf]
  %v3194 = vld [vmem:[%s1374 + $0x178] sm:$0xf]
  %3211 = vrot.lane.b32.xlu0 %v3179, 12
  %v3212 = vpop.permute.xlu0 %3211
  %3213 = vrot.lane.b32.xlu0 %v3180, 12
  %v3214 = vpop.permute.xlu0 %3213
  %3215 = vrot.lane.b32.xlu0 %v3181, 12
  %v3216 = vpop.permute.xlu0 %3215
  %3217 = vrot.lane.b32.xlu0 %v3182, 12
  %v3218 = vpop.permute.xlu0 %3217
  %3219 = vrot.lane.b32.xlu0 %v3183, 12
  %v3220 = vpop.permute.xlu0 %3219
  %3221 = vrot.lane.b32.xlu0 %v3184, 12
  %v3222 = vpop.permute.xlu0 %3221
  %3223 = vrot.lane.b32.xlu0 %v3185, 12
  %v3224 = vpop.permute.xlu0 %3223
  %3225 = vrot.lane.b32.xlu0 %v3186, 12
  %v3226 = vpop.permute.xlu0 %3225
  %3227 = vrot.lane.b32.xlu0 %v3187, 12
  %v3228 = vpop.permute.xlu0 %3227
  %3229 = vrot.lane.b32.xlu0 %v3188, 12
  %v3230 = vpop.permute.xlu0 %3229
  %3231 = vrot.lane.b32.xlu0 %v3189, 12
  %v3232 = vpop.permute.xlu0 %3231
  %3233 = vrot.lane.b32.xlu0 %v3190, 12
  %v3234 = vpop.permute.xlu0 %3233
  %3235 = vrot.lane.b32.xlu0 %v3191, 12
  %v3236 = vpop.permute.xlu0 %3235
  %3237 = vrot.lane.b32.xlu0 %v3192, 12
  %v3238 = vpop.permute.xlu0 %3237
  %3239 = vrot.lane.b32.xlu0 %v3193, 12
  %v3240 = vpop.permute.xlu0 %3239
  %3241 = vrot.lane.b32.xlu0 %v3194, 12
  %v3242 = vpop.permute.xlu0 %3241
  %vm3259 = vcmask 126048
  %3260 = vst.msk [vmem:[#allocation4] sm:$0xf] %vm3259, %v3212
  %3261 = vst.msk [vmem:[#allocation4 + $0x4] sm:$0xf] %vm3259, %v3214
  %3262 = vst.msk [vmem:[#allocation4 + $0x8] sm:$0xf] %vm3259, %v3216
  %3263 = vst.msk [vmem:[#allocation4 + $0xc] sm:$0xf] %vm3259, %v3218
  %3264 = vst.msk [vmem:[#allocation4 + $0x10] sm:$0xf] %vm3259, %v3220
  %3265 = vst.msk [vmem:[#allocation4 + $0x14] sm:$0xf] %vm3259, %v3222
  %3266 = vst.msk [vmem:[#allocation4 + $0x18] sm:$0xf] %vm3259, %v3224
  %3267 = vst.msk [vmem:[#allocation4 + $0x1c] sm:$0xf] %vm3259, %v3226
  %3268 = vst.msk [vmem:[#allocation4 + $0x20] sm:$0xf] %vm3259, %v3228
  %3269 = vst.msk [vmem:[#allocation4 + $0x24] sm:$0xf] %vm3259, %v3230
  %3270 = vst.msk [vmem:[#allocation4 + $0x28] sm:$0xf] %vm3259, %v3232
  %3271 = vst.msk [vmem:[#allocation4 + $0x2c] sm:$0xf] %vm3259, %v3234
  %3272 = vst.msk [vmem:[#allocation4 + $0x30] sm:$0xf] %vm3259, %v3236
  %3273 = vst.msk [vmem:[#allocation4 + $0x34] sm:$0xf] %vm3259, %v3238
  %3274 = vst.msk [vmem:[#allocation4 + $0x38] sm:$0xf] %vm3259, %v3240
  %3275 = vst.msk [vmem:[#allocation4 + $0x3c] sm:$0xf] %vm3259, %v3242
  %v3276 = vld [vmem:[%s986] sm:$0xf]
  %v3277 = vld [vmem:[%s986 + $0x4] sm:$0x1]
  %v3278 = vld [vmem:[%s986 + $0x8] sm:$0xf]
  %v3279 = vld [vmem:[%s986 + $0xc] sm:$0x1]
  %v3280 = vld [vmem:[%s986 + $0x10] sm:$0xf]
  %v3281 = vld [vmem:[%s986 + $0x14] sm:$0x1]
  %v3282 = vld [vmem:[%s986 + $0x18] sm:$0xf]
  %v3283 = vld [vmem:[%s986 + $0x1c] sm:$0x1]
  %v3284 = vld [vmem:[%s986 + $0x20] sm:$0xf]
  %v3285 = vld [vmem:[%s986 + $0x24] sm:$0x1]
  %v3286 = vld [vmem:[%s986 + $0x28] sm:$0xf]
  %v3287 = vld [vmem:[%s986 + $0x2c] sm:$0x1]
  %v3288 = vld [vmem:[%s986 + $0x30] sm:$0xf]
  %v3289 = vld [vmem:[%s986 + $0x34] sm:$0x1]
  %v3290 = vld [vmem:[%s986 + $0x38] sm:$0xf]
  %v3291 = vld [vmem:[%s986 + $0x3c] sm:$0x1]
  %v3292 = vld [vmem:[%s986 + $0x140] sm:$0xf]
  %v3293 = vld [vmem:[%s986 + $0x144] sm:$0x1]
  %v3294 = vld [vmem:[%s986 + $0x148] sm:$0xf]
  %v3295 = vld [vmem:[%s986 + $0x14c] sm:$0x1]
  %v3296 = vld [vmem:[%s986 + $0x150] sm:$0xf]
  %v3297 = vld [vmem:[%s986 + $0x154] sm:$0x1]
  %v3298 = vld [vmem:[%s986 + $0x158] sm:$0xf]
  %v3299 = vld [vmem:[%s986 + $0x15c] sm:$0x1]
  %v3300 = vld [vmem:[%s986 + $0x160] sm:$0xf]
  %v3301 = vld [vmem:[%s986 + $0x164] sm:$0x1]
  %v3302 = vld [vmem:[%s986 + $0x168] sm:$0xf]
  %v3303 = vld [vmem:[%s986 + $0x16c] sm:$0x1]
  %v3304 = vld [vmem:[%s986 + $0x170] sm:$0xf]
  %v3305 = vld [vmem:[%s986 + $0x174] sm:$0x1]
  %v3306 = vld [vmem:[%s986 + $0x178] sm:$0xf]
  %v3307 = vld [vmem:[%s986 + $0x17c] sm:$0x1]
  %v3309 = vshrl.u32 %v3276, 16
  %v3311 = vrot.slane %v3309, 4
  %v3312 = vshll.u32 %v3276, 16
  %v3314 = vrot.slane %v3312, 5
  %v3315 = vor.u32 %v3311, %v3314
  %v3316 = vrot.slane %v3315, 4
  %v3318 = vshll.u32 %v3277, 16
  %v3320 = vrot.slane %v3318, 5
  %v3321 = vsel %vm2277, %v3316, %v3320
  %v3323 = vshrl.u32 %v3278, 16
  %v3325 = vrot.slane %v3323, 4
  %v3326 = vshll.u32 %v3278, 16
  %v3328 = vrot.slane %v3326, 5
  %v3329 = vor.u32 %v3325, %v3328
  %v3330 = vrot.slane %v3329, 4
  %v3332 = vshll.u32 %v3279, 16
  %v3334 = vrot.slane %v3332, 5
  %v3335 = vsel %vm2277, %v3330, %v3334
  %v3337 = vshrl.u32 %v3280, 16
  %v3339 = vrot.slane %v3337, 4
  %v3340 = vshll.u32 %v3280, 16
  %v3342 = vrot.slane %v3340, 5
  %v3343 = vor.u32 %v3339, %v3342
  %v3344 = vrot.slane %v3343, 4
  %v3346 = vshll.u32 %v3281, 16
  %v3348 = vrot.slane %v3346, 5
  %v3349 = vsel %vm2277, %v3344, %v3348
  %v3351 = vshrl.u32 %v3282, 16
  %v3353 = vrot.slane %v3351, 4
  %v3354 = vshll.u32 %v3282, 16
  %v3356 = vrot.slane %v3354, 5
  %v3357 = vor.u32 %v3353, %v3356
  %v3358 = vrot.slane %v3357, 4
  %v3360 = vshll.u32 %v3283, 16
  %v3362 = vrot.slane %v3360, 5
  %v3363 = vsel %vm2277, %v3358, %v3362
  %v3365 = vshrl.u32 %v3284, 16
  %v3367 = vrot.slane %v3365, 4
  %v3368 = vshll.u32 %v3284, 16
  %v3370 = vrot.slane %v3368, 5
  %v3371 = vor.u32 %v3367, %v3370
  %v3372 = vrot.slane %v3371, 4
  %v3374 = vshll.u32 %v3285, 16
  %v3376 = vrot.slane %v3374, 5
  %v3377 = vsel %vm2277, %v3372, %v3376
  %v3379 = vshrl.u32 %v3286, 16
  %v3381 = vrot.slane %v3379, 4
  %v3382 = vshll.u32 %v3286, 16
  %v3384 = vrot.slane %v3382, 5
  %v3385 = vor.u32 %v3381, %v3384
  %v3386 = vrot.slane %v3385, 4
  %v3388 = vshll.u32 %v3287, 16
  %v3390 = vrot.slane %v3388, 5
  %v3391 = vsel %vm2277, %v3386, %v3390
  %v3393 = vshrl.u32 %v3288, 16
  %v3395 = vrot.slane %v3393, 4
  %v3396 = vshll.u32 %v3288, 16
  %v3398 = vrot.slane %v3396, 5
  %v3399 = vor.u32 %v3395, %v3398
  %v3400 = vrot.slane %v3399, 4
  %v3402 = vshll.u32 %v3289, 16
  %v3404 = vrot.slane %v3402, 5
  %v3405 = vsel %vm2277, %v3400, %v3404
  %v3407 = vshrl.u32 %v3290, 16
  %v3409 = vrot.slane %v3407, 4
  %v3410 = vshll.u32 %v3290, 16
  %v3412 = vrot.slane %v3410, 5
  %v3413 = vor.u32 %v3409, %v3412
  %v3414 = vrot.slane %v3413, 4
  %v3416 = vshll.u32 %v3291, 16
  %v3418 = vrot.slane %v3416, 5
  %v3419 = vsel %vm2277, %v3414, %v3418
  %v3421 = vshrl.u32 %v3292, 16
  %v3423 = vrot.slane %v3421, 4
  %v3424 = vshll.u32 %v3292, 16
  %v3426 = vrot.slane %v3424, 5
  %v3427 = vor.u32 %v3423, %v3426
  %v3428 = vrot.slane %v3427, 4
  %v3430 = vshll.u32 %v3293, 16
  %v3432 = vrot.slane %v3430, 5
  %v3433 = vsel %vm2277, %v3428, %v3432
  %v3435 = vshrl.u32 %v3294, 16
  %v3437 = vrot.slane %v3435, 4
  %v3438 = vshll.u32 %v3294, 16
  %v3440 = vrot.slane %v3438, 5
  %v3441 = vor.u32 %v3437, %v3440
  %v3442 = vrot.slane %v3441, 4
  %v3444 = vshll.u32 %v3295, 16
  %v3446 = vrot.slane %v3444, 5
  %v3447 = vsel %vm2277, %v3442, %v3446
  %v3449 = vshrl.u32 %v3296, 16
  %v3451 = vrot.slane %v3449, 4
  %v3452 = vshll.u32 %v3296, 16
  %v3454 = vrot.slane %v3452, 5
  %v3455 = vor.u32 %v3451, %v3454
  %v3456 = vrot.slane %v3455, 4
  %v3458 = vshll.u32 %v3297, 16
  %v3460 = vrot.slane %v3458, 5
  %v3461 = vsel %vm2277, %v3456, %v3460
  %v3463 = vshrl.u32 %v3298, 16
  %v3465 = vrot.slane %v3463, 4
  %v3466 = vshll.u32 %v3298, 16
  %v3468 = vrot.slane %v3466, 5
  %v3469 = vor.u32 %v3465, %v3468
  %v3470 = vrot.slane %v3469, 4
  %v3472 = vshll.u32 %v3299, 16
  %v3474 = vrot.slane %v3472, 5
  %v3475 = vsel %vm2277, %v3470, %v3474
  %v3477 = vshrl.u32 %v3300, 16
  %v3479 = vrot.slane %v3477, 4
  %v3480 = vshll.u32 %v3300, 16
  %v3482 = vrot.slane %v3480, 5
  %v3483 = vor.u32 %v3479, %v3482
  %v3484 = vrot.slane %v3483, 4
  %v3486 = vshll.u32 %v3301, 16
  %v3488 = vrot.slane %v3486, 5
  %v3489 = vsel %vm2277, %v3484, %v3488
  %v3491 = vshrl.u32 %v3302, 16
  %v3493 = vrot.slane %v3491, 4
  %v3494 = vshll.u32 %v3302, 16
  %v3496 = vrot.slane %v3494, 5
  %v3497 = vor.u32 %v3493, %v3496
  %v3498 = vrot.slane %v3497, 4
  %v3500 = vshll.u32 %v3303, 16
  %v3502 = vrot.slane %v3500, 5
  %v3503 = vsel %vm2277, %v3498, %v3502
  %v3505 = vshrl.u32 %v3304, 16
  %v3507 = vrot.slane %v3505, 4
  %v3508 = vshll.u32 %v3304, 16
  %v3510 = vrot.slane %v3508, 5
  %v3511 = vor.u32 %v3507, %v3510
  %v3512 = vrot.slane %v3511, 4
  %v3514 = vshll.u32 %v3305, 16
  %v3516 = vrot.slane %v3514, 5
  %v3517 = vsel %vm2277, %v3512, %v3516
  %v3519 = vshrl.u32 %v3306, 16
  %v3521 = vrot.slane %v3519, 4
  %v3522 = vshll.u32 %v3306, 16
  %v3524 = vrot.slane %v3522, 5
  %v3525 = vor.u32 %v3521, %v3524
  %v3526 = vrot.slane %v3525, 4
  %v3528 = vshll.u32 %v3307, 16
  %v3530 = vrot.slane %v3528, 5
  %v3531 = vsel %vm2277, %v3526, %v3530
  %3532 = vrot.lane.b32.xlu0 %v3321, 16
  %v3533 = vpop.permute.xlu0 %3532
  %3534 = vrot.lane.b32.xlu0 %v3335, 16
  %v3535 = vpop.permute.xlu0 %3534
  %3536 = vrot.lane.b32.xlu0 %v3349, 16
  %v3537 = vpop.permute.xlu0 %3536
  %3538 = vrot.lane.b32.xlu0 %v3363, 16
  %v3539 = vpop.permute.xlu0 %3538
  %3540 = vrot.lane.b32.xlu0 %v3377, 16
  %v3541 = vpop.permute.xlu0 %3540
  %3542 = vrot.lane.b32.xlu0 %v3391, 16
  %v3543 = vpop.permute.xlu0 %3542
  %3544 = vrot.lane.b32.xlu0 %v3405, 16
  %v3545 = vpop.permute.xlu0 %3544
  %3546 = vrot.lane.b32.xlu0 %v3419, 16
  %v3547 = vpop.permute.xlu0 %3546
  %3548 = vrot.lane.b32.xlu0 %v3433, 16
  %v3549 = vpop.permute.xlu0 %3548
  %3550 = vrot.lane.b32.xlu0 %v3447, 16
  %v3551 = vpop.permute.xlu0 %3550
  %3552 = vrot.lane.b32.xlu0 %v3461, 16
  %v3553 = vpop.permute.xlu0 %3552
  %3554 = vrot.lane.b32.xlu0 %v3475, 16
  %v3555 = vpop.permute.xlu0 %3554
  %3556 = vrot.lane.b32.xlu0 %v3489, 16
  %v3557 = vpop.permute.xlu0 %3556
  %3558 = vrot.lane.b32.xlu0 %v3503, 16
  %v3559 = vpop.permute.xlu0 %3558
  %3560 = vrot.lane.b32.xlu0 %v3517, 16
  %v3561 = vpop.permute.xlu0 %3560
  %3562 = vrot.lane.b32.xlu0 %v3531, 16
  %v3563 = vpop.permute.xlu0 %3562
  %vm3580 = vcmask 158848
  %3581 = vst.msk [vmem:[#allocation4] sm:$0xf] %vm3580, %v3533
  %3582 = vst.msk [vmem:[#allocation4 + $0x4] sm:$0xf] %vm3580, %v3535
  %3583 = vst.msk [vmem:[#allocation4 + $0x8] sm:$0xf] %vm3580, %v3537
  %3584 = vst.msk [vmem:[#allocation4 + $0xc] sm:$0xf] %vm3580, %v3539
  %3585 = vst.msk [vmem:[#allocation4 + $0x10] sm:$0xf] %vm3580, %v3541
  %3586 = vst.msk [vmem:[#allocation4 + $0x14] sm:$0xf] %vm3580, %v3543
  %3587 = vst.msk [vmem:[#allocation4 + $0x18] sm:$0xf] %vm3580, %v3545
  %3588 = vst.msk [vmem:[#allocation4 + $0x1c] sm:$0xf] %vm3580, %v3547
  %3589 = vst.msk [vmem:[#allocation4 + $0x20] sm:$0xf] %vm3580, %v3549
  %3590 = vst.msk [vmem:[#allocation4 + $0x24] sm:$0xf] %vm3580, %v3551
  %3591 = vst.msk [vmem:[#allocation4 + $0x28] sm:$0xf] %vm3580, %v3553
  %3592 = vst.msk [vmem:[#allocation4 + $0x2c] sm:$0xf] %vm3580, %v3555
  %3593 = vst.msk [vmem:[#allocation4 + $0x30] sm:$0xf] %vm3580, %v3557
  %3594 = vst.msk [vmem:[#allocation4 + $0x34] sm:$0xf] %vm3580, %v3559
  %3595 = vst.msk [vmem:[#allocation4 + $0x38] sm:$0xf] %vm3580, %v3561
  %3596 = vst.msk [vmem:[#allocation4 + $0x3c] sm:$0xf] %vm3580, %v3563
  %v3597 = vld [vmem:[%s1374] sm:$0xf]
  %v3598 = vld [vmem:[%s1374 + $0x4] sm:$0x1]
  %v3599 = vld [vmem:[%s1374 + $0x8] sm:$0xf]
  %v3600 = vld [vmem:[%s1374 + $0xc] sm:$0x1]
  %v3601 = vld [vmem:[%s1374 + $0x10] sm:$0xf]
  %v3602 = vld [vmem:[%s1374 + $0x14] sm:$0x1]
  %v3603 = vld [vmem:[%s1374 + $0x18] sm:$0xf]
  %v3604 = vld [vmem:[%s1374 + $0x1c] sm:$0x1]
  %v3605 = vld [vmem:[%s1374 + $0x20] sm:$0xf]
  %v3606 = vld [vmem:[%s1374 + $0x24] sm:$0x1]
  %v3607 = vld [vmem:[%s1374 + $0x28] sm:$0xf]
  %v3608 = vld [vmem:[%s1374 + $0x2c] sm:$0x1]
  %v3609 = vld [vmem:[%s1374 + $0x30] sm:$0xf]
  %v3610 = vld [vmem:[%s1374 + $0x34] sm:$0x1]
  %v3611 = vld [vmem:[%s1374 + $0x38] sm:$0xf]
  %v3612 = vld [vmem:[%s1374 + $0x3c] sm:$0x1]
  %v3613 = vld [vmem:[%s1374 + $0x140] sm:$0xf]
  %v3614 = vld [vmem:[%s1374 + $0x144] sm:$0x1]
  %v3615 = vld [vmem:[%s1374 + $0x148] sm:$0xf]
  %v3616 = vld [vmem:[%s1374 + $0x14c] sm:$0x1]
  %v3617 = vld [vmem:[%s1374 + $0x150] sm:$0xf]
  %v3618 = vld [vmem:[%s1374 + $0x154] sm:$0x1]
  %v3619 = vld [vmem:[%s1374 + $0x158] sm:$0xf]
  %v3620 = vld [vmem:[%s1374 + $0x15c] sm:$0x1]
  %v3621 = vld [vmem:[%s1374 + $0x160] sm:$0xf]
  %v3622 = vld [vmem:[%s1374 + $0x164] sm:$0x1]
  %v3623 = vld [vmem:[%s1374 + $0x168] sm:$0xf]
  %v3624 = vld [vmem:[%s1374 + $0x16c] sm:$0x1]
  %v3625 = vld [vmem:[%s1374 + $0x170] sm:$0xf]
  %v3626 = vld [vmem:[%s1374 + $0x174] sm:$0x1]
  %v3627 = vld [vmem:[%s1374 + $0x178] sm:$0xf]
  %v3628 = vld [vmem:[%s1374 + $0x17c] sm:$0x1]
  %v3630 = vshrl.u32 %v3597, 16
  %v3632 = vrot.slane %v3630, 4
  %v3633 = vshll.u32 %v3597, 16
  %v3635 = vrot.slane %v3633, 5
  %v3636 = vor.u32 %v3632, %v3635
  %v3637 = vrot.slane %v3636, 4
  %v3639 = vshll.u32 %v3598, 16
  %v3641 = vrot.slane %v3639, 5
  %v3642 = vsel %vm2277, %v3637, %v3641
  %v3644 = vshrl.u32 %v3599, 16
  %v3646 = vrot.slane %v3644, 4
  %v3647 = vshll.u32 %v3599, 16
  %v3649 = vrot.slane %v3647, 5
  %v3650 = vor.u32 %v3646, %v3649
  %v3651 = vrot.slane %v3650, 4
  %v3653 = vshll.u32 %v3600, 16
  %v3655 = vrot.slane %v3653, 5
  %v3656 = vsel %vm2277, %v3651, %v3655
  %v3658 = vshrl.u32 %v3601, 16
  %v3660 = vrot.slane %v3658, 4
  %v3661 = vshll.u32 %v3601, 16
  %v3663 = vrot.slane %v3661, 5
  %v3664 = vor.u32 %v3660, %v3663
  %v3665 = vrot.slane %v3664, 4
  %v3667 = vshll.u32 %v3602, 16
  %v3669 = vrot.slane %v3667, 5
  %v3670 = vsel %vm2277, %v3665, %v3669
  %v3672 = vshrl.u32 %v3603, 16
  %v3674 = vrot.slane %v3672, 4
  %v3675 = vshll.u32 %v3603, 16
  %v3677 = vrot.slane %v3675, 5
  %v3678 = vor.u32 %v3674, %v3677
  %v3679 = vrot.slane %v3678, 4
  %v3681 = vshll.u32 %v3604, 16
  %v3683 = vrot.slane %v3681, 5
  %v3684 = vsel %vm2277, %v3679, %v3683
  %v3686 = vshrl.u32 %v3605, 16
  %v3688 = vrot.slane %v3686, 4
  %v3689 = vshll.u32 %v3605, 16
  %v3691 = vrot.slane %v3689, 5
  %v3692 = vor.u32 %v3688, %v3691
  %v3693 = vrot.slane %v3692, 4
  %v3695 = vshll.u32 %v3606, 16
  %v3697 = vrot.slane %v3695, 5
  %v3698 = vsel %vm2277, %v3693, %v3697
  %v3700 = vshrl.u32 %v3607, 16
  %v3702 = vrot.slane %v3700, 4
  %v3703 = vshll.u32 %v3607, 16
  %v3705 = vrot.slane %v3703, 5
  %v3706 = vor.u32 %v3702, %v3705
  %v3707 = vrot.slane %v3706, 4
  %v3709 = vshll.u32 %v3608, 16
  %v3711 = vrot.slane %v3709, 5
  %v3712 = vsel %vm2277, %v3707, %v3711
  %v3714 = vshrl.u32 %v3609, 16
  %v3716 = vrot.slane %v3714, 4
  %v3717 = vshll.u32 %v3609, 16
  %v3719 = vrot.slane %v3717, 5
  %v3720 = vor.u32 %v3716, %v3719
  %v3721 = vrot.slane %v3720, 4
  %v3723 = vshll.u32 %v3610, 16
  %v3725 = vrot.slane %v3723, 5
  %v3726 = vsel %vm2277, %v3721, %v3725
  %v3728 = vshrl.u32 %v3611, 16
  %v3730 = vrot.slane %v3728, 4
  %v3731 = vshll.u32 %v3611, 16
  %v3733 = vrot.slane %v3731, 5
  %v3734 = vor.u32 %v3730, %v3733
  %v3735 = vrot.slane %v3734, 4
  %v3737 = vshll.u32 %v3612, 16
  %v3739 = vrot.slane %v3737, 5
  %v3740 = vsel %vm2277, %v3735, %v3739
  %v3742 = vshrl.u32 %v3613, 16
  %v3744 = vrot.slane %v3742, 4
  %v3745 = vshll.u32 %v3613, 16
  %v3747 = vrot.slane %v3745, 5
  %v3748 = vor.u32 %v3744, %v3747
  %v3749 = vrot.slane %v3748, 4
  %v3751 = vshll.u32 %v3614, 16
  %v3753 = vrot.slane %v3751, 5
  %v3754 = vsel %vm2277, %v3749, %v3753
  %v3756 = vshrl.u32 %v3615, 16
  %v3758 = vrot.slane %v3756, 4
  %v3759 = vshll.u32 %v3615, 16
  %v3761 = vrot.slane %v3759, 5
  %v3762 = vor.u32 %v3758, %v3761
  %v3763 = vrot.slane %v3762, 4
  %v3765 = vshll.u32 %v3616, 16
  %v3767 = vrot.slane %v3765, 5
  %v3768 = vsel %vm2277, %v3763, %v3767
  %v3770 = vshrl.u32 %v3617, 16
  %v3772 = vrot.slane %v3770, 4
  %v3773 = vshll.u32 %v3617, 16
  %v3775 = vrot.slane %v3773, 5
  %v3776 = vor.u32 %v3772, %v3775
  %v3777 = vrot.slane %v3776, 4
  %v3779 = vshll.u32 %v3618, 16
  %v3781 = vrot.slane %v3779, 5
  %v3782 = vsel %vm2277, %v3777, %v3781
  %v3784 = vshrl.u32 %v3619, 16
  %v3786 = vrot.slane %v3784, 4
  %v3787 = vshll.u32 %v3619, 16
  %v3789 = vrot.slane %v3787, 5
  %v3790 = vor.u32 %v3786, %v3789
  %v3791 = vrot.slane %v3790, 4
  %v3793 = vshll.u32 %v3620, 16
  %v3795 = vrot.slane %v3793, 5
  %v3796 = vsel %vm2277, %v3791, %v3795
  %v3798 = vshrl.u32 %v3621, 16
  %v3800 = vrot.slane %v3798, 4
  %v3801 = vshll.u32 %v3621, 16
  %v3803 = vrot.slane %v3801, 5
  %v3804 = vor.u32 %v3800, %v3803
  %v3805 = vrot.slane %v3804, 4
  %v3807 = vshll.u32 %v3622, 16
  %v3809 = vrot.slane %v3807, 5
  %v3810 = vsel %vm2277, %v3805, %v3809
  %v3812 = vshrl.u32 %v3623, 16
  %v3814 = vrot.slane %v3812, 4
  %v3815 = vshll.u32 %v3623, 16
  %v3817 = vrot.slane %v3815, 5
  %v3818 = vor.u32 %v3814, %v3817
  %v3819 = vrot.slane %v3818, 4
  %v3821 = vshll.u32 %v3624, 16
  %v3823 = vrot.slane %v3821, 5
  %v3824 = vsel %vm2277, %v3819, %v3823
  %v3826 = vshrl.u32 %v3625, 16
  %v3828 = vrot.slane %v3826, 4
  %v3829 = vshll.u32 %v3625, 16
  %v3831 = vrot.slane %v3829, 5
  %v3832 = vor.u32 %v3828, %v3831
  %v3833 = vrot.slane %v3832, 4
  %v3835 = vshll.u32 %v3626, 16
  %v3837 = vrot.slane %v3835, 5
  %v3838 = vsel %vm2277, %v3833, %v3837
  %v3840 = vshrl.u32 %v3627, 16
  %v3842 = vrot.slane %v3840, 4
  %v3843 = vshll.u32 %v3627, 16
  %v3845 = vrot.slane %v3843, 5
  %v3846 = vor.u32 %v3842, %v3845
  %v3847 = vrot.slane %v3846, 4
  %v3849 = vshll.u32 %v3628, 16
  %v3851 = vrot.slane %v3849, 5
  %v3852 = vsel %vm2277, %v3847, %v3851
  %3853 = vrot.lane.b32.xlu0 %v3642, 20
  %v3854 = vpop.permute.xlu0 %3853
  %3855 = vrot.lane.b32.xlu0 %v3656, 20
  %v3856 = vpop.permute.xlu0 %3855
  %3857 = vrot.lane.b32.xlu0 %v3670, 20
  %v3858 = vpop.permute.xlu0 %3857
  %3859 = vrot.lane.b32.xlu0 %v3684, 20
  %v3860 = vpop.permute.xlu0 %3859
  %3861 = vrot.lane.b32.xlu0 %v3698, 20
  %v3862 = vpop.permute.xlu0 %3861
  %3863 = vrot.lane.b32.xlu0 %v3712, 20
  %v3864 = vpop.permute.xlu0 %3863
  %3865 = vrot.lane.b32.xlu0 %v3726, 20
  %v3866 = vpop.permute.xlu0 %3865
  %3867 = vrot.lane.b32.xlu0 %v3740, 20
  %v3868 = vpop.permute.xlu0 %3867
  %3869 = vrot.lane.b32.xlu0 %v3754, 20
  %v3870 = vpop.permute.xlu0 %3869
  %3871 = vrot.lane.b32.xlu0 %v3768, 20
  %v3872 = vpop.permute.xlu0 %3871
  %3873 = vrot.lane.b32.xlu0 %v3782, 20
  %v3874 = vpop.permute.xlu0 %3873
  %3875 = vrot.lane.b32.xlu0 %v3796, 20
  %v3876 = vpop.permute.xlu0 %3875
  %3877 = vrot.lane.b32.xlu0 %v3810, 20
  %v3878 = vpop.permute.xlu0 %3877
  %3879 = vrot.lane.b32.xlu0 %v3824, 20
  %v3880 = vpop.permute.xlu0 %3879
  %3881 = vrot.lane.b32.xlu0 %v3838, 20
  %v3882 = vpop.permute.xlu0 %3881
  %3883 = vrot.lane.b32.xlu0 %v3852, 20
  %v3884 = vpop.permute.xlu0 %3883
  %vm3901 = vcmask 191648
  %3902 = vst.msk [vmem:[#allocation4] sm:$0xf] %vm3901, %v3854
  %3903 = vst.msk [vmem:[#allocation4 + $0x4] sm:$0xf] %vm3901, %v3856
  %3904 = vst.msk [vmem:[#allocation4 + $0x8] sm:$0xf] %vm3901, %v3858
  %3905 = vst.msk [vmem:[#allocation4 + $0xc] sm:$0xf] %vm3901, %v3860
  %3906 = vst.msk [vmem:[#allocation4 + $0x10] sm:$0xf] %vm3901, %v3862
  %3907 = vst.msk [vmem:[#allocation4 + $0x14] sm:$0xf] %vm3901, %v3864
  %3908 = vst.msk [vmem:[#allocation4 + $0x18] sm:$0xf] %vm3901, %v3866
  %3909 = vst.msk [vmem:[#allocation4 + $0x1c] sm:$0xf] %vm3901, %v3868
  %3910 = vst.msk [vmem:[#allocation4 + $0x20] sm:$0xf] %vm3901, %v3870
  %3911 = vst.msk [vmem:[#allocation4 + $0x24] sm:$0xf] %vm3901, %v3872
  %3912 = vst.msk [vmem:[#allocation4 + $0x28] sm:$0xf] %vm3901, %v3874
  %3913 = vst.msk [vmem:[#allocation4 + $0x2c] sm:$0xf] %vm3901, %v3876
  %3914 = vst.msk [vmem:[#allocation4 + $0x30] sm:$0xf] %vm3901, %v3878
  %3915 = vst.msk [vmem:[#allocation4 + $0x34] sm:$0xf] %vm3901, %v3880
  %3916 = vst.msk [vmem:[#allocation4 + $0x38] sm:$0xf] %vm3901, %v3882
  %3917 = vst.msk [vmem:[#allocation4 + $0x3c] sm:$0xf] %vm3901, %v3884
  %v3918 = vld [vmem:[%s2146] sm:$0xf]
  %v3919 = vld [vmem:[%s2146 + $0x8] sm:$0xf]
  %v3920 = vld [vmem:[%s2146 + $0x10] sm:$0xf]
  %v3921 = vld [vmem:[%s2146 + $0x18] sm:$0xf]
  %v3922 = vld [vmem:[%s2146 + $0x20] sm:$0xf]
  %v3923 = vld [vmem:[%s2146 + $0x28] sm:$0xf]
  %v3924 = vld [vmem:[%s2146 + $0x30] sm:$0xf]
  %v3925 = vld [vmem:[%s2146 + $0x38] sm:$0xf]
  %v3926 = vld [vmem:[%s2146 + $0x140] sm:$0xf]
  %v3927 = vld [vmem:[%s2146 + $0x148] sm:$0xf]
  %v3928 = vld [vmem:[%s2146 + $0x150] sm:$0xf]
  %v3929 = vld [vmem:[%s2146 + $0x158] sm:$0xf]
  %v3930 = vld [vmem:[%s2146 + $0x160] sm:$0xf]
  %v3931 = vld [vmem:[%s2146 + $0x168] sm:$0xf]
  %v3932 = vld [vmem:[%s2146 + $0x170] sm:$0xf]
  %v3933 = vld [vmem:[%s2146 + $0x178] sm:$0xf]
  %3950 = vrot.lane.b32.xlu0 %v3918, 24
  %v3951 = vpop.permute.xlu0 %3950
  %3952 = vrot.lane.b32.xlu0 %v3919, 24
  %v3953 = vpop.permute.xlu0 %3952
  %3954 = vrot.lane.b32.xlu0 %v3920, 24
  %v3955 = vpop.permute.xlu0 %3954
  %3956 = vrot.lane.b32.xlu0 %v3921, 24
  %v3957 = vpop.permute.xlu0 %3956
  %3958 = vrot.lane.b32.xlu0 %v3922, 24
  %v3959 = vpop.permute.xlu0 %3958
  %3960 = vrot.lane.b32.xlu0 %v3923, 24
  %v3961 = vpop.permute.xlu0 %3960
  %3962 = vrot.lane.b32.xlu0 %v3924, 24
  %v3963 = vpop.permute.xlu0 %3962
  %3964 = vrot.lane.b32.xlu0 %v3925, 24
  %v3965 = vpop.permute.xlu0 %3964
  %3966 = vrot.lane.b32.xlu0 %v3926, 24
  %v3967 = vpop.permute.xlu0 %3966
  %3968 = vrot.lane.b32.xlu0 %v3927, 24
  %v3969 = vpop.permute.xlu0 %3968
  %3970 = vrot.lane.b32.xlu0 %v3928, 24
  %v3971 = vpop.permute.xlu0 %3970
  %3972 = vrot.lane.b32.xlu0 %v3929, 24
  %v3973 = vpop.permute.xlu0 %3972
  %3974 = vrot.lane.b32.xlu0 %v3930, 24
  %v3975 = vpop.permute.xlu0 %3974
  %3976 = vrot.lane.b32.xlu0 %v3931, 24
  %v3977 = vpop.permute.xlu0 %3976
  %3978 = vrot.lane.b32.xlu0 %v3932, 24
  %v3979 = vpop.permute.xlu0 %3978
  %3980 = vrot.lane.b32.xlu0 %v3933, 24
  %v3981 = vpop.permute.xlu0 %3980
  %vm3998 = vcmask 224448
  %3999 = vst.msk [vmem:[#allocation4] sm:$0xf] %vm3998, %v3951
  %4000 = vst.msk [vmem:[#allocation4 + $0x4] sm:$0xf] %vm3998, %v3953
  %4001 = vst.msk [vmem:[#allocation4 + $0x8] sm:$0xf] %vm3998, %v3955
  %4002 = vst.msk [vmem:[#allocation4 + $0xc] sm:$0xf] %vm3998, %v3957
  %4003 = vst.msk [vmem:[#allocation4 + $0x10] sm:$0xf] %vm3998, %v3959
  %4004 = vst.msk [vmem:[#allocation4 + $0x14] sm:$0xf] %vm3998, %v3961
  %4005 = vst.msk [vmem:[#allocation4 + $0x18] sm:$0xf] %vm3998, %v3963
  %4006 = vst.msk [vmem:[#allocation4 + $0x1c] sm:$0xf] %vm3998, %v3965
  %4007 = vst.msk [vmem:[#allocation4 + $0x20] sm:$0xf] %vm3998, %v3967
  %4008 = vst.msk [vmem:[#allocation4 + $0x24] sm:$0xf] %vm3998, %v3969
  %4009 = vst.msk [vmem:[#allocation4 + $0x28] sm:$0xf] %vm3998, %v3971
  %4010 = vst.msk [vmem:[#allocation4 + $0x2c] sm:$0xf] %vm3998, %v3973
  %4011 = vst.msk [vmem:[#allocation4 + $0x30] sm:$0xf] %vm3998, %v3975
  %4012 = vst.msk [vmem:[#allocation4 + $0x34] sm:$0xf] %vm3998, %v3977
  %4013 = vst.msk [vmem:[#allocation4 + $0x38] sm:$0xf] %vm3998, %v3979
  %4014 = vst.msk [vmem:[#allocation4 + $0x3c] sm:$0xf] %vm3998, %v3981
  %v4015 = vld [vmem:[%s1760] sm:$0xf]
  %v4016 = vld [vmem:[%s1760 + $0x4] sm:$0x1]
  %v4017 = vld [vmem:[%s1760 + $0x8] sm:$0xf]
  %v4018 = vld [vmem:[%s1760 + $0xc] sm:$0x1]
  %v4019 = vld [vmem:[%s1760 + $0x10] sm:$0xf]
  %v4020 = vld [vmem:[%s1760 + $0x14] sm:$0x1]
  %v4021 = vld [vmem:[%s1760 + $0x18] sm:$0xf]
  %v4022 = vld [vmem:[%s1760 + $0x1c] sm:$0x1]
  %v4023 = vld [vmem:[%s1760 + $0x20] sm:$0xf]
  %v4024 = vld [vmem:[%s1760 + $0x24] sm:$0x1]
  %v4025 = vld [vmem:[%s1760 + $0x28] sm:$0xf]
  %v4026 = vld [vmem:[%s1760 + $0x2c] sm:$0x1]
  %v4027 = vld [vmem:[%s1760 + $0x30] sm:$0xf]
  %v4028 = vld [vmem:[%s1760 + $0x34] sm:$0x1]
  %v4029 = vld [vmem:[%s1760 + $0x38] sm:$0xf]
  %v4030 = vld [vmem:[%s1760 + $0x3c] sm:$0x1]
  %v4031 = vld [vmem:[%s1760 + $0x140] sm:$0xf]
  %v4032 = vld [vmem:[%s1760 + $0x144] sm:$0x1]
  %v4033 = vld [vmem:[%s1760 + $0x148] sm:$0xf]
  %v4034 = vld [vmem:[%s1760 + $0x14c] sm:$0x1]
  %v4035 = vld [vmem:[%s1760 + $0x150] sm:$0xf]
  %v4036 = vld [vmem:[%s1760 + $0x154] sm:$0x1]
  %v4037 = vld [vmem:[%s1760 + $0x158] sm:$0xf]
  %v4038 = vld [vmem:[%s1760 + $0x15c] sm:$0x1]
  %v4039 = vld [vmem:[%s1760 + $0x160] sm:$0xf]
  %v4040 = vld [vmem:[%s1760 + $0x164] sm:$0x1]
  %v4041 = vld [vmem:[%s1760 + $0x168] sm:$0xf]
  %v4042 = vld [vmem:[%s1760 + $0x16c] sm:$0x1]
  %v4043 = vld [vmem:[%s1760 + $0x170] sm:$0xf]
  %v4044 = vld [vmem:[%s1760 + $0x174] sm:$0x1]
  %v4045 = vld [vmem:[%s1760 + $0x178] sm:$0xf]
  %v4046 = vld [vmem:[%s1760 + $0x17c] sm:$0x1]
  %v4048 = vshrl.u32 %v4015, 16
  %v4050 = vrot.slane %v4048, 4
  %v4051 = vshll.u32 %v4015, 16
  %v4053 = vrot.slane %v4051, 5
  %v4054 = vor.u32 %v4050, %v4053
  %v4055 = vrot.slane %v4054, 4
  %v4057 = vshll.u32 %v4016, 16
  %v4059 = vrot.slane %v4057, 5
  %v4060 = vsel %vm2277, %v4055, %v4059
  %v4062 = vshrl.u32 %v4017, 16
  %v4064 = vrot.slane %v4062, 4
  %v4065 = vshll.u32 %v4017, 16
  %v4067 = vrot.slane %v4065, 5
  %v4068 = vor.u32 %v4064, %v4067
  %v4069 = vrot.slane %v4068, 4
  %v4071 = vshll.u32 %v4018, 16
  %v4073 = vrot.slane %v4071, 5
  %v4074 = vsel %vm2277, %v4069, %v4073
  %v4076 = vshrl.u32 %v4019, 16
  %v4078 = vrot.slane %v4076, 4
  %v4079 = vshll.u32 %v4019, 16
  %v4081 = vrot.slane %v4079, 5
  %v4082 = vor.u32 %v4078, %v4081
  %v4083 = vrot.slane %v4082, 4
  %v4085 = vshll.u32 %v4020, 16
  %v4087 = vrot.slane %v4085, 5
  %v4088 = vsel %vm2277, %v4083, %v4087
  %v4090 = vshrl.u32 %v4021, 16
  %v4092 = vrot.slane %v4090, 4
  %v4093 = vshll.u32 %v4021, 16
  %v4095 = vrot.slane %v4093, 5
  %v4096 = vor.u32 %v4092, %v4095
  %v4097 = vrot.slane %v4096, 4
  %v4099 = vshll.u32 %v4022, 16
  %v4101 = vrot.slane %v4099, 5
  %v4102 = vsel %vm2277, %v4097, %v4101
  %v4104 = vshrl.u32 %v4023, 16
  %v4106 = vrot.slane %v4104, 4
  %v4107 = vshll.u32 %v4023, 16
  %v4109 = vrot.slane %v4107, 5
  %v4110 = vor.u32 %v4106, %v4109
  %v4111 = vrot.slane %v4110, 4
  %v4113 = vshll.u32 %v4024, 16
  %v4115 = vrot.slane %v4113, 5
  %v4116 = vsel %vm2277, %v4111, %v4115
  %v4118 = vshrl.u32 %v4025, 16
  %v4120 = vrot.slane %v4118, 4
  %v4121 = vshll.u32 %v4025, 16
  %v4123 = vrot.slane %v4121, 5
  %v4124 = vor.u32 %v4120, %v4123
  %v4125 = vrot.slane %v4124, 4
  %v4127 = vshll.u32 %v4026, 16
  %v4129 = vrot.slane %v4127, 5
  %v4130 = vsel %vm2277, %v4125, %v4129
  %v4132 = vshrl.u32 %v4027, 16
  %v4134 = vrot.slane %v4132, 4
  %v4135 = vshll.u32 %v4027, 16
  %v4137 = vrot.slane %v4135, 5
  %v4138 = vor.u32 %v4134, %v4137
  %v4139 = vrot.slane %v4138, 4
  %v4141 = vshll.u32 %v4028, 16
  %v4143 = vrot.slane %v4141, 5
  %v4144 = vsel %vm2277, %v4139, %v4143
  %v4146 = vshrl.u32 %v4029, 16
  %v4148 = vrot.slane %v4146, 4
  %v4149 = vshll.u32 %v4029, 16
  %v4151 = vrot.slane %v4149, 5
  %v4152 = vor.u32 %v4148, %v4151
  %v4153 = vrot.slane %v4152, 4
  %v4155 = vshll.u32 %v4030, 16
  %v4157 = vrot.slane %v4155, 5
  %v4158 = vsel %vm2277, %v4153, %v4157
  %v4160 = vshrl.u32 %v4031, 16
  %v4162 = vrot.slane %v4160, 4
  %v4163 = vshll.u32 %v4031, 16
  %v4165 = vrot.slane %v4163, 5
  %v4166 = vor.u32 %v4162, %v4165
  %v4167 = vrot.slane %v4166, 4
  %v4169 = vshll.u32 %v4032, 16
  %v4171 = vrot.slane %v4169, 5
  %v4172 = vsel %vm2277, %v4167, %v4171
  %v4174 = vshrl.u32 %v4033, 16
  %v4176 = vrot.slane %v4174, 4
  %v4177 = vshll.u32 %v4033, 16
  %v4179 = vrot.slane %v4177, 5
  %v4180 = vor.u32 %v4176, %v4179
  %v4181 = vrot.slane %v4180, 4
  %v4183 = vshll.u32 %v4034, 16
  %v4185 = vrot.slane %v4183, 5
  %v4186 = vsel %vm2277, %v4181, %v4185
  %v4188 = vshrl.u32 %v4035, 16
  %v4190 = vrot.slane %v4188, 4
  %v4191 = vshll.u32 %v4035, 16
  %v4193 = vrot.slane %v4191, 5
  %v4194 = vor.u32 %v4190, %v4193
  %v4195 = vrot.slane %v4194, 4
  %v4197 = vshll.u32 %v4036, 16
  %v4199 = vrot.slane %v4197, 5
  %v4200 = vsel %vm2277, %v4195, %v4199
  %v4202 = vshrl.u32 %v4037, 16
  %v4204 = vrot.slane %v4202, 4
  %v4205 = vshll.u32 %v4037, 16
  %v4207 = vrot.slane %v4205, 5
  %v4208 = vor.u32 %v4204, %v4207
  %v4209 = vrot.slane %v4208, 4
  %v4211 = vshll.u32 %v4038, 16
  %v4213 = vrot.slane %v4211, 5
  %v4214 = vsel %vm2277, %v4209, %v4213
  %v4216 = vshrl.u32 %v4039, 16
  %v4218 = vrot.slane %v4216, 4
  %v4219 = vshll.u32 %v4039, 16
  %v4221 = vrot.slane %v4219, 5
  %v4222 = vor.u32 %v4218, %v4221
  %v4223 = vrot.slane %v4222, 4
  %v4225 = vshll.u32 %v4040, 16
  %v4227 = vrot.slane %v4225, 5
  %v4228 = vsel %vm2277, %v4223, %v4227
  %v4230 = vshrl.u32 %v4041, 16
  %v4232 = vrot.slane %v4230, 4
  %v4233 = vshll.u32 %v4041, 16
  %v4235 = vrot.slane %v4233, 5
  %v4236 = vor.u32 %v4232, %v4235
  %v4237 = vrot.slane %v4236, 4
  %v4239 = vshll.u32 %v4042, 16
  %v4241 = vrot.slane %v4239, 5
  %v4242 = vsel %vm2277, %v4237, %v4241
  %v4244 = vshrl.u32 %v4043, 16
  %v4246 = vrot.slane %v4244, 4
  %v4247 = vshll.u32 %v4043, 16
  %v4249 = vrot.slane %v4247, 5
  %v4250 = vor.u32 %v4246, %v4249
  %v4251 = vrot.slane %v4250, 4
  %v4253 = vshll.u32 %v4044, 16
  %v4255 = vrot.slane %v4253, 5
  %v4256 = vsel %vm2277, %v4251, %v4255
  %v4258 = vshrl.u32 %v4045, 16
  %v4260 = vrot.slane %v4258, 4
  %v4261 = vshll.u32 %v4045, 16
  %v4263 = vrot.slane %v4261, 5
  %v4264 = vor.u32 %v4260, %v4263
  %v4265 = vrot.slane %v4264, 4
  %v4267 = vshll.u32 %v4046, 16
  %v4269 = vrot.slane %v4267, 5
  %v4270 = vsel %vm2277, %v4265, %v4269
  %4271 = vrot.lane.b32.xlu0 %v4060, 28
  %v4272 = vpop.permute.xlu0 %4271
  %4273 = vrot.lane.b32.xlu0 %v4074, 28
  %v4274 = vpop.permute.xlu0 %4273
  %4275 = vrot.lane.b32.xlu0 %v4088, 28
  %v4276 = vpop.permute.xlu0 %4275
  %4277 = vrot.lane.b32.xlu0 %v4102, 28
  %v4278 = vpop.permute.xlu0 %4277
  %4279 = vrot.lane.b32.xlu0 %v4116, 28
  %v4280 = vpop.permute.xlu0 %4279
  %4281 = vrot.lane.b32.xlu0 %v4130, 28
  %v4282 = vpop.permute.xlu0 %4281
  %4283 = vrot.lane.b32.xlu0 %v4144, 28
  %v4284 = vpop.permute.xlu0 %4283
  %4285 = vrot.lane.b32.xlu0 %v4158, 28
  %v4286 = vpop.permute.xlu0 %4285
  %4287 = vrot.lane.b32.xlu0 %v4172, 28
  %v4288 = vpop.permute.xlu0 %4287
  %4289 = vrot.lane.b32.xlu0 %v4186, 28
  %v4290 = vpop.permute.xlu0 %4289
  %4291 = vrot.lane.b32.xlu0 %v4200, 28
  %v4292 = vpop.permute.xlu0 %4291
  %4293 = vrot.lane.b32.xlu0 %v4214, 28
  %v4294 = vpop.permute.xlu0 %4293
  %4295 = vrot.lane.b32.xlu0 %v4228, 28
  %v4296 = vpop.permute.xlu0 %4295
  %4297 = vrot.lane.b32.xlu0 %v4242, 28
  %v4298 = vpop.permute.xlu0 %4297
  %4299 = vrot.lane.b32.xlu0 %v4256, 28
  %v4300 = vpop.permute.xlu0 %4299
  %4301 = vrot.lane.b32.xlu0 %v4270, 28
  %v4302 = vpop.permute.xlu0 %4301
  %vm4319 = vcmask 257248
  %4320 = vst.msk [vmem:[#allocation4] sm:$0xf] %vm4319, %v4272
  %4321 = vst.msk [vmem:[#allocation4 + $0x4] sm:$0xf] %vm4319, %v4274
  %4322 = vst.msk [vmem:[#allocation4 + $0x8] sm:$0xf] %vm4319, %v4276
  %4323 = vst.msk [vmem:[#allocation4 + $0xc] sm:$0xf] %vm4319, %v4278
  %4324 = vst.msk [vmem:[#allocation4 + $0x10] sm:$0xf] %vm4319, %v4280
  %4325 = vst.msk [vmem:[#allocation4 + $0x14] sm:$0xf] %vm4319, %v4282
  %4326 = vst.msk [vmem:[#allocation4 + $0x18] sm:$0xf] %vm4319, %v4284
  %4327 = vst.msk [vmem:[#allocation4 + $0x1c] sm:$0xf] %vm4319, %v4286
  %4328 = vst.msk [vmem:[#allocation4 + $0x20] sm:$0xf] %vm4319, %v4288
  %4329 = vst.msk [vmem:[#allocation4 + $0x24] sm:$0xf] %vm4319, %v4290
  %4330 = vst.msk [vmem:[#allocation4 + $0x28] sm:$0xf] %vm4319, %v4292
  %4331 = vst.msk [vmem:[#allocation4 + $0x2c] sm:$0xf] %vm4319, %v4294
  %4332 = vst.msk [vmem:[#allocation4 + $0x30] sm:$0xf] %vm4319, %v4296
  %4333 = vst.msk [vmem:[#allocation4 + $0x34] sm:$0xf] %vm4319, %v4298
  %4334 = vst.msk [vmem:[#allocation4 + $0x38] sm:$0xf] %vm4319, %v4300
  %4335 = vst.msk [vmem:[#allocation4 + $0x3c] sm:$0xf] %vm4319, %v4302
  %v4336 = vld [vmem:[%s2146] sm:$0xf]
  %v4337 = vld [vmem:[%s2146 + $0x4] sm:$0x1]
  %v4338 = vld [vmem:[%s2146 + $0x8] sm:$0xf]
  %v4339 = vld [vmem:[%s2146 + $0xc] sm:$0x1]
  %v4340 = vld [vmem:[%s2146 + $0x10] sm:$0xf]
  %v4341 = vld [vmem:[%s2146 + $0x14] sm:$0x1]
  %v4342 = vld [vmem:[%s2146 + $0x18] sm:$0xf]
  %v4343 = vld [vmem:[%s2146 + $0x1c] sm:$0x1]
  %v4344 = vld [vmem:[%s2146 + $0x20] sm:$0xf]
  %v4345 = vld [vmem:[%s2146 + $0x24] sm:$0x1]
  %v4346 = vld [vmem:[%s2146 + $0x28] sm:$0xf]
  %v4347 = vld [vmem:[%s2146 + $0x2c] sm:$0x1]
  %v4348 = vld [vmem:[%s2146 + $0x30] sm:$0xf]
  %v4349 = vld [vmem:[%s2146 + $0x34] sm:$0x1]
  %v4350 = vld [vmem:[%s2146 + $0x38] sm:$0xf]
  %v4351 = vld [vmem:[%s2146 + $0x3c] sm:$0x1]
  %v4352 = vld [vmem:[%s2146 + $0x140] sm:$0xf]
  %v4353 = vld [vmem:[%s2146 + $0x144] sm:$0x1]
  %v4354 = vld [vmem:[%s2146 + $0x148] sm:$0xf]
  %v4355 = vld [vmem:[%s2146 + $0x14c] sm:$0x1]
  %v4356 = vld [vmem:[%s2146 + $0x150] sm:$0xf]
  %v4357 = vld [vmem:[%s2146 + $0x154] sm:$0x1]
  %v4358 = vld [vmem:[%s2146 + $0x158] sm:$0xf]
  %v4359 = vld [vmem:[%s2146 + $0x15c] sm:$0x1]
  %v4360 = vld [vmem:[%s2146 + $0x160] sm:$0xf]
  %v4361 = vld [vmem:[%s2146 + $0x164] sm:$0x1]
  %v4362 = vld [vmem:[%s2146 + $0x168] sm:$0xf]
  %v4363 = vld [vmem:[%s2146 + $0x16c] sm:$0x1]
  %v4364 = vld [vmem:[%s2146 + $0x170] sm:$0xf]
  %v4365 = vld [vmem:[%s2146 + $0x174] sm:$0x1]
  %v4366 = vld [vmem:[%s2146 + $0x178] sm:$0xf]
  %v4367 = vld [vmem:[%s2146 + $0x17c] sm:$0x1]
  %v4369 = vshrl.u32 %v4336, 16
  %v4371 = vrot.slane %v4369, 4
  %v4372 = vshll.u32 %v4336, 16
  %v4374 = vrot.slane %v4372, 5
  %v4375 = vor.u32 %v4371, %v4374
  %v4376 = vrot.slane %v4375, 4
  %v4378 = vshll.u32 %v4337, 16
  %v4380 = vrot.slane %v4378, 5
  %v4381 = vsel %vm2277, %v4376, %v4380
  %v4383 = vshrl.u32 %v4338, 16
  %v4385 = vrot.slane %v4383, 4
  %v4386 = vshll.u32 %v4338, 16
  %v4388 = vrot.slane %v4386, 5
  %v4389 = vor.u32 %v4385, %v4388
  %v4390 = vrot.slane %v4389, 4
  %v4392 = vshll.u32 %v4339, 16
  %v4394 = vrot.slane %v4392, 5
  %v4395 = vsel %vm2277, %v4390, %v4394
  %v4397 = vshrl.u32 %v4340, 16
  %v4399 = vrot.slane %v4397, 4
  %v4400 = vshll.u32 %v4340, 16
  %v4402 = vrot.slane %v4400, 5
  %v4403 = vor.u32 %v4399, %v4402
  %v4404 = vrot.slane %v4403, 4
  %v4406 = vshll.u32 %v4341, 16
  %v4408 = vrot.slane %v4406, 5
  %v4409 = vsel %vm2277, %v4404, %v4408
  %v4411 = vshrl.u32 %v4342, 16
  %v4413 = vrot.slane %v4411, 4
  %v4414 = vshll.u32 %v4342, 16
  %v4416 = vrot.slane %v4414, 5
  %v4417 = vor.u32 %v4413, %v4416
  %v4418 = vrot.slane %v4417, 4
  %v4420 = vshll.u32 %v4343, 16
  %v4422 = vrot.slane %v4420, 5
  %v4423 = vsel %vm2277, %v4418, %v4422
  %v4425 = vshrl.u32 %v4344, 16
  %v4427 = vrot.slane %v4425, 4
  %v4428 = vshll.u32 %v4344, 16
  %v4430 = vrot.slane %v4428, 5
  %v4431 = vor.u32 %v4427, %v4430
  %v4432 = vrot.slane %v4431, 4
  %v4434 = vshll.u32 %v4345, 16
  %v4436 = vrot.slane %v4434, 5
  %v4437 = vsel %vm2277, %v4432, %v4436
  %v4439 = vshrl.u32 %v4346, 16
  %v4441 = vrot.slane %v4439, 4
  %v4442 = vshll.u32 %v4346, 16
  %v4444 = vrot.slane %v4442, 5
  %v4445 = vor.u32 %v4441, %v4444
  %v4446 = vrot.slane %v4445, 4
  %v4448 = vshll.u32 %v4347, 16
  %v4450 = vrot.slane %v4448, 5
  %v4451 = vsel %vm2277, %v4446, %v4450
  %v4453 = vshrl.u32 %v4348, 16
  %v4455 = vrot.slane %v4453, 4
  %v4456 = vshll.u32 %v4348, 16
  %v4458 = vrot.slane %v4456, 5
  %v4459 = vor.u32 %v4455, %v4458
  %v4460 = vrot.slane %v4459, 4
  %v4462 = vshll.u32 %v4349, 16
  %v4464 = vrot.slane %v4462, 5
  %v4465 = vsel %vm2277, %v4460, %v4464
  %v4467 = vshrl.u32 %v4350, 16
  %v4469 = vrot.slane %v4467, 4
  %v4470 = vshll.u32 %v4350, 16
  %v4472 = vrot.slane %v4470, 5
  %v4473 = vor.u32 %v4469, %v4472
  %v4474 = vrot.slane %v4473, 4
  %v4476 = vshll.u32 %v4351, 16
  %v4478 = vrot.slane %v4476, 5
  %v4479 = vsel %vm2277, %v4474, %v4478
  %v4481 = vshrl.u32 %v4352, 16
  %v4483 = vrot.slane %v4481, 4
  %v4484 = vshll.u32 %v4352, 16
  %v4486 = vrot.slane %v4484, 5
  %v4487 = vor.u32 %v4483, %v4486
  %v4488 = vrot.slane %v4487, 4
  %v4490 = vshll.u32 %v4353, 16
  %v4492 = vrot.slane %v4490, 5
  %v4493 = vsel %vm2277, %v4488, %v4492
  %v4495 = vshrl.u32 %v4354, 16
  %v4497 = vrot.slane %v4495, 4
  %v4498 = vshll.u32 %v4354, 16
  %v4500 = vrot.slane %v4498, 5
  %v4501 = vor.u32 %v4497, %v4500
  %v4502 = vrot.slane %v4501, 4
  %v4504 = vshll.u32 %v4355, 16
  %v4506 = vrot.slane %v4504, 5
  %v4507 = vsel %vm2277, %v4502, %v4506
  %v4509 = vshrl.u32 %v4356, 16
  %v4511 = vrot.slane %v4509, 4
  %v4512 = vshll.u32 %v4356, 16
  %v4514 = vrot.slane %v4512, 5
  %v4515 = vor.u32 %v4511, %v4514
  %v4516 = vrot.slane %v4515, 4
  %v4518 = vshll.u32 %v4357, 16
  %v4520 = vrot.slane %v4518, 5
  %v4521 = vsel %vm2277, %v4516, %v4520
  %v4523 = vshrl.u32 %v4358, 16
  %v4525 = vrot.slane %v4523, 4
  %v4526 = vshll.u32 %v4358, 16
  %v4528 = vrot.slane %v4526, 5
  %v4529 = vor.u32 %v4525, %v4528
  %v4530 = vrot.slane %v4529, 4
  %v4532 = vshll.u32 %v4359, 16
  %v4534 = vrot.slane %v4532, 5
  %v4535 = vsel %vm2277, %v4530, %v4534
  %v4537 = vshrl.u32 %v4360, 16
  %v4539 = vrot.slane %v4537, 4
  %v4540 = vshll.u32 %v4360, 16
  %v4542 = vrot.slane %v4540, 5
  %v4543 = vor.u32 %v4539, %v4542
  %v4544 = vrot.slane %v4543, 4
  %v4546 = vshll.u32 %v4361, 16
  %v4548 = vrot.slane %v4546, 5
  %v4549 = vsel %vm2277, %v4544, %v4548
  %v4551 = vshrl.u32 %v4362, 16
  %v4553 = vrot.slane %v4551, 4
  %v4554 = vshll.u32 %v4362, 16
  %v4556 = vrot.slane %v4554, 5
  %v4557 = vor.u32 %v4553, %v4556
  %v4558 = vrot.slane %v4557, 4
  %v4560 = vshll.u32 %v4363, 16
  %v4562 = vrot.slane %v4560, 5
  %v4563 = vsel %vm2277, %v4558, %v4562
  %v4565 = vshrl.u32 %v4364, 16
  %v4567 = vrot.slane %v4565, 4
  %v4568 = vshll.u32 %v4364, 16
  %v4570 = vrot.slane %v4568, 5
  %v4571 = vor.u32 %v4567, %v4570
  %v4572 = vrot.slane %v4571, 4
  %v4574 = vshll.u32 %v4365, 16
  %v4576 = vrot.slane %v4574, 5
  %v4577 = vsel %vm2277, %v4572, %v4576
  %v4579 = vshrl.u32 %v4366, 16
  %v4581 = vrot.slane %v4579, 4
  %v4582 = vshll.u32 %v4366, 16
  %v4584 = vrot.slane %v4582, 5
  %v4585 = vor.u32 %v4581, %v4584
  %v4586 = vrot.slane %v4585, 4
  %v4588 = vshll.u32 %v4367, 16
  %v4590 = vrot.slane %v4588, 5
  %v4591 = vsel %vm2277, %v4586, %v4590
  %4592 = vrot.lane.b32.xlu0 %v4381, 32
  %v4593 = vpop.permute.xlu0 %4592
  %4594 = vrot.lane.b32.xlu0 %v4395, 32
  %v4595 = vpop.permute.xlu0 %4594
  %4596 = vrot.lane.b32.xlu0 %v4409, 32
  %v4597 = vpop.permute.xlu0 %4596
  %4598 = vrot.lane.b32.xlu0 %v4423, 32
  %v4599 = vpop.permute.xlu0 %4598
  %4600 = vrot.lane.b32.xlu0 %v4437, 32
  %v4601 = vpop.permute.xlu0 %4600
  %4602 = vrot.lane.b32.xlu0 %v4451, 32
  %v4603 = vpop.permute.xlu0 %4602
  %4604 = vrot.lane.b32.xlu0 %v4465, 32
  %v4605 = vpop.permute.xlu0 %4604
  %4606 = vrot.lane.b32.xlu0 %v4479, 32
  %v4607 = vpop.permute.xlu0 %4606
  %4608 = vrot.lane.b32.xlu0 %v4493, 32
  %v4609 = vpop.permute.xlu0 %4608
  %4610 = vrot.lane.b32.xlu0 %v4507, 32
  %v4611 = vpop.permute.xlu0 %4610
  %4612 = vrot.lane.b32.xlu0 %v4521, 32
  %v4613 = vpop.permute.xlu0 %4612
  %4614 = vrot.lane.b32.xlu0 %v4535, 32
  %v4615 = vpop.permute.xlu0 %4614
  %4616 = vrot.lane.b32.xlu0 %v4549, 32
  %v4617 = vpop.permute.xlu0 %4616
  %4618 = vrot.lane.b32.xlu0 %v4563, 32
  %v4619 = vpop.permute.xlu0 %4618
  %4620 = vrot.lane.b32.xlu0 %v4577, 32
  %v4621 = vpop.permute.xlu0 %4620
  %4622 = vrot.lane.b32.xlu0 %v4591, 32
  %v4623 = vpop.permute.xlu0 %4622
  %vm4640 = vcmask 290048
  %4641 = vst.msk [vmem:[#allocation4] sm:$0xf] %vm4640, %v4593
  %4642 = vst.msk [vmem:[#allocation4 + $0x4] sm:$0xf] %vm4640, %v4595
  %4643 = vst.msk [vmem:[#allocation4 + $0x8] sm:$0xf] %vm4640, %v4597
  %4644 = vst.msk [vmem:[#allocation4 + $0xc] sm:$0xf] %vm4640, %v4599
  %4645 = vst.msk [vmem:[#allocation4 + $0x10] sm:$0xf] %vm4640, %v4601
  %4646 = vst.msk [vmem:[#allocation4 + $0x14] sm:$0xf] %vm4640, %v4603
  %4647 = vst.msk [vmem:[#allocation4 + $0x18] sm:$0xf] %vm4640, %v4605
  %4648 = vst.msk [vmem:[#allocation4 + $0x1c] sm:$0xf] %vm4640, %v4607
  %4649 = vst.msk [vmem:[#allocation4 + $0x20] sm:$0xf] %vm4640, %v4609
  %4650 = vst.msk [vmem:[#allocation4 + $0x24] sm:$0xf] %vm4640, %v4611
  %4651 = vst.msk [vmem:[#allocation4 + $0x28] sm:$0xf] %vm4640, %v4613
  %4652 = vst.msk [vmem:[#allocation4 + $0x2c] sm:$0xf] %vm4640, %v4615
  %4653 = vst.msk [vmem:[#allocation4 + $0x30] sm:$0xf] %vm4640, %v4617
  %4654 = vst.msk [vmem:[#allocation4 + $0x34] sm:$0xf] %vm4640, %v4619
  %4655 = vst.msk [vmem:[#allocation4 + $0x38] sm:$0xf] %vm4640, %v4621
  %4656 = vst.msk [vmem:[#allocation4 + $0x3c] sm:$0xf] %vm4640, %v4623
  %v4657 = vld [vmem:[#allocation4] sm:$0xf]
  %v4658 = vld [vmem:[#allocation4 + $0x4] sm:$0xf]
  %v4659 = vld [vmem:[#allocation4 + $0x8] sm:$0xf]
  %v4660 = vld [vmem:[#allocation4 + $0xc] sm:$0xf]
  %v4661 = vld [vmem:[#allocation4 + $0x10] sm:$0xf]
  %v4662 = vld [vmem:[#allocation4 + $0x14] sm:$0xf]
  %v4663 = vld [vmem:[#allocation4 + $0x18] sm:$0xf]
  %v4664 = vld [vmem:[#allocation4 + $0x1c] sm:$0xf]
  %v4665 = vld [vmem:[#allocation4 + $0x20] sm:$0xf]
  %v4666 = vld [vmem:[#allocation4 + $0x24] sm:$0xf]
  %v4667 = vld [vmem:[#allocation4 + $0x28] sm:$0xf]
  %v4668 = vld [vmem:[#allocation4 + $0x2c] sm:$0xf]
  %v4669 = vld [vmem:[#allocation4 + $0x30] sm:$0xf]
  %v4670 = vld [vmem:[#allocation4 + $0x34] sm:$0xf]
  %v4671 = vld [vmem:[#allocation4 + $0x38] sm:$0xf]
  %v4672 = vld [vmem:[#allocation4 + $0x3c] sm:$0xf]
  %v4673 = vld [vmem:[%s3] sm:$0xf]
  %v4674 = vld [vmem:[%s3 + $0x4] sm:$0xf]
  %v4675 = vld [vmem:[%s3 + $0x8] sm:$0xf]
  %v4676 = vld [vmem:[%s3 + $0xc] sm:$0xf]
  %v4677 = vld [vmem:[%s3 + $0x10] sm:$0x3]
  %v4694 = vunpack.c.l.b16 %v4657
  %v4695 = vunpack.c.l.b16 %v4658
  %v4696 = vunpack.c.l.b16 %v4659
  %v4697 = vunpack.c.l.b16 %v4660
  %v4698 = vunpack.c.l.b16 %v4661
  %v4699 = vunpack.c.l.b16 %v4662
  %v4700 = vunpack.c.l.b16 %v4663
  %v4701 = vunpack.c.l.b16 %v4664
  %v4702 = vunpack.c.l.b16 %v4665
  %v4703 = vunpack.c.l.b16 %v4666
  %v4704 = vunpack.c.l.b16 %v4667
  %v4705 = vunpack.c.l.b16 %v4668
  %v4706 = vunpack.c.l.b16 %v4669
  %v4707 = vunpack.c.l.b16 %v4670
  %v4708 = vunpack.c.l.b16 %v4671
  %v4709 = vunpack.c.l.b16 %v4672
  %v4710 = vpack.c.b16 %v4695, %v4694
  %v4711 = vpack.c.b16 %v4697, %v4696
  %v4712 = vpack.c.b16 %v4699, %v4698
  %v4713 = vpack.c.b16 %v4701, %v4700
  %v4714 = vpack.c.b16 %v4703, %v4702
  %v4715 = vpack.c.b16 %v4705, %v4704
  %v4716 = vpack.c.b16 %v4707, %v4706
  %v4717 = vpack.c.b16 %v4709, %v4708
  %v4723 = vunpack.c.l.b16 %v4673
  %v4724 = vunpack.c.l.b16 %v4674
  %v4725 = vunpack.c.l.b16 %v4675
  %v4726 = vunpack.c.l.b16 %v4676
  %v4727 = vunpack.c.l.b16 %v4677
  %v4728 = vpack.c.b16 %v4724, %v4723
  %v4729 = vpack.c.b16 %v4726, %v4725
  %v4730 = vpack.c.b16 %v4727, %v4727
  %vm4733 = vcmask 293888
  %v4735 = vsel %vm4733, %v4710, 0
  %v4738 = vsel %vm4733, %v4711, 0
  %v4741 = vsel %vm4733, %v4712, 0
  %v4744 = vsel %vm4733, %v4713, 0
  %v4747 = vsel %vm4733, %v4714, 0
  %v4750 = vsel %vm4733, %v4715, 0
  %v4753 = vsel %vm4733, %v4716, 0
  %v4756 = vsel %vm4733, %v4717, 0
  %vm4758 = vcmask 1041408
  %v4760 = vsel %vm4758, %v4730, 0
  %4762 = vmatprep.subr.bf16.mxu0 0
  %4763 = vmatpush1.bf16.msra.mxu0 %v4728
  %4764 = vmatprep.subr.bf16.mxu0 0
  %4765 = vmatpush1.bf16.msra.mxu0 %v4729
  %4766 = vmatprep.subr.bf16.mxu0 0
  %4767 = vmatpush1.bf16.msra.mxu0 %v4760
  %4768 = vmatprep.subr.bf16.mxu0 0
  %4769 = vmatpush1.bf16.msra.mxu0 0
  %4770 = vmatprep.subr.bf16.mxu0 0
  %4771 = vmatpush1.bf16.msra.mxu0 0
  %4772 = vmatprep.subr.bf16.mxu0 0
  %4773 = vmatpush1.bf16.msra.mxu0 0
  %4774 = vmatprep.subr.bf16.mxu0 0
  %4775 = vmatpush1.bf16.msra.mxu0 0
  %4776 = vmatprep.subr.bf16.mxu0 0
  %4777 = vmatpush1.bf16.msra.mxu0 0
  %4778 = vmatprep.subr.bf16.mxu0 0
  %4779 = vmatpush1.bf16.msra.mxu0 0
  %4780 = vmatprep.subr.bf16.mxu0 0
  %4781 = vmatpush1.bf16.msra.mxu0 0
  %4782 = vmatprep.subr.bf16.mxu0 0
  %4783 = vmatpush1.bf16.msra.mxu0 0
  %4784 = vmatprep.subr.bf16.mxu0 0
  %4785 = vmatpush1.bf16.msra.mxu0 0
  %4786 = vmatprep.subr.bf16.mxu0 0
  %4787 = vmatpush1.bf16.msra.mxu0 0
  %4788 = vmatprep.subr.bf16.mxu0 0
  %4789 = vmatpush1.bf16.msra.mxu0 0
  %4790 = vmatprep.subr.bf16.mxu0 0
  %4791 = vmatpush1.bf16.msra.mxu0 0
  %4792 = vmatprep.subr.bf16.mxu0 0
  %4793 = vmatpush1.bf16.msra.mxu0 0
  %4794 = vmatprep.mubr.bf16.mxu0 0
  %4795 = vmatmul.mubr.bf16.gmra.mrb[0].mxu0 %v4735
  %v4796 = vpop.f32.mrb[0].mxu0
  %v4797 = vadd.f32 0.0, %v4796
  %v4798 = vpop.f32.mrb[0].mxu0
  %v4799 = vpop.f32.mrb[0].mxu0
  %v4800 = vadd.f32 0.0, %v4799
  %v4801 = vpop.f32.mrb[0].mxu0
  %4802 = vmatprep.mubr.bf16.mxu0 0
  %4803 = vmatmul.mubr.bf16.gmra.mrb[0].mxu0 %v4738
  %v4804 = vpop.f32.mrb[0].mxu0
  %v4805 = vadd.f32 0.0, %v4804
  %v4806 = vpop.f32.mrb[0].mxu0
  %v4807 = vpop.f32.mrb[0].mxu0
  %v4808 = vadd.f32 0.0, %v4807
  %v4809 = vpop.f32.mrb[0].mxu0
  %4810 = vmatprep.mubr.bf16.mxu0 0
  %4811 = vmatmul.mubr.bf16.gmra.mrb[0].mxu0 %v4741
  %v4812 = vpop.f32.mrb[0].mxu0
  %v4813 = vadd.f32 0.0, %v4812
  %v4814 = vpop.f32.mrb[0].mxu0
  %v4815 = vpop.f32.mrb[0].mxu0
  %v4816 = vadd.f32 0.0, %v4815
  %v4817 = vpop.f32.mrb[0].mxu0
  %4818 = vmatprep.mubr.bf16.mxu0 0
  %4819 = vmatmul.mubr.bf16.gmra.mrb[0].mxu0 %v4744
  %v4820 = vpop.f32.mrb[0].mxu0
  %v4821 = vadd.f32 0.0, %v4820
  %v4822 = vpop.f32.mrb[0].mxu0
  %v4823 = vpop.f32.mrb[0].mxu0
  %v4824 = vadd.f32 0.0, %v4823
  %v4825 = vpop.f32.mrb[0].mxu0
  %4826 = vmatprep.mubr.bf16.mxu0 0
  %4827 = vmatmul.mubr.bf16.gmra.mrb[0].mxu0 %v4747
  %v4828 = vpop.f32.mrb[0].mxu0
  %v4829 = vadd.f32 0.0, %v4828
  %v4830 = vpop.f32.mrb[0].mxu0
  %v4831 = vpop.f32.mrb[0].mxu0
  %v4832 = vadd.f32 0.0, %v4831
  %v4833 = vpop.f32.mrb[0].mxu0
  %4834 = vmatprep.mubr.bf16.mxu0 0
  %4835 = vmatmul.mubr.bf16.gmra.mrb[0].mxu0 %v4750
  %v4836 = vpop.f32.mrb[0].mxu0
  %v4837 = vadd.f32 0.0, %v4836
  %v4838 = vpop.f32.mrb[0].mxu0
  %v4839 = vpop.f32.mrb[0].mxu0
  %v4840 = vadd.f32 0.0, %v4839
  %v4841 = vpop.f32.mrb[0].mxu0
  %4842 = vmatprep.mubr.bf16.mxu0 0
  %4843 = vmatmul.mubr.bf16.gmra.mrb[0].mxu0 %v4753
  %v4844 = vpop.f32.mrb[0].mxu0
  %v4845 = vadd.f32 0.0, %v4844
  %v4846 = vpop.f32.mrb[0].mxu0
  %v4847 = vpop.f32.mrb[0].mxu0
  %v4848 = vadd.f32 0.0, %v4847
  %v4849 = vpop.f32.mrb[0].mxu0
  %4850 = vmatprep.mubr.bf16.mxu0 0
  %4851 = vmatmul.mubr.bf16.gmra.mrb[0].mxu0 %v4756
  %v4852 = vpop.f32.mrb[0].mxu0
  %v4853 = vadd.f32 0.0, %v4852
  %v4854 = vpop.f32.mrb[0].mxu0
  %v4855 = vpop.f32.mrb[0].mxu0
  %v4856 = vadd.f32 0.0, %v4855
  %v4857 = vpop.f32.mrb[0].mxu0
  %4858 = vdwg.mxu0
  %v4859 = vld [vmem:[%s4] sm:$0x1]
  %v4861 = vlaneseq
  %v4862 = vshrl.u32 %v4861, 7
  %v4863 = vsub.s32 0, %v4862
  %v4864 = vrot.slane %v4859, %v4863
  %v4866 = vmul.f32 %v4797, %v4864
  %v4867 = vmul.f32 %v4800, %v4864
  %v4868 = vmul.f32 %v4805, %v4864
  %v4869 = vmul.f32 %v4808, %v4864
  %v4870 = vmul.f32 %v4813, %v4864
  %v4871 = vmul.f32 %v4816, %v4864
  %v4872 = vmul.f32 %v4821, %v4864
  %v4873 = vmul.f32 %v4824, %v4864
  %v4874 = vmul.f32 %v4829, %v4864
  %v4875 = vmul.f32 %v4832, %v4864
  %v4876 = vmul.f32 %v4837, %v4864
  %v4877 = vmul.f32 %v4840, %v4864
  %v4878 = vmul.f32 %v4845, %v4864
  %v4879 = vmul.f32 %v4848, %v4864
  %v4880 = vmul.f32 %v4853, %v4864
  %v4881 = vmul.f32 %v4856, %v4864
  %v4882 = vld [vmem:[%s5] sm:$0x1]
  %v4884 = vlaneseq
  %v4885 = vshrl.u32 %v4884, 7
  %v4886 = vsub.s32 0, %v4885
  %v4887 = vrot.slane %v4882, %v4886
  %v4889 = vadd.f32 %v4866, %v4887
  %v4890 = vadd.f32 %v4867, %v4887
  %v4891 = vadd.f32 %v4868, %v4887
  %v4892 = vadd.f32 %v4869, %v4887
  %v4893 = vadd.f32 %v4870, %v4887
  %v4894 = vadd.f32 %v4871, %v4887
  %v4895 = vadd.f32 %v4872, %v4887
  %v4896 = vadd.f32 %v4873, %v4887
  %v4897 = vadd.f32 %v4874, %v4887
  %v4898 = vadd.f32 %v4875, %v4887
  %v4899 = vadd.f32 %v4876, %v4887
  %v4900 = vadd.f32 %v4877, %v4887
  %v4901 = vadd.f32 %v4878, %v4887
  %v4902 = vadd.f32 %v4879, %v4887
  %v4903 = vadd.f32 %v4880, %v4887
  %v4904 = vadd.f32 %v4881, %v4887
  %v4905 = vmax.f32 %v4889, 0.0
  %v4906 = vmax.f32 %v4890, 0.0
  %v4907 = vmax.f32 %v4891, 0.0
  %v4908 = vmax.f32 %v4892, 0.0
  %v4909 = vmax.f32 %v4893, 0.0
  %v4910 = vmax.f32 %v4894, 0.0
  %v4911 = vmax.f32 %v4895, 0.0
  %v4912 = vmax.f32 %v4896, 0.0
  %v4913 = vmax.f32 %v4897, 0.0
  %v4914 = vmax.f32 %v4898, 0.0
  %v4915 = vmax.f32 %v4899, 0.0
  %v4916 = vmax.f32 %v4900, 0.0
  %v4917 = vmax.f32 %v4901, 0.0
  %v4918 = vmax.f32 %v4902, 0.0
  %v4919 = vmax.f32 %v4903, 0.0
  %v4920 = vmax.f32 %v4904, 0.0
  %v4921 = vpack.c.bf16 %v4906, %v4905
  %v4922 = vpack.c.bf16 %v4908, %v4907
  %v4923 = vpack.c.bf16 %v4910, %v4909
  %v4924 = vpack.c.bf16 %v4912, %v4911
  %v4925 = vpack.c.bf16 %v4914, %v4913
  %v4926 = vpack.c.bf16 %v4916, %v4915
  %v4927 = vpack.c.bf16 %v4918, %v4917
  %v4928 = vpack.c.bf16 %v4920, %v4919
  %v4937 = vunpack.c.l.b16 %v4921
  %v4938 = vunpack.c.h.b16 %v4921
  %v4939 = vunpack.c.l.b16 %v4922
  %v4940 = vunpack.c.h.b16 %v4922
  %v4941 = vunpack.c.l.b16 %v4923
  %v4942 = vunpack.c.h.b16 %v4923
  %v4943 = vunpack.c.l.b16 %v4924
  %v4944 = vunpack.c.h.b16 %v4924
  %v4945 = vunpack.c.l.b16 %v4925
  %v4946 = vunpack.c.h.b16 %v4925
  %v4947 = vunpack.c.l.b16 %v4926
  %v4948 = vunpack.c.h.b16 %v4926
  %v4949 = vunpack.c.l.b16 %v4927
  %v4950 = vunpack.c.h.b16 %v4927
  %v4951 = vunpack.c.l.b16 %v4928
  %v4952 = vunpack.c.h.b16 %v4928
  %v4953 = vpack.c.b16 %v4937, %v4937
  %v4954 = vpack.c.b16 %v4938, %v4938
  %v4955 = vpack.c.b16 %v4939, %v4939
  %v4956 = vpack.c.b16 %v4940, %v4940
  %v4957 = vpack.c.b16 %v4941, %v4941
  %v4958 = vpack.c.b16 %v4942, %v4942
  %v4959 = vpack.c.b16 %v4943, %v4943
  %v4960 = vpack.c.b16 %v4944, %v4944
  %v4961 = vpack.c.b16 %v4945, %v4945
  %v4962 = vpack.c.b16 %v4946, %v4946
  %v4963 = vpack.c.b16 %v4947, %v4947
  %v4964 = vpack.c.b16 %v4948, %v4948
  %v4965 = vpack.c.b16 %v4949, %v4949
  %v4966 = vpack.c.b16 %v4950, %v4950
  %v4967 = vpack.c.b16 %v4951, %v4951
  %v4968 = vpack.c.b16 %v4952, %v4952
  %v4970 = vshrl.u32 %v4953, 16
  %v4972 = vrot.slane %v4970, 7
  %v4973 = vshll.u32 %v4953, 16
  %v4975 = vor.u32 %v4972, %v4973
  %v4976 = vrot.slane %v4972, 4
  %v4978 = vshrl.u32 %v4954, 16
  %v4980 = vrot.slane %v4978, 7
  %v4981 = vshll.u32 %v4954, 16
  %v4983 = vor.u32 %v4980, %v4981
  %v4984 = vrot.slane %v4980, 4
  %v4986 = vshrl.u32 %v4955, 16
  %v4988 = vrot.slane %v4986, 7
  %v4989 = vshll.u32 %v4955, 16
  %v4991 = vor.u32 %v4988, %v4989
  %v4992 = vrot.slane %v4988, 4
  %v4994 = vshrl.u32 %v4956, 16
  %v4996 = vrot.slane %v4994, 7
  %v4997 = vshll.u32 %v4956, 16
  %v4999 = vor.u32 %v4996, %v4997
  %v5000 = vrot.slane %v4996, 4
  %v5002 = vshrl.u32 %v4957, 16
  %v5004 = vrot.slane %v5002, 7
  %v5005 = vshll.u32 %v4957, 16
  %v5007 = vor.u32 %v5004, %v5005
  %v5008 = vrot.slane %v5004, 4
  %v5010 = vshrl.u32 %v4958, 16
  %v5012 = vrot.slane %v5010, 7
  %v5013 = vshll.u32 %v4958, 16
  %v5015 = vor.u32 %v5012, %v5013
  %v5016 = vrot.slane %v5012, 4
  %v5018 = vshrl.u32 %v4959, 16
  %v5020 = vrot.slane %v5018, 7
  %v5021 = vshll.u32 %v4959, 16
  %v5023 = vor.u32 %v5020, %v5021
  %v5024 = vrot.slane %v5020, 4
  %v5026 = vshrl.u32 %v4960, 16
  %v5028 = vrot.slane %v5026, 7
  %v5029 = vshll.u32 %v4960, 16
  %v5031 = vor.u32 %v5028, %v5029
  %v5032 = vrot.slane %v5028, 4
  %v5034 = vshrl.u32 %v4961, 16
  %v5036 = vrot.slane %v5034, 7
  %v5037 = vshll.u32 %v4961, 16
  %v5039 = vor.u32 %v5036, %v5037
  %v5040 = vrot.slane %v5036, 4
  %v5042 = vshrl.u32 %v4962, 16
  %v5044 = vrot.slane %v5042, 7
  %v5045 = vshll.u32 %v4962, 16
  %v5047 = vor.u32 %v5044, %v5045
  %v5048 = vrot.slane %v5044, 4
  %v5050 = vshrl.u32 %v4963, 16
  %v5052 = vrot.slane %v5050, 7
  %v5053 = vshll.u32 %v4963, 16
  %v5055 = vor.u32 %v5052, %v5053
  %v5056 = vrot.slane %v5052, 4
  %v5058 = vshrl.u32 %v4964, 16
  %v5060 = vrot.slane %v5058, 7
  %v5061 = vshll.u32 %v4964, 16
  %v5063 = vor.u32 %v5060, %v5061
  %v5064 = vrot.slane %v5060, 4
  %v5066 = vshrl.u32 %v4965, 16
  %v5068 = vrot.slane %v5066, 7
  %v5069 = vshll.u32 %v4965, 16
  %v5071 = vor.u32 %v5068, %v5069
  %v5072 = vrot.slane %v5068, 4
  %v5074 = vshrl.u32 %v4966, 16
  %v5076 = vrot.slane %v5074, 7
  %v5077 = vshll.u32 %v4966, 16
  %v5079 = vor.u32 %v5076, %v5077
  %v5080 = vrot.slane %v5076, 4
  %v5082 = vshrl.u32 %v4967, 16
  %v5084 = vrot.slane %v5082, 7
  %v5085 = vshll.u32 %v4967, 16
  %v5087 = vor.u32 %v5084, %v5085
  %v5088 = vrot.slane %v5084, 4
  %v5090 = vshrl.u32 %v4968, 16
  %v5092 = vrot.slane %v5090, 7
  %v5093 = vshll.u32 %v4968, 16
  %v5095 = vor.u32 %v5092, %v5093
  %v5096 = vrot.slane %v5092, 4
  %s5129 = scalar_lea.vmem [#allocation3], 8
  %vm5130 = vcmask 60416
  %vm5131 = vmand %vm5130, %vm308
  %v5132 = vld [vmem:[%s5129] sm:$0xf]
  %v5133 = vsel %vm5131, %v4975, %v5132
  %5134 = vst [vmem:[%s5129] sm:$0xf] %v5133
  %v5135 = vld [vmem:[%s5129 + $0x4] sm:$0x1]
  %v5136 = vsel %vm562, %v4976, %v5135
  %5137 = vst [vmem:[%s5129 + $0x4] sm:$0x1] %v5136
  %v5138 = vld [vmem:[%s5129 + $0x8] sm:$0xf]
  %v5139 = vsel %vm5131, %v4983, %v5138
  %5140 = vst [vmem:[%s5129 + $0x8] sm:$0xf] %v5139
  %v5141 = vld [vmem:[%s5129 + $0xc] sm:$0x1]
  %v5142 = vsel %vm562, %v4984, %v5141
  %5143 = vst [vmem:[%s5129 + $0xc] sm:$0x1] %v5142
  %v5144 = vld [vmem:[%s5129 + $0x10] sm:$0xf]
  %v5145 = vsel %vm5131, %v4991, %v5144
  %5146 = vst [vmem:[%s5129 + $0x10] sm:$0xf] %v5145
  %v5147 = vld [vmem:[%s5129 + $0x14] sm:$0x1]
  %v5148 = vsel %vm562, %v4992, %v5147
  %5149 = vst [vmem:[%s5129 + $0x14] sm:$0x1] %v5148
  %v5150 = vld [vmem:[%s5129 + $0x18] sm:$0xf]
  %v5151 = vsel %vm5131, %v4999, %v5150
  %5152 = vst [vmem:[%s5129 + $0x18] sm:$0xf] %v5151
  %v5153 = vld [vmem:[%s5129 + $0x1c] sm:$0x1]
  %v5154 = vsel %vm562, %v5000, %v5153
  %5155 = vst [vmem:[%s5129 + $0x1c] sm:$0x1] %v5154
  %v5156 = vld [vmem:[%s5129 + $0x20] sm:$0xf]
  %v5157 = vsel %vm5131, %v5007, %v5156
  %5158 = vst [vmem:[%s5129 + $0x20] sm:$0xf] %v5157
  %v5159 = vld [vmem:[%s5129 + $0x24] sm:$0x1]
  %v5160 = vsel %vm562, %v5008, %v5159
  %5161 = vst [vmem:[%s5129 + $0x24] sm:$0x1] %v5160
  %v5162 = vld [vmem:[%s5129 + $0x28] sm:$0xf]
  %v5163 = vsel %vm5131, %v5015, %v5162
  %5164 = vst [vmem:[%s5129 + $0x28] sm:$0xf] %v5163
  %v5165 = vld [vmem:[%s5129 + $0x2c] sm:$0x1]
  %v5166 = vsel %vm562, %v5016, %v5165
  %5167 = vst [vmem:[%s5129 + $0x2c] sm:$0x1] %v5166
  %v5168 = vld [vmem:[%s5129 + $0x30] sm:$0xf]
  %v5169 = vsel %vm5131, %v5023, %v5168
  %5170 = vst [vmem:[%s5129 + $0x30] sm:$0xf] %v5169
  %v5171 = vld [vmem:[%s5129 + $0x34] sm:$0x1]
  %v5172 = vsel %vm562, %v5024, %v5171
  %5173 = vst [vmem:[%s5129 + $0x34] sm:$0x1] %v5172
  %v5174 = vld [vmem:[%s5129 + $0x38] sm:$0xf]
  %v5175 = vsel %vm5131, %v5031, %v5174
  %5176 = vst [vmem:[%s5129 + $0x38] sm:$0xf] %v5175
  %v5177 = vld [vmem:[%s5129 + $0x3c] sm:$0x1]
  %v5178 = vsel %vm562, %v5032, %v5177
  %5179 = vst [vmem:[%s5129 + $0x3c] sm:$0x1] %v5178
  %v5180 = vld [vmem:[%s5129 + $0x50] sm:$0xf]
  %v5181 = vsel %vm5131, %v5039, %v5180
  %5182 = vst [vmem:[%s5129 + $0x50] sm:$0xf] %v5181
  %v5183 = vld [vmem:[%s5129 + $0x54] sm:$0x1]
  %v5184 = vsel %vm562, %v5040, %v5183
  %5185 = vst [vmem:[%s5129 + $0x54] sm:$0x1] %v5184
  %v5186 = vld [vmem:[%s5129 + $0x58] sm:$0xf]
  %v5187 = vsel %vm5131, %v5047, %v5186
  %5188 = vst [vmem:[%s5129 + $0x58] sm:$0xf] %v5187
  %v5189 = vld [vmem:[%s5129 + $0x5c] sm:$0x1]
  %v5190 = vsel %vm562, %v5048, %v5189
  %5191 = vst [vmem:[%s5129 + $0x5c] sm:$0x1] %v5190
  %v5192 = vld [vmem:[%s5129 + $0x60] sm:$0xf]
  %v5193 = vsel %vm5131, %v5055, %v5192
  %5194 = vst [vmem:[%s5129 + $0x60] sm:$0xf] %v5193
  %v5195 = vld [vmem:[%s5129 + $0x64] sm:$0x1]
  %v5196 = vsel %vm562, %v5056, %v5195
  %5197 = vst [vmem:[%s5129 + $0x64] sm:$0x1] %v5196
  %v5198 = vld [vmem:[%s5129 + $0x68] sm:$0xf]
  %v5199 = vsel %vm5131, %v5063, %v5198
  %5200 = vst [vmem:[%s5129 + $0x68] sm:$0xf] %v5199
  %v5201 = vld [vmem:[%s5129 + $0x6c] sm:$0x1]
  %v5202 = vsel %vm562, %v5064, %v5201
  %5203 = vst [vmem:[%s5129 + $0x6c] sm:$0x1] %v5202
  %v5204 = vld [vmem:[%s5129 + $0x70] sm:$0xf]
  %v5205 = vsel %vm5131, %v5071, %v5204
  %5206 = vst [vmem:[%s5129 + $0x70] sm:$0xf] %v5205
  %v5207 = vld [vmem:[%s5129 + $0x74] sm:$0x1]
  %v5208 = vsel %vm562, %v5072, %v5207
  %5209 = vst [vmem:[%s5129 + $0x74] sm:$0x1] %v5208
  %v5210 = vld [vmem:[%s5129 + $0x78] sm:$0xf]
  %v5211 = vsel %vm5131, %v5079, %v5210
  %5212 = vst [vmem:[%s5129 + $0x78] sm:$0xf] %v5211
  %v5213 = vld [vmem:[%s5129 + $0x7c] sm:$0x1]
  %v5214 = vsel %vm562, %v5080, %v5213
  %5215 = vst [vmem:[%s5129 + $0x7c] sm:$0x1] %v5214
  %v5216 = vld [vmem:[%s5129 + $0x80] sm:$0xf]
  %v5217 = vsel %vm5131, %v5087, %v5216
  %5218 = vst [vmem:[%s5129 + $0x80] sm:$0xf] %v5217
  %v5219 = vld [vmem:[%s5129 + $0x84] sm:$0x1]
  %v5220 = vsel %vm562, %v5088, %v5219
  %5221 = vst [vmem:[%s5129 + $0x84] sm:$0x1] %v5220
  %v5222 = vld [vmem:[%s5129 + $0x88] sm:$0xf]
  %v5223 = vsel %vm5131, %v5095, %v5222
  %5224 = vst [vmem:[%s5129 + $0x88] sm:$0xf] %v5223
  %v5225 = vld [vmem:[%s5129 + $0x8c] sm:$0x1]
  %v5226 = vsel %vm562, %v5096, %v5225
  %5227 = vst [vmem:[%s5129 + $0x8c] sm:$0x1] %v5226
  %v5228 = vld [vmem:[#allocation3] sm:$0xf]
  %v5229 = vld [vmem:[#allocation3 + $0x8] sm:$0xf]
  %v5230 = vld [vmem:[#allocation3 + $0x10] sm:$0xf]
  %v5231 = vld [vmem:[#allocation3 + $0x18] sm:$0xf]
  %v5232 = vld [vmem:[#allocation3 + $0x20] sm:$0xf]
  %v5233 = vld [vmem:[#allocation3 + $0x28] sm:$0xf]
  %v5234 = vld [vmem:[#allocation3 + $0x30] sm:$0xf]
  %v5235 = vld [vmem:[#allocation3 + $0x38] sm:$0xf]
  %v5236 = vld [vmem:[#allocation3 + $0x50] sm:$0xf]
  %v5237 = vld [vmem:[#allocation3 + $0x58] sm:$0xf]
  %v5238 = vld [vmem:[#allocation3 + $0x60] sm:$0xf]
  %v5239 = vld [vmem:[#allocation3 + $0x68] sm:$0xf]
  %v5240 = vld [vmem:[#allocation3 + $0x70] sm:$0xf]
  %v5241 = vld [vmem:[#allocation3 + $0x78] sm:$0xf]
  %v5242 = vld [vmem:[#allocation3 + $0x80] sm:$0xf]
  %v5243 = vld [vmem:[#allocation3 + $0x88] sm:$0xf]
  %5244 = vst.msk [vmem:[#allocation5] sm:$0xf] %vm550, %v5228
  %5245 = vst.msk [vmem:[#allocation5 + $0x4] sm:$0xf] %vm550, %v5229
  %5246 = vst.msk [vmem:[#allocation5 + $0x8] sm:$0xf] %vm550, %v5230
  %5247 = vst.msk [vmem:[#allocation5 + $0xc] sm:$0xf] %vm550, %v5231
  %5248 = vst.msk [vmem:[#allocation5 + $0x10] sm:$0xf] %vm550, %v5232
  %5249 = vst.msk [vmem:[#allocation5 + $0x14] sm:$0xf] %vm550, %v5233
  %5250 = vst.msk [vmem:[#allocation5 + $0x18] sm:$0xf] %vm550, %v5234
  %5251 = vst.msk [vmem:[#allocation5 + $0x1c] sm:$0xf] %vm550, %v5235
  %5252 = vst.msk [vmem:[#allocation5 + $0x20] sm:$0xf] %vm550, %v5236
  %5253 = vst.msk [vmem:[#allocation5 + $0x24] sm:$0xf] %vm550, %v5237
  %5254 = vst.msk [vmem:[#allocation5 + $0x28] sm:$0xf] %vm550, %v5238
  %5255 = vst.msk [vmem:[#allocation5 + $0x2c] sm:$0xf] %vm550, %v5239
  %5256 = vst.msk [vmem:[#allocation5 + $0x30] sm:$0xf] %vm550, %v5240
  %5257 = vst.msk [vmem:[#allocation5 + $0x34] sm:$0xf] %vm550, %v5241
  %5258 = vst.msk [vmem:[#allocation5 + $0x38] sm:$0xf] %vm550, %v5242
  %5259 = vst.msk [vmem:[#allocation5 + $0x3c] sm:$0xf] %vm550, %v5243
  %v5260 = vld [vmem:[#allocation3] sm:$0xf]
  %v5261 = vld [vmem:[#allocation3 + $0x4] sm:$0x1]
  %v5262 = vld [vmem:[#allocation3 + $0x8] sm:$0xf]
  %v5263 = vld [vmem:[#allocation3 + $0xc] sm:$0x1]
  %v5264 = vld [vmem:[#allocation3 + $0x10] sm:$0xf]
  %v5265 = vld [vmem:[#allocation3 + $0x14] sm:$0x1]
  %v5266 = vld [vmem:[#allocation3 + $0x18] sm:$0xf]
  %v5267 = vld [vmem:[#allocation3 + $0x1c] sm:$0x1]
  %v5268 = vld [vmem:[#allocation3 + $0x20] sm:$0xf]
  %v5269 = vld [vmem:[#allocation3 + $0x24] sm:$0x1]
  %v5270 = vld [vmem:[#allocation3 + $0x28] sm:$0xf]
  %v5271 = vld [vmem:[#allocation3 + $0x2c] sm:$0x1]
  %v5272 = vld [vmem:[#allocation3 + $0x30] sm:$0xf]
  %v5273 = vld [vmem:[#allocation3 + $0x34] sm:$0x1]
  %v5274 = vld [vmem:[#allocation3 + $0x38] sm:$0xf]
  %v5275 = vld [vmem:[#allocation3 + $0x3c] sm:$0x1]
  %v5276 = vld [vmem:[#allocation3 + $0x50] sm:$0xf]
  %v5277 = vld [vmem:[#allocation3 + $0x54] sm:$0x1]
  %v5278 = vld [vmem:[#allocation3 + $0x58] sm:$0xf]
  %v5279 = vld [vmem:[#allocation3 + $0x5c] sm:$0x1]
  %v5280 = vld [vmem:[#allocation3 + $0x60] sm:$0xf]
  %v5281 = vld [vmem:[#allocation3 + $0x64] sm:$0x1]
  %v5282 = vld [vmem:[#allocation3 + $0x68] sm:$0xf]
  %v5283 = vld [vmem:[#allocation3 + $0x6c] sm:$0x1]
  %v5284 = vld [vmem:[#allocation3 + $0x70] sm:$0xf]
  %v5285 = vld [vmem:[#allocation3 + $0x74] sm:$0x1]
  %v5286 = vld [vmem:[#allocation3 + $0x78] sm:$0xf]
  %v5287 = vld [vmem:[#allocation3 + $0x7c] sm:$0x1]
  %v5288 = vld [vmem:[#allocation3 + $0x80] sm:$0xf]
  %v5289 = vld [vmem:[#allocation3 + $0x84] sm:$0x1]
  %v5290 = vld [vmem:[#allocation3 + $0x88] sm:$0xf]
  %v5291 = vld [vmem:[#allocation3 + $0x8c] sm:$0x1]
  %v5293 = vshrl.u32 %v5260, 16
  %v5295 = vrot.slane %v5293, 4
  %v5296 = vshll.u32 %v5260, 16
  %v5298 = vrot.slane %v5296, 5
  %v5299 = vor.u32 %v5295, %v5298
  %v5300 = vrot.slane %v5299, 4
  %v5302 = vshll.u32 %v5261, 16
  %v5304 = vrot.slane %v5302, 5
  %v5305 = vsel %vm2277, %v5300, %v5304
  %v5307 = vshrl.u32 %v5262, 16
  %v5309 = vrot.slane %v5307, 4
  %v5310 = vshll.u32 %v5262, 16
  %v5312 = vrot.slane %v5310, 5
  %v5313 = vor.u32 %v5309, %v5312
  %v5314 = vrot.slane %v5313, 4
  %v5316 = vshll.u32 %v5263, 16
  %v5318 = vrot.slane %v5316, 5
  %v5319 = vsel %vm2277, %v5314, %v5318
  %v5321 = vshrl.u32 %v5264, 16
  %v5323 = vrot.slane %v5321, 4
  %v5324 = vshll.u32 %v5264, 16
  %v5326 = vrot.slane %v5324, 5
  %v5327 = vor.u32 %v5323, %v5326
  %v5328 = vrot.slane %v5327, 4
  %v5330 = vshll.u32 %v5265, 16
  %v5332 = vrot.slane %v5330, 5
  %v5333 = vsel %vm2277, %v5328, %v5332
  %v5335 = vshrl.u32 %v5266, 16
  %v5337 = vrot.slane %v5335, 4
  %v5338 = vshll.u32 %v5266, 16
  %v5340 = vrot.slane %v5338, 5
  %v5341 = vor.u32 %v5337, %v5340
  %v5342 = vrot.slane %v5341, 4
  %v5344 = vshll.u32 %v5267, 16
  %v5346 = vrot.slane %v5344, 5
  %v5347 = vsel %vm2277, %v5342, %v5346
  %v5349 = vshrl.u32 %v5268, 16
  %v5351 = vrot.slane %v5349, 4
  %v5352 = vshll.u32 %v5268, 16
  %v5354 = vrot.slane %v5352, 5
  %v5355 = vor.u32 %v5351, %v5354
  %v5356 = vrot.slane %v5355, 4
  %v5358 = vshll.u32 %v5269, 16
  %v5360 = vrot.slane %v5358, 5
  %v5361 = vsel %vm2277, %v5356, %v5360
  %v5363 = vshrl.u32 %v5270, 16
  %v5365 = vrot.slane %v5363, 4
  %v5366 = vshll.u32 %v5270, 16
  %v5368 = vrot.slane %v5366, 5
  %v5369 = vor.u32 %v5365, %v5368
  %v5370 = vrot.slane %v5369, 4
  %v5372 = vshll.u32 %v5271, 16
  %v5374 = vrot.slane %v5372, 5
  %v5375 = vsel %vm2277, %v5370, %v5374
  %v5377 = vshrl.u32 %v5272, 16
  %v5379 = vrot.slane %v5377, 4
  %v5380 = vshll.u32 %v5272, 16
  %v5382 = vrot.slane %v5380, 5
  %v5383 = vor.u32 %v5379, %v5382
  %v5384 = vrot.slane %v5383, 4
  %v5386 = vshll.u32 %v5273, 16
  %v5388 = vrot.slane %v5386, 5
  %v5389 = vsel %vm2277, %v5384, %v5388
  %v5391 = vshrl.u32 %v5274, 16
  %v5393 = vrot.slane %v5391, 4
  %v5394 = vshll.u32 %v5274, 16
  %v5396 = vrot.slane %v5394, 5
  %v5397 = vor.u32 %v5393, %v5396
  %v5398 = vrot.slane %v5397, 4
  %v5400 = vshll.u32 %v5275, 16
  %v5402 = vrot.slane %v5400, 5
  %v5403 = vsel %vm2277, %v5398, %v5402
  %v5405 = vshrl.u32 %v5276, 16
  %v5407 = vrot.slane %v5405, 4
  %v5408 = vshll.u32 %v5276, 16
  %v5410 = vrot.slane %v5408, 5
  %v5411 = vor.u32 %v5407, %v5410
  %v5412 = vrot.slane %v5411, 4
  %v5414 = vshll.u32 %v5277, 16
  %v5416 = vrot.slane %v5414, 5
  %v5417 = vsel %vm2277, %v5412, %v5416
  %v5419 = vshrl.u32 %v5278, 16
  %v5421 = vrot.slane %v5419, 4
  %v5422 = vshll.u32 %v5278, 16
  %v5424 = vrot.slane %v5422, 5
  %v5425 = vor.u32 %v5421, %v5424
  %v5426 = vrot.slane %v5425, 4
  %v5428 = vshll.u32 %v5279, 16
  %v5430 = vrot.slane %v5428, 5
  %v5431 = vsel %vm2277, %v5426, %v5430
  %v5433 = vshrl.u32 %v5280, 16
  %v5435 = vrot.slane %v5433, 4
  %v5436 = vshll.u32 %v5280, 16
  %v5438 = vrot.slane %v5436, 5
  %v5439 = vor.u32 %v5435, %v5438
  %v5440 = vrot.slane %v5439, 4
  %v5442 = vshll.u32 %v5281, 16
  %v5444 = vrot.slane %v5442, 5
  %v5445 = vsel %vm2277, %v5440, %v5444
  %v5447 = vshrl.u32 %v5282, 16
  %v5449 = vrot.slane %v5447, 4
  %v5450 = vshll.u32 %v5282, 16
  %v5452 = vrot.slane %v5450, 5
  %v5453 = vor.u32 %v5449, %v5452
  %v5454 = vrot.slane %v5453, 4
  %v5456 = vshll.u32 %v5283, 16
  %v5458 = vrot.slane %v5456, 5
  %v5459 = vsel %vm2277, %v5454, %v5458
  %v5461 = vshrl.u32 %v5284, 16
  %v5463 = vrot.slane %v5461, 4
  %v5464 = vshll.u32 %v5284, 16
  %v5466 = vrot.slane %v5464, 5
  %v5467 = vor.u32 %v5463, %v5466
  %v5468 = vrot.slane %v5467, 4
  %v5470 = vshll.u32 %v5285, 16
  %v5472 = vrot.slane %v5470, 5
  %v5473 = vsel %vm2277, %v5468, %v5472
  %v5475 = vshrl.u32 %v5286, 16
  %v5477 = vrot.slane %v5475, 4
  %v5478 = vshll.u32 %v5286, 16
  %v5480 = vrot.slane %v5478, 5
  %v5481 = vor.u32 %v5477, %v5480
  %v5482 = vrot.slane %v5481, 4
  %v5484 = vshll.u32 %v5287, 16
  %v5486 = vrot.slane %v5484, 5
  %v5487 = vsel %vm2277, %v5482, %v5486
  %v5489 = vshrl.u32 %v5288, 16
  %v5491 = vrot.slane %v5489, 4
  %v5492 = vshll.u32 %v5288, 16
  %v5494 = vrot.slane %v5492, 5
  %v5495 = vor.u32 %v5491, %v5494
  %v5496 = vrot.slane %v5495, 4
  %v5498 = vshll.u32 %v5289, 16
  %v5500 = vrot.slane %v5498, 5
  %v5501 = vsel %vm2277, %v5496, %v5500
  %v5503 = vshrl.u32 %v5290, 16
  %v5505 = vrot.slane %v5503, 4
  %v5506 = vshll.u32 %v5290, 16
  %v5508 = vrot.slane %v5506, 5
  %v5509 = vor.u32 %v5505, %v5508
  %v5510 = vrot.slane %v5509, 4
  %v5512 = vshll.u32 %v5291, 16
  %v5514 = vrot.slane %v5512, 5
  %v5515 = vsel %vm2277, %v5510, %v5514
  %5516 = vrot.lane.b32.xlu0 %v5305, 8
  %v5517 = vpop.permute.xlu0 %5516
  %5518 = vrot.lane.b32.xlu0 %v5319, 8
  %v5519 = vpop.permute.xlu0 %5518
  %5520 = vrot.lane.b32.xlu0 %v5333, 8
  %v5521 = vpop.permute.xlu0 %5520
  %5522 = vrot.lane.b32.xlu0 %v5347, 8
  %v5523 = vpop.permute.xlu0 %5522
  %5524 = vrot.lane.b32.xlu0 %v5361, 8
  %v5525 = vpop.permute.xlu0 %5524
  %5526 = vrot.lane.b32.xlu0 %v5375, 8
  %v5527 = vpop.permute.xlu0 %5526
  %5528 = vrot.lane.b32.xlu0 %v5389, 8
  %v5529 = vpop.permute.xlu0 %5528
  %5530 = vrot.lane.b32.xlu0 %v5403, 8
  %v5531 = vpop.permute.xlu0 %5530
  %5532 = vrot.lane.b32.xlu0 %v5417, 8
  %v5533 = vpop.permute.xlu0 %5532
  %5534 = vrot.lane.b32.xlu0 %v5431, 8
  %v5535 = vpop.permute.xlu0 %5534
  %5536 = vrot.lane.b32.xlu0 %v5445, 8
  %v5537 = vpop.permute.xlu0 %5536
  %5538 = vrot.lane.b32.xlu0 %v5459, 8
  %v5539 = vpop.permute.xlu0 %5538
  %5540 = vrot.lane.b32.xlu0 %v5473, 8
  %v5541 = vpop.permute.xlu0 %5540
  %5542 = vrot.lane.b32.xlu0 %v5487, 8
  %v5543 = vpop.permute.xlu0 %5542
  %5544 = vrot.lane.b32.xlu0 %v5501, 8
  %v5545 = vpop.permute.xlu0 %5544
  %5546 = vrot.lane.b32.xlu0 %v5515, 8
  %v5547 = vpop.permute.xlu0 %5546
  %vm5564 = vcmask 126016
  %5565 = vst.msk [vmem:[#allocation5] sm:$0xf] %vm5564, %v5517
  %5566 = vst.msk [vmem:[#allocation5 + $0x4] sm:$0xf] %vm5564, %v5519
  %5567 = vst.msk [vmem:[#allocation5 + $0x8] sm:$0xf] %vm5564, %v5521
  %5568 = vst.msk [vmem:[#allocation5 + $0xc] sm:$0xf] %vm5564, %v5523
  %5569 = vst.msk [vmem:[#allocation5 + $0x10] sm:$0xf] %vm5564, %v5525
  %5570 = vst.msk [vmem:[#allocation5 + $0x14] sm:$0xf] %vm5564, %v5527
  %5571 = vst.msk [vmem:[#allocation5 + $0x18] sm:$0xf] %vm5564, %v5529
  %5572 = vst.msk [vmem:[#allocation5 + $0x1c] sm:$0xf] %vm5564, %v5531
  %5573 = vst.msk [vmem:[#allocation5 + $0x20] sm:$0xf] %vm5564, %v5533
  %5574 = vst.msk [vmem:[#allocation5 + $0x24] sm:$0xf] %vm5564, %v5535
  %5575 = vst.msk [vmem:[#allocation5 + $0x28] sm:$0xf] %vm5564, %v5537
  %5576 = vst.msk [vmem:[#allocation5 + $0x2c] sm:$0xf] %vm5564, %v5539
  %5577 = vst.msk [vmem:[#allocation5 + $0x30] sm:$0xf] %vm5564, %v5541
  %5578 = vst.msk [vmem:[#allocation5 + $0x34] sm:$0xf] %vm5564, %v5543
  %5579 = vst.msk [vmem:[#allocation5 + $0x38] sm:$0xf] %vm5564, %v5545
  %5580 = vst.msk [vmem:[#allocation5 + $0x3c] sm:$0xf] %vm5564, %v5547
  %v5581 = vld [vmem:[#allocation3] sm:$0xe]
  %v5582 = vld [vmem:[#allocation3 + $0x4] sm:$0x1]
  %v5583 = vld [vmem:[#allocation3 + $0x8] sm:$0xe]
  %v5584 = vld [vmem:[#allocation3 + $0xc] sm:$0x1]
  %v5585 = vld [vmem:[#allocation3 + $0x10] sm:$0xe]
  %v5586 = vld [vmem:[#allocation3 + $0x14] sm:$0x1]
  %v5587 = vld [vmem:[#allocation3 + $0x18] sm:$0xe]
  %v5588 = vld [vmem:[#allocation3 + $0x1c] sm:$0x1]
  %v5589 = vld [vmem:[#allocation3 + $0x20] sm:$0xe]
  %v5590 = vld [vmem:[#allocation3 + $0x24] sm:$0x1]
  %v5591 = vld [vmem:[#allocation3 + $0x28] sm:$0xe]
  %v5592 = vld [vmem:[#allocation3 + $0x2c] sm:$0x1]
  %v5593 = vld [vmem:[#allocation3 + $0x30] sm:$0xe]
  %v5594 = vld [vmem:[#allocation3 + $0x34] sm:$0x1]
  %v5595 = vld [vmem:[#allocation3 + $0x38] sm:$0xe]
  %v5596 = vld [vmem:[#allocation3 + $0x3c] sm:$0x1]
  %v5597 = vld [vmem:[#allocation3 + $0x50] sm:$0xe]
  %v5598 = vld [vmem:[#allocation3 + $0x54] sm:$0x1]
  %v5599 = vld [vmem:[#allocation3 + $0x58] sm:$0xe]
  %v5600 = vld [vmem:[#allocation3 + $0x5c] sm:$0x1]
  %v5601 = vld [vmem:[#allocation3 + $0x60] sm:$0xe]
  %v5602 = vld [vmem:[#allocation3 + $0x64] sm:$0x1]
  %v5603 = vld [vmem:[#allocation3 + $0x68] sm:$0xe]
  %v5604 = vld [vmem:[#allocation3 + $0x6c] sm:$0x1]
  %v5605 = vld [vmem:[#allocation3 + $0x70] sm:$0xe]
  %v5606 = vld [vmem:[#allocation3 + $0x74] sm:$0x1]
  %v5607 = vld [vmem:[#allocation3 + $0x78] sm:$0xe]
  %v5608 = vld [vmem:[#allocation3 + $0x7c] sm:$0x1]
  %v5609 = vld [vmem:[#allocation3 + $0x80] sm:$0xe]
  %v5610 = vld [vmem:[#allocation3 + $0x84] sm:$0x1]
  %v5611 = vld [vmem:[#allocation3 + $0x88] sm:$0xe]
  %v5612 = vld [vmem:[#allocation3 + $0x8c] sm:$0x1]
  %vm5645 = vcmask 1042432
  %vm5646 = vcmask 1046532
  %vm5647 = vmor %vm5645, %vm5646
  %v5648 = vrot.slane %v5581, 5
  %v5649 = vrot.slane %v5648, 4
  %v5650 = vrot.slane %v5582, 5
  %v5651 = vsel %vm5647, %v5649, %v5650
  %v5652 = vrot.slane %v5583, 5
  %v5653 = vrot.slane %v5652, 4
  %v5654 = vrot.slane %v5584, 5
  %v5655 = vsel %vm5647, %v5653, %v5654
  %v5656 = vrot.slane %v5585, 5
  %v5657 = vrot.slane %v5656, 4
  %v5658 = vrot.slane %v5586, 5
  %v5659 = vsel %vm5647, %v5657, %v5658
  %v5660 = vrot.slane %v5587, 5
  %v5661 = vrot.slane %v5660, 4
  %v5662 = vrot.slane %v5588, 5
  %v5663 = vsel %vm5647, %v5661, %v5662
  %v5664 = vrot.slane %v5589, 5
  %v5665 = vrot.slane %v5664, 4
  %v5666 = vrot.slane %v5590, 5
  %v5667 = vsel %vm5647, %v5665, %v5666
  %v5668 = vrot.slane %v5591, 5
  %v5669 = vrot.slane %v5668, 4
  %v5670 = vrot.slane %v5592, 5
  %v5671 = vsel %vm5647, %v5669, %v5670
  %v5672 = vrot.slane %v5593, 5
  %v5673 = vrot.slane %v5672, 4
  %v5674 = vrot.slane %v5594, 5
  %v5675 = vsel %vm5647, %v5673, %v5674
  %v5676 = vrot.slane %v5595, 5
  %v5677 = vrot.slane %v5676, 4
  %v5678 = vrot.slane %v5596, 5
  %v5679 = vsel %vm5647, %v5677, %v5678
  %v5680 = vrot.slane %v5597, 5
  %v5681 = vrot.slane %v5680, 4
  %v5682 = vrot.slane %v5598, 5
  %v5683 = vsel %vm5647, %v5681, %v5682
  %v5684 = vrot.slane %v5599, 5
  %v5685 = vrot.slane %v5684, 4
  %v5686 = vrot.slane %v5600, 5
  %v5687 = vsel %vm5647, %v5685, %v5686
  %v5688 = vrot.slane %v5601, 5
  %v5689 = vrot.slane %v5688, 4
  %v5690 = vrot.slane %v5602, 5
  %v5691 = vsel %vm5647, %v5689, %v5690
  %v5692 = vrot.slane %v5603, 5
  %v5693 = vrot.slane %v5692, 4
  %v5694 = vrot.slane %v5604, 5
  %v5695 = vsel %vm5647, %v5693, %v5694
  %v5696 = vrot.slane %v5605, 5
  %v5697 = vrot.slane %v5696, 4
  %v5698 = vrot.slane %v5606, 5
  %v5699 = vsel %vm5647, %v5697, %v5698
  %v5700 = vrot.slane %v5607, 5
  %v5701 = vrot.slane %v5700, 4
  %v5702 = vrot.slane %v5608, 5
  %v5703 = vsel %vm5647, %v5701, %v5702
  %v5704 = vrot.slane %v5609, 5
  %v5705 = vrot.slane %v5704, 4
  %v5706 = vrot.slane %v5610, 5
  %v5707 = vsel %vm5647, %v5705, %v5706
  %v5708 = vrot.slane %v5611, 5
  %v5709 = vrot.slane %v5708, 4
  %v5710 = vrot.slane %v5612, 5
  %v5711 = vsel %vm5647, %v5709, %v5710
  %5712 = vrot.lane.b32.xlu0 %v5651, 16
  %v5713 = vpop.permute.xlu0 %5712
  %5714 = vrot.lane.b32.xlu0 %v5655, 16
  %v5715 = vpop.permute.xlu0 %5714
  %5716 = vrot.lane.b32.xlu0 %v5659, 16
  %v5717 = vpop.permute.xlu0 %5716
  %5718 = vrot.lane.b32.xlu0 %v5663, 16
  %v5719 = vpop.permute.xlu0 %5718
  %5720 = vrot.lane.b32.xlu0 %v5667, 16
  %v5721 = vpop.permute.xlu0 %5720
  %5722 = vrot.lane.b32.xlu0 %v5671, 16
  %v5723 = vpop.permute.xlu0 %5722
  %5724 = vrot.lane.b32.xlu0 %v5675, 16
  %v5725 = vpop.permute.xlu0 %5724
  %5726 = vrot.lane.b32.xlu0 %v5679, 16
  %v5727 = vpop.permute.xlu0 %5726
  %5728 = vrot.lane.b32.xlu0 %v5683, 16
  %v5729 = vpop.permute.xlu0 %5728
  %5730 = vrot.lane.b32.xlu0 %v5687, 16
  %v5731 = vpop.permute.xlu0 %5730
  %5732 = vrot.lane.b32.xlu0 %v5691, 16
  %v5733 = vpop.permute.xlu0 %5732
  %5734 = vrot.lane.b32.xlu0 %v5695, 16
  %v5735 = vpop.permute.xlu0 %5734
  %5736 = vrot.lane.b32.xlu0 %v5699, 16
  %v5737 = vpop.permute.xlu0 %5736
  %5738 = vrot.lane.b32.xlu0 %v5703, 16
  %v5739 = vpop.permute.xlu0 %5738
  %5740 = vrot.lane.b32.xlu0 %v5707, 16
  %v5741 = vpop.permute.xlu0 %5740
  %5742 = vrot.lane.b32.xlu0 %v5711, 16
  %v5743 = vpop.permute.xlu0 %5742
  %vm5760 = vcmask 191616
  %5761 = vst.msk [vmem:[#allocation5] sm:$0xf] %vm5760, %v5713
  %5762 = vst.msk [vmem:[#allocation5 + $0x4] sm:$0xf] %vm5760, %v5715
  %5763 = vst.msk [vmem:[#allocation5 + $0x8] sm:$0xf] %vm5760, %v5717
  %5764 = vst.msk [vmem:[#allocation5 + $0xc] sm:$0xf] %vm5760, %v5719
  %5765 = vst.msk [vmem:[#allocation5 + $0x10] sm:$0xf] %vm5760, %v5721
  %5766 = vst.msk [vmem:[#allocation5 + $0x14] sm:$0xf] %vm5760, %v5723
  %5767 = vst.msk [vmem:[#allocation5 + $0x18] sm:$0xf] %vm5760, %v5725
  %5768 = vst.msk [vmem:[#allocation5 + $0x1c] sm:$0xf] %vm5760, %v5727
  %5769 = vst.msk [vmem:[#allocation5 + $0x20] sm:$0xf] %vm5760, %v5729
  %5770 = vst.msk [vmem:[#allocation5 + $0x24] sm:$0xf] %vm5760, %v5731
  %5771 = vst.msk [vmem:[#allocation5 + $0x28] sm:$0xf] %vm5760, %v5733
  %5772 = vst.msk [vmem:[#allocation5 + $0x2c] sm:$0xf] %vm5760, %v5735
  %5773 = vst.msk [vmem:[#allocation5 + $0x30] sm:$0xf] %vm5760, %v5737
  %5774 = vst.msk [vmem:[#allocation5 + $0x34] sm:$0xf] %vm5760, %v5739
  %5775 = vst.msk [vmem:[#allocation5 + $0x38] sm:$0xf] %vm5760, %v5741
  %5776 = vst.msk [vmem:[#allocation5 + $0x3c] sm:$0xf] %vm5760, %v5743
  %v5777 = vld [vmem:[%s5129] sm:$0xf]
  %v5778 = vld [vmem:[%s5129 + $0x8] sm:$0xf]
  %v5779 = vld [vmem:[%s5129 + $0x10] sm:$0xf]
  %v5780 = vld [vmem:[%s5129 + $0x18] sm:$0xf]
  %v5781 = vld [vmem:[%s5129 + $0x20] sm:$0xf]
  %v5782 = vld [vmem:[%s5129 + $0x28] sm:$0xf]
  %v5783 = vld [vmem:[%s5129 + $0x30] sm:$0xf]
  %v5784 = vld [vmem:[%s5129 + $0x38] sm:$0xf]
  %v5785 = vld [vmem:[%s5129 + $0x50] sm:$0xf]
  %v5786 = vld [vmem:[%s5129 + $0x58] sm:$0xf]
  %v5787 = vld [vmem:[%s5129 + $0x60] sm:$0xf]
  %v5788 = vld [vmem:[%s5129 + $0x68] sm:$0xf]
  %v5789 = vld [vmem:[%s5129 + $0x70] sm:$0xf]
  %v5790 = vld [vmem:[%s5129 + $0x78] sm:$0xf]
  %v5791 = vld [vmem:[%s5129 + $0x80] sm:$0xf]
  %v5792 = vld [vmem:[%s5129 + $0x88] sm:$0xf]
  %5809 = vrot.lane.b32.xlu0 %v5777, 24
  %v5810 = vpop.permute.xlu0 %5809
  %5811 = vrot.lane.b32.xlu0 %v5778, 24
  %v5812 = vpop.permute.xlu0 %5811
  %5813 = vrot.lane.b32.xlu0 %v5779, 24
  %v5814 = vpop.permute.xlu0 %5813
  %5815 = vrot.lane.b32.xlu0 %v5780, 24
  %v5816 = vpop.permute.xlu0 %5815
  %5817 = vrot.lane.b32.xlu0 %v5781, 24
  %v5818 = vpop.permute.xlu0 %5817
  %5819 = vrot.lane.b32.xlu0 %v5782, 24
  %v5820 = vpop.permute.xlu0 %5819
  %5821 = vrot.lane.b32.xlu0 %v5783, 24
  %v5822 = vpop.permute.xlu0 %5821
  %5823 = vrot.lane.b32.xlu0 %v5784, 24
  %v5824 = vpop.permute.xlu0 %5823
  %5825 = vrot.lane.b32.xlu0 %v5785, 24
  %v5826 = vpop.permute.xlu0 %5825
  %5827 = vrot.lane.b32.xlu0 %v5786, 24
  %v5828 = vpop.permute.xlu0 %5827
  %5829 = vrot.lane.b32.xlu0 %v5787, 24
  %v5830 = vpop.permute.xlu0 %5829
  %5831 = vrot.lane.b32.xlu0 %v5788, 24
  %v5832 = vpop.permute.xlu0 %5831
  %5833 = vrot.lane.b32.xlu0 %v5789, 24
  %v5834 = vpop.permute.xlu0 %5833
  %5835 = vrot.lane.b32.xlu0 %v5790, 24
  %v5836 = vpop.permute.xlu0 %5835
  %5837 = vrot.lane.b32.xlu0 %v5791, 24
  %v5838 = vpop.permute.xlu0 %5837
  %5839 = vrot.lane.b32.xlu0 %v5792, 24
  %v5840 = vpop.permute.xlu0 %5839
  %vm5857 = vcmask 257216
  %5858 = vst.msk [vmem:[#allocation5] sm:$0xf] %vm5857, %v5810
  %5859 = vst.msk [vmem:[#allocation5 + $0x4] sm:$0xf] %vm5857, %v5812
  %5860 = vst.msk [vmem:[#allocation5 + $0x8] sm:$0xf] %vm5857, %v5814
  %5861 = vst.msk [vmem:[#allocation5 + $0xc] sm:$0xf] %vm5857, %v5816
  %5862 = vst.msk [vmem:[#allocation5 + $0x10] sm:$0xf] %vm5857, %v5818
  %5863 = vst.msk [vmem:[#allocation5 + $0x14] sm:$0xf] %vm5857, %v5820
  %5864 = vst.msk [vmem:[#allocation5 + $0x18] sm:$0xf] %vm5857, %v5822
  %5865 = vst.msk [vmem:[#allocation5 + $0x1c] sm:$0xf] %vm5857, %v5824
  %5866 = vst.msk [vmem:[#allocation5 + $0x20] sm:$0xf] %vm5857, %v5826
  %5867 = vst.msk [vmem:[#allocation5 + $0x24] sm:$0xf] %vm5857, %v5828
  %5868 = vst.msk [vmem:[#allocation5 + $0x28] sm:$0xf] %vm5857, %v5830
  %5869 = vst.msk [vmem:[#allocation5 + $0x2c] sm:$0xf] %vm5857, %v5832
  %5870 = vst.msk [vmem:[#allocation5 + $0x30] sm:$0xf] %vm5857, %v5834
  %5871 = vst.msk [vmem:[#allocation5 + $0x34] sm:$0xf] %vm5857, %v5836
  %5872 = vst.msk [vmem:[#allocation5 + $0x38] sm:$0xf] %vm5857, %v5838
  %5873 = vst.msk [vmem:[#allocation5 + $0x3c] sm:$0xf] %vm5857, %v5840
  %v5874 = vld [vmem:[%s5129] sm:$0xf]
  %v5875 = vld [vmem:[%s5129 + $0x4] sm:$0x1]
  %v5876 = vld [vmem:[%s5129 + $0x8] sm:$0xf]
  %v5877 = vld [vmem:[%s5129 + $0xc] sm:$0x1]
  %v5878 = vld [vmem:[%s5129 + $0x10] sm:$0xf]
  %v5879 = vld [vmem:[%s5129 + $0x14] sm:$0x1]
  %v5880 = vld [vmem:[%s5129 + $0x18] sm:$0xf]
  %v5881 = vld [vmem:[%s5129 + $0x1c] sm:$0x1]
  %v5882 = vld [vmem:[%s5129 + $0x20] sm:$0xf]
  %v5883 = vld [vmem:[%s5129 + $0x24] sm:$0x1]
  %v5884 = vld [vmem:[%s5129 + $0x28] sm:$0xf]
  %v5885 = vld [vmem:[%s5129 + $0x2c] sm:$0x1]
  %v5886 = vld [vmem:[%s5129 + $0x30] sm:$0xf]
  %v5887 = vld [vmem:[%s5129 + $0x34] sm:$0x1]
  %v5888 = vld [vmem:[%s5129 + $0x38] sm:$0xf]
  %v5889 = vld [vmem:[%s5129 + $0x3c] sm:$0x1]
  %v5890 = vld [vmem:[%s5129 + $0x50] sm:$0xf]
  %v5891 = vld [vmem:[%s5129 + $0x54] sm:$0x1]
  %v5892 = vld [vmem:[%s5129 + $0x58] sm:$0xf]
  %v5893 = vld [vmem:[%s5129 + $0x5c] sm:$0x1]
  %v5894 = vld [vmem:[%s5129 + $0x60] sm:$0xf]
  %v5895 = vld [vmem:[%s5129 + $0x64] sm:$0x1]
  %v5896 = vld [vmem:[%s5129 + $0x68] sm:$0xf]
  %v5897 = vld [vmem:[%s5129 + $0x6c] sm:$0x1]
  %v5898 = vld [vmem:[%s5129 + $0x70] sm:$0xf]
  %v5899 = vld [vmem:[%s5129 + $0x74] sm:$0x1]
  %v5900 = vld [vmem:[%s5129 + $0x78] sm:$0xf]
  %v5901 = vld [vmem:[%s5129 + $0x7c] sm:$0x1]
  %v5902 = vld [vmem:[%s5129 + $0x80] sm:$0xf]
  %v5903 = vld [vmem:[%s5129 + $0x84] sm:$0x1]
  %v5904 = vld [vmem:[%s5129 + $0x88] sm:$0xf]
  %v5905 = vld [vmem:[%s5129 + $0x8c] sm:$0x1]
  %v5907 = vshrl.u32 %v5874, 16
  %v5909 = vrot.slane %v5907, 4
  %v5910 = vshll.u32 %v5874, 16
  %v5912 = vrot.slane %v5910, 5
  %v5913 = vor.u32 %v5909, %v5912
  %v5914 = vrot.slane %v5913, 4
  %v5916 = vshll.u32 %v5875, 16
  %v5918 = vrot.slane %v5916, 5
  %v5919 = vsel %vm2277, %v5914, %v5918
  %v5921 = vshrl.u32 %v5876, 16
  %v5923 = vrot.slane %v5921, 4
  %v5924 = vshll.u32 %v5876, 16
  %v5926 = vrot.slane %v5924, 5
  %v5927 = vor.u32 %v5923, %v5926
  %v5928 = vrot.slane %v5927, 4
  %v5930 = vshll.u32 %v5877, 16
  %v5932 = vrot.slane %v5930, 5
  %v5933 = vsel %vm2277, %v5928, %v5932
  %v5935 = vshrl.u32 %v5878, 16
  %v5937 = vrot.slane %v5935, 4
  %v5938 = vshll.u32 %v5878, 16
  %v5940 = vrot.slane %v5938, 5
  %v5941 = vor.u32 %v5937, %v5940
  %v5942 = vrot.slane %v5941, 4
  %v5944 = vshll.u32 %v5879, 16
  %v5946 = vrot.slane %v5944, 5
  %v5947 = vsel %vm2277, %v5942, %v5946
  %v5949 = vshrl.u32 %v5880, 16
  %v5951 = vrot.slane %v5949, 4
  %v5952 = vshll.u32 %v5880, 16
  %v5954 = vrot.slane %v5952, 5
  %v5955 = vor.u32 %v5951, %v5954
  %v5956 = vrot.slane %v5955, 4
  %v5958 = vshll.u32 %v5881, 16
  %v5960 = vrot.slane %v5958, 5
  %v5961 = vsel %vm2277, %v5956, %v5960
  %v5963 = vshrl.u32 %v5882, 16
  %v5965 = vrot.slane %v5963, 4
  %v5966 = vshll.u32 %v5882, 16
  %v5968 = vrot.slane %v5966, 5
  %v5969 = vor.u32 %v5965, %v5968
  %v5970 = vrot.slane %v5969, 4
  %v5972 = vshll.u32 %v5883, 16
  %v5974 = vrot.slane %v5972, 5
  %v5975 = vsel %vm2277, %v5970, %v5974
  %v5977 = vshrl.u32 %v5884, 16
  %v5979 = vrot.slane %v5977, 4
  %v5980 = vshll.u32 %v5884, 16
  %v5982 = vrot.slane %v5980, 5
  %v5983 = vor.u32 %v5979, %v5982
  %v5984 = vrot.slane %v5983, 4
  %v5986 = vshll.u32 %v5885, 16
  %v5988 = vrot.slane %v5986, 5
  %v5989 = vsel %vm2277, %v5984, %v5988
  %v5991 = vshrl.u32 %v5886, 16
  %v5993 = vrot.slane %v5991, 4
  %v5994 = vshll.u32 %v5886, 16
  %v5996 = vrot.slane %v5994, 5
  %v5997 = vor.u32 %v5993, %v5996
  %v5998 = vrot.slane %v5997, 4
  %v6000 = vshll.u32 %v5887, 16
  %v6002 = vrot.slane %v6000, 5
  %v6003 = vsel %vm2277, %v5998, %v6002
  %v6005 = vshrl.u32 %v5888, 16
  %v6007 = vrot.slane %v6005, 4
  %v6008 = vshll.u32 %v5888, 16
  %v6010 = vrot.slane %v6008, 5
  %v6011 = vor.u32 %v6007, %v6010
  %v6012 = vrot.slane %v6011, 4
  %v6014 = vshll.u32 %v5889, 16
  %v6016 = vrot.slane %v6014, 5
  %v6017 = vsel %vm2277, %v6012, %v6016
  %v6019 = vshrl.u32 %v5890, 16
  %v6021 = vrot.slane %v6019, 4
  %v6022 = vshll.u32 %v5890, 16
  %v6024 = vrot.slane %v6022, 5
  %v6025 = vor.u32 %v6021, %v6024
  %v6026 = vrot.slane %v6025, 4
  %v6028 = vshll.u32 %v5891, 16
  %v6030 = vrot.slane %v6028, 5
  %v6031 = vsel %vm2277, %v6026, %v6030
  %v6033 = vshrl.u32 %v5892, 16
  %v6035 = vrot.slane %v6033, 4
  %v6036 = vshll.u32 %v5892, 16
  %v6038 = vrot.slane %v6036, 5
  %v6039 = vor.u32 %v6035, %v6038
  %v6040 = vrot.slane %v6039, 4
  %v6042 = vshll.u32 %v5893, 16
  %v6044 = vrot.slane %v6042, 5
  %v6045 = vsel %vm2277, %v6040, %v6044
  %v6047 = vshrl.u32 %v5894, 16
  %v6049 = vrot.slane %v6047, 4
  %v6050 = vshll.u32 %v5894, 16
  %v6052 = vrot.slane %v6050, 5
  %v6053 = vor.u32 %v6049, %v6052
  %v6054 = vrot.slane %v6053, 4
  %v6056 = vshll.u32 %v5895, 16
  %v6058 = vrot.slane %v6056, 5
  %v6059 = vsel %vm2277, %v6054, %v6058
  %v6061 = vshrl.u32 %v5896, 16
  %v6063 = vrot.slane %v6061, 4
  %v6064 = vshll.u32 %v5896, 16
  %v6066 = vrot.slane %v6064, 5
  %v6067 = vor.u32 %v6063, %v6066
  %v6068 = vrot.slane %v6067, 4
  %v6070 = vshll.u32 %v5897, 16
  %v6072 = vrot.slane %v6070, 5
  %v6073 = vsel %vm2277, %v6068, %v6072
  %v6075 = vshrl.u32 %v5898, 16
  %v6077 = vrot.slane %v6075, 4
  %v6078 = vshll.u32 %v5898, 16
  %v6080 = vrot.slane %v6078, 5
  %v6081 = vor.u32 %v6077, %v6080
  %v6082 = vrot.slane %v6081, 4
  %v6084 = vshll.u32 %v5899, 16
  %v6086 = vrot.slane %v6084, 5
  %v6087 = vsel %vm2277, %v6082, %v6086
  %v6089 = vshrl.u32 %v5900, 16
  %v6091 = vrot.slane %v6089, 4
  %v6092 = vshll.u32 %v5900, 16
  %v6094 = vrot.slane %v6092, 5
  %v6095 = vor.u32 %v6091, %v6094
  %v6096 = vrot.slane %v6095, 4
  %v6098 = vshll.u32 %v5901, 16
  %v6100 = vrot.slane %v6098, 5
  %v6101 = vsel %vm2277, %v6096, %v6100
  %v6103 = vshrl.u32 %v5902, 16
  %v6105 = vrot.slane %v6103, 4
  %v6106 = vshll.u32 %v5902, 16
  %v6108 = vrot.slane %v6106, 5
  %v6109 = vor.u32 %v6105, %v6108
  %v6110 = vrot.slane %v6109, 4
  %v6112 = vshll.u32 %v5903, 16
  %v6114 = vrot.slane %v6112, 5
  %v6115 = vsel %vm2277, %v6110, %v6114
  %v6117 = vshrl.u32 %v5904, 16
  %v6119 = vrot.slane %v6117, 4
  %v6120 = vshll.u32 %v5904, 16
  %v6122 = vrot.slane %v6120, 5
  %v6123 = vor.u32 %v6119, %v6122
  %v6124 = vrot.slane %v6123, 4
  %v6126 = vshll.u32 %v5905, 16
  %v6128 = vrot.slane %v6126, 5
  %v6129 = vsel %vm2277, %v6124, %v6128
  %6130 = vrot.lane.b32.xlu0 %v5919, 32
  %v6131 = vpop.permute.xlu0 %6130
  %6132 = vrot.lane.b32.xlu0 %v5933, 32
  %v6133 = vpop.permute.xlu0 %6132
  %6134 = vrot.lane.b32.xlu0 %v5947, 32
  %v6135 = vpop.permute.xlu0 %6134
  %6136 = vrot.lane.b32.xlu0 %v5961, 32
  %v6137 = vpop.permute.xlu0 %6136
  %6138 = vrot.lane.b32.xlu0 %v5975, 32
  %v6139 = vpop.permute.xlu0 %6138
  %6140 = vrot.lane.b32.xlu0 %v5989, 32
  %v6141 = vpop.permute.xlu0 %6140
  %6142 = vrot.lane.b32.xlu0 %v6003, 32
  %v6143 = vpop.permute.xlu0 %6142
  %6144 = vrot.lane.b32.xlu0 %v6017, 32
  %v6145 = vpop.permute.xlu0 %6144
  %6146 = vrot.lane.b32.xlu0 %v6031, 32
  %v6147 = vpop.permute.xlu0 %6146
  %6148 = vrot.lane.b32.xlu0 %v6045, 32
  %v6149 = vpop.permute.xlu0 %6148
  %6150 = vrot.lane.b32.xlu0 %v6059, 32
  %v6151 = vpop.permute.xlu0 %6150
  %6152 = vrot.lane.b32.xlu0 %v6073, 32
  %v6153 = vpop.permute.xlu0 %6152
  %6154 = vrot.lane.b32.xlu0 %v6087, 32
  %v6155 = vpop.permute.xlu0 %6154
  %6156 = vrot.lane.b32.xlu0 %v6101, 32
  %v6157 = vpop.permute.xlu0 %6156
  %6158 = vrot.lane.b32.xlu0 %v6115, 32
  %v6159 = vpop.permute.xlu0 %6158
  %6160 = vrot.lane.b32.xlu0 %v6129, 32
  %v6161 = vpop.permute.xlu0 %6160
  %vm6178 = vcmask 322816
  %6179 = vst.msk [vmem:[#allocation5] sm:$0xf] %vm6178, %v6131
  %6180 = vst.msk [vmem:[#allocation5 + $0x4] sm:$0xf] %vm6178, %v6133
  %6181 = vst.msk [vmem:[#allocation5 + $0x8] sm:$0xf] %vm6178, %v6135
  %6182 = vst.msk [vmem:[#allocation5 + $0xc] sm:$0xf] %vm6178, %v6137
  %6183 = vst.msk [vmem:[#allocation5 + $0x10] sm:$0xf] %vm6178, %v6139
  %6184 = vst.msk [vmem:[#allocation5 + $0x14] sm:$0xf] %vm6178, %v6141
  %6185 = vst.msk [vmem:[#allocation5 + $0x18] sm:$0xf] %vm6178, %v6143
  %6186 = vst.msk [vmem:[#allocation5 + $0x1c] sm:$0xf] %vm6178, %v6145
  %6187 = vst.msk [vmem:[#allocation5 + $0x20] sm:$0xf] %vm6178, %v6147
  %6188 = vst.msk [vmem:[#allocation5 + $0x24] sm:$0xf] %vm6178, %v6149
  %6189 = vst.msk [vmem:[#allocation5 + $0x28] sm:$0xf] %vm6178, %v6151
  %6190 = vst.msk [vmem:[#allocation5 + $0x2c] sm:$0xf] %vm6178, %v6153
  %6191 = vst.msk [vmem:[#allocation5 + $0x30] sm:$0xf] %vm6178, %v6155
  %6192 = vst.msk [vmem:[#allocation5 + $0x34] sm:$0xf] %vm6178, %v6157
  %6193 = vst.msk [vmem:[#allocation5 + $0x38] sm:$0xf] %vm6178, %v6159
  %6194 = vst.msk [vmem:[#allocation5 + $0x3c] sm:$0xf] %vm6178, %v6161
  %v6195 = vld [vmem:[%s5129] sm:$0xe]
  %v6196 = vld [vmem:[%s5129 + $0x4] sm:$0x1]
  %v6197 = vld [vmem:[%s5129 + $0x8] sm:$0xe]
  %v6198 = vld [vmem:[%s5129 + $0xc] sm:$0x1]
  %v6199 = vld [vmem:[%s5129 + $0x10] sm:$0xe]
  %v6200 = vld [vmem:[%s5129 + $0x14] sm:$0x1]
  %v6201 = vld [vmem:[%s5129 + $0x18] sm:$0xe]
  %v6202 = vld [vmem:[%s5129 + $0x1c] sm:$0x1]
  %v6203 = vld [vmem:[%s5129 + $0x20] sm:$0xe]
  %v6204 = vld [vmem:[%s5129 + $0x24] sm:$0x1]
  %v6205 = vld [vmem:[%s5129 + $0x28] sm:$0xe]
  %v6206 = vld [vmem:[%s5129 + $0x2c] sm:$0x1]
  %v6207 = vld [vmem:[%s5129 + $0x30] sm:$0xe]
  %v6208 = vld [vmem:[%s5129 + $0x34] sm:$0x1]
  %v6209 = vld [vmem:[%s5129 + $0x38] sm:$0xe]
  %v6210 = vld [vmem:[%s5129 + $0x3c] sm:$0x1]
  %v6211 = vld [vmem:[%s5129 + $0x50] sm:$0xe]
  %v6212 = vld [vmem:[%s5129 + $0x54] sm:$0x1]
  %v6213 = vld [vmem:[%s5129 + $0x58] sm:$0xe]
  %v6214 = vld [vmem:[%s5129 + $0x5c] sm:$0x1]
  %v6215 = vld [vmem:[%s5129 + $0x60] sm:$0xe]
  %v6216 = vld [vmem:[%s5129 + $0x64] sm:$0x1]
  %v6217 = vld [vmem:[%s5129 + $0x68] sm:$0xe]
  %v6218 = vld [vmem:[%s5129 + $0x6c] sm:$0x1]
  %v6219 = vld [vmem:[%s5129 + $0x70] sm:$0xe]
  %v6220 = vld [vmem:[%s5129 + $0x74] sm:$0x1]
  %v6221 = vld [vmem:[%s5129 + $0x78] sm:$0xe]
  %v6222 = vld [vmem:[%s5129 + $0x7c] sm:$0x1]
  %v6223 = vld [vmem:[%s5129 + $0x80] sm:$0xe]
  %v6224 = vld [vmem:[%s5129 + $0x84] sm:$0x1]
  %v6225 = vld [vmem:[%s5129 + $0x88] sm:$0xe]
  %v6226 = vld [vmem:[%s5129 + $0x8c] sm:$0x1]
  %v6259 = vrot.slane %v6195, 5
  %v6260 = vrot.slane %v6259, 4
  %v6261 = vrot.slane %v6196, 5
  %v6262 = vsel %vm5647, %v6260, %v6261
  %v6263 = vrot.slane %v6197, 5
  %v6264 = vrot.slane %v6263, 4
  %v6265 = vrot.slane %v6198, 5
  %v6266 = vsel %vm5647, %v6264, %v6265
  %v6267 = vrot.slane %v6199, 5
  %v6268 = vrot.slane %v6267, 4
  %v6269 = vrot.slane %v6200, 5
  %v6270 = vsel %vm5647, %v6268, %v6269
  %v6271 = vrot.slane %v6201, 5
  %v6272 = vrot.slane %v6271, 4
  %v6273 = vrot.slane %v6202, 5
  %v6274 = vsel %vm5647, %v6272, %v6273
  %v6275 = vrot.slane %v6203, 5
  %v6276 = vrot.slane %v6275, 4
  %v6277 = vrot.slane %v6204, 5
  %v6278 = vsel %vm5647, %v6276, %v6277
  %v6279 = vrot.slane %v6205, 5
  %v6280 = vrot.slane %v6279, 4
  %v6281 = vrot.slane %v6206, 5
  %v6282 = vsel %vm5647, %v6280, %v6281
  %v6283 = vrot.slane %v6207, 5
  %v6284 = vrot.slane %v6283, 4
  %v6285 = vrot.slane %v6208, 5
  %v6286 = vsel %vm5647, %v6284, %v6285
  %v6287 = vrot.slane %v6209, 5
  %v6288 = vrot.slane %v6287, 4
  %v6289 = vrot.slane %v6210, 5
  %v6290 = vsel %vm5647, %v6288, %v6289
  %v6291 = vrot.slane %v6211, 5
  %v6292 = vrot.slane %v6291, 4
  %v6293 = vrot.slane %v6212, 5
  %v6294 = vsel %vm5647, %v6292, %v6293
  %v6295 = vrot.slane %v6213, 5
  %v6296 = vrot.slane %v6295, 4
  %v6297 = vrot.slane %v6214, 5
  %v6298 = vsel %vm5647, %v6296, %v6297
  %v6299 = vrot.slane %v6215, 5
  %v6300 = vrot.slane %v6299, 4
  %v6301 = vrot.slane %v6216, 5
  %v6302 = vsel %vm5647, %v6300, %v6301
  %v6303 = vrot.slane %v6217, 5
  %v6304 = vrot.slane %v6303, 4
  %v6305 = vrot.slane %v6218, 5
  %v6306 = vsel %vm5647, %v6304, %v6305
  %v6307 = vrot.slane %v6219, 5
  %v6308 = vrot.slane %v6307, 4
  %v6309 = vrot.slane %v6220, 5
  %v6310 = vsel %vm5647, %v6308, %v6309
  %v6311 = vrot.slane %v6221, 5
  %v6312 = vrot.slane %v6311, 4
  %v6313 = vrot.slane %v6222, 5
  %v6314 = vsel %vm5647, %v6312, %v6313
  %v6315 = vrot.slane %v6223, 5
  %v6316 = vrot.slane %v6315, 4
  %v6317 = vrot.slane %v6224, 5
  %v6318 = vsel %vm5647, %v6316, %v6317
  %v6319 = vrot.slane %v6225, 5
  %v6320 = vrot.slane %v6319, 4
  %v6321 = vrot.slane %v6226, 5
  %v6322 = vsel %vm5647, %v6320, %v6321
  %6323 = vrot.lane.b32.xlu0 %v6262, 40
  %v6324 = vpop.permute.xlu0 %6323
  %6325 = vrot.lane.b32.xlu0 %v6266, 40
  %v6326 = vpop.permute.xlu0 %6325
  %6327 = vrot.lane.b32.xlu0 %v6270, 40
  %v6328 = vpop.permute.xlu0 %6327
  %6329 = vrot.lane.b32.xlu0 %v6274, 40
  %v6330 = vpop.permute.xlu0 %6329
  %6331 = vrot.lane.b32.xlu0 %v6278, 40
  %v6332 = vpop.permute.xlu0 %6331
  %6333 = vrot.lane.b32.xlu0 %v6282, 40
  %v6334 = vpop.permute.xlu0 %6333
  %6335 = vrot.lane.b32.xlu0 %v6286, 40
  %v6336 = vpop.permute.xlu0 %6335
  %6337 = vrot.lane.b32.xlu0 %v6290, 40
  %v6338 = vpop.permute.xlu0 %6337
  %6339 = vrot.lane.b32.xlu0 %v6294, 40
  %v6340 = vpop.permute.xlu0 %6339
  %6341 = vrot.lane.b32.xlu0 %v6298, 40
  %v6342 = vpop.permute.xlu0 %6341
  %6343 = vrot.lane.b32.xlu0 %v6302, 40
  %v6344 = vpop.permute.xlu0 %6343
  %6345 = vrot.lane.b32.xlu0 %v6306, 40
  %v6346 = vpop.permute.xlu0 %6345
  %6347 = vrot.lane.b32.xlu0 %v6310, 40
  %v6348 = vpop.permute.xlu0 %6347
  %6349 = vrot.lane.b32.xlu0 %v6314, 40
  %v6350 = vpop.permute.xlu0 %6349
  %6351 = vrot.lane.b32.xlu0 %v6318, 40
  %v6352 = vpop.permute.xlu0 %6351
  %6353 = vrot.lane.b32.xlu0 %v6322, 40
  %v6354 = vpop.permute.xlu0 %6353
  %vm6371 = vcmask 388416
  %6372 = vst.msk [vmem:[#allocation5] sm:$0xf] %vm6371, %v6324
  %6373 = vst.msk [vmem:[#allocation5 + $0x4] sm:$0xf] %vm6371, %v6326
  %6374 = vst.msk [vmem:[#allocation5 + $0x8] sm:$0xf] %vm6371, %v6328
  %6375 = vst.msk [vmem:[#allocation5 + $0xc] sm:$0xf] %vm6371, %v6330
  %6376 = vst.msk [vmem:[#allocation5 + $0x10] sm:$0xf] %vm6371, %v6332
  %6377 = vst.msk [vmem:[#allocation5 + $0x14] sm:$0xf] %vm6371, %v6334
  %6378 = vst.msk [vmem:[#allocation5 + $0x18] sm:$0xf] %vm6371, %v6336
  %6379 = vst.msk [vmem:[#allocation5 + $0x1c] sm:$0xf] %vm6371, %v6338
  %6380 = vst.msk [vmem:[#allocation5 + $0x20] sm:$0xf] %vm6371, %v6340
  %6381 = vst.msk [vmem:[#allocation5 + $0x24] sm:$0xf] %vm6371, %v6342
  %6382 = vst.msk [vmem:[#allocation5 + $0x28] sm:$0xf] %vm6371, %v6344
  %6383 = vst.msk [vmem:[#allocation5 + $0x2c] sm:$0xf] %vm6371, %v6346
  %6384 = vst.msk [vmem:[#allocation5 + $0x30] sm:$0xf] %vm6371, %v6348
  %6385 = vst.msk [vmem:[#allocation5 + $0x34] sm:$0xf] %vm6371, %v6350
  %6386 = vst.msk [vmem:[#allocation5 + $0x38] sm:$0xf] %vm6371, %v6352
  %6387 = vst.msk [vmem:[#allocation5 + $0x3c] sm:$0xf] %vm6371, %v6354
  %s6388 = scalar_lea.vmem [#allocation3], 16
  %v6389 = vld [vmem:[%s6388] sm:$0xf]
  %v6390 = vld [vmem:[%s6388 + $0x8] sm:$0xf]
  %v6391 = vld [vmem:[%s6388 + $0x10] sm:$0xf]
  %v6392 = vld [vmem:[%s6388 + $0x18] sm:$0xf]
  %v6393 = vld [vmem:[%s6388 + $0x20] sm:$0xf]
  %v6394 = vld [vmem:[%s6388 + $0x28] sm:$0xf]
  %v6395 = vld [vmem:[%s6388 + $0x30] sm:$0xf]
  %v6396 = vld [vmem:[%s6388 + $0x38] sm:$0xf]
  %v6397 = vld [vmem:[%s6388 + $0x50] sm:$0xf]
  %v6398 = vld [vmem:[%s6388 + $0x58] sm:$0xf]
  %v6399 = vld [vmem:[%s6388 + $0x60] sm:$0xf]
  %v6400 = vld [vmem:[%s6388 + $0x68] sm:$0xf]
  %v6401 = vld [vmem:[%s6388 + $0x70] sm:$0xf]
  %v6402 = vld [vmem:[%s6388 + $0x78] sm:$0xf]
  %v6403 = vld [vmem:[%s6388 + $0x80] sm:$0xf]
  %v6404 = vld [vmem:[%s6388 + $0x88] sm:$0xf]
  %6421 = vrot.lane.b32.xlu0 %v6389, 48
  %v6422 = vpop.permute.xlu0 %6421
  %6423 = vrot.lane.b32.xlu0 %v6390, 48
  %v6424 = vpop.permute.xlu0 %6423
  %6425 = vrot.lane.b32.xlu0 %v6391, 48
  %v6426 = vpop.permute.xlu0 %6425
  %6427 = vrot.lane.b32.xlu0 %v6392, 48
  %v6428 = vpop.permute.xlu0 %6427
  %6429 = vrot.lane.b32.xlu0 %v6393, 48
  %v6430 = vpop.permute.xlu0 %6429
  %6431 = vrot.lane.b32.xlu0 %v6394, 48
  %v6432 = vpop.permute.xlu0 %6431
  %6433 = vrot.lane.b32.xlu0 %v6395, 48
  %v6434 = vpop.permute.xlu0 %6433
  %6435 = vrot.lane.b32.xlu0 %v6396, 48
  %v6436 = vpop.permute.xlu0 %6435
  %6437 = vrot.lane.b32.xlu0 %v6397, 48
  %v6438 = vpop.permute.xlu0 %6437
  %6439 = vrot.lane.b32.xlu0 %v6398, 48
  %v6440 = vpop.permute.xlu0 %6439
  %6441 = vrot.lane.b32.xlu0 %v6399, 48
  %v6442 = vpop.permute.xlu0 %6441
  %6443 = vrot.lane.b32.xlu0 %v6400, 48
  %v6444 = vpop.permute.xlu0 %6443
  %6445 = vrot.lane.b32.xlu0 %v6401, 48
  %v6446 = vpop.permute.xlu0 %6445
  %6447 = vrot.lane.b32.xlu0 %v6402, 48
  %v6448 = vpop.permute.xlu0 %6447
  %6449 = vrot.lane.b32.xlu0 %v6403, 48
  %v6450 = vpop.permute.xlu0 %6449
  %6451 = vrot.lane.b32.xlu0 %v6404, 48
  %v6452 = vpop.permute.xlu0 %6451
  %vm6469 = vcmask 454016
  %6470 = vst.msk [vmem:[#allocation5] sm:$0xf] %vm6469, %v6422
  %6471 = vst.msk [vmem:[#allocation5 + $0x4] sm:$0xf] %vm6469, %v6424
  %6472 = vst.msk [vmem:[#allocation5 + $0x8] sm:$0xf] %vm6469, %v6426
  %6473 = vst.msk [vmem:[#allocation5 + $0xc] sm:$0xf] %vm6469, %v6428
  %6474 = vst.msk [vmem:[#allocation5 + $0x10] sm:$0xf] %vm6469, %v6430
  %6475 = vst.msk [vmem:[#allocation5 + $0x14] sm:$0xf] %vm6469, %v6432
  %6476 = vst.msk [vmem:[#allocation5 + $0x18] sm:$0xf] %vm6469, %v6434
  %6477 = vst.msk [vmem:[#allocation5 + $0x1c] sm:$0xf] %vm6469, %v6436
  %6478 = vst.msk [vmem:[#allocation5 + $0x20] sm:$0xf] %vm6469, %v6438
  %6479 = vst.msk [vmem:[#allocation5 + $0x24] sm:$0xf] %vm6469, %v6440
  %6480 = vst.msk [vmem:[#allocation5 + $0x28] sm:$0xf] %vm6469, %v6442
  %6481 = vst.msk [vmem:[#allocation5 + $0x2c] sm:$0xf] %vm6469, %v6444
  %6482 = vst.msk [vmem:[#allocation5 + $0x30] sm:$0xf] %vm6469, %v6446
  %6483 = vst.msk [vmem:[#allocation5 + $0x34] sm:$0xf] %vm6469, %v6448
  %6484 = vst.msk [vmem:[#allocation5 + $0x38] sm:$0xf] %vm6469, %v6450
  %6485 = vst.msk [vmem:[#allocation5 + $0x3c] sm:$0xf] %vm6469, %v6452
  %v6486 = vld [vmem:[%s6388] sm:$0xf]
  %v6487 = vld [vmem:[%s6388 + $0x4] sm:$0x1]
  %v6488 = vld [vmem:[%s6388 + $0x8] sm:$0xf]
  %v6489 = vld [vmem:[%s6388 + $0xc] sm:$0x1]
  %v6490 = vld [vmem:[%s6388 + $0x10] sm:$0xf]
  %v6491 = vld [vmem:[%s6388 + $0x14] sm:$0x1]
  %v6492 = vld [vmem:[%s6388 + $0x18] sm:$0xf]
  %v6493 = vld [vmem:[%s6388 + $0x1c] sm:$0x1]
  %v6494 = vld [vmem:[%s6388 + $0x20] sm:$0xf]
  %v6495 = vld [vmem:[%s6388 + $0x24] sm:$0x1]
  %v6496 = vld [vmem:[%s6388 + $0x28] sm:$0xf]
  %v6497 = vld [vmem:[%s6388 + $0x2c] sm:$0x1]
  %v6498 = vld [vmem:[%s6388 + $0x30] sm:$0xf]
  %v6499 = vld [vmem:[%s6388 + $0x34] sm:$0x1]
  %v6500 = vld [vmem:[%s6388 + $0x38] sm:$0xf]
  %v6501 = vld [vmem:[%s6388 + $0x3c] sm:$0x1]
  %v6502 = vld [vmem:[%s6388 + $0x50] sm:$0xf]
  %v6503 = vld [vmem:[%s6388 + $0x54] sm:$0x1]
  %v6504 = vld [vmem:[%s6388 + $0x58] sm:$0xf]
  %v6505 = vld [vmem:[%s6388 + $0x5c] sm:$0x1]
  %v6506 = vld [vmem:[%s6388 + $0x60] sm:$0xf]
  %v6507 = vld [vmem:[%s6388 + $0x64] sm:$0x1]
  %v6508 = vld [vmem:[%s6388 + $0x68] sm:$0xf]
  %v6509 = vld [vmem:[%s6388 + $0x6c] sm:$0x1]
  %v6510 = vld [vmem:[%s6388 + $0x70] sm:$0xf]
  %v6511 = vld [vmem:[%s6388 + $0x74] sm:$0x1]
  %v6512 = vld [vmem:[%s6388 + $0x78] sm:$0xf]
  %v6513 = vld [vmem:[%s6388 + $0x7c] sm:$0x1]
  %v6514 = vld [vmem:[%s6388 + $0x80] sm:$0xf]
  %v6515 = vld [vmem:[%s6388 + $0x84] sm:$0x1]
  %v6516 = vld [vmem:[%s6388 + $0x88] sm:$0xf]
  %v6517 = vld [vmem:[%s6388 + $0x8c] sm:$0x1]
  %v6519 = vshrl.u32 %v6486, 16
  %v6521 = vrot.slane %v6519, 4
  %v6522 = vshll.u32 %v6486, 16
  %v6524 = vrot.slane %v6522, 5
  %v6525 = vor.u32 %v6521, %v6524
  %v6526 = vrot.slane %v6525, 4
  %v6528 = vshll.u32 %v6487, 16
  %v6530 = vrot.slane %v6528, 5
  %v6531 = vsel %vm2277, %v6526, %v6530
  %v6533 = vshrl.u32 %v6488, 16
  %v6535 = vrot.slane %v6533, 4
  %v6536 = vshll.u32 %v6488, 16
  %v6538 = vrot.slane %v6536, 5
  %v6539 = vor.u32 %v6535, %v6538
  %v6540 = vrot.slane %v6539, 4
  %v6542 = vshll.u32 %v6489, 16
  %v6544 = vrot.slane %v6542, 5
  %v6545 = vsel %vm2277, %v6540, %v6544
  %v6547 = vshrl.u32 %v6490, 16
  %v6549 = vrot.slane %v6547, 4
  %v6550 = vshll.u32 %v6490, 16
  %v6552 = vrot.slane %v6550, 5
  %v6553 = vor.u32 %v6549, %v6552
  %v6554 = vrot.slane %v6553, 4
  %v6556 = vshll.u32 %v6491, 16
  %v6558 = vrot.slane %v6556, 5
  %v6559 = vsel %vm2277, %v6554, %v6558
  %v6561 = vshrl.u32 %v6492, 16
  %v6563 = vrot.slane %v6561, 4
  %v6564 = vshll.u32 %v6492, 16
  %v6566 = vrot.slane %v6564, 5
  %v6567 = vor.u32 %v6563, %v6566
  %v6568 = vrot.slane %v6567, 4
  %v6570 = vshll.u32 %v6493, 16
  %v6572 = vrot.slane %v6570, 5
  %v6573 = vsel %vm2277, %v6568, %v6572
  %v6575 = vshrl.u32 %v6494, 16
  %v6577 = vrot.slane %v6575, 4
  %v6578 = vshll.u32 %v6494, 16
  %v6580 = vrot.slane %v6578, 5
  %v6581 = vor.u32 %v6577, %v6580
  %v6582 = vrot.slane %v6581, 4
  %v6584 = vshll.u32 %v6495, 16
  %v6586 = vrot.slane %v6584, 5
  %v6587 = vsel %vm2277, %v6582, %v6586
  %v6589 = vshrl.u32 %v6496, 16
  %v6591 = vrot.slane %v6589, 4
  %v6592 = vshll.u32 %v6496, 16
  %v6594 = vrot.slane %v6592, 5
  %v6595 = vor.u32 %v6591, %v6594
  %v6596 = vrot.slane %v6595, 4
  %v6598 = vshll.u32 %v6497, 16
  %v6600 = vrot.slane %v6598, 5
  %v6601 = vsel %vm2277, %v6596, %v6600
  %v6603 = vshrl.u32 %v6498, 16
  %v6605 = vrot.slane %v6603, 4
  %v6606 = vshll.u32 %v6498, 16
  %v6608 = vrot.slane %v6606, 5
  %v6609 = vor.u32 %v6605, %v6608
  %v6610 = vrot.slane %v6609, 4
  %v6612 = vshll.u32 %v6499, 16
  %v6614 = vrot.slane %v6612, 5
  %v6615 = vsel %vm2277, %v6610, %v6614
  %v6617 = vshrl.u32 %v6500, 16
  %v6619 = vrot.slane %v6617, 4
  %v6620 = vshll.u32 %v6500, 16
  %v6622 = vrot.slane %v6620, 5
  %v6623 = vor.u32 %v6619, %v6622
  %v6624 = vrot.slane %v6623, 4
  %v6626 = vshll.u32 %v6501, 16
  %v6628 = vrot.slane %v6626, 5
  %v6629 = vsel %vm2277, %v6624, %v6628
  %v6631 = vshrl.u32 %v6502, 16
  %v6633 = vrot.slane %v6631, 4
  %v6634 = vshll.u32 %v6502, 16
  %v6636 = vrot.slane %v6634, 5
  %v6637 = vor.u32 %v6633, %v6636
  %v6638 = vrot.slane %v6637, 4
  %v6640 = vshll.u32 %v6503, 16
  %v6642 = vrot.slane %v6640, 5
  %v6643 = vsel %vm2277, %v6638, %v6642
  %v6645 = vshrl.u32 %v6504, 16
  %v6647 = vrot.slane %v6645, 4
  %v6648 = vshll.u32 %v6504, 16
  %v6650 = vrot.slane %v6648, 5
  %v6651 = vor.u32 %v6647, %v6650
  %v6652 = vrot.slane %v6651, 4
  %v6654 = vshll.u32 %v6505, 16
  %v6656 = vrot.slane %v6654, 5
  %v6657 = vsel %vm2277, %v6652, %v6656
  %v6659 = vshrl.u32 %v6506, 16
  %v6661 = vrot.slane %v6659, 4
  %v6662 = vshll.u32 %v6506, 16
  %v6664 = vrot.slane %v6662, 5
  %v6665 = vor.u32 %v6661, %v6664
  %v6666 = vrot.slane %v6665, 4
  %v6668 = vshll.u32 %v6507, 16
  %v6670 = vrot.slane %v6668, 5
  %v6671 = vsel %vm2277, %v6666, %v6670
  %v6673 = vshrl.u32 %v6508, 16
  %v6675 = vrot.slane %v6673, 4
  %v6676 = vshll.u32 %v6508, 16
  %v6678 = vrot.slane %v6676, 5
  %v6679 = vor.u32 %v6675, %v6678
  %v6680 = vrot.slane %v6679, 4
  %v6682 = vshll.u32 %v6509, 16
  %v6684 = vrot.slane %v6682, 5
  %v6685 = vsel %vm2277, %v6680, %v6684
  %v6687 = vshrl.u32 %v6510, 16
  %v6689 = vrot.slane %v6687, 4
  %v6690 = vshll.u32 %v6510, 16
  %v6692 = vrot.slane %v6690, 5
  %v6693 = vor.u32 %v6689, %v6692
  %v6694 = vrot.slane %v6693, 4
  %v6696 = vshll.u32 %v6511, 16
  %v6698 = vrot.slane %v6696, 5
  %v6699 = vsel %vm2277, %v6694, %v6698
  %v6701 = vshrl.u32 %v6512, 16
  %v6703 = vrot.slane %v6701, 4
  %v6704 = vshll.u32 %v6512, 16
  %v6706 = vrot.slane %v6704, 5
  %v6707 = vor.u32 %v6703, %v6706
  %v6708 = vrot.slane %v6707, 4
  %v6710 = vshll.u32 %v6513, 16
  %v6712 = vrot.slane %v6710, 5
  %v6713 = vsel %vm2277, %v6708, %v6712
  %v6715 = vshrl.u32 %v6514, 16
  %v6717 = vrot.slane %v6715, 4
  %v6718 = vshll.u32 %v6514, 16
  %v6720 = vrot.slane %v6718, 5
  %v6721 = vor.u32 %v6717, %v6720
  %v6722 = vrot.slane %v6721, 4
  %v6724 = vshll.u32 %v6515, 16
  %v6726 = vrot.slane %v6724, 5
  %v6727 = vsel %vm2277, %v6722, %v6726
  %v6729 = vshrl.u32 %v6516, 16
  %v6731 = vrot.slane %v6729, 4
  %v6732 = vshll.u32 %v6516, 16
  %v6734 = vrot.slane %v6732, 5
  %v6735 = vor.u32 %v6731, %v6734
  %v6736 = vrot.slane %v6735, 4
  %v6738 = vshll.u32 %v6517, 16
  %v6740 = vrot.slane %v6738, 5
  %v6741 = vsel %vm2277, %v6736, %v6740
  %6742 = vrot.lane.b32.xlu0 %v6531, 56
  %v6743 = vpop.permute.xlu0 %6742
  %6744 = vrot.lane.b32.xlu0 %v6545, 56
  %v6745 = vpop.permute.xlu0 %6744
  %6746 = vrot.lane.b32.xlu0 %v6559, 56
  %v6747 = vpop.permute.xlu0 %6746
  %6748 = vrot.lane.b32.xlu0 %v6573, 56
  %v6749 = vpop.permute.xlu0 %6748
  %6750 = vrot.lane.b32.xlu0 %v6587, 56
  %v6751 = vpop.permute.xlu0 %6750
  %6752 = vrot.lane.b32.xlu0 %v6601, 56
  %v6753 = vpop.permute.xlu0 %6752
  %6754 = vrot.lane.b32.xlu0 %v6615, 56
  %v6755 = vpop.permute.xlu0 %6754
  %6756 = vrot.lane.b32.xlu0 %v6629, 56
  %v6757 = vpop.permute.xlu0 %6756
  %6758 = vrot.lane.b32.xlu0 %v6643, 56
  %v6759 = vpop.permute.xlu0 %6758
  %6760 = vrot.lane.b32.xlu0 %v6657, 56
  %v6761 = vpop.permute.xlu0 %6760
  %6762 = vrot.lane.b32.xlu0 %v6671, 56
  %v6763 = vpop.permute.xlu0 %6762
  %6764 = vrot.lane.b32.xlu0 %v6685, 56
  %v6765 = vpop.permute.xlu0 %6764
  %6766 = vrot.lane.b32.xlu0 %v6699, 56
  %v6767 = vpop.permute.xlu0 %6766
  %6768 = vrot.lane.b32.xlu0 %v6713, 56
  %v6769 = vpop.permute.xlu0 %6768
  %6770 = vrot.lane.b32.xlu0 %v6727, 56
  %v6771 = vpop.permute.xlu0 %6770
  %6772 = vrot.lane.b32.xlu0 %v6741, 56
  %v6773 = vpop.permute.xlu0 %6772
  %vm6790 = vcmask 519616
  %6791 = vst.msk [vmem:[#allocation5] sm:$0xf] %vm6790, %v6743
  %6792 = vst.msk [vmem:[#allocation5 + $0x4] sm:$0xf] %vm6790, %v6745
  %6793 = vst.msk [vmem:[#allocation5 + $0x8] sm:$0xf] %vm6790, %v6747
  %6794 = vst.msk [vmem:[#allocation5 + $0xc] sm:$0xf] %vm6790, %v6749
  %6795 = vst.msk [vmem:[#allocation5 + $0x10] sm:$0xf] %vm6790, %v6751
  %6796 = vst.msk [vmem:[#allocation5 + $0x14] sm:$0xf] %vm6790, %v6753
  %6797 = vst.msk [vmem:[#allocation5 + $0x18] sm:$0xf] %vm6790, %v6755
  %6798 = vst.msk [vmem:[#allocation5 + $0x1c] sm:$0xf] %vm6790, %v6757
  %6799 = vst.msk [vmem:[#allocation5 + $0x20] sm:$0xf] %vm6790, %v6759
  %6800 = vst.msk [vmem:[#allocation5 + $0x24] sm:$0xf] %vm6790, %v6761
  %6801 = vst.msk [vmem:[#allocation5 + $0x28] sm:$0xf] %vm6790, %v6763
  %6802 = vst.msk [vmem:[#allocation5 + $0x2c] sm:$0xf] %vm6790, %v6765
  %6803 = vst.msk [vmem:[#allocation5 + $0x30] sm:$0xf] %vm6790, %v6767
  %6804 = vst.msk [vmem:[#allocation5 + $0x34] sm:$0xf] %vm6790, %v6769
  %6805 = vst.msk [vmem:[#allocation5 + $0x38] sm:$0xf] %vm6790, %v6771
  %6806 = vst.msk [vmem:[#allocation5 + $0x3c] sm:$0xf] %vm6790, %v6773
  %v6807 = vld [vmem:[%s6388] sm:$0xe]
  %v6808 = vld [vmem:[%s6388 + $0x4] sm:$0x1]
  %v6809 = vld [vmem:[%s6388 + $0x8] sm:$0xe]
  %v6810 = vld [vmem:[%s6388 + $0xc] sm:$0x1]
  %v6811 = vld [vmem:[%s6388 + $0x10] sm:$0xe]
  %v6812 = vld [vmem:[%s6388 + $0x14] sm:$0x1]
  %v6813 = vld [vmem:[%s6388 + $0x18] sm:$0xe]
  %v6814 = vld [vmem:[%s6388 + $0x1c] sm:$0x1]
  %v6815 = vld [vmem:[%s6388 + $0x20] sm:$0xe]
  %v6816 = vld [vmem:[%s6388 + $0x24] sm:$0x1]
  %v6817 = vld [vmem:[%s6388 + $0x28] sm:$0xe]
  %v6818 = vld [vmem:[%s6388 + $0x2c] sm:$0x1]
  %v6819 = vld [vmem:[%s6388 + $0x30] sm:$0xe]
  %v6820 = vld [vmem:[%s6388 + $0x34] sm:$0x1]
  %v6821 = vld [vmem:[%s6388 + $0x38] sm:$0xe]
  %v6822 = vld [vmem:[%s6388 + $0x3c] sm:$0x1]
  %v6823 = vld [vmem:[%s6388 + $0x50] sm:$0xe]
  %v6824 = vld [vmem:[%s6388 + $0x54] sm:$0x1]
  %v6825 = vld [vmem:[%s6388 + $0x58] sm:$0xe]
  %v6826 = vld [vmem:[%s6388 + $0x5c] sm:$0x1]
  %v6827 = vld [vmem:[%s6388 + $0x60] sm:$0xe]
  %v6828 = vld [vmem:[%s6388 + $0x64] sm:$0x1]
  %v6829 = vld [vmem:[%s6388 + $0x68] sm:$0xe]
  %v6830 = vld [vmem:[%s6388 + $0x6c] sm:$0x1]
  %v6831 = vld [vmem:[%s6388 + $0x70] sm:$0xe]
  %v6832 = vld [vmem:[%s6388 + $0x74] sm:$0x1]
  %v6833 = vld [vmem:[%s6388 + $0x78] sm:$0xe]
  %v6834 = vld [vmem:[%s6388 + $0x7c] sm:$0x1]
  %v6835 = vld [vmem:[%s6388 + $0x80] sm:$0xe]
  %v6836 = vld [vmem:[%s6388 + $0x84] sm:$0x1]
  %v6837 = vld [vmem:[%s6388 + $0x88] sm:$0xe]
  %v6838 = vld [vmem:[%s6388 + $0x8c] sm:$0x1]
  %v6871 = vrot.slane %v6807, 5
  %v6872 = vrot.slane %v6871, 4
  %v6873 = vrot.slane %v6808, 5
  %v6874 = vsel %vm5647, %v6872, %v6873
  %v6875 = vrot.slane %v6809, 5
  %v6876 = vrot.slane %v6875, 4
  %v6877 = vrot.slane %v6810, 5
  %v6878 = vsel %vm5647, %v6876, %v6877
  %v6879 = vrot.slane %v6811, 5
  %v6880 = vrot.slane %v6879, 4
  %v6881 = vrot.slane %v6812, 5
  %v6882 = vsel %vm5647, %v6880, %v6881
  %v6883 = vrot.slane %v6813, 5
  %v6884 = vrot.slane %v6883, 4
  %v6885 = vrot.slane %v6814, 5
  %v6886 = vsel %vm5647, %v6884, %v6885
  %v6887 = vrot.slane %v6815, 5
  %v6888 = vrot.slane %v6887, 4
  %v6889 = vrot.slane %v6816, 5
  %v6890 = vsel %vm5647, %v6888, %v6889
  %v6891 = vrot.slane %v6817, 5
  %v6892 = vrot.slane %v6891, 4
  %v6893 = vrot.slane %v6818, 5
  %v6894 = vsel %vm5647, %v6892, %v6893
  %v6895 = vrot.slane %v6819, 5
  %v6896 = vrot.slane %v6895, 4
  %v6897 = vrot.slane %v6820, 5
  %v6898 = vsel %vm5647, %v6896, %v6897
  %v6899 = vrot.slane %v6821, 5
  %v6900 = vrot.slane %v6899, 4
  %v6901 = vrot.slane %v6822, 5
  %v6902 = vsel %vm5647, %v6900, %v6901
  %v6903 = vrot.slane %v6823, 5
  %v6904 = vrot.slane %v6903, 4
  %v6905 = vrot.slane %v6824, 5
  %v6906 = vsel %vm5647, %v6904, %v6905
  %v6907 = vrot.slane %v6825, 5
  %v6908 = vrot.slane %v6907, 4
  %v6909 = vrot.slane %v6826, 5
  %v6910 = vsel %vm5647, %v6908, %v6909
  %v6911 = vrot.slane %v6827, 5
  %v6912 = vrot.slane %v6911, 4
  %v6913 = vrot.slane %v6828, 5
  %v6914 = vsel %vm5647, %v6912, %v6913
  %v6915 = vrot.slane %v6829, 5
  %v6916 = vrot.slane %v6915, 4
  %v6917 = vrot.slane %v6830, 5
  %v6918 = vsel %vm5647, %v6916, %v6917
  %v6919 = vrot.slane %v6831, 5
  %v6920 = vrot.slane %v6919, 4
  %v6921 = vrot.slane %v6832, 5
  %v6922 = vsel %vm5647, %v6920, %v6921
  %v6923 = vrot.slane %v6833, 5
  %v6924 = vrot.slane %v6923, 4
  %v6925 = vrot.slane %v6834, 5
  %v6926 = vsel %vm5647, %v6924, %v6925
  %v6927 = vrot.slane %v6835, 5
  %v6928 = vrot.slane %v6927, 4
  %v6929 = vrot.slane %v6836, 5
  %v6930 = vsel %vm5647, %v6928, %v6929
  %v6931 = vrot.slane %v6837, 5
  %v6932 = vrot.slane %v6931, 4
  %v6933 = vrot.slane %v6838, 5
  %v6934 = vsel %vm5647, %v6932, %v6933
  %6935 = vrot.lane.b32.xlu0 %v6874, 64
  %v6936 = vpop.permute.xlu0 %6935
  %6937 = vrot.lane.b32.xlu0 %v6878, 64
  %v6938 = vpop.permute.xlu0 %6937
  %6939 = vrot.lane.b32.xlu0 %v6882, 64
  %v6940 = vpop.permute.xlu0 %6939
  %6941 = vrot.lane.b32.xlu0 %v6886, 64
  %v6942 = vpop.permute.xlu0 %6941
  %6943 = vrot.lane.b32.xlu0 %v6890, 64
  %v6944 = vpop.permute.xlu0 %6943
  %6945 = vrot.lane.b32.xlu0 %v6894, 64
  %v6946 = vpop.permute.xlu0 %6945
  %6947 = vrot.lane.b32.xlu0 %v6898, 64
  %v6948 = vpop.permute.xlu0 %6947
  %6949 = vrot.lane.b32.xlu0 %v6902, 64
  %v6950 = vpop.permute.xlu0 %6949
  %6951 = vrot.lane.b32.xlu0 %v6906, 64
  %v6952 = vpop.permute.xlu0 %6951
  %6953 = vrot.lane.b32.xlu0 %v6910, 64
  %v6954 = vpop.permute.xlu0 %6953
  %6955 = vrot.lane.b32.xlu0 %v6914, 64
  %v6956 = vpop.permute.xlu0 %6955
  %6957 = vrot.lane.b32.xlu0 %v6918, 64
  %v6958 = vpop.permute.xlu0 %6957
  %6959 = vrot.lane.b32.xlu0 %v6922, 64
  %v6960 = vpop.permute.xlu0 %6959
  %6961 = vrot.lane.b32.xlu0 %v6926, 64
  %v6962 = vpop.permute.xlu0 %6961
  %6963 = vrot.lane.b32.xlu0 %v6930, 64
  %v6964 = vpop.permute.xlu0 %6963
  %6965 = vrot.lane.b32.xlu0 %v6934, 64
  %v6966 = vpop.permute.xlu0 %6965
  %vm6983 = vcmask 585216
  %6984 = vst.msk [vmem:[#allocation5] sm:$0xf] %vm6983, %v6936
  %6985 = vst.msk [vmem:[#allocation5 + $0x4] sm:$0xf] %vm6983, %v6938
  %6986 = vst.msk [vmem:[#allocation5 + $0x8] sm:$0xf] %vm6983, %v6940
  %6987 = vst.msk [vmem:[#allocation5 + $0xc] sm:$0xf] %vm6983, %v6942
  %6988 = vst.msk [vmem:[#allocation5 + $0x10] sm:$0xf] %vm6983, %v6944
  %6989 = vst.msk [vmem:[#allocation5 + $0x14] sm:$0xf] %vm6983, %v6946
  %6990 = vst.msk [vmem:[#allocation5 + $0x18] sm:$0xf] %vm6983, %v6948
  %6991 = vst.msk [vmem:[#allocation5 + $0x1c] sm:$0xf] %vm6983, %v6950
  %6992 = vst.msk [vmem:[#allocation5 + $0x20] sm:$0xf] %vm6983, %v6952
  %6993 = vst.msk [vmem:[#allocation5 + $0x24] sm:$0xf] %vm6983, %v6954
  %6994 = vst.msk [vmem:[#allocation5 + $0x28] sm:$0xf] %vm6983, %v6956
  %6995 = vst.msk [vmem:[#allocation5 + $0x2c] sm:$0xf] %vm6983, %v6958
  %6996 = vst.msk [vmem:[#allocation5 + $0x30] sm:$0xf] %vm6983, %v6960
  %6997 = vst.msk [vmem:[#allocation5 + $0x34] sm:$0xf] %vm6983, %v6962
  %6998 = vst.msk [vmem:[#allocation5 + $0x38] sm:$0xf] %vm6983, %v6964
  %6999 = vst.msk [vmem:[#allocation5 + $0x3c] sm:$0xf] %vm6983, %v6966
  %v7000 = vld [vmem:[#allocation5] sm:$0xf]
  %v7001 = vld [vmem:[#allocation5 + $0x4] sm:$0xf]
  %v7002 = vld [vmem:[#allocation5 + $0x8] sm:$0xf]
  %v7003 = vld [vmem:[#allocation5 + $0xc] sm:$0xf]
  %v7004 = vld [vmem:[#allocation5 + $0x10] sm:$0xf]
  %v7005 = vld [vmem:[#allocation5 + $0x14] sm:$0xf]
  %v7006 = vld [vmem:[#allocation5 + $0x18] sm:$0xf]
  %v7007 = vld [vmem:[#allocation5 + $0x1c] sm:$0xf]
  %v7008 = vld [vmem:[#allocation5 + $0x20] sm:$0xf]
  %v7009 = vld [vmem:[#allocation5 + $0x24] sm:$0xf]
  %v7010 = vld [vmem:[#allocation5 + $0x28] sm:$0xf]
  %v7011 = vld [vmem:[#allocation5 + $0x2c] sm:$0xf]
  %v7012 = vld [vmem:[#allocation5 + $0x30] sm:$0xf]
  %v7013 = vld [vmem:[#allocation5 + $0x34] sm:$0xf]
  %v7014 = vld [vmem:[#allocation5 + $0x38] sm:$0xf]
  %v7015 = vld [vmem:[#allocation5 + $0x3c] sm:$0xf]
  %v7016 = vld [vmem:[%s6] sm:$0xf]
  %v7017 = vld [vmem:[%s6 + $0x4] sm:$0xf]
  %v7018 = vld [vmem:[%s6 + $0x8] sm:$0xf]
  %v7019 = vld [vmem:[%s6 + $0xc] sm:$0xf]
  %v7020 = vld [vmem:[%s6 + $0x10] sm:$0xf]
  %v7021 = vld [vmem:[%s6 + $0x14] sm:$0xf]
  %v7022 = vld [vmem:[%s6 + $0x18] sm:$0xf]
  %v7023 = vld [vmem:[%s6 + $0x1c] sm:$0xf]
  %v7024 = vld [vmem:[%s6 + $0x20] sm:$0xf]
  %v7041 = vunpack.c.l.b16 %v7000
  %v7042 = vunpack.c.l.b16 %v7001
  %v7043 = vunpack.c.l.b16 %v7002
  %v7044 = vunpack.c.l.b16 %v7003
  %v7045 = vunpack.c.l.b16 %v7004
  %v7046 = vunpack.c.l.b16 %v7005
  %v7047 = vunpack.c.l.b16 %v7006
  %v7048 = vunpack.c.l.b16 %v7007
  %v7049 = vunpack.c.l.b16 %v7008
  %v7050 = vunpack.c.l.b16 %v7009
  %v7051 = vunpack.c.l.b16 %v7010
  %v7052 = vunpack.c.l.b16 %v7011
  %v7053 = vunpack.c.l.b16 %v7012
  %v7054 = vunpack.c.l.b16 %v7013
  %v7055 = vunpack.c.l.b16 %v7014
  %v7056 = vunpack.c.l.b16 %v7015
  %v7057 = vpack.c.b16 %v7042, %v7041
  %v7058 = vpack.c.b16 %v7044, %v7043
  %v7059 = vpack.c.b16 %v7046, %v7045
  %v7060 = vpack.c.b16 %v7048, %v7047
  %v7061 = vpack.c.b16 %v7050, %v7049
  %v7062 = vpack.c.b16 %v7052, %v7051
  %v7063 = vpack.c.b16 %v7054, %v7053
  %v7064 = vpack.c.b16 %v7056, %v7055
  %v7074 = vunpack.c.l.b16 %v7016
  %v7075 = vunpack.c.l.b16 %v7017
  %v7076 = vunpack.c.l.b16 %v7018
  %v7077 = vunpack.c.l.b16 %v7019
  %v7078 = vunpack.c.l.b16 %v7020
  %v7079 = vunpack.c.l.b16 %v7021
  %v7080 = vunpack.c.l.b16 %v7022
  %v7081 = vunpack.c.l.b16 %v7023
  %v7082 = vunpack.c.l.b16 %v7024
  %v7083 = vpack.c.b16 %v7075, %v7074
  %v7084 = vpack.c.b16 %v7077, %v7076
  %v7085 = vpack.c.b16 %v7079, %v7078
  %v7086 = vpack.c.b16 %v7081, %v7080
  %v7087 = vpack.c.b16 %v7082, %v7082
  %vm7092 = vcmask 588800
  %v7094 = vsel %vm7092, %v7057, 0
  %v7097 = vsel %vm7092, %v7058, 0
  %v7100 = vsel %vm7092, %v7059, 0
  %v7103 = vsel %vm7092, %v7060, 0
  %v7106 = vsel %vm7092, %v7061, 0
  %v7109 = vsel %vm7092, %v7062, 0
  %v7112 = vsel %vm7092, %v7063, 0
  %v7115 = vsel %vm7092, %v7064, 0
  %vm7117 = vcmask 1043456
  %v7119 = vsel %vm7117, %v7087, 0
  %7121 = vmatprep.subr.bf16.mxu0 0
  %7122 = vmatpush1.bf16.msra.mxu0 %v7083
  %7123 = vmatprep.subr.bf16.mxu0 0
  %7124 = vmatpush1.bf16.msra.mxu0 %v7084
  %7125 = vmatprep.subr.bf16.mxu0 0
  %7126 = vmatpush1.bf16.msra.mxu0 %v7085
  %7127 = vmatprep.subr.bf16.mxu0 0
  %7128 = vmatpush1.bf16.msra.mxu0 %v7086
  %7129 = vmatprep.subr.bf16.mxu0 0
  %7130 = vmatpush1.bf16.msra.mxu0 %v7119
  %7131 = vmatprep.subr.bf16.mxu0 0
  %7132 = vmatpush1.bf16.msra.mxu0 0
  %7133 = vmatprep.subr.bf16.mxu0 0
  %7134 = vmatpush1.bf16.msra.mxu0 0
  %7135 = vmatprep.subr.bf16.mxu0 0
  %7136 = vmatpush1.bf16.msra.mxu0 0
  %7137 = vmatprep.subr.bf16.mxu0 0
  %7138 = vmatpush1.bf16.msra.mxu0 0
  %7139 = vmatprep.subr.bf16.mxu0 0
  %7140 = vmatpush1.bf16.msra.mxu0 0
  %7141 = vmatprep.subr.bf16.mxu0 0
  %7142 = vmatpush1.bf16.msra.mxu0 0
  %7143 = vmatprep.subr.bf16.mxu0 0
  %7144 = vmatpush1.bf16.msra.mxu0 0
  %7145 = vmatprep.subr.bf16.mxu0 0
  %7146 = vmatpush1.bf16.msra.mxu0 0
  %7147 = vmatprep.subr.bf16.mxu0 0
  %7148 = vmatpush1.bf16.msra.mxu0 0
  %7149 = vmatprep.subr.bf16.mxu0 0
  %7150 = vmatpush1.bf16.msra.mxu0 0
  %7151 = vmatprep.subr.bf16.mxu0 0
  %7152 = vmatpush1.bf16.msra.mxu0 0
  %7153 = vmatprep.mubr.bf16.mxu0 0
  %7154 = vmatmul.mubr.bf16.gmra.mrb[0].mxu0 %v7094
  %v7155 = vpop.f32.mrb[0].mxu0
  %v7156 = vadd.f32 0.0, %v7155
  %v7157 = vpop.f32.mrb[0].mxu0
  %v7158 = vpop.f32.mrb[0].mxu0
  %v7159 = vadd.f32 0.0, %v7158
  %v7160 = vpop.f32.mrb[0].mxu0
  %7161 = vmatprep.mubr.bf16.mxu0 0
  %7162 = vmatmul.mubr.bf16.gmra.mrb[0].mxu0 %v7097
  %v7163 = vpop.f32.mrb[0].mxu0
  %v7164 = vadd.f32 0.0, %v7163
  %v7165 = vpop.f32.mrb[0].mxu0
  %v7166 = vpop.f32.mrb[0].mxu0
  %v7167 = vadd.f32 0.0, %v7166
  %v7168 = vpop.f32.mrb[0].mxu0
  %7169 = vmatprep.mubr.bf16.mxu0 0
  %7170 = vmatmul.mubr.bf16.gmra.mrb[0].mxu0 %v7100
  %v7171 = vpop.f32.mrb[0].mxu0
  %v7172 = vadd.f32 0.0, %v7171
  %v7173 = vpop.f32.mrb[0].mxu0
  %v7174 = vpop.f32.mrb[0].mxu0
  %v7175 = vadd.f32 0.0, %v7174
  %v7176 = vpop.f32.mrb[0].mxu0
  %7177 = vmatprep.mubr.bf16.mxu0 0
  %7178 = vmatmul.mubr.bf16.gmra.mrb[0].mxu0 %v7103
  %v7179 = vpop.f32.mrb[0].mxu0
  %v7180 = vadd.f32 0.0, %v7179
  %v7181 = vpop.f32.mrb[0].mxu0
  %v7182 = vpop.f32.mrb[0].mxu0
  %v7183 = vadd.f32 0.0, %v7182
  %v7184 = vpop.f32.mrb[0].mxu0
  %7185 = vmatprep.mubr.bf16.mxu0 0
  %7186 = vmatmul.mubr.bf16.gmra.mrb[0].mxu0 %v7106
  %v7187 = vpop.f32.mrb[0].mxu0
  %v7188 = vadd.f32 0.0, %v7187
  %v7189 = vpop.f32.mrb[0].mxu0
  %v7190 = vpop.f32.mrb[0].mxu0
  %v7191 = vadd.f32 0.0, %v7190
  %v7192 = vpop.f32.mrb[0].mxu0
  %7193 = vmatprep.mubr.bf16.mxu0 0
  %7194 = vmatmul.mubr.bf16.gmra.mrb[0].mxu0 %v7109
  %v7195 = vpop.f32.mrb[0].mxu0
  %v7196 = vadd.f32 0.0, %v7195
  %v7197 = vpop.f32.mrb[0].mxu0
  %v7198 = vpop.f32.mrb[0].mxu0
  %v7199 = vadd.f32 0.0, %v7198
  %v7200 = vpop.f32.mrb[0].mxu0
  %7201 = vmatprep.mubr.bf16.mxu0 0
  %7202 = vmatmul.mubr.bf16.gmra.mrb[0].mxu0 %v7112
  %v7203 = vpop.f32.mrb[0].mxu0
  %v7204 = vadd.f32 0.0, %v7203
  %v7205 = vpop.f32.mrb[0].mxu0
  %v7206 = vpop.f32.mrb[0].mxu0
  %v7207 = vadd.f32 0.0, %v7206
  %v7208 = vpop.f32.mrb[0].mxu0
  %7209 = vmatprep.mubr.bf16.mxu0 0
  %7210 = vmatmul.mubr.bf16.gmra.mrb[0].mxu0 %v7115
  %v7211 = vpop.f32.mrb[0].mxu0
  %v7212 = vadd.f32 0.0, %v7211
  %v7213 = vpop.f32.mrb[0].mxu0
  %v7214 = vpop.f32.mrb[0].mxu0
  %v7215 = vadd.f32 0.0, %v7214
  %v7216 = vpop.f32.mrb[0].mxu0
  %7217 = vdwg.mxu0
  %v7218 = vunpack.c.l.b16 %v2291
  %v7219 = vunpack.c.l.b16 %v2305
  %v7220 = vunpack.c.l.b16 %v2319
  %v7221 = vunpack.c.l.b16 %v2333
  %v7222 = vunpack.c.l.b16 %v2347
  %v7223 = vunpack.c.l.b16 %v2361
  %v7224 = vunpack.c.l.b16 %v2375
  %v7225 = vunpack.c.l.b16 %v2389
  %v7226 = vunpack.c.l.b16 %v2403
  %v7227 = vunpack.c.l.b16 %v2417
  %v7228 = vunpack.c.l.b16 %v2431
  %v7229 = vunpack.c.l.b16 %v2445
  %v7230 = vunpack.c.l.b16 %v2459
  %v7231 = vunpack.c.l.b16 %v2473
  %v7232 = vunpack.c.l.b16 %v2487
  %v7233 = vunpack.c.l.b16 %v2501
  %v7234 = vpack.c.b16 %v7219, %v7218
  %v7235 = vpack.c.b16 %v7221, %v7220
  %v7236 = vpack.c.b16 %v7223, %v7222
  %v7237 = vpack.c.b16 %v7225, %v7224
  %v7238 = vpack.c.b16 %v7227, %v7226
  %v7239 = vpack.c.b16 %v7229, %v7228
  %v7240 = vpack.c.b16 %v7231, %v7230
  %v7241 = vpack.c.b16 %v7233, %v7232
  %vm7242 = vcmask 31744
  %v7244 = vsel %vm7242, %v7234, 0
  %v7247 = vsel %vm7242, %v7235, 0
  %v7250 = vsel %vm7242, %v7236, 0
  %v7253 = vsel %vm7242, %v7237, 0
  %v7256 = vsel %vm7242, %v7238, 0
  %v7259 = vsel %vm7242, %v7239, 0
  %v7262 = vsel %vm7242, %v7240, 0
  %v7265 = vsel %vm7242, %v7241, 0
  %v7268 = vsel %vm4758, %v2502, 0
  %7270 = vmatprep.subr.bf16.mxu0 0
  %7271 = vmatpush1.bf16.msra.mxu0 %v7268
  %7272 = vmatprep.subr.bf16.mxu0 0
  %7273 = vmatpush1.bf16.msra.mxu0 0
  %7274 = vmatprep.subr.bf16.mxu0 0
  %7275 = vmatpush1.bf16.msra.mxu0 0
  %7276 = vmatprep.subr.bf16.mxu0 0
  %7277 = vmatpush1.bf16.msra.mxu0 0
  %7278 = vmatprep.subr.bf16.mxu0 0
  %7279 = vmatpush1.bf16.msra.mxu0 0
  %7280 = vmatprep.subr.bf16.mxu0 0
  %7281 = vmatpush1.bf16.msra.mxu0 0
  %7282 = vmatprep.subr.bf16.mxu0 0
  %7283 = vmatpush1.bf16.msra.mxu0 0
  %7284 = vmatprep.subr.bf16.mxu0 0
  %7285 = vmatpush1.bf16.msra.mxu0 0
  %7286 = vmatprep.subr.bf16.mxu0 0
  %7287 = vmatpush1.bf16.msra.mxu0 0
  %7288 = vmatprep.subr.bf16.mxu0 0
  %7289 = vmatpush1.bf16.msra.mxu0 0
  %7290 = vmatprep.subr.bf16.mxu0 0
  %7291 = vmatpush1.bf16.msra.mxu0 0
  %7292 = vmatprep.subr.bf16.mxu0 0
  %7293 = vmatpush1.bf16.msra.mxu0 0
  %7294 = vmatprep.subr.bf16.mxu0 0
  %7295 = vmatpush1.bf16.msra.mxu0 0
  %7296 = vmatprep.subr.bf16.mxu0 0
  %7297 = vmatpush1.bf16.msra.mxu0 0
  %7298 = vmatprep.subr.bf16.mxu0 0
  %7299 = vmatpush1.bf16.msra.mxu0 0
  %7300 = vmatprep.subr.bf16.mxu0 0
  %7301 = vmatpush1.bf16.msra.mxu0 0
  %7302 = vmatprep.mubr.bf16.mxu0 0
  %7303 = vmatmul.mubr.bf16.gmra.mrb[0].mxu0 %v7244
  %v7304 = vpop.f32.mrb[0].mxu0
  %v7305 = vadd.f32 %v7156, %v7304
  %v7306 = vpop.f32.mrb[0].mxu0
  %v7307 = vpop.f32.mrb[0].mxu0
  %v7308 = vadd.f32 %v7159, %v7307
  %v7309 = vpop.f32.mrb[0].mxu0
  %7310 = vmatprep.mubr.bf16.mxu0 0
  %7311 = vmatmul.mubr.bf16.gmra.mrb[0].mxu0 %v7247
  %v7312 = vpop.f32.mrb[0].mxu0
  %v7313 = vadd.f32 %v7164, %v7312
  %v7314 = vpop.f32.mrb[0].mxu0
  %v7315 = vpop.f32.mrb[0].mxu0
  %v7316 = vadd.f32 %v7167, %v7315
  %v7317 = vpop.f32.mrb[0].mxu0
  %7318 = vmatprep.mubr.bf16.mxu0 0
  %7319 = vmatmul.mubr.bf16.gmra.mrb[0].mxu0 %v7250
  %v7320 = vpop.f32.mrb[0].mxu0
  %v7321 = vadd.f32 %v7172, %v7320
  %v7322 = vpop.f32.mrb[0].mxu0
  %v7323 = vpop.f32.mrb[0].mxu0
  %v7324 = vadd.f32 %v7175, %v7323
  %v7325 = vpop.f32.mrb[0].mxu0
  %7326 = vmatprep.mubr.bf16.mxu0 0
  %7327 = vmatmul.mubr.bf16.gmra.mrb[0].mxu0 %v7253
  %v7328 = vpop.f32.mrb[0].mxu0
  %v7329 = vadd.f32 %v7180, %v7328
  %v7330 = vpop.f32.mrb[0].mxu0
  %v7331 = vpop.f32.mrb[0].mxu0
  %v7332 = vadd.f32 %v7183, %v7331
  %v7333 = vpop.f32.mrb[0].mxu0
  %7334 = vmatprep.mubr.bf16.mxu0 0
  %7335 = vmatmul.mubr.bf16.gmra.mrb[0].mxu0 %v7256
  %v7336 = vpop.f32.mrb[0].mxu0
  %v7337 = vadd.f32 %v7188, %v7336
  %v7338 = vpop.f32.mrb[0].mxu0
  %v7339 = vpop.f32.mrb[0].mxu0
  %v7340 = vadd.f32 %v7191, %v7339
  %v7341 = vpop.f32.mrb[0].mxu0
  %7342 = vmatprep.mubr.bf16.mxu0 0
  %7343 = vmatmul.mubr.bf16.gmra.mrb[0].mxu0 %v7259
  %v7344 = vpop.f32.mrb[0].mxu0
  %v7345 = vadd.f32 %v7196, %v7344
  %v7346 = vpop.f32.mrb[0].mxu0
  %v7347 = vpop.f32.mrb[0].mxu0
  %v7348 = vadd.f32 %v7199, %v7347
  %v7349 = vpop.f32.mrb[0].mxu0
  %7350 = vmatprep.mubr.bf16.mxu0 0
  %7351 = vmatmul.mubr.bf16.gmra.mrb[0].mxu0 %v7262
  %v7352 = vpop.f32.mrb[0].mxu0
  %v7353 = vadd.f32 %v7204, %v7352
  %v7354 = vpop.f32.mrb[0].mxu0
  %v7355 = vpop.f32.mrb[0].mxu0
  %v7356 = vadd.f32 %v7207, %v7355
  %v7357 = vpop.f32.mrb[0].mxu0
  %7358 = vmatprep.mubr.bf16.mxu0 0
  %7359 = vmatmul.mubr.bf16.gmra.mrb[0].mxu0 %v7265
  %v7360 = vpop.f32.mrb[0].mxu0
  %v7361 = vadd.f32 %v7212, %v7360
  %v7362 = vpop.f32.mrb[0].mxu0
  %v7363 = vpop.f32.mrb[0].mxu0
  %v7364 = vadd.f32 %v7215, %v7363
  %v7365 = vpop.f32.mrb[0].mxu0
  %7366 = vdwg.mxu0
  %v7367 = vpack.c.bf16 %v7308, %v7305
  %v7368 = vpack.c.bf16 %v7316, %v7313
  %v7369 = vpack.c.bf16 %v7324, %v7321
  %v7370 = vpack.c.bf16 %v7332, %v7329
  %v7371 = vpack.c.bf16 %v7340, %v7337
  %v7372 = vpack.c.bf16 %v7348, %v7345
  %v7373 = vpack.c.bf16 %v7356, %v7353
  %v7374 = vpack.c.bf16 %v7364, %v7361
  %v7383 = vunpack.c.l.b16 %v7367
  %v7384 = vunpack.c.h.b16 %v7367
  %v7385 = vunpack.c.l.b16 %v7368
  %v7386 = vunpack.c.h.b16 %v7368
  %v7387 = vunpack.c.l.b16 %v7369
  %v7388 = vunpack.c.h.b16 %v7369
  %v7389 = vunpack.c.l.b16 %v7370
  %v7390 = vunpack.c.h.b16 %v7370
  %v7391 = vunpack.c.l.b16 %v7371
  %v7392 = vunpack.c.h.b16 %v7371
  %v7393 = vunpack.c.l.b16 %v7372
  %v7394 = vunpack.c.h.b16 %v7372
  %v7395 = vunpack.c.l.b16 %v7373
  %v7396 = vunpack.c.h.b16 %v7373
  %v7397 = vunpack.c.l.b16 %v7374
  %v7398 = vunpack.c.h.b16 %v7374
  %v7399 = vpack.c.b16 %v7383, %v7383
  %v7400 = vpack.c.b16 %v7384, %v7384
  %v7401 = vpack.c.b16 %v7385, %v7385
  %v7402 = vpack.c.b16 %v7386, %v7386
  %v7403 = vpack.c.b16 %v7387, %v7387
  %v7404 = vpack.c.b16 %v7388, %v7388
  %v7405 = vpack.c.b16 %v7389, %v7389
  %v7406 = vpack.c.b16 %v7390, %v7390
  %v7407 = vpack.c.b16 %v7391, %v7391
  %v7408 = vpack.c.b16 %v7392, %v7392
  %v7409 = vpack.c.b16 %v7393, %v7393
  %v7410 = vpack.c.b16 %v7394, %v7394
  %v7411 = vpack.c.b16 %v7395, %v7395
  %v7412 = vpack.c.b16 %v7396, %v7396
  %v7413 = vpack.c.b16 %v7397, %v7397
  %v7414 = vpack.c.b16 %v7398, %v7398
  %7431 = vst.msk [vmem:[%s8] sm:$0xf] %vm550, %v7399
  %7432 = vst.msk [vmem:[%s8 + $0x4] sm:$0xf] %vm550, %v7400
  %7433 = vst.msk [vmem:[%s8 + $0x8] sm:$0xf] %vm550, %v7401
  %7434 = vst.msk [vmem:[%s8 + $0xc] sm:$0xf] %vm550, %v7402
  %7435 = vst.msk [vmem:[%s8 + $0x10] sm:$0xf] %vm550, %v7403
  %7436 = vst.msk [vmem:[%s8 + $0x14] sm:$0xf] %vm550, %v7404
  %7437 = vst.msk [vmem:[%s8 + $0x18] sm:$0xf] %vm550, %v7405
  %7438 = vst.msk [vmem:[%s8 + $0x1c] sm:$0xf] %vm550, %v7406
  %7439 = vst.msk [vmem:[%s8 + $0x20] sm:$0xf] %vm550, %v7407
  %7440 = vst.msk [vmem:[%s8 + $0x24] sm:$0xf] %vm550, %v7408
  %7441 = vst.msk [vmem:[%s8 + $0x28] sm:$0xf] %vm550, %v7409
  %7442 = vst.msk [vmem:[%s8 + $0x2c] sm:$0xf] %vm550, %v7410
  %7443 = vst.msk [vmem:[%s8 + $0x30] sm:$0xf] %vm550, %v7411
  %7444 = vst.msk [vmem:[%s8 + $0x34] sm:$0xf] %vm550, %v7412
  %7445 = vst.msk [vmem:[%s8 + $0x38] sm:$0xf] %vm550, %v7413
  %7446 = vst.msk [vmem:[%s8 + $0x3c] sm:$0xf] %vm550, %v7414
  // Predicated region
  $region34: #{network_block_forward.2} parent=0 // pred_check
    _
  $region35: #{network_block_forward.2} parent=0 // pred_check_branch
    %7448 = sbr.rel (0) target = $region37
  $region36: #{network_block_forward.2} parent=0 // pred_region
    _
  $region37: #{network_block_forward.2} parent=0 // pred_fallthru
    _
  // Predicated region
  $region38: #{network_block_forward.2} parent=0 // pred_check
    _
  $region39: #{network_block_forward.2} parent=0 // pred_check_branch
    %7450 = sbr.rel (0) target = $region41
  $region40: #{network_block_forward.2} parent=0 // pred_region
    _
  $region41: #{network_block_forward.2} parent=0 // pred_fallthru
    _

</llo_original>
